<compile_context>
chip_gen: v7x
topology: tpu7x:2x2x1
jax: 0.10.0
libtpu: 0.0.40
codegen_flags: <defaults>
</compile_context>

<pallas_src>
import functools

import jax
import jax.numpy as jnp
from jax.experimental import pallas as pl
from jax.experimental.pallas import tpu as pltpu


_VMEM_LIMIT = 48 * 1024 * 1024


def _round_up(x, m):
    return ((x + m - 1) // m) * m


def _tile(m, prefer=1024, align=16):
    """Largest power-of-two tile <= prefer dividing m, with >= 4 grid steps
    (v7x: 2 TCs x >= 2 pipelined steps each); falls back to >= 2, then m."""
    for min_steps in (4, 2):
        t = prefer
        while t >= align:
            if m % t == 0 and m // t >= min_steps:
                return t
            t //= 2
    return m


def _cparams(n_axes=1):
    return pltpu.CompilerParams(
        dimension_semantics=("parallel",) * n_axes,
        vmem_limit_bytes=_VMEM_LIMIT)


# ---------------------------------------------------------------------------
# Pallas kernels
# ---------------------------------------------------------------------------

def dense1x1_kernel(x_ref, s_ref, t_ref, w_ref, b_ref, o_ref):
    # o = relu( relu(x * s + t) @ W + b )
    # (bn1 + relu + conv1x1 + bn2 + relu fused; bn2 scale folded into W,
    #  bn2 shift passed as b).  x is bf16, BN math in f32, matmul bf16 x bf16
    #  with f32 accumulation, output stored bf16.
    h = jnp.maximum(x_ref[...].astype(jnp.float32) * s_ref[...] + t_ref[...], 0.0)
    y = jnp.dot(h.astype(jnp.bfloat16), w_ref[...],
                preferred_element_type=jnp.float32)
    o_ref[...] = jnp.maximum(y + b_ref[...], 0.0).astype(jnp.bfloat16)


def matmul_bias_kernel(x_ref, w_ref, b_ref, o_ref):
    # o = x @ W + b   (bf16 operands, f32 accumulation)
    y = jnp.dot(x_ref[...], w_ref[...], preferred_element_type=jnp.float32)
    o_ref[...] = (y + b_ref[...]).astype(o_ref.dtype)


def conv3x3_kernel(x_ref, w_ref, b_ref, o_ref, *, wp, q, stack_k):
    # 3x3 conv (zero-padding already applied) on the flattened (row-major)
    # padded image.  x_ref: (1, R, Cin) bf16, w_ref: (9*Cin, Cout) bf16
    # (rows ordered (dy, dx, cin)), o_ref: (1, q, Cout) bf16.
    x = x_ref[0]
    cin = x.shape[-1]
    offs = [dy * wp + dx for dy in range(3) for dx in range(3)]
    if stack_k:
        # Single deep-K matmul: stack the 9 shifted windows along K in VMEM.
        # Only used when Cin % 128 == 0 so the lane-concat is tile-aligned.
        xc = jnp.concatenate([x[off:off + q, :] for off in offs], axis=-1)
        y = jnp.dot(xc, w_ref[...], preferred_element_type=jnp.float32)
    else:
        # Fallback: 9 value-accumulated matmuls (operands already bf16, the
        # accumulator is a value, not a VMEM ref).
        w = w_ref[...]
        y = None
        for k, off in enumerate(offs):
            part = jnp.dot(x[off:off + q, :], w[k * cin:(k + 1) * cin, :],
                           preferred_element_type=jnp.float32)
            y = part if y is None else y + part
    o_ref[0] = (y + b_ref[...]).astype(jnp.bfloat16)


def bn_relu_pool_w_kernel(x_ref, s_ref, t_ref, o_ref, *, c):
    # horizontal 2-pixel average of relu(bn(x)); x_ref: (T, 2*C) lane-dense,
    # the two pixels live in the two lane-aligned halves.
    h = jnp.maximum(x_ref[...].astype(jnp.float32) * s_ref[...] + t_ref[...], 0.0)
    o_ref[...] = ((h[:, :c] + h[:, c:]) * 0.5).astype(jnp.bfloat16)


def pool_h_kernel(x_ref, o_ref, *, d):
    # vertical 2-row average; x_ref: (T, 2*D) lane-dense halves.
    x = x_ref[...].astype(jnp.float32)
    o_ref[...] = ((x[:, :d] + x[:, d:]) * 0.5).astype(jnp.bfloat16)


def global_pool_fc_kernel(x_ref, w_ref, b_ref, o_ref):
    # adaptive avg pool to (1,1) + linear head
    pooled = jnp.mean(x_ref[...].astype(jnp.float32), axis=1)      # (N, C)
    y = jnp.dot(pooled.astype(jnp.bfloat16), w_ref[...],
                preferred_element_type=jnp.float32)
    o_ref[...] = y + b_ref[...]


# ---------------------------------------------------------------------------
# pallas_call wrappers
# ---------------------------------------------------------------------------

def pallas_dense1x1(x2d, scale, shift, w_bf16, bias, *, kp):
    M, _ = x2d.shape
    Nc = w_bf16.shape[1]
    TM = _tile(M)
    # K is blocked to kp (either a multiple of 128 or the full slab width):
    # zero / not-yet-written channels beyond kp are never DMA'd or multiplied.
    return pl.pallas_call(
        dense1x1_kernel,
        out_shape=jax.ShapeDtypeStruct((M, Nc), jnp.bfloat16),
        grid=(M // TM,),
        in_specs=[
            pl.BlockSpec((TM, kp), lambda i: (i, 0)),
            pl.BlockSpec((1, kp), lambda i: (0, 0)),
            pl.BlockSpec((1, kp), lambda i: (0, 0)),
            pl.BlockSpec((kp, Nc), lambda i: (0, 0)),
            pl.BlockSpec((1, Nc), lambda i: (0, 0)),
        ],
        out_specs=pl.BlockSpec((TM, Nc), lambda i: (i, 0)),
        compiler_params=_cparams(1),
    )(x2d, scale, shift, w_bf16, bias)


def pallas_matmul_bias(x2d, w_bf16, bias, out_dtype=jnp.bfloat16):
    M, K = x2d.shape
    Nc = w_bf16.shape[1]
    TM = _tile(M)
    return pl.pallas_call(
        matmul_bias_kernel,
        out_shape=jax.ShapeDtypeStruct((M, Nc), out_dtype),
        grid=(M // TM,),
        in_specs=[
            pl.BlockSpec((TM, K), lambda i: (i, 0)),
            pl.BlockSpec((K, Nc), lambda i: (0, 0)),
            pl.BlockSpec((1, Nc), lambda i: (0, 0)),
        ],
        out_specs=pl.BlockSpec((TM, Nc), lambda i: (i, 0)),
        compiler_params=_cparams(1),
    )(x2d, w_bf16, bias)


def pallas_conv3x3(x_flat, w_bf16, bias, *, wp, q):
    N, R, Cin = x_flat.shape
    Cout = w_bf16.shape[-1]
    stack_k = (Cin % 128 == 0)          # lane-aligned stacked-K only
    kern = functools.partial(conv3x3_kernel, wp=wp, q=q, stack_k=stack_k)
    return pl.pallas_call(
        kern,
        out_shape=jax.ShapeDtypeStruct((N, q, Cout), jnp.bfloat16),
        grid=(N,),
        in_specs=[
            pl.BlockSpec((1, R, Cin), lambda n: (n, 0, 0)),
            pl.BlockSpec((9 * Cin, Cout), lambda n: (0, 0)),
            pl.BlockSpec((1, Cout), lambda n: (0, 0)),
        ],
        out_specs=pl.BlockSpec((1, q, Cout), lambda n: (n, 0, 0)),
        compiler_params=_cparams(1),
    )(x_flat, w_bf16, bias)


def pallas_bn_relu_pool_w(x2d, scale2, shift2, *, c):
    M, C2 = x2d.shape
    TM = _tile(M)
    return pl.pallas_call(
        functools.partial(bn_relu_pool_w_kernel, c=c),
        out_shape=jax.ShapeDtypeStruct((M, c), jnp.bfloat16),
        grid=(M // TM,),
        in_specs=[
            pl.BlockSpec((TM, C2), lambda i: (i, 0)),
            pl.BlockSpec((1, C2), lambda i: (0, 0)),
            pl.BlockSpec((1, C2), lambda i: (0, 0)),
        ],
        out_specs=pl.BlockSpec((TM, c), lambda i: (i, 0)),
        compiler_params=_cparams(1),
    )(x2d, scale2, shift2)


def pallas_pool_h(x2d, *, d):
    M, D2 = x2d.shape
    TM = _tile(M)
    return pl.pallas_call(
        functools.partial(pool_h_kernel, d=d),
        out_shape=jax.ShapeDtypeStruct((M, d), jnp.bfloat16),
        grid=(M // TM,),
        in_specs=[pl.BlockSpec((TM, D2), lambda i: (i, 0))],
        out_specs=pl.BlockSpec((TM, d), lambda i: (i, 0)),
        compiler_params=_cparams(1),
    )(x2d)


def pallas_global_pool_fc(x3d, w_bf16, bias):
    N, HW, C = x3d.shape
    NC = w_bf16.shape[1]
    return pl.pallas_call(
        global_pool_fc_kernel,
        out_shape=jax.ShapeDtypeStruct((N, NC), jnp.float32),
        grid=(1,),
        in_specs=[
            pl.BlockSpec((N, HW, C), lambda i: (0, 0, 0)),
            pl.BlockSpec((C, NC), lambda i: (0, 0)),
            pl.BlockSpec((1, NC), lambda i: (0, 0)),
        ],
        out_specs=pl.BlockSpec((N, NC), lambda i: (0, 0)),
        compiler_params=_cparams(1),
    )(x3d, w_bf16, bias)


# ---------------------------------------------------------------------------
# Model glue (reshapes, zero-padding) in plain JAX
# ---------------------------------------------------------------------------

def conv3x3(x_nhwc, w_stacked_bf16, bias):
    # zero-pad (like PyTorch conv padding=1), flatten each padded image and run
    # the 9-tap kernel.  Outputs land on the padded-width column grid; the
    # garbage columns are sliced away afterwards.
    N, H, W, C = x_nhwc.shape
    Cout = w_stacked_bf16.shape[-1]
    Hp, Wp = H + 2, W + 2
    q = H * Wp
    R = Hp * Wp + 2 * Wp + 2           # tail pad keeps every tap window in bounds
    xp = jnp.pad(x_nhwc, ((0, 0), (1, 1), (1, 1), (0, 0)))
    xp = xp.reshape(N, Hp * Wp, C)
    xp = jnp.pad(xp, ((0, 0), (0, R - Hp * Wp), (0, 0)))
    y = pallas_conv3x3(xp, w_stacked_bf16, bias, wp=Wp, q=q)
    return y.reshape(N, H, Wp, Cout)[:, :, :W, :]


def dense_layer(slab, lp, g):
    # slab: (N,H,W,Cfull) bf16; valid channels are [:cj]; this layer writes
    # channels [cj:cj+g].
    N, H, W, Cfull = slab.shape
    cj = lp["cj"]
    u = pallas_dense1x1(slab.reshape(N * H * W, Cfull),
                        lp["s1"], lp["t1"], lp["w1"], lp["b1"], kp=lp["kp"])
    u = u.reshape(N, H, W, -1)          # = relu(bn2(conv1(relu(bn1(x)))))
    y = conv3x3(u, lp["w2"], lp["b2"])  # (N,H,W,g) bf16
    # TODO(synk): stripe width g is not 128-lane aligned, so this write is left
    # to XLA's in-place dynamic-update-slice instead of an aliased Pallas store.
    return slab.at[:, :, :, cj:cj + g].set(y)


def transition(slab, tp):
    # avgpool(conv1x1(relu(bn(x)))) == conv1x1(avgpool(relu(bn(x)))) since the
    # 1x1 conv is affine: pool first, then matmul at quarter resolution.
    N, H, W, C = slab.shape
    assert H % 2 == 0 and W % 2 == 0, "transition assumes even H and W"
    xw = slab.reshape(N * H * (W // 2), 2 * C)
    hw = pallas_bn_relu_pool_w(xw, tp["s"], tp["t"], c=C)
    D = (W // 2) * C
    xh = hw.reshape(N * (H // 2), 2 * D)
    ph = pallas_pool_h(xh, d=D)
    p2 = ph.reshape(N * (H // 2) * (W // 2), C)
    y = pallas_matmul_bias(p2, tp["w"], tp["b"])
    return y.reshape(N, H // 2, W // 2, -1)


def densenet_forward(plan, x_nchw, growth_rate):
    g = growth_rate
    x = jnp.transpose(x_nchw, (0, 2, 3, 1)).astype(jnp.float32)   # NCHW -> NHWC
    # Stem bn1 + relu applied as XLA elementwise ops that fuse into the zero-pad
    # the stem conv needs anyway (no standalone Pallas bn_relu HBM round trip,
    # and the conv padding remains exact zeros).
    stem = plan["stem"]
    h = jnp.maximum(x * stem["s"][None, None, None, :]
                    + stem["t"][None, None, None, :], 0.0)
    h = conv3x3(h.astype(jnp.bfloat16), stem["w"], stem["b"])     # bf16
    for blk in plan["blocks"]:
        N, H, W, Cin = h.shape
        Cfull = blk["Cfull"]
        # preallocated bf16 channel slab replaces the per-layer torch.cat
        slab = jnp.pad(h, ((0, 0), (0, 0), (0, 0), (0, Cfull - Cin)))
        for lp in blk["layers"]:
            slab = dense_layer(slab, lp, g)
        h = transition(slab, blk["trans"])
    N, H, W, C = h.shape
    # adaptive avg pool (1,1) + flatten + fc
    return pallas_global_pool_fc(h.reshape(N, H * W, C),
                                 plan["fc_w"], plan["fc_b"])


# ---------------------------------------------------------------------------
# Parameter folding / fusion (done once, outside the forward graph)
# ---------------------------------------------------------------------------

def bn_fold(bn, eps=1e-5):
    scale = bn["gamma"] / jnp.sqrt(bn["var"] + eps)
    shift = bn["beta"] - bn["mean"] * scale
    return scale, shift


def prepare_params(params, growth_rate):
    """Fold BN stats, fuse bn2 into the 1x1 weight, build the valid-K padded
    BN/weight tensors, reshape 3x3 weights to the stacked-tap (9*Cin, Cout)
    layout and pre-cast every MXU operand to bf16."""
    g = growth_rate
    plan = {}
    s, t = bn_fold(params["bn1"])
    stem_w = params["conv1_w"]
    plan["stem"] = dict(
        s=s.astype(jnp.float32), t=t.astype(jnp.float32),
        w=stem_w.reshape(-1, stem_w.shape[-1]).astype(jnp.bfloat16),
        b=params["conv1_b"][None, :].astype(jnp.float32),
    )
    blocks = []
    nf = stem_w.shape[-1]
    for bp in params["blocks"]:
        nl = len(bp["layers"])
        C0 = nf
        Cfull = C0 + nl * g
        lyrs = []
        for j, lp in enumerate(bp["layers"]):
            cj = C0 + j * g
            kp = min(_round_up(cj, 128), Cfull)       # valid-K block width
            s1, t1 = bn_fold(lp["bn1"])               # (cj,)
            s2, t2 = bn_fold(lp["bn2"])               # (4g,)
            w1 = lp["conv1_w"] * s2[None, :]          # bn2 scale folded in
            s1p = jnp.zeros((1, kp), jnp.float32).at[0, :cj].set(s1)
            t1p = jnp.zeros((1, kp), jnp.float32).at[0, :cj].set(t1)
            w1p = jnp.zeros((kp, w1.shape[1]), jnp.float32).at[:cj, :].set(w1)
            w2 = lp["conv2_w"]                        # (3,3,4g,g)
            lyrs.append(dict(
                cj=cj, kp=kp,
                s1=s1p, t1=t1p,
                w1=w1p.astype(jnp.bfloat16),
                b1=t2[None, :].astype(jnp.float32),
                w2=w2.reshape(-1, w2.shape[-1]).astype(jnp.bfloat16),
                b2=jnp.zeros((1, w2.shape[-1]), jnp.float32),
            ))
        st, tt = bn_fold(bp["trans"]["bn"])           # (Cfull,)
        out_c = bp["trans"]["conv_w"].shape[-1]
        blocks.append(dict(
            C0=C0, Cfull=Cfull, layers=lyrs,
            trans=dict(
                s=jnp.concatenate([st, st])[None, :].astype(jnp.float32),
                t=jnp.concatenate([tt, tt])[None, :].astype(jnp.float32),
                w=bp["trans"]["conv_w"].astype(jnp.bfloat16),
                b=bp["trans"]["conv_b"][None, :].astype(jnp.float32),
            )))
        nf = out_c
    plan["blocks"] = blocks
    plan["fc_w"] = params["fc_w"].astype(jnp.bfloat16)
    plan["fc_b"] = params["fc_b"][None, :].astype(jnp.float32)
    return plan


# ---------------------------------------------------------------------------
# Deterministic parameter initialization (shapes follow the PyTorch __init__)
# ---------------------------------------------------------------------------

def init_bn(key, c):
    k1, k2, k3, k4 = jax.random.split(key, 4)
    return dict(
        gamma=jax.random.uniform(k1, (c,), minval=0.5, maxval=1.5),
        beta=jax.random.normal(k2, (c,)) * 0.1,
        mean=jax.random.normal(k3, (c,)) * 0.1,
        var=jax.random.uniform(k4, (c,), minval=0.5, maxval=1.5),
    )


def build_params(key, num_classes, layers, growth_rate=32, theta=0.5):
    keys = iter(jax.random.split(key, 512))
    norm = jax.random.normal
    params = {}
    nf = 2 * growth_rate
    params["bn1"] = init_bn(next(keys), 3)
    params["conv1_w"] = (norm(next(keys), (3, 3, 3, nf))
                         / jnp.sqrt(27.0)).astype(jnp.float32)
    params["conv1_b"] = (norm(next(keys), (nf,)) * 0.1).astype(jnp.float32)
    blocks = []
    for nl in layers:
        block_layers = []
        for j in range(nl):
            cin = nf + j * growth_rate
            block_layers.append(dict(
                bn1=init_bn(next(keys), cin),
                conv1_w=(norm(next(keys), (cin, 4 * growth_rate))
                         / jnp.sqrt(cin)).astype(jnp.float32),
                bn2=init_bn(next(keys), 4 * growth_rate),
                conv2_w=(norm(next(keys), (3, 3, 4 * growth_rate, growth_rate))
                         / jnp.sqrt(9.0 * 4 * growth_rate)).astype(jnp.float32),
            ))
        nf = nf + nl * growth_rate
        out_c = int(nf * theta)
        blocks.append(dict(
            layers=block_layers,
            trans=dict(
                bn=init_bn(next(keys), nf),
                conv_w=(norm(next(keys), (nf, out_c))
                        / jnp.sqrt(nf)).astype(jnp.float32),
                conv_b=(norm(next(keys), (out_c,)) * 0.1).astype(jnp.float32),
            ),
        ))
        nf = out_c
    params["blocks"] = blocks
    params["fc_w"] = (norm(next(keys), (nf, num_classes))
                      / jnp.sqrt(nf)).astype(jnp.float32)
    params["fc_b"] = (norm(next(keys), (num_classes,)) * 0.1).astype(jnp.float32)
    return params


# ---------------------------------------------------------------------------

if __name__ == "__main__":
    key = jax.random.PRNGKey(0)
    kp_, kx = jax.random.split(key)

    # Small DenseNet config: num_classes=10, layers=[2, 2], growth_rate=8, theta=0.5
    num_classes, layer_cfg, growth_rate, theta = 10, [2, 2], 8, 0.5
    params = build_params(kp_, num_classes, layer_cfg, growth_rate, theta)
    plan = prepare_params(params, growth_rate)

    # Input matches PyTorch NCHW convention: (batch=2, channels=3, 16, 16)
    x = jax.random.normal(kx, (2, 3, 16, 16), dtype=jnp.float32)

    fwd = jax.jit(functools.partial(densenet_forward, plan,
                                    growth_rate=growth_rate))
    out = fwd(x)
    jax.block_until_ready(out)

    assert out.shape == (2, num_classes), out.shape
    assert out.dtype == jnp.float32
    print("KERNEL_OK")
</pallas_src>

<mosaic_0001>
module attributes {stable_mosaic.version = 11 : i64} {
  func.func @conv3x3_kernel(%arg0: i32, %arg1: memref<1x362x3xbf16, #tpu.memory_space<vmem>>, %arg2: memref<27x16xbf16, #tpu.memory_space<vmem>>, %arg3: memref<1x16xf32, #tpu.memory_space<vmem>>, %arg4: memref<1x288x16xbf16, #tpu.memory_space<vmem>>) attributes {dimension_semantics = [#tpu.dimension_semantics<parallel>], iteration_bounds = array<i64: 2>, scalar_prefetch = 0 : i64, scratch_operands = 0 : i64, tpu.core_type = #tpu.core_type<tc>, window_params = [{transform_indices = @transform_0, window_bounds = array<i64: 1, 362, 3>}, {pipeline_mode = #tpu.pipeline_mode<synchronous>, transform_indices = @transform_1, window_bounds = array<i64: 27, 16>}, {pipeline_mode = #tpu.pipeline_mode<synchronous>, transform_indices = @transform_2, window_bounds = array<i64: 1, 16>}, {transform_indices = @transform_3, window_bounds = array<i64: 1, 288, 16>}]} {
    %c0 = arith.constant 0 : index
    %c0_0 = arith.constant 0 : index
    %c0_1 = arith.constant 0 : index
    %0 = vector.load %arg1[%c0, %c0_0, %c0_1] : memref<1x362x3xbf16, #tpu.memory_space<vmem>>, vector<1x362x3xbf16>
    %1 = vector.shape_cast %0 : vector<1x362x3xbf16> to vector<362x3xbf16>
    %c0_2 = arith.constant 0 : index
    %c0_3 = arith.constant 0 : index
    %2 = vector.load %arg2[%c0_2, %c0_3] : memref<27x16xbf16, #tpu.memory_space<vmem>>, vector<27x16xbf16>
    %3 = vector.extract_strided_slice %1 {offsets = [0, 0], sizes = [288, 3], strides = [1, 1]} : vector<362x3xbf16> to vector<288x3xbf16>
    %4 = vector.extract_strided_slice %2 {offsets = [0, 0], sizes = [3, 16], strides = [1, 1]} : vector<27x16xbf16> to vector<3x16xbf16>
    %cst = arith.constant dense<0.000000e+00> : vector<288x16xf32>
    %5 = tpu.matmul %3, %4, %cst {dimension_numbers = #tpu.dot_dimension_numbers<[1], [0], [0], [1], [0, 0, 1, 1], [], []>} : vector<288x3xbf16>, vector<3x16xbf16>, vector<288x16xf32> -> vector<288x16xf32>
    %6 = vector.extract_strided_slice %1 {offsets = [1, 0], sizes = [288, 3], strides = [1, 1]} : vector<362x3xbf16> to vector<288x3xbf16>
    %7 = vector.extract_strided_slice %2 {offsets = [3, 0], sizes = [3, 16], strides = [1, 1]} : vector<27x16xbf16> to vector<3x16xbf16>
    %cst_4 = arith.constant dense<0.000000e+00> : vector<288x16xf32>
    %8 = tpu.matmul %6, %7, %cst_4 {dimension_numbers = #tpu.dot_dimension_numbers<[1], [0], [0], [1], [0, 0, 1, 1], [], []>} : vector<288x3xbf16>, vector<3x16xbf16>, vector<288x16xf32> -> vector<288x16xf32>
    %9 = arith.addf %5, %8 : vector<288x16xf32>
    %10 = vector.extract_strided_slice %1 {offsets = [2, 0], sizes = [288, 3], strides = [1, 1]} : vector<362x3xbf16> to vector<288x3xbf16>
    %11 = vector.extract_strided_slice %2 {offsets = [6, 0], sizes = [3, 16], strides = [1, 1]} : vector<27x16xbf16> to vector<3x16xbf16>
    %cst_5 = arith.constant dense<0.000000e+00> : vector<288x16xf32>
    %12 = tpu.matmul %10, %11, %cst_5 {dimension_numbers = #tpu.dot_dimension_numbers<[1], [0], [0], [1], [0, 0, 1, 1], [], []>} : vector<288x3xbf16>, vector<3x16xbf16>, vector<288x16xf32> -> vector<288x16xf32>
    %13 = arith.addf %9, %12 : vector<288x16xf32>
    %14 = vector.extract_strided_slice %1 {offsets = [18, 0], sizes = [288, 3], strides = [1, 1]} : vector<362x3xbf16> to vector<288x3xbf16>
    %15 = vector.extract_strided_slice %2 {offsets = [9, 0], sizes = [3, 16], strides = [1, 1]} : vector<27x16xbf16> to vector<3x16xbf16>
    %cst_6 = arith.constant dense<0.000000e+00> : vector<288x16xf32>
    %16 = tpu.matmul %14, %15, %cst_6 {dimension_numbers = #tpu.dot_dimension_numbers<[1], [0], [0], [1], [0, 0, 1, 1], [], []>} : vector<288x3xbf16>, vector<3x16xbf16>, vector<288x16xf32> -> vector<288x16xf32>
    %17 = arith.addf %13, %16 : vector<288x16xf32>
    %18 = vector.extract_strided_slice %1 {offsets = [19, 0], sizes = [288, 3], strides = [1, 1]} : vector<362x3xbf16> to vector<288x3xbf16>
    %19 = vector.extract_strided_slice %2 {offsets = [12, 0], sizes = [3, 16], strides = [1, 1]} : vector<27x16xbf16> to vector<3x16xbf16>
    %cst_7 = arith.constant dense<0.000000e+00> : vector<288x16xf32>
    %20 = tpu.matmul %18, %19, %cst_7 {dimension_numbers = #tpu.dot_dimension_numbers<[1], [0], [0], [1], [0, 0, 1, 1], [], []>} : vector<288x3xbf16>, vector<3x16xbf16>, vector<288x16xf32> -> vector<288x16xf32>
    %21 = arith.addf %17, %20 : vector<288x16xf32>
    %22 = vector.extract_strided_slice %1 {offsets = [20, 0], sizes = [288, 3], strides = [1, 1]} : vector<362x3xbf16> to vector<288x3xbf16>
    %23 = vector.extract_strided_slice %2 {offsets = [15, 0], sizes = [3, 16], strides = [1, 1]} : vector<27x16xbf16> to vector<3x16xbf16>
    %cst_8 = arith.constant dense<0.000000e+00> : vector<288x16xf32>
    %24 = tpu.matmul %22, %23, %cst_8 {dimension_numbers = #tpu.dot_dimension_numbers<[1], [0], [0], [1], [0, 0, 1, 1], [], []>} : vector<288x3xbf16>, vector<3x16xbf16>, vector<288x16xf32> -> vector<288x16xf32>
    %25 = arith.addf %21, %24 : vector<288x16xf32>
    %26 = vector.extract_strided_slice %1 {offsets = [36, 0], sizes = [288, 3], strides = [1, 1]} : vector<362x3xbf16> to vector<288x3xbf16>
    %27 = vector.extract_strided_slice %2 {offsets = [18, 0], sizes = [3, 16], strides = [1, 1]} : vector<27x16xbf16> to vector<3x16xbf16>
    %cst_9 = arith.constant dense<0.000000e+00> : vector<288x16xf32>
    %28 = tpu.matmul %26, %27, %cst_9 {dimension_numbers = #tpu.dot_dimension_numbers<[1], [0], [0], [1], [0, 0, 1, 1], [], []>} : vector<288x3xbf16>, vector<3x16xbf16>, vector<288x16xf32> -> vector<288x16xf32>
    %29 = arith.addf %25, %28 : vector<288x16xf32>
    %30 = vector.extract_strided_slice %1 {offsets = [37, 0], sizes = [288, 3], strides = [1, 1]} : vector<362x3xbf16> to vector<288x3xbf16>
    %31 = vector.extract_strided_slice %2 {offsets = [21, 0], sizes = [3, 16], strides = [1, 1]} : vector<27x16xbf16> to vector<3x16xbf16>
    %cst_10 = arith.constant dense<0.000000e+00> : vector<288x16xf32>
    %32 = tpu.matmul %30, %31, %cst_10 {dimension_numbers = #tpu.dot_dimension_numbers<[1], [0], [0], [1], [0, 0, 1, 1], [], []>} : vector<288x3xbf16>, vector<3x16xbf16>, vector<288x16xf32> -> vector<288x16xf32>
    %33 = arith.addf %29, %32 : vector<288x16xf32>
    %34 = vector.extract_strided_slice %1 {offsets = [38, 0], sizes = [288, 3], strides = [1, 1]} : vector<362x3xbf16> to vector<288x3xbf16>
    %35 = vector.extract_strided_slice %2 {offsets = [24, 0], sizes = [3, 16], strides = [1, 1]} : vector<27x16xbf16> to vector<3x16xbf16>
    %cst_11 = arith.constant dense<0.000000e+00> : vector<288x16xf32>
    %36 = tpu.matmul %34, %35, %cst_11 {dimension_numbers = #tpu.dot_dimension_numbers<[1], [0], [0], [1], [0, 0, 1, 1], [], []>} : vector<288x3xbf16>, vector<3x16xbf16>, vector<288x16xf32> -> vector<288x16xf32>
    %37 = arith.addf %33, %36 : vector<288x16xf32>
    %c0_12 = arith.constant 0 : index
    %c0_13 = arith.constant 0 : index
    %38 = vector.load %arg3[%c0_12, %c0_13] : memref<1x16xf32, #tpu.memory_space<vmem>>, vector<1x16xf32>
    %39 = vector.broadcast %38 : vector<1x16xf32> to vector<288x16xf32>
    %40 = arith.addf %37, %39 : vector<288x16xf32>
    %41 = arith.truncf %40 : vector<288x16xf32> to vector<288x16xbf16>
    %c0_14 = arith.constant 0 : index
    %c0_15 = arith.constant 0 : index
    %c0_16 = arith.constant 0 : index
    %42 = vector.load %arg4[%c0_14, %c0_15, %c0_16] : memref<1x288x16xbf16, #tpu.memory_space<vmem>>, vector<1x288x16xbf16>
    %43 = vector.shape_cast %42 : vector<1x288x16xbf16> to vector<288x16xbf16>
    %44 = vector.shape_cast %41 : vector<288x16xbf16> to vector<1x288x16xbf16>
    tpu.vector_store %arg4[%c0_14, %c0_15, %c0_16], %44 {strides = array<i32>} : memref<1x288x16xbf16, #tpu.memory_space<vmem>>, vector<1x288x16xbf16>,
    return
  }
  func.func @transform_0(%arg0: i32) -> (i32, i32, i32) {
    %c0_i32 = arith.constant 0 : i32
    %c0_i32_0 = arith.constant 0 : i32
    %c0_i32_1 = arith.constant 0 : i32
    return %arg0, %c0_i32, %c0_i32_0 : i32, i32, i32
  }
  func.func @transform_1(%arg0: i32) -> (i32, i32) {
    %c0_i32 = arith.constant 0 : i32
    %c0_i32_0 = arith.constant 0 : i32
    %c0_i32_1 = arith.constant 0 : i32
    return %c0_i32, %c0_i32_0 : i32, i32
  }
  func.func @transform_2(%arg0: i32) -> (i32, i32) {
    %c0_i32 = arith.constant 0 : i32
    %c0_i32_0 = arith.constant 0 : i32
    %c0_i32_1 = arith.constant 0 : i32
    return %c0_i32, %c0_i32_0 : i32, i32
  }
  func.func @transform_3(%arg0: i32) -> (i32, i32, i32) {
    %c0_i32 = arith.constant 0 : i32
    %c0_i32_0 = arith.constant 0 : i32
    %c0_i32_1 = arith.constant 0 : i32
    return %arg0, %c0_i32, %c0_i32_0 : i32, i32, i32
  }
}

module attributes {stable_mosaic.version = 11 : i64} {
  func.func @dense1x1_kernel(%arg0: i32, %arg1: memref<128x32xbf16, #tpu.memory_space<vmem>>, %arg2: memref<1x32xf32, #tpu.memory_space<vmem>>, %arg3: memref<1x32xf32, #tpu.memory_space<vmem>>, %arg4: memref<32x32xbf16, #tpu.memory_space<vmem>>, %arg5: memref<1x32xf32, #tpu.memory_space<vmem>>, %arg6: memref<128x32xbf16, #tpu.memory_space<vmem>>) attributes {dimension_semantics = [#tpu.dimension_semantics<parallel>], iteration_bounds = array<i64: 4>, scalar_prefetch = 0 : i64, scratch_operands = 0 : i64, tpu.core_type = #tpu.core_type<tc>, window_params = [{transform_indices = @transform_0, window_bounds = array<i64: 128, 32>}, {pipeline_mode = #tpu.pipeline_mode<synchronous>, transform_indices = @transform_1, window_bounds = array<i64: 1, 32>}, {pipeline_mode = #tpu.pipeline_mode<synchronous>, transform_indices = @transform_2, window_bounds = array<i64: 1, 32>}, {pipeline_mode = #tpu.pipeline_mode<synchronous>, transform_indices = @transform_3, window_bounds = array<i64: 32, 32>}, {pipeline_mode = #tpu.pipeline_mode<synchronous>, transform_indices = @transform_4, window_bounds = array<i64: 1, 32>}, {transform_indices = @transform_5, window_bounds = array<i64: 128, 32>}]} {
    %c0 = arith.constant 0 : index
    %c0_0 = arith.constant 0 : index
    %0 = vector.load %arg1[%c0, %c0_0] : memref<128x32xbf16, #tpu.memory_space<vmem>>, vector<128x32xbf16>
    %1 = arith.extf %0 : vector<128x32xbf16> to vector<128x32xf32>
    %c0_1 = arith.constant 0 : index
    %c0_2 = arith.constant 0 : index
    %2 = vector.load %arg2[%c0_1, %c0_2] : memref<1x32xf32, #tpu.memory_space<vmem>>, vector<1x32xf32>
    %3 = vector.broadcast %2 : vector<1x32xf32> to vector<128x32xf32>
    %4 = arith.mulf %1, %3 : vector<128x32xf32>
    %c0_3 = arith.constant 0 : index
    %c0_4 = arith.constant 0 : index
    %5 = vector.load %arg3[%c0_3, %c0_4] : memref<1x32xf32, #tpu.memory_space<vmem>>, vector<1x32xf32>
    %6 = vector.broadcast %5 : vector<1x32xf32> to vector<128x32xf32>
    %7 = arith.addf %4, %6 : vector<128x32xf32>
    %cst = arith.constant 0.000000e+00 : f32
    %8 = vector.broadcast %cst : f32 to vector<128x32xf32>
    %9 = arith.maximumf %7, %8 : vector<128x32xf32>
    %10 = arith.truncf %9 : vector<128x32xf32> to vector<128x32xbf16>
    %c0_5 = arith.constant 0 : index
    %c0_6 = arith.constant 0 : index
    %11 = vector.load %arg4[%c0_5, %c0_6] : memref<32x32xbf16, #tpu.memory_space<vmem>>, vector<32x32xbf16>
    %cst_7 = arith.constant dense<0.000000e+00> : vector<128x32xf32>
    %12 = tpu.matmul %10, %11, %cst_7 {dimension_numbers = #tpu.dot_dimension_numbers<[1], [0], [0], [1], [0, 0, 1, 1], [], []>} : vector<128x32xbf16>, vector<32x32xbf16>, vector<128x32xf32> -> vector<128x32xf32>
    %c0_8 = arith.constant 0 : index
    %c0_9 = arith.constant 0 : index
    %13 = vector.load %arg5[%c0_8, %c0_9] : memref<1x32xf32, #tpu.memory_space<vmem>>, vector<1x32xf32>
    %14 = vector.broadcast %13 : vector<1x32xf32> to vector<128x32xf32>
    %15 = arith.addf %12, %14 : vector<128x32xf32>
    %cst_10 = arith.constant 0.000000e+00 : f32
    %16 = vector.broadcast %cst_10 : f32 to vector<128x32xf32>
    %17 = arith.maximumf %15, %16 : vector<128x32xf32>
    %18 = arith.truncf %17 : vector<128x32xf32> to vector<128x32xbf16>
    %c0_11 = arith.constant 0 : index
    %c0_12 = arith.constant 0 : index
    %19 = vector.load %arg6[%c0_11, %c0_12] : memref<128x32xbf16, #tpu.memory_space<vmem>>, vector<128x32xbf16>
    tpu.vector_store %arg6[%c0_11, %c0_12], %18 {strides = array<i32>} : memref<128x32xbf16, #tpu.memory_space<vmem>>, vector<128x32xbf16>,
    return
  }
  func.func @transform_0(%arg0: i32) -> (i32, i32) {
    %c0_i32 = arith.constant 0 : i32
    %c0_i32_0 = arith.constant 0 : i32
    return %arg0, %c0_i32 : i32, i32
  }
  func.func @transform_1(%arg0: i32) -> (i32, i32) {
    %c0_i32 = arith.constant 0 : i32
    %c0_i32_0 = arith.constant 0 : i32
    %c0_i32_1 = arith.constant 0 : i32
    return %c0_i32, %c0_i32_0 : i32, i32
  }
  func.func @transform_2(%arg0: i32) -> (i32, i32) {
    %c0_i32 = arith.constant 0 : i32
    %c0_i32_0 = arith.constant 0 : i32
    %c0_i32_1 = arith.constant 0 : i32
    return %c0_i32, %c0_i32_0 : i32, i32
  }
  func.func @transform_3(%arg0: i32) -> (i32, i32) {
    %c0_i32 = arith.constant 0 : i32
    %c0_i32_0 = arith.constant 0 : i32
    %c0_i32_1 = arith.constant 0 : i32
    return %c0_i32, %c0_i32_0 : i32, i32
  }
  func.func @transform_4(%arg0: i32) -> (i32, i32) {
    %c0_i32 = arith.constant 0 : i32
    %c0_i32_0 = arith.constant 0 : i32
    %c0_i32_1 = arith.constant 0 : i32
    return %c0_i32, %c0_i32_0 : i32, i32
  }
  func.func @transform_5(%arg0: i32) -> (i32, i32) {
    %c0_i32 = arith.constant 0 : i32
    %c0_i32_0 = arith.constant 0 : i32
    return %arg0, %c0_i32 : i32, i32
  }
}

module attributes {stable_mosaic.version = 11 : i64} {
  func.func @conv3x3_kernel(%arg0: i32, %arg1: memref<1x362x32xbf16, #tpu.memory_space<vmem>>, %arg2: memref<288x8xbf16, #tpu.memory_space<vmem>>, %arg3: memref<1x8xf32, #tpu.memory_space<vmem>>, %arg4: memref<1x288x8xbf16, #tpu.memory_space<vmem>>) attributes {dimension_semantics = [#tpu.dimension_semantics<parallel>], iteration_bounds = array<i64: 2>, scalar_prefetch = 0 : i64, scratch_operands = 0 : i64, tpu.core_type = #tpu.core_type<tc>, window_params = [{transform_indices = @transform_0, window_bounds = array<i64: 1, 362, 32>}, {pipeline_mode = #tpu.pipeline_mode<synchronous>, transform_indices = @transform_1, window_bounds = array<i64: 288, 8>}, {pipeline_mode = #tpu.pipeline_mode<synchronous>, transform_indices = @transform_2, window_bounds = array<i64: 1, 8>}, {transform_indices = @transform_3, window_bounds = array<i64: 1, 288, 8>}]} {
    %c0 = arith.constant 0 : index
    %c0_0 = arith.constant 0 : index
    %c0_1 = arith.constant 0 : index
    %0 = vector.load %arg1[%c0, %c0_0, %c0_1] : memref<1x362x32xbf16, #tpu.memory_space<vmem>>, vector<1x362x32xbf16>
    %1 = vector.shape_cast %0 : vector<1x362x32xbf16> to vector<362x32xbf16>
    %c0_2 = arith.constant 0 : index
    %c0_3 = arith.constant 0 : index
    %2 = vector.load %arg2[%c0_2, %c0_3] : memref<288x8xbf16, #tpu.memory_space<vmem>>, vector<288x8xbf16>
    %3 = vector.extract_strided_slice %1 {offsets = [0, 0], sizes = [288, 32], strides = [1, 1]} : vector<362x32xbf16> to vector<288x32xbf16>
    %4 = vector.extract_strided_slice %2 {offsets = [0, 0], sizes = [32, 8], strides = [1, 1]} : vector<288x8xbf16> to vector<32x8xbf16>
    %cst = arith.constant dense<0.000000e+00> : vector<288x8xf32>
    %5 = tpu.matmul %3, %4, %cst {dimension_numbers = #tpu.dot_dimension_numbers<[1], [0], [0], [1], [0, 0, 1, 1], [], []>} : vector<288x32xbf16>, vector<32x8xbf16>, vector<288x8xf32> -> vector<288x8xf32>
    %6 = vector.extract_strided_slice %1 {offsets = [1, 0], sizes = [288, 32], strides = [1, 1]} : vector<362x32xbf16> to vector<288x32xbf16>
    %7 = vector.extract_strided_slice %2 {offsets = [32, 0], sizes = [32, 8], strides = [1, 1]} : vector<288x8xbf16> to vector<32x8xbf16>
    %cst_4 = arith.constant dense<0.000000e+00> : vector<288x8xf32>
    %8 = tpu.matmul %6, %7, %cst_4 {dimension_numbers = #tpu.dot_dimension_numbers<[1], [0], [0], [1], [0, 0, 1, 1], [], []>} : vector<288x32xbf16>, vector<32x8xbf16>, vector<288x8xf32> -> vector<288x8xf32>
    %9 = arith.addf %5, %8 : vector<288x8xf32>
    %10 = vector.extract_strided_slice %1 {offsets = [2, 0], sizes = [288, 32], strides = [1, 1]} : vector<362x32xbf16> to vector<288x32xbf16>
    %11 = vector.extract_strided_slice %2 {offsets = [64, 0], sizes = [32, 8], strides = [1, 1]} : vector<288x8xbf16> to vector<32x8xbf16>
    %cst_5 = arith.constant dense<0.000000e+00> : vector<288x8xf32>
    %12 = tpu.matmul %10, %11, %cst_5 {dimension_numbers = #tpu.dot_dimension_numbers<[1], [0], [0], [1], [0, 0, 1, 1], [], []>} : vector<288x32xbf16>, vector<32x8xbf16>, vector<288x8xf32> -> vector<288x8xf32>
    %13 = arith.addf %9, %12 : vector<288x8xf32>
    %14 = vector.extract_strided_slice %1 {offsets = [18, 0], sizes = [288, 32], strides = [1, 1]} : vector<362x32xbf16> to vector<288x32xbf16>
    %15 = vector.extract_strided_slice %2 {offsets = [96, 0], sizes = [32, 8], strides = [1, 1]} : vector<288x8xbf16> to vector<32x8xbf16>
    %cst_6 = arith.constant dense<0.000000e+00> : vector<288x8xf32>
    %16 = tpu.matmul %14, %15, %cst_6 {dimension_numbers = #tpu.dot_dimension_numbers<[1], [0], [0], [1], [0, 0, 1, 1], [], []>} : vector<288x32xbf16>, vector<32x8xbf16>, vector<288x8xf32> -> vector<288x8xf32>
    %17 = arith.addf %13, %16 : vector<288x8xf32>
    %18 = vector.extract_strided_slice %1 {offsets = [19, 0], sizes = [288, 32], strides = [1, 1]} : vector<362x32xbf16> to vector<288x32xbf16>
    %19 = vector.extract_strided_slice %2 {offsets = [128, 0], sizes = [32, 8], strides = [1, 1]} : vector<288x8xbf16> to vector<32x8xbf16>
    %cst_7 = arith.constant dense<0.000000e+00> : vector<288x8xf32>
    %20 = tpu.matmul %18, %19, %cst_7 {dimension_numbers = #tpu.dot_dimension_numbers<[1], [0], [0], [1], [0, 0, 1, 1], [], []>} : vector<288x32xbf16>, vector<32x8xbf16>, vector<288x8xf32> -> vector<288x8xf32>
    %21 = arith.addf %17, %20 : vector<288x8xf32>
    %22 = vector.extract_strided_slice %1 {offsets = [20, 0], sizes = [288, 32], strides = [1, 1]} : vector<362x32xbf16> to vector<288x32xbf16>
    %23 = vector.extract_strided_slice %2 {offsets = [160, 0], sizes = [32, 8], strides = [1, 1]} : vector<288x8xbf16> to vector<32x8xbf16>
    %cst_8 = arith.constant dense<0.000000e+00> : vector<288x8xf32>
    %24 = tpu.matmul %22, %23, %cst_8 {dimension_numbers = #tpu.dot_dimension_numbers<[1], [0], [0], [1], [0, 0, 1, 1], [], []>} : vector<288x32xbf16>, vector<32x8xbf16>, vector<288x8xf32> -> vector<288x8xf32>
    %25 = arith.addf %21, %24 : vector<288x8xf32>
    %26 = vector.extract_strided_slice %1 {offsets = [36, 0], sizes = [288, 32], strides = [1, 1]} : vector<362x32xbf16> to vector<288x32xbf16>
    %27 = vector.extract_strided_slice %2 {offsets = [192, 0], sizes = [32, 8], strides = [1, 1]} : vector<288x8xbf16> to vector<32x8xbf16>
    %cst_9 = arith.constant dense<0.000000e+00> : vector<288x8xf32>
    %28 = tpu.matmul %26, %27, %cst_9 {dimension_numbers = #tpu.dot_dimension_numbers<[1], [0], [0], [1], [0, 0, 1, 1], [], []>} : vector<288x32xbf16>, vector<32x8xbf16>, vector<288x8xf32> -> vector<288x8xf32>
    %29 = arith.addf %25, %28 : vector<288x8xf32>
    %30 = vector.extract_strided_slice %1 {offsets = [37, 0], sizes = [288, 32], strides = [1, 1]} : vector<362x32xbf16> to vector<288x32xbf16>
    %31 = vector.extract_strided_slice %2 {offsets = [224, 0], sizes = [32, 8], strides = [1, 1]} : vector<288x8xbf16> to vector<32x8xbf16>
    %cst_10 = arith.constant dense<0.000000e+00> : vector<288x8xf32>
    %32 = tpu.matmul %30, %31, %cst_10 {dimension_numbers = #tpu.dot_dimension_numbers<[1], [0], [0], [1], [0, 0, 1, 1], [], []>} : vector<288x32xbf16>, vector<32x8xbf16>, vector<288x8xf32> -> vector<288x8xf32>
    %33 = arith.addf %29, %32 : vector<288x8xf32>
    %34 = vector.extract_strided_slice %1 {offsets = [38, 0], sizes = [288, 32], strides = [1, 1]} : vector<362x32xbf16> to vector<288x32xbf16>
    %35 = vector.extract_strided_slice %2 {offsets = [256, 0], sizes = [32, 8], strides = [1, 1]} : vector<288x8xbf16> to vector<32x8xbf16>
    %cst_11 = arith.constant dense<0.000000e+00> : vector<288x8xf32>
    %36 = tpu.matmul %34, %35, %cst_11 {dimension_numbers = #tpu.dot_dimension_numbers<[1], [0], [0], [1], [0, 0, 1, 1], [], []>} : vector<288x32xbf16>, vector<32x8xbf16>, vector<288x8xf32> -> vector<288x8xf32>
    %37 = arith.addf %33, %36 : vector<288x8xf32>
    %c0_12 = arith.constant 0 : index
    %c0_13 = arith.constant 0 : index
    %38 = vector.load %arg3[%c0_12, %c0_13] : memref<1x8xf32, #tpu.memory_space<vmem>>, vector<1x8xf32>
    %39 = vector.broadcast %38 : vector<1x8xf32> to vector<288x8xf32>
    %40 = arith.addf %37, %39 : vector<288x8xf32>
    %41 = arith.truncf %40 : vector<288x8xf32> to vector<288x8xbf16>
    %c0_14 = arith.constant 0 : index
    %c0_15 = arith.constant 0 : index
    %c0_16 = arith.constant 0 : index
    %42 = vector.load %arg4[%c0_14, %c0_15, %c0_16] : memref<1x288x8xbf16, #tpu.memory_space<vmem>>, vector<1x288x8xbf16>
    %43 = vector.shape_cast %42 : vector<1x288x8xbf16> to vector<288x8xbf16>
    %44 = vector.shape_cast %41 : vector<288x8xbf16> to vector<1x288x8xbf16>
    tpu.vector_store %arg4[%c0_14, %c0_15, %c0_16], %44 {strides = array<i32>} : memref<1x288x8xbf16, #tpu.memory_space<vmem>>, vector<1x288x8xbf16>,
    return
  }
  func.func @transform_0(%arg0: i32) -> (i32, i32, i32) {
    %c0_i32 = arith.constant 0 : i32
    %c0_i32_0 = arith.constant 0 : i32
    %c0_i32_1 = arith.constant 0 : i32
    return %arg0, %c0_i32, %c0_i32_0 : i32, i32, i32
  }
  func.func @transform_1(%arg0: i32) -> (i32, i32) {
    %c0_i32 = arith.constant 0 : i32
    %c0_i32_0 = arith.constant 0 : i32
    %c0_i32_1 = arith.constant 0 : i32
    return %c0_i32, %c0_i32_0 : i32, i32
  }
  func.func @transform_2(%arg0: i32) -> (i32, i32) {
    %c0_i32 = arith.constant 0 : i32
    %c0_i32_0 = arith.constant 0 : i32
    %c0_i32_1 = arith.constant 0 : i32
    return %c0_i32, %c0_i32_0 : i32, i32
  }
  func.func @transform_3(%arg0: i32) -> (i32, i32, i32) {
    %c0_i32 = arith.constant 0 : i32
    %c0_i32_0 = arith.constant 0 : i32
    %c0_i32_1 = arith.constant 0 : i32
    return %arg0, %c0_i32, %c0_i32_0 : i32, i32, i32
  }
}

module attributes {stable_mosaic.version = 11 : i64} {
  func.func @bn_relu_pool_w_kernel(%arg0: i32, %arg1: memref<64x64xbf16, #tpu.memory_space<vmem>>, %arg2: memref<1x64xf32, #tpu.memory_space<vmem>>, %arg3: memref<1x64xf32, #tpu.memory_space<vmem>>, %arg4: memref<64x32xbf16, #tpu.memory_space<vmem>>) attributes {dimension_semantics = [#tpu.dimension_semantics<parallel>], iteration_bounds = array<i64: 4>, scalar_prefetch = 0 : i64, scratch_operands = 0 : i64, tpu.core_type = #tpu.core_type<tc>, window_params = [{transform_indices = @transform_0, window_bounds = array<i64: 64, 64>}, {pipeline_mode = #tpu.pipeline_mode<synchronous>, transform_indices = @transform_1, window_bounds = array<i64: 1, 64>}, {pipeline_mode = #tpu.pipeline_mode<synchronous>, transform_indices = @transform_2, window_bounds = array<i64: 1, 64>}, {transform_indices = @transform_3, window_bounds = array<i64: 64, 32>}]} {
    %c0 = arith.constant 0 : index
    %c0_0 = arith.constant 0 : index
    %0 = vector.load %arg1[%c0, %c0_0] : memref<64x64xbf16, #tpu.memory_space<vmem>>, vector<64x64xbf16>
    %1 = arith.extf %0 : vector<64x64xbf16> to vector<64x64xf32>
    %c0_1 = arith.constant 0 : index
    %c0_2 = arith.constant 0 : index
    %2 = vector.load %arg2[%c0_1, %c0_2] : memref<1x64xf32, #tpu.memory_space<vmem>>, vector<1x64xf32>
    %3 = vector.broadcast %2 : vector<1x64xf32> to vector<64x64xf32>
    %4 = arith.mulf %1, %3 : vector<64x64xf32>
    %c0_3 = arith.constant 0 : index
    %c0_4 = arith.constant 0 : index
    %5 = vector.load %arg3[%c0_3, %c0_4] : memref<1x64xf32, #tpu.memory_space<vmem>>, vector<1x64xf32>
    %6 = vector.broadcast %5 : vector<1x64xf32> to vector<64x64xf32>
    %7 = arith.addf %4, %6 : vector<64x64xf32>
    %cst = arith.constant 0.000000e+00 : f32
    %8 = vector.broadcast %cst : f32 to vector<64x64xf32>
    %9 = arith.maximumf %7, %8 : vector<64x64xf32>
    %10 = vector.extract_strided_slice %9 {offsets = [0, 0], sizes = [64, 32], strides = [1, 1]} : vector<64x64xf32> to vector<64x32xf32>
    %11 = vector.extract_strided_slice %9 {offsets = [0, 32], sizes = [64, 32], strides = [1, 1]} : vector<64x64xf32> to vector<64x32xf32>
    %12 = arith.addf %10, %11 : vector<64x32xf32>
    %cst_5 = arith.constant 5.000000e-01 : f32
    %13 = vector.broadcast %cst_5 : f32 to vector<64x32xf32>
    %14 = arith.mulf %12, %13 : vector<64x32xf32>
    %15 = arith.truncf %14 : vector<64x32xf32> to vector<64x32xbf16>
    %c0_6 = arith.constant 0 : index
    %c0_7 = arith.constant 0 : index
    %16 = vector.load %arg4[%c0_6, %c0_7] : memref<64x32xbf16, #tpu.memory_space<vmem>>, vector<64x32xbf16>
    tpu.vector_store %arg4[%c0_6, %c0_7], %15 {strides = array<i32>} : memref<64x32xbf16, #tpu.memory_space<vmem>>, vector<64x32xbf16>,
    return
  }
  func.func @transform_0(%arg0: i32) -> (i32, i32) {
    %c0_i32 = arith.constant 0 : i32
    %c0_i32_0 = arith.constant 0 : i32
    return %arg0, %c0_i32 : i32, i32
  }
  func.func @transform_1(%arg0: i32) -> (i32, i32) {
    %c0_i32 = arith.constant 0 : i32
    %c0_i32_0 = arith.constant 0 : i32
    %c0_i32_1 = arith.constant 0 : i32
    return %c0_i32, %c0_i32_0 : i32, i32
  }
  func.func @transform_2(%arg0: i32) -> (i32, i32) {
    %c0_i32 = arith.constant 0 : i32
    %c0_i32_0 = arith.constant 0 : i32
    %c0_i32_1 = arith.constant 0 : i32
    return %c0_i32, %c0_i32_0 : i32, i32
  }
  func.func @transform_3(%arg0: i32) -> (i32, i32) {
    %c0_i32 = arith.constant 0 : i32
    %c0_i32_0 = arith.constant 0 : i32
    return %arg0, %c0_i32 : i32, i32
  }
}

module attributes {stable_mosaic.version = 11 : i64} {
  func.func @pool_h_kernel(%arg0: i32, %arg1: memref<16x512xbf16, #tpu.memory_space<vmem>>, %arg2: memref<16x256xbf16, #tpu.memory_space<vmem>>) attributes {dimension_semantics = [#tpu.dimension_semantics<parallel>], iteration_bounds = array<i64: 1>, scalar_prefetch = 0 : i64, scratch_operands = 0 : i64, tpu.core_type = #tpu.core_type<tc>, window_params = [{transform_indices = @transform_0, window_bounds = array<i64: 16, 512>}, {transform_indices = @transform_1, window_bounds = array<i64: 16, 256>}]} {
    %c0 = arith.constant 0 : index
    %c0_0 = arith.constant 0 : index
    %0 = vector.load %arg1[%c0, %c0_0] : memref<16x512xbf16, #tpu.memory_space<vmem>>, vector<16x512xbf16>
    %1 = arith.extf %0 : vector<16x512xbf16> to vector<16x512xf32>
    %2 = vector.extract_strided_slice %1 {offsets = [0, 0], sizes = [16, 256], strides = [1, 1]} : vector<16x512xf32> to vector<16x256xf32>
    %3 = vector.extract_strided_slice %1 {offsets = [0, 256], sizes = [16, 256], strides = [1, 1]} : vector<16x512xf32> to vector<16x256xf32>
    %4 = arith.addf %2, %3 : vector<16x256xf32>
    %cst = arith.constant 5.000000e-01 : f32
    %5 = vector.broadcast %cst : f32 to vector<16x256xf32>
    %6 = arith.mulf %4, %5 : vector<16x256xf32>
    %7 = arith.truncf %6 : vector<16x256xf32> to vector<16x256xbf16>
    %c0_1 = arith.constant 0 : index
    %c0_2 = arith.constant 0 : index
    %8 = vector.load %arg2[%c0_1, %c0_2] : memref<16x256xbf16, #tpu.memory_space<vmem>>, vector<16x256xbf16>
    tpu.vector_store %arg2[%c0_1, %c0_2], %7 {strides = array<i32>} : memref<16x256xbf16, #tpu.memory_space<vmem>>, vector<16x256xbf16>,
    return
  }
  func.func @transform_0(%arg0: i32) -> (i32, i32) {
    %c0_i32 = arith.constant 0 : i32
    %c0_i32_0 = arith.constant 0 : i32
    return %arg0, %c0_i32 : i32, i32
  }
  func.func @transform_1(%arg0: i32) -> (i32, i32) {
    %c0_i32 = arith.constant 0 : i32
    %c0_i32_0 = arith.constant 0 : i32
    return %arg0, %c0_i32 : i32, i32
  }
}

module attributes {stable_mosaic.version = 11 : i64} {
  func.func @dense1x1_kernel(%arg0: i32, %arg1: memref<32x32xbf16, #tpu.memory_space<vmem>>, %arg2: memref<1x32xf32, #tpu.memory_space<vmem>>, %arg3: memref<1x32xf32, #tpu.memory_space<vmem>>, %arg4: memref<32x32xbf16, #tpu.memory_space<vmem>>, %arg5: memref<1x32xf32, #tpu.memory_space<vmem>>, %arg6: memref<32x32xbf16, #tpu.memory_space<vmem>>) attributes {dimension_semantics = [#tpu.dimension_semantics<parallel>], iteration_bounds = array<i64: 4>, scalar_prefetch = 0 : i64, scratch_operands = 0 : i64, tpu.core_type = #tpu.core_type<tc>, window_params = [{transform_indices = @transform_0, window_bounds = array<i64: 32, 32>}, {pipeline_mode = #tpu.pipeline_mode<synchronous>, transform_indices = @transform_1, window_bounds = array<i64: 1, 32>}, {pipeline_mode = #tpu.pipeline_mode<synchronous>, transform_indices = @transform_2, window_bounds = array<i64: 1, 32>}, {pipeline_mode = #tpu.pipeline_mode<synchronous>, transform_indices = @transform_3, window_bounds = array<i64: 32, 32>}, {pipeline_mode = #tpu.pipeline_mode<synchronous>, transform_indices = @transform_4, window_bounds = array<i64: 1, 32>}, {transform_indices = @transform_5, window_bounds = array<i64: 32, 32>}]} {
    %c0 = arith.constant 0 : index
    %c0_0 = arith.constant 0 : index
    %0 = vector.load %arg1[%c0, %c0_0] : memref<32x32xbf16, #tpu.memory_space<vmem>>, vector<32x32xbf16>
    %1 = arith.extf %0 : vector<32x32xbf16> to vector<32x32xf32>
    %c0_1 = arith.constant 0 : index
    %c0_2 = arith.constant 0 : index
    %2 = vector.load %arg2[%c0_1, %c0_2] : memref<1x32xf32, #tpu.memory_space<vmem>>, vector<1x32xf32>
    %3 = vector.broadcast %2 : vector<1x32xf32> to vector<32x32xf32>
    %4 = arith.mulf %1, %3 : vector<32x32xf32>
    %c0_3 = arith.constant 0 : index
    %c0_4 = arith.constant 0 : index
    %5 = vector.load %arg3[%c0_3, %c0_4] : memref<1x32xf32, #tpu.memory_space<vmem>>, vector<1x32xf32>
    %6 = vector.broadcast %5 : vector<1x32xf32> to vector<32x32xf32>
    %7 = arith.addf %4, %6 : vector<32x32xf32>
    %cst = arith.constant 0.000000e+00 : f32
    %8 = vector.broadcast %cst : f32 to vector<32x32xf32>
    %9 = arith.maximumf %7, %8 : vector<32x32xf32>
    %10 = arith.truncf %9 : vector<32x32xf32> to vector<32x32xbf16>
    %c0_5 = arith.constant 0 : index
    %c0_6 = arith.constant 0 : index
    %11 = vector.load %arg4[%c0_5, %c0_6] : memref<32x32xbf16, #tpu.memory_space<vmem>>, vector<32x32xbf16>
    %cst_7 = arith.constant dense<0.000000e+00> : vector<32x32xf32>
    %12 = tpu.matmul %10, %11, %cst_7 {dimension_numbers = #tpu.dot_dimension_numbers<[1], [0], [0], [1], [0, 0, 1, 1], [], []>} : vector<32x32xbf16>, vector<32x32xbf16>, vector<32x32xf32> -> vector<32x32xf32>
    %c0_8 = arith.constant 0 : index
    %c0_9 = arith.constant 0 : index
    %13 = vector.load %arg5[%c0_8, %c0_9] : memref<1x32xf32, #tpu.memory_space<vmem>>, vector<1x32xf32>
    %14 = vector.broadcast %13 : vector<1x32xf32> to vector<32x32xf32>
    %15 = arith.addf %12, %14 : vector<32x32xf32>
    %cst_10 = arith.constant 0.000000e+00 : f32
    %16 = vector.broadcast %cst_10 : f32 to vector<32x32xf32>
    %17 = arith.maximumf %15, %16 : vector<32x32xf32>
    %18 = arith.truncf %17 : vector<32x32xf32> to vector<32x32xbf16>
    %c0_11 = arith.constant 0 : index
    %c0_12 = arith.constant 0 : index
    %19 = vector.load %arg6[%c0_11, %c0_12] : memref<32x32xbf16, #tpu.memory_space<vmem>>, vector<32x32xbf16>
    tpu.vector_store %arg6[%c0_11, %c0_12], %18 {strides = array<i32>} : memref<32x32xbf16, #tpu.memory_space<vmem>>, vector<32x32xbf16>,
    return
  }
  func.func @transform_0(%arg0: i32) -> (i32, i32) {
    %c0_i32 = arith.constant 0 : i32
    %c0_i32_0 = arith.constant 0 : i32
    return %arg0, %c0_i32 : i32, i32
  }
  func.func @transform_1(%arg0: i32) -> (i32, i32) {
    %c0_i32 = arith.constant 0 : i32
    %c0_i32_0 = arith.constant 0 : i32
    %c0_i32_1 = arith.constant 0 : i32
    return %c0_i32, %c0_i32_0 : i32, i32
  }
  func.func @transform_2(%arg0: i32) -> (i32, i32) {
    %c0_i32 = arith.constant 0 : i32
    %c0_i32_0 = arith.constant 0 : i32
    %c0_i32_1 = arith.constant 0 : i32
    return %c0_i32, %c0_i32_0 : i32, i32
  }
  func.func @transform_3(%arg0: i32) -> (i32, i32) {
    %c0_i32 = arith.constant 0 : i32
    %c0_i32_0 = arith.constant 0 : i32
    %c0_i32_1 = arith.constant 0 : i32
    return %c0_i32, %c0_i32_0 : i32, i32
  }
  func.func @transform_4(%arg0: i32) -> (i32, i32) {
    %c0_i32 = arith.constant 0 : i32
    %c0_i32_0 = arith.constant 0 : i32
    %c0_i32_1 = arith.constant 0 : i32
    return %c0_i32, %c0_i32_0 : i32, i32
  }
  func.func @transform_5(%arg0: i32) -> (i32, i32) {
    %c0_i32 = arith.constant 0 : i32
    %c0_i32_0 = arith.constant 0 : i32
    return %arg0, %c0_i32 : i32, i32
  }
}

module attributes {stable_mosaic.version = 11 : i64} {
  func.func @matmul_bias_kernel(%arg0: i32, %arg1: memref<32x32xbf16, #tpu.memory_space<vmem>>, %arg2: memref<32x16xbf16, #tpu.memory_space<vmem>>, %arg3: memref<1x16xf32, #tpu.memory_space<vmem>>, %arg4: memref<32x16xbf16, #tpu.memory_space<vmem>>) attributes {dimension_semantics = [#tpu.dimension_semantics<parallel>], iteration_bounds = array<i64: 4>, scalar_prefetch = 0 : i64, scratch_operands = 0 : i64, tpu.core_type = #tpu.core_type<tc>, window_params = [{transform_indices = @transform_0, window_bounds = array<i64: 32, 32>}, {pipeline_mode = #tpu.pipeline_mode<synchronous>, transform_indices = @transform_1, window_bounds = array<i64: 32, 16>}, {pipeline_mode = #tpu.pipeline_mode<synchronous>, transform_indices = @transform_2, window_bounds = array<i64: 1, 16>}, {transform_indices = @transform_3, window_bounds = array<i64: 32, 16>}]} {
    %c0 = arith.constant 0 : index
    %c0_0 = arith.constant 0 : index
    %0 = vector.load %arg1[%c0, %c0_0] : memref<32x32xbf16, #tpu.memory_space<vmem>>, vector<32x32xbf16>
    %c0_1 = arith.constant 0 : index
    %c0_2 = arith.constant 0 : index
    %1 = vector.load %arg2[%c0_1, %c0_2] : memref<32x16xbf16, #tpu.memory_space<vmem>>, vector<32x16xbf16>
    %cst = arith.constant dense<0.000000e+00> : vector<32x16xf32>
    %2 = tpu.matmul %0, %1, %cst {dimension_numbers = #tpu.dot_dimension_numbers<[1], [0], [0], [1], [0, 0, 1, 1], [], []>} : vector<32x32xbf16>, vector<32x16xbf16>, vector<32x16xf32> -> vector<32x16xf32>
    %c0_3 = arith.constant 0 : index
    %c0_4 = arith.constant 0 : index
    %3 = vector.load %arg3[%c0_3, %c0_4] : memref<1x16xf32, #tpu.memory_space<vmem>>, vector<1x16xf32>
    %4 = vector.broadcast %3 : vector<1x16xf32> to vector<32x16xf32>
    %5 = arith.addf %2, %4 : vector<32x16xf32>
    %6 = arith.truncf %5 : vector<32x16xf32> to vector<32x16xbf16>
    %c0_5 = arith.constant 0 : index
    %c0_6 = arith.constant 0 : index
    %7 = vector.load %arg4[%c0_5, %c0_6] : memref<32x16xbf16, #tpu.memory_space<vmem>>, vector<32x16xbf16>
    tpu.vector_store %arg4[%c0_5, %c0_6], %6 {strides = array<i32>} : memref<32x16xbf16, #tpu.memory_space<vmem>>, vector<32x16xbf16>,
    return
  }
  func.func @transform_0(%arg0: i32) -> (i32, i32) {
    %c0_i32 = arith.constant 0 : i32
    %c0_i32_0 = arith.constant 0 : i32
    return %arg0, %c0_i32 : i32, i32
  }
  func.func @transform_1(%arg0: i32) -> (i32, i32) {
    %c0_i32 = arith.constant 0 : i32
    %c0_i32_0 = arith.constant 0 : i32
    %c0_i32_1 = arith.constant 0 : i32
    return %c0_i32, %c0_i32_0 : i32, i32
  }
  func.func @transform_2(%arg0: i32) -> (i32, i32) {
    %c0_i32 = arith.constant 0 : i32
    %c0_i32_0 = arith.constant 0 : i32
    %c0_i32_1 = arith.constant 0 : i32
    return %c0_i32, %c0_i32_0 : i32, i32
  }
  func.func @transform_3(%arg0: i32) -> (i32, i32) {
    %c0_i32 = arith.constant 0 : i32
    %c0_i32_0 = arith.constant 0 : i32
    return %arg0, %c0_i32 : i32, i32
  }
}

module attributes {stable_mosaic.version = 11 : i64} {
  func.func @conv3x3_kernel(%arg0: i32, %arg1: memref<1x122x32xbf16, #tpu.memory_space<vmem>>, %arg2: memref<288x8xbf16, #tpu.memory_space<vmem>>, %arg3: memref<1x8xf32, #tpu.memory_space<vmem>>, %arg4: memref<1x80x8xbf16, #tpu.memory_space<vmem>>) attributes {dimension_semantics = [#tpu.dimension_semantics<parallel>], iteration_bounds = array<i64: 2>, scalar_prefetch = 0 : i64, scratch_operands = 0 : i64, tpu.core_type = #tpu.core_type<tc>, window_params = [{transform_indices = @transform_0, window_bounds = array<i64: 1, 122, 32>}, {pipeline_mode = #tpu.pipeline_mode<synchronous>, transform_indices = @transform_1, window_bounds = array<i64: 288, 8>}, {pipeline_mode = #tpu.pipeline_mode<synchronous>, transform_indices = @transform_2, window_bounds = array<i64: 1, 8>}, {transform_indices = @transform_3, window_bounds = array<i64: 1, 80, 8>}]} {
    %c0 = arith.constant 0 : index
    %c0_0 = arith.constant 0 : index
    %c0_1 = arith.constant 0 : index
    %0 = vector.load %arg1[%c0, %c0_0, %c0_1] : memref<1x122x32xbf16, #tpu.memory_space<vmem>>, vector<1x122x32xbf16>
    %1 = vector.shape_cast %0 : vector<1x122x32xbf16> to vector<122x32xbf16>
    %c0_2 = arith.constant 0 : index
    %c0_3 = arith.constant 0 : index
    %2 = vector.load %arg2[%c0_2, %c0_3] : memref<288x8xbf16, #tpu.memory_space<vmem>>, vector<288x8xbf16>
    %3 = vector.extract_strided_slice %1 {offsets = [0, 0], sizes = [80, 32], strides = [1, 1]} : vector<122x32xbf16> to vector<80x32xbf16>
    %4 = vector.extract_strided_slice %2 {offsets = [0, 0], sizes = [32, 8], strides = [1, 1]} : vector<288x8xbf16> to vector<32x8xbf16>
    %cst = arith.constant dense<0.000000e+00> : vector<80x8xf32>
    %5 = tpu.matmul %3, %4, %cst {dimension_numbers = #tpu.dot_dimension_numbers<[1], [0], [0], [1], [0, 0, 1, 1], [], []>} : vector<80x32xbf16>, vector<32x8xbf16>, vector<80x8xf32> -> vector<80x8xf32>
    %6 = vector.extract_strided_slice %1 {offsets = [1, 0], sizes = [80, 32], strides = [1, 1]} : vector<122x32xbf16> to vector<80x32xbf16>
    %7 = vector.extract_strided_slice %2 {offsets = [32, 0], sizes = [32, 8], strides = [1, 1]} : vector<288x8xbf16> to vector<32x8xbf16>
    %cst_4 = arith.constant dense<0.000000e+00> : vector<80x8xf32>
    %8 = tpu.matmul %6, %7, %cst_4 {dimension_numbers = #tpu.dot_dimension_numbers<[1], [0], [0], [1], [0, 0, 1, 1], [], []>} : vector<80x32xbf16>, vector<32x8xbf16>, vector<80x8xf32> -> vector<80x8xf32>
    %9 = arith.addf %5, %8 : vector<80x8xf32>
    %10 = vector.extract_strided_slice %1 {offsets = [2, 0], sizes = [80, 32], strides = [1, 1]} : vector<122x32xbf16> to vector<80x32xbf16>
    %11 = vector.extract_strided_slice %2 {offsets = [64, 0], sizes = [32, 8], strides = [1, 1]} : vector<288x8xbf16> to vector<32x8xbf16>
    %cst_5 = arith.constant dense<0.000000e+00> : vector<80x8xf32>
    %12 = tpu.matmul %10, %11, %cst_5 {dimension_numbers = #tpu.dot_dimension_numbers<[1], [0], [0], [1], [0, 0, 1, 1], [], []>} : vector<80x32xbf16>, vector<32x8xbf16>, vector<80x8xf32> -> vector<80x8xf32>
    %13 = arith.addf %9, %12 : vector<80x8xf32>
    %14 = vector.extract_strided_slice %1 {offsets = [10, 0], sizes = [80, 32], strides = [1, 1]} : vector<122x32xbf16> to vector<80x32xbf16>
    %15 = vector.extract_strided_slice %2 {offsets = [96, 0], sizes = [32, 8], strides = [1, 1]} : vector<288x8xbf16> to vector<32x8xbf16>
    %cst_6 = arith.constant dense<0.000000e+00> : vector<80x8xf32>
    %16 = tpu.matmul %14, %15, %cst_6 {dimension_numbers = #tpu.dot_dimension_numbers<[1], [0], [0], [1], [0, 0, 1, 1], [], []>} : vector<80x32xbf16>, vector<32x8xbf16>, vector<80x8xf32> -> vector<80x8xf32>
    %17 = arith.addf %13, %16 : vector<80x8xf32>
    %18 = vector.extract_strided_slice %1 {offsets = [11, 0], sizes = [80, 32], strides = [1, 1]} : vector<122x32xbf16> to vector<80x32xbf16>
    %19 = vector.extract_strided_slice %2 {offsets = [128, 0], sizes = [32, 8], strides = [1, 1]} : vector<288x8xbf16> to vector<32x8xbf16>
    %cst_7 = arith.constant dense<0.000000e+00> : vector<80x8xf32>
    %20 = tpu.matmul %18, %19, %cst_7 {dimension_numbers = #tpu.dot_dimension_numbers<[1], [0], [0], [1], [0, 0, 1, 1], [], []>} : vector<80x32xbf16>, vector<32x8xbf16>, vector<80x8xf32> -> vector<80x8xf32>
    %21 = arith.addf %17, %20 : vector<80x8xf32>
    %22 = vector.extract_strided_slice %1 {offsets = [12, 0], sizes = [80, 32], strides = [1, 1]} : vector<122x32xbf16> to vector<80x32xbf16>
    %23 = vector.extract_strided_slice %2 {offsets = [160, 0], sizes = [32, 8], strides = [1, 1]} : vector<288x8xbf16> to vector<32x8xbf16>
    %cst_8 = arith.constant dense<0.000000e+00> : vector<80x8xf32>
    %24 = tpu.matmul %22, %23, %cst_8 {dimension_numbers = #tpu.dot_dimension_numbers<[1], [0], [0], [1], [0, 0, 1, 1], [], []>} : vector<80x32xbf16>, vector<32x8xbf16>, vector<80x8xf32> -> vector<80x8xf32>
    %25 = arith.addf %21, %24 : vector<80x8xf32>
    %26 = vector.extract_strided_slice %1 {offsets = [20, 0], sizes = [80, 32], strides = [1, 1]} : vector<122x32xbf16> to vector<80x32xbf16>
    %27 = vector.extract_strided_slice %2 {offsets = [192, 0], sizes = [32, 8], strides = [1, 1]} : vector<288x8xbf16> to vector<32x8xbf16>
    %cst_9 = arith.constant dense<0.000000e+00> : vector<80x8xf32>
    %28 = tpu.matmul %26, %27, %cst_9 {dimension_numbers = #tpu.dot_dimension_numbers<[1], [0], [0], [1], [0, 0, 1, 1], [], []>} : vector<80x32xbf16>, vector<32x8xbf16>, vector<80x8xf32> -> vector<80x8xf32>
    %29 = arith.addf %25, %28 : vector<80x8xf32>
    %30 = vector.extract_strided_slice %1 {offsets = [21, 0], sizes = [80, 32], strides = [1, 1]} : vector<122x32xbf16> to vector<80x32xbf16>
    %31 = vector.extract_strided_slice %2 {offsets = [224, 0], sizes = [32, 8], strides = [1, 1]} : vector<288x8xbf16> to vector<32x8xbf16>
    %cst_10 = arith.constant dense<0.000000e+00> : vector<80x8xf32>
    %32 = tpu.matmul %30, %31, %cst_10 {dimension_numbers = #tpu.dot_dimension_numbers<[1], [0], [0], [1], [0, 0, 1, 1], [], []>} : vector<80x32xbf16>, vector<32x8xbf16>, vector<80x8xf32> -> vector<80x8xf32>
    %33 = arith.addf %29, %32 : vector<80x8xf32>
    %34 = vector.extract_strided_slice %1 {offsets = [22, 0], sizes = [80, 32], strides = [1, 1]} : vector<122x32xbf16> to vector<80x32xbf16>
    %35 = vector.extract_strided_slice %2 {offsets = [256, 0], sizes = [32, 8], strides = [1, 1]} : vector<288x8xbf16> to vector<32x8xbf16>
    %cst_11 = arith.constant dense<0.000000e+00> : vector<80x8xf32>
    %36 = tpu.matmul %34, %35, %cst_11 {dimension_numbers = #tpu.dot_dimension_numbers<[1], [0], [0], [1], [0, 0, 1, 1], [], []>} : vector<80x32xbf16>, vector<32x8xbf16>, vector<80x8xf32> -> vector<80x8xf32>
    %37 = arith.addf %33, %36 : vector<80x8xf32>
    %c0_12 = arith.constant 0 : index
    %c0_13 = arith.constant 0 : index
    %38 = vector.load %arg3[%c0_12, %c0_13] : memref<1x8xf32, #tpu.memory_space<vmem>>, vector<1x8xf32>
    %39 = vector.broadcast %38 : vector<1x8xf32> to vector<80x8xf32>
    %40 = arith.addf %37, %39 : vector<80x8xf32>
    %41 = arith.truncf %40 : vector<80x8xf32> to vector<80x8xbf16>
    %c0_14 = arith.constant 0 : index
    %c0_15 = arith.constant 0 : index
    %c0_16 = arith.constant 0 : index
    %42 = vector.load %arg4[%c0_14, %c0_15, %c0_16] : memref<1x80x8xbf16, #tpu.memory_space<vmem>>, vector<1x80x8xbf16>
    %43 = vector.shape_cast %42 : vector<1x80x8xbf16> to vector<80x8xbf16>
    %44 = vector.shape_cast %41 : vector<80x8xbf16> to vector<1x80x8xbf16>
    tpu.vector_store %arg4[%c0_14, %c0_15, %c0_16], %44 {strides = array<i32>} : memref<1x80x8xbf16, #tpu.memory_space<vmem>>, vector<1x80x8xbf16>,
    return
  }
  func.func @transform_0(%arg0: i32) -> (i32, i32, i32) {
    %c0_i32 = arith.constant 0 : i32
    %c0_i32_0 = arith.constant 0 : i32
    %c0_i32_1 = arith.constant 0 : i32
    return %arg0, %c0_i32, %c0_i32_0 : i32, i32, i32
  }
  func.func @transform_1(%arg0: i32) -> (i32, i32) {
    %c0_i32 = arith.constant 0 : i32
    %c0_i32_0 = arith.constant 0 : i32
    %c0_i32_1 = arith.constant 0 : i32
    return %c0_i32, %c0_i32_0 : i32, i32
  }
  func.func @transform_2(%arg0: i32) -> (i32, i32) {
    %c0_i32 = arith.constant 0 : i32
    %c0_i32_0 = arith.constant 0 : i32
    %c0_i32_1 = arith.constant 0 : i32
    return %c0_i32, %c0_i32_0 : i32, i32
  }
  func.func @transform_3(%arg0: i32) -> (i32, i32, i32) {
    %c0_i32 = arith.constant 0 : i32
    %c0_i32_0 = arith.constant 0 : i32
    %c0_i32_1 = arith.constant 0 : i32
    return %arg0, %c0_i32, %c0_i32_0 : i32, i32, i32
  }
}

module attributes {stable_mosaic.version = 11 : i64} {
  func.func @bn_relu_pool_w_kernel(%arg0: i32, %arg1: memref<16x64xbf16, #tpu.memory_space<vmem>>, %arg2: memref<1x64xf32, #tpu.memory_space<vmem>>, %arg3: memref<1x64xf32, #tpu.memory_space<vmem>>, %arg4: memref<16x32xbf16, #tpu.memory_space<vmem>>) attributes {dimension_semantics = [#tpu.dimension_semantics<parallel>], iteration_bounds = array<i64: 4>, scalar_prefetch = 0 : i64, scratch_operands = 0 : i64, tpu.core_type = #tpu.core_type<tc>, window_params = [{transform_indices = @transform_0, window_bounds = array<i64: 16, 64>}, {pipeline_mode = #tpu.pipeline_mode<synchronous>, transform_indices = @transform_1, window_bounds = array<i64: 1, 64>}, {pipeline_mode = #tpu.pipeline_mode<synchronous>, transform_indices = @transform_2, window_bounds = array<i64: 1, 64>}, {transform_indices = @transform_3, window_bounds = array<i64: 16, 32>}]} {
    %c0 = arith.constant 0 : index
    %c0_0 = arith.constant 0 : index
    %0 = vector.load %arg1[%c0, %c0_0] : memref<16x64xbf16, #tpu.memory_space<vmem>>, vector<16x64xbf16>
    %1 = arith.extf %0 : vector<16x64xbf16> to vector<16x64xf32>
    %c0_1 = arith.constant 0 : index
    %c0_2 = arith.constant 0 : index
    %2 = vector.load %arg2[%c0_1, %c0_2] : memref<1x64xf32, #tpu.memory_space<vmem>>, vector<1x64xf32>
    %3 = vector.broadcast %2 : vector<1x64xf32> to vector<16x64xf32>
    %4 = arith.mulf %1, %3 : vector<16x64xf32>
    %c0_3 = arith.constant 0 : index
    %c0_4 = arith.constant 0 : index
    %5 = vector.load %arg3[%c0_3, %c0_4] : memref<1x64xf32, #tpu.memory_space<vmem>>, vector<1x64xf32>
    %6 = vector.broadcast %5 : vector<1x64xf32> to vector<16x64xf32>
    %7 = arith.addf %4, %6 : vector<16x64xf32>
    %cst = arith.constant 0.000000e+00 : f32
    %8 = vector.broadcast %cst : f32 to vector<16x64xf32>
    %9 = arith.maximumf %7, %8 : vector<16x64xf32>
    %10 = vector.extract_strided_slice %9 {offsets = [0, 0], sizes = [16, 32], strides = [1, 1]} : vector<16x64xf32> to vector<16x32xf32>
    %11 = vector.extract_strided_slice %9 {offsets = [0, 32], sizes = [16, 32], strides = [1, 1]} : vector<16x64xf32> to vector<16x32xf32>
    %12 = arith.addf %10, %11 : vector<16x32xf32>
    %cst_5 = arith.constant 5.000000e-01 : f32
    %13 = vector.broadcast %cst_5 : f32 to vector<16x32xf32>
    %14 = arith.mulf %12, %13 : vector<16x32xf32>
    %15 = arith.truncf %14 : vector<16x32xf32> to vector<16x32xbf16>
    %c0_6 = arith.constant 0 : index
    %c0_7 = arith.constant 0 : index
    %16 = vector.load %arg4[%c0_6, %c0_7] : memref<16x32xbf16, #tpu.memory_space<vmem>>, vector<16x32xbf16>
    tpu.vector_store %arg4[%c0_6, %c0_7], %15 {strides = array<i32>} : memref<16x32xbf16, #tpu.memory_space<vmem>>, vector<16x32xbf16>,
    return
  }
  func.func @transform_0(%arg0: i32) -> (i32, i32) {
    %c0_i32 = arith.constant 0 : i32
    %c0_i32_0 = arith.constant 0 : i32
    return %arg0, %c0_i32 : i32, i32
  }
  func.func @transform_1(%arg0: i32) -> (i32, i32) {
    %c0_i32 = arith.constant 0 : i32
    %c0_i32_0 = arith.constant 0 : i32
    %c0_i32_1 = arith.constant 0 : i32
    return %c0_i32, %c0_i32_0 : i32, i32
  }
  func.func @transform_2(%arg0: i32) -> (i32, i32) {
    %c0_i32 = arith.constant 0 : i32
    %c0_i32_0 = arith.constant 0 : i32
    %c0_i32_1 = arith.constant 0 : i32
    return %c0_i32, %c0_i32_0 : i32, i32
  }
  func.func @transform_3(%arg0: i32) -> (i32, i32) {
    %c0_i32 = arith.constant 0 : i32
    %c0_i32_0 = arith.constant 0 : i32
    return %arg0, %c0_i32 : i32, i32
  }
}

module attributes {stable_mosaic.version = 11 : i64} {
  func.func @pool_h_kernel(%arg0: i32, %arg1: memref<8x256xbf16, #tpu.memory_space<vmem>>, %arg2: memref<8x128xbf16, #tpu.memory_space<vmem>>) attributes {dimension_semantics = [#tpu.dimension_semantics<parallel>], iteration_bounds = array<i64: 1>, scalar_prefetch = 0 : i64, scratch_operands = 0 : i64, tpu.core_type = #tpu.core_type<tc>, window_params = [{transform_indices = @transform_0, window_bounds = array<i64: 8, 256>}, {transform_indices = @transform_1, window_bounds = array<i64: 8, 128>}]} {
    %c0 = arith.constant 0 : index
    %c0_0 = arith.constant 0 : index
    %0 = vector.load %arg1[%c0, %c0_0] : memref<8x256xbf16, #tpu.memory_space<vmem>>, vector<8x256xbf16>
    %1 = arith.extf %0 : vector<8x256xbf16> to vector<8x256xf32>
    %2 = vector.extract_strided_slice %1 {offsets = [0, 0], sizes = [8, 128], strides = [1, 1]} : vector<8x256xf32> to vector<8x128xf32>
    %3 = vector.extract_strided_slice %1 {offsets = [0, 128], sizes = [8, 128], strides = [1, 1]} : vector<8x256xf32> to vector<8x128xf32>
    %4 = arith.addf %2, %3 : vector<8x128xf32>
    %cst = arith.constant 5.000000e-01 : f32
    %5 = vector.broadcast %cst : f32 to vector<8x128xf32>
    %6 = arith.mulf %4, %5 : vector<8x128xf32>
    %7 = arith.truncf %6 : vector<8x128xf32> to vector<8x128xbf16>
    %c0_1 = arith.constant 0 : index
    %c0_2 = arith.constant 0 : index
    %8 = vector.load %arg2[%c0_1, %c0_2] : memref<8x128xbf16, #tpu.memory_space<vmem>>, vector<8x128xbf16>
    tpu.vector_store %arg2[%c0_1, %c0_2], %7 {strides = array<i32>} : memref<8x128xbf16, #tpu.memory_space<vmem>>, vector<8x128xbf16>,
    return
  }
  func.func @transform_0(%arg0: i32) -> (i32, i32) {
    %c0_i32 = arith.constant 0 : i32
    %c0_i32_0 = arith.constant 0 : i32
    return %arg0, %c0_i32 : i32, i32
  }
  func.func @transform_1(%arg0: i32) -> (i32, i32) {
    %c0_i32 = arith.constant 0 : i32
    %c0_i32_0 = arith.constant 0 : i32
    return %arg0, %c0_i32 : i32, i32
  }
}

module attributes {stable_mosaic.version = 11 : i64} {
  func.func @global_pool_fc_kernel(%arg0: i32, %arg1: memref<2x16x16xbf16, #tpu.memory_space<vmem>>, %arg2: memref<16x10xbf16, #tpu.memory_space<vmem>>, %arg3: memref<1x10xf32, #tpu.memory_space<vmem>>, %arg4: memref<2x10xf32, #tpu.memory_space<vmem>>) attributes {dimension_semantics = [#tpu.dimension_semantics<parallel>], iteration_bounds = array<i64: 1>, scalar_prefetch = 0 : i64, scratch_operands = 0 : i64, tpu.core_type = #tpu.core_type<tc>, window_params = [{pipeline_mode = #tpu.pipeline_mode<synchronous>, transform_indices = @transform_0, window_bounds = array<i64: 2, 16, 16>}, {pipeline_mode = #tpu.pipeline_mode<synchronous>, transform_indices = @transform_1, window_bounds = array<i64: 16, 10>}, {pipeline_mode = #tpu.pipeline_mode<synchronous>, transform_indices = @transform_2, window_bounds = array<i64: 1, 10>}, {pipeline_mode = #tpu.pipeline_mode<synchronous>, transform_indices = @transform_3, window_bounds = array<i64: 2, 10>}]} {
    %c0 = arith.constant 0 : index
    %c0_0 = arith.constant 0 : index
    %c0_1 = arith.constant 0 : index
    %0 = vector.load %arg1[%c0, %c0_0, %c0_1] : memref<2x16x16xbf16, #tpu.memory_space<vmem>>, vector<2x16x16xbf16>
    %1 = arith.extf %0 : vector<2x16x16xbf16> to vector<2x16x16xf32>
    %cst = arith.constant dense<0.000000e+00> : vector<2x16xf32>
    %2 = vector.multi_reduction <add>, %1, %cst [1] : vector<2x16x16xf32> to vector<2x16xf32>
    %cst_2 = arith.constant 1.600000e+01 : f32
    %3 = vector.broadcast %cst_2 : f32 to vector<2x16xf32>
    %4 = arith.divf %2, %3 : vector<2x16xf32>
    %5 = arith.truncf %4 : vector<2x16xf32> to vector<2x16xbf16>
    %c0_3 = arith.constant 0 : index
    %c0_4 = arith.constant 0 : index
    %6 = vector.load %arg2[%c0_3, %c0_4] : memref<16x10xbf16, #tpu.memory_space<vmem>>, vector<16x10xbf16>
    %cst_5 = arith.constant dense<0.000000e+00> : vector<2x10xf32>
    %7 = tpu.matmul %5, %6, %cst_5 {dimension_numbers = #tpu.dot_dimension_numbers<[1], [0], [0], [1], [0, 0, 1, 1], [], []>} : vector<2x16xbf16>, vector<16x10xbf16>, vector<2x10xf32> -> vector<2x10xf32>
    %c0_6 = arith.constant 0 : index
    %c0_7 = arith.constant 0 : index
    %8 = vector.load %arg3[%c0_6, %c0_7] : memref<1x10xf32, #tpu.memory_space<vmem>>, vector<1x10xf32>
    %9 = vector.broadcast %8 : vector<1x10xf32> to vector<2x10xf32>
    %10 = arith.addf %7, %9 : vector<2x10xf32>
    %c0_8 = arith.constant 0 : index
    %c0_9 = arith.constant 0 : index
    %11 = vector.load %arg4[%c0_8, %c0_9] : memref<2x10xf32, #tpu.memory_space<vmem>>, vector<2x10xf32>
    tpu.vector_store %arg4[%c0_8, %c0_9], %10 {strides = array<i32>} : memref<2x10xf32, #tpu.memory_space<vmem>>, vector<2x10xf32>,
    return
  }
  func.func @transform_0(%arg0: i32) -> (i32, i32, i32) {
    %c0_i32 = arith.constant 0 : i32
    %c0_i32_0 = arith.constant 0 : i32
    %c0_i32_1 = arith.constant 0 : i32
    %c0_i32_2 = arith.constant 0 : i32
    return %c0_i32, %c0_i32_0, %c0_i32_1 : i32, i32, i32
  }
  func.func @transform_1(%arg0: i32) -> (i32, i32) {
    %c0_i32 = arith.constant 0 : i32
    %c0_i32_0 = arith.constant 0 : i32
    %c0_i32_1 = arith.constant 0 : i32
    return %c0_i32, %c0_i32_0 : i32, i32
  }
  func.func @transform_2(%arg0: i32) -> (i32, i32) {
    %c0_i32 = arith.constant 0 : i32
    %c0_i32_0 = arith.constant 0 : i32
    %c0_i32_1 = arith.constant 0 : i32
    return %c0_i32, %c0_i32_0 : i32, i32
  }
  func.func @transform_3(%arg0: i32) -> (i32, i32) {
    %c0_i32 = arith.constant 0 : i32
    %c0_i32_0 = arith.constant 0 : i32
    %c0_i32_1 = arith.constant 0 : i32
    return %c0_i32, %c0_i32_0 : i32, i32
  }
}

module attributes {stable_mosaic.version = 11 : i64} {
  func.func @matmul_bias_kernel(%arg0: i32, %arg1: memref<16x32xbf16, #tpu.memory_space<vmem>>, %arg2: memref<32x16xbf16, #tpu.memory_space<vmem>>, %arg3: memref<1x16xf32, #tpu.memory_space<vmem>>, %arg4: memref<16x16xbf16, #tpu.memory_space<vmem>>) attributes {dimension_semantics = [#tpu.dimension_semantics<parallel>], iteration_bounds = array<i64: 2>, scalar_prefetch = 0 : i64, scratch_operands = 0 : i64, tpu.core_type = #tpu.core_type<tc>, window_params = [{transform_indices = @transform_0, window_bounds = array<i64: 16, 32>}, {pipeline_mode = #tpu.pipeline_mode<synchronous>, transform_indices = @transform_1, window_bounds = array<i64: 32, 16>}, {pipeline_mode = #tpu.pipeline_mode<synchronous>, transform_indices = @transform_2, window_bounds = array<i64: 1, 16>}, {transform_indices = @transform_3, window_bounds = array<i64: 16, 16>}]} {
    %c0 = arith.constant 0 : index
    %c0_0 = arith.constant 0 : index
    %0 = vector.load %arg1[%c0, %c0_0] : memref<16x32xbf16, #tpu.memory_space<vmem>>, vector<16x32xbf16>
    %c0_1 = arith.constant 0 : index
    %c0_2 = arith.constant 0 : index
    %1 = vector.load %arg2[%c0_1, %c0_2] : memref<32x16xbf16, #tpu.memory_space<vmem>>, vector<32x16xbf16>
    %cst = arith.constant dense<0.000000e+00> : vector<16x16xf32>
    %2 = tpu.matmul %0, %1, %cst {dimension_numbers = #tpu.dot_dimension_numbers<[1], [0], [0], [1], [0, 0, 1, 1], [], []>} : vector<16x32xbf16>, vector<32x16xbf16>, vector<16x16xf32> -> vector<16x16xf32>
    %c0_3 = arith.constant 0 : index
    %c0_4 = arith.constant 0 : index
    %3 = vector.load %arg3[%c0_3, %c0_4] : memref<1x16xf32, #tpu.memory_space<vmem>>, vector<1x16xf32>
    %4 = vector.broadcast %3 : vector<1x16xf32> to vector<16x16xf32>
    %5 = arith.addf %2, %4 : vector<16x16xf32>
    %6 = arith.truncf %5 : vector<16x16xf32> to vector<16x16xbf16>
    %c0_5 = arith.constant 0 : index
    %c0_6 = arith.constant 0 : index
    %7 = vector.load %arg4[%c0_5, %c0_6] : memref<16x16xbf16, #tpu.memory_space<vmem>>, vector<16x16xbf16>
    tpu.vector_store %arg4[%c0_5, %c0_6], %6 {strides = array<i32>} : memref<16x16xbf16, #tpu.memory_space<vmem>>, vector<16x16xbf16>,
    return
  }
  func.func @transform_0(%arg0: i32) -> (i32, i32) {
    %c0_i32 = arith.constant 0 : i32
    %c0_i32_0 = arith.constant 0 : i32
    return %arg0, %c0_i32 : i32, i32
  }
  func.func @transform_1(%arg0: i32) -> (i32, i32) {
    %c0_i32 = arith.constant 0 : i32
    %c0_i32_0 = arith.constant 0 : i32
    %c0_i32_1 = arith.constant 0 : i32
    return %c0_i32, %c0_i32_0 : i32, i32
  }
  func.func @transform_2(%arg0: i32) -> (i32, i32) {
    %c0_i32 = arith.constant 0 : i32
    %c0_i32_0 = arith.constant 0 : i32
    %c0_i32_1 = arith.constant 0 : i32
    return %c0_i32, %c0_i32_0 : i32, i32
  }
  func.func @transform_3(%arg0: i32) -> (i32, i32) {
    %c0_i32 = arith.constant 0 : i32
    %c0_i32_0 = arith.constant 0 : i32
    return %arg0, %c0_i32 : i32, i32
  }
}

</mosaic_0001>

<llo_original>
// kernel: densenet_forward.17
$region0: #{densenet_forward.17}
  #allocation0 [shape = 'u32[]', space=smem, size = 0x4, offset = 0x4, fixed_abs, tag = 'smem constant byte address 0x4 - core index']
  #allocation1 [shape = 'u32[144,128]{1,0:T(1,128)}', space=vmem, size = 0x12000, scoped, tag = 'internal scratch']
  %s0 = inlined_call_operand.vmem [shape: bf16[512,32], index: 0, kind: input, shape index: {}]
  %s1 = inlined_call_operand.vmem [shape: f32[1,32], index: 1, kind: input, shape index: {}]
  %s2 = inlined_call_operand.vmem [shape: f32[1,32], index: 2, kind: input, shape index: {}]
  %s3 = inlined_call_operand.vmem [shape: bf16[32,32], index: 3, kind: input, shape index: {}]
  %s4 = inlined_call_operand.vmem [shape: f32[1,32], index: 4, kind: input, shape index: {}]
  %s5 = inlined_call_operand.vmem [shape: bf16[512,32], index: 5, kind: output, shape index: {}]
  %s6 = sld [smem:[#allocation0]]
  $region53: #{densenet_forward.17} parent=0
    _
  %s8 = ssub.s32 1, %s6
  %s9 = scalar_select 0, %s8, %s6
  loop: start=0, step=1, limit=6
  $region2: #{densenet_forward.17} parent=0 // loop_pre_header
    _
  $region3: #{densenet_forward.17} parent=0 // loop_header
    %s11 = sphi 0, %s15
    %p12 = scmp.ge.s32.totalorder %s11, 6
    %s21 = sphi 0, %s23
    %s24 = sphi 0, %s21
    %s25 = sphi 0, %s24
    %s41 = sphi 0, %s25
    %s45 = sphi 0, %s45
    %s47 = sphi 0, %s45
    %s48 = sphi 0, %s47
    %s62 = sphi 0, %s48
    %s66 = sphi 0, %s66
    %s68 = sphi 0, %s66
    %s69 = sphi 0, %s68
    %s83 = sphi 0, %s69
    %s87 = sphi 0, %s87
    %s89 = sphi 0, %s87
    %s90 = sphi 0, %s89
    %s104 = sphi 0, %s90
    %s108 = sphi 0, %s108
    %s110 = sphi 0, %s108
    %s111 = sphi 0, %s110
    %s125 = sphi 0, %s111
    %s131 = sphi 0, %s133
    %s134 = sphi 0, %s131
    %s135 = sphi 0, %s134
    %s151 = sphi 0, %s135
  $region4: #{densenet_forward.17} parent=0 // loop_header_branch
    %14 = sbr.rel (%p12) target = $region8
  $region5: #{densenet_forward.17} parent=0 // loop_body
    %s16 = ssub.s32 %s11, 1
    %s17 = ssub.s32 %s11, 2
    %s18 = sadd.s32 %s11, 1
    %s19 = ssub.s32 %s11, %s18
    %p20 = scmp.eq.s32.totalorder %s19, 0
    %s22 = sadd.s32 %s21, 1
    %s23 = scalar_select %p20, %s21, %s22
    %p26 = pneg %p20
    %p27 = scmp.eq.s32.totalorder %s11, 3
    %p28 = por %p26, %p27
    %p29 = scmp.ne.s32.totalorder %s21, %s24
    %p30 = scmp.eq.s32.totalorder %s11, 0
    %p31 = por %p29, %p30
    %p32 = scmp.ne.s32.totalorder %s21, %s24
    %p33 = scmp.eq.s32.totalorder %s16, 3
    %p34 = por %p32, %p33
    %p35 = scmp.ne.s32.totalorder %s24, %s25
    %p36 = scmp.eq.s32.totalorder %s16, 0
    %p37 = por %p35, %p36
    %p38 = scmp.ne.s32.totalorder %s24, %s25
    %p39 = scmp.eq.s32.totalorder %s17, 3
    %p40 = por %p38, %p39
    %p42 = scmp.ne.s32.totalorder %s25, %s41
    %p43 = scmp.eq.s32.totalorder %s17, 0
    %p44 = por %p42, %p43
    %s46 = sadd.s32 %s45, 1
    %p49 = scmp.eq.s32.totalorder %s11, 3
    %p50 = scmp.ne.s32.totalorder %s45, %s47
    %p51 = scmp.eq.s32.totalorder %s11, 0
    %p52 = por %p50, %p51
    %p53 = scmp.ne.s32.totalorder %s45, %s47
    %p54 = scmp.eq.s32.totalorder %s16, 3
    %p55 = por %p53, %p54
    %p56 = scmp.ne.s32.totalorder %s47, %s48
    %p57 = scmp.eq.s32.totalorder %s16, 0
    %p58 = por %p56, %p57
    %p59 = scmp.ne.s32.totalorder %s47, %s48
    %p60 = scmp.eq.s32.totalorder %s17, 3
    %p61 = por %p59, %p60
    %p63 = scmp.ne.s32.totalorder %s48, %s62
    %p64 = scmp.eq.s32.totalorder %s17, 0
    %p65 = por %p63, %p64
    %s67 = sadd.s32 %s66, 1
    %p70 = scmp.eq.s32.totalorder %s11, 3
    %p71 = scmp.ne.s32.totalorder %s66, %s68
    %p72 = scmp.eq.s32.totalorder %s11, 0
    %p73 = por %p71, %p72
    %p74 = scmp.ne.s32.totalorder %s66, %s68
    %p75 = scmp.eq.s32.totalorder %s16, 3
    %p76 = por %p74, %p75
    %p77 = scmp.ne.s32.totalorder %s68, %s69
    %p78 = scmp.eq.s32.totalorder %s16, 0
    %p79 = por %p77, %p78
    %p80 = scmp.ne.s32.totalorder %s68, %s69
    %p81 = scmp.eq.s32.totalorder %s17, 3
    %p82 = por %p80, %p81
    %p84 = scmp.ne.s32.totalorder %s69, %s83
    %p85 = scmp.eq.s32.totalorder %s17, 0
    %p86 = por %p84, %p85
    %s88 = sadd.s32 %s87, 1
    %p91 = scmp.eq.s32.totalorder %s11, 3
    %p92 = scmp.ne.s32.totalorder %s87, %s89
    %p93 = scmp.eq.s32.totalorder %s11, 0
    %p94 = por %p92, %p93
    %p95 = scmp.ne.s32.totalorder %s87, %s89
    %p96 = scmp.eq.s32.totalorder %s16, 3
    %p97 = por %p95, %p96
    %p98 = scmp.ne.s32.totalorder %s89, %s90
    %p99 = scmp.eq.s32.totalorder %s16, 0
    %p100 = por %p98, %p99
    %p101 = scmp.ne.s32.totalorder %s89, %s90
    %p102 = scmp.eq.s32.totalorder %s17, 3
    %p103 = por %p101, %p102
    %p105 = scmp.ne.s32.totalorder %s90, %s104
    %p106 = scmp.eq.s32.totalorder %s17, 0
    %p107 = por %p105, %p106
    %s109 = sadd.s32 %s108, 1
    %p112 = scmp.eq.s32.totalorder %s11, 3
    %p113 = scmp.ne.s32.totalorder %s108, %s110
    %p114 = scmp.eq.s32.totalorder %s11, 0
    %p115 = por %p113, %p114
    %p116 = scmp.ne.s32.totalorder %s108, %s110
    %p117 = scmp.eq.s32.totalorder %s16, 3
    %p118 = por %p116, %p117
    %p119 = scmp.ne.s32.totalorder %s110, %s111
    %p120 = scmp.eq.s32.totalorder %s16, 0
    %p121 = por %p119, %p120
    %p122 = scmp.ne.s32.totalorder %s110, %s111
    %p123 = scmp.eq.s32.totalorder %s17, 3
    %p124 = por %p122, %p123
    %p126 = scmp.ne.s32.totalorder %s111, %s125
    %p127 = scmp.eq.s32.totalorder %s17, 0
    %p128 = por %p126, %p127
    %s129 = ssub.s32 %s11, %s18
    %p130 = scmp.eq.s32.totalorder %s129, 0
    %s132 = sadd.s32 %s131, 1
    %s133 = scalar_select %p130, %s131, %s132
    %p136 = pneg %p130
    %p137 = scmp.eq.s32.totalorder %s11, 3
    %p138 = por %p136, %p137
    %p139 = scmp.ne.s32.totalorder %s131, %s134
    %p140 = scmp.eq.s32.totalorder %s11, 0
    %p141 = por %p139, %p140
    %p142 = scmp.ne.s32.totalorder %s131, %s134
    %p143 = scmp.eq.s32.totalorder %s16, 3
    %p144 = por %p142, %p143
    %p145 = scmp.ne.s32.totalorder %s134, %s135
    %p146 = scmp.eq.s32.totalorder %s16, 0
    %p147 = por %p145, %p146
    %p148 = scmp.ne.s32.totalorder %s134, %s135
    %p149 = scmp.eq.s32.totalorder %s17, 3
    %p150 = por %p148, %p149
    %p152 = scmp.ne.s32.totalorder %s135, %s151
    %p153 = scmp.eq.s32.totalorder %s17, 0
    %p154 = por %p152, %p153
    %p155 = scmp.le.s32.totalorder 1, %s11
    %p156 = scmp.lt.s32.totalorder %s11, 5
    %p157 = pnand %p155, %p156
    %p158 = pneg %p157
    // Predicated region
    $region9: #{densenet_forward.17} parent=5 // pred_check
      _
    $region10: #{densenet_forward.17} parent=5 // pred_check_branch
      %160 = sbr.rel (%p157) target = $region12
    $region11: #{densenet_forward.17} parent=5 // pred_region
      %s161 = ssub.s32 %s11, 1
      // Predicated region
      $region13: #{densenet_forward.17} parent=11 // pred_check
        %p162 = pneg %p58
      $region14: #{densenet_forward.17} parent=11 // pred_check_branch
        %164 = sbr.rel (%p162) target = $region16
      $region15: #{densenet_forward.17} parent=11 // pred_region
        _
      $region16: #{densenet_forward.17} parent=11 // pred_fallthru
        _
      // Predicated region
      $region17: #{densenet_forward.17} parent=11 // pred_check
        %p165 = pneg %p79
      $region18: #{densenet_forward.17} parent=11 // pred_check_branch
        %167 = sbr.rel (%p165) target = $region20
      $region19: #{densenet_forward.17} parent=11 // pred_region
        _
      $region20: #{densenet_forward.17} parent=11 // pred_fallthru
        _
      // Predicated region
      $region21: #{densenet_forward.17} parent=11 // pred_check
        %p168 = pneg %p100
      $region22: #{densenet_forward.17} parent=11 // pred_check_branch
        %170 = sbr.rel (%p168) target = $region24
      $region23: #{densenet_forward.17} parent=11 // pred_region
        _
      $region24: #{densenet_forward.17} parent=11 // pred_fallthru
        _
      // Predicated region
      $region25: #{densenet_forward.17} parent=11 // pred_check
        %p171 = pneg %p121
      $region26: #{densenet_forward.17} parent=11 // pred_check_branch
        %173 = sbr.rel (%p171) target = $region28
      $region27: #{densenet_forward.17} parent=11 // pred_region
        _
      $region28: #{densenet_forward.17} parent=11 // pred_fallthru
        _
    $region12: #{densenet_forward.17} parent=5 // pred_fallthru
      _
    %p174 = scmp.lt.s32.totalorder %s11, 4
    // Predicated region
    $region29: #{densenet_forward.17} parent=5 // pred_check
      %p175 = pneg %p174
    $region30: #{densenet_forward.17} parent=5 // pred_check_branch
      %177 = sbr.rel (%p175) target = $region32
    $region31: #{densenet_forward.17} parent=5 // pred_region
      // Predicated region
      $region33: #{densenet_forward.17} parent=31 // pred_check
        %p178 = pneg %p31
      $region34: #{densenet_forward.17} parent=31 // pred_check_branch
        %180 = sbr.rel (%p178) target = $region36
      $region35: #{densenet_forward.17} parent=31 // pred_region
        %s181 = smul.u32 16, %s11
        %p182 = scmp.lt.s32.totalorder %s181, 63
        %s183 = scalar_select %p182, %s181, 63
        %s184 = smul.addr %s183, 4
        %s185 = scalar_lea.vmem %s0, %s184
        %s186 = smul.u32 16, %s11
      $region36: #{densenet_forward.17} parent=31 // pred_fallthru
        _
    $region32: #{densenet_forward.17} parent=5 // pred_fallthru
      _
    %p187 = scmp.le.s32.totalorder 1, %s11
    %p188 = scmp.lt.s32.totalorder %s11, 5
    %p189 = pnand %p187, %p188
    %p190 = pneg %p189
    // Predicated region
    $region37: #{densenet_forward.17} parent=5 // pred_check
      _
    $region38: #{densenet_forward.17} parent=5 // pred_check_branch
      %192 = sbr.rel (%p189) target = $region40
    $region39: #{densenet_forward.17} parent=5 // pred_region
      %s193 = ssub.s32 %s11, 1
      %s194 = smul.u32 16, %s16
      %p195 = scmp.lt.s32.totalorder %s194, 63
      %s196 = scalar_select %p195, %s194, 63
      %s197 = smul.addr %s196, 4
      %s198 = scalar_lea.vmem %s0, %s197
      %p199 = pneg %p37
      %p200 = pneg %p34
      %p201 = pneg %p58
      %p202 = pneg %p55
      %p203 = pneg %p79
      %p204 = pneg %p76
      %p205 = pneg %p100
      %p206 = pneg %p97
      %p207 = pneg %p121
      %p208 = pneg %p118
      %p209 = pneg %p147
      %p210 = pneg %p144
      %s211 = smul.u32 16, %s16
      %p212 = scmp.lt.s32.totalorder %s211, 63
      %s213 = scalar_select %p212, %s211, 63
      %s214 = smul.addr %s213, 4
      %s215 = scalar_lea.vmem %s5, %s214
      %s216 = smul.u32 16, %s16
      %p217 = scmp.lt.s32.totalorder %s216, 63
      %s218 = scalar_select %p217, %s216, 63
      %s219 = smul.addr %s218, 4
      %s220 = scalar_lea.vmem %s0, %s219
      %s221 = smul.u32 16, %s16
      %s222 = smul.u32 16, %s16
      %p223 = scmp.lt.s32.totalorder %s222, 63
      %s224 = scalar_select %p223, %s222, 63
      %s225 = smul.addr %s224, 4
      %s226 = scalar_lea.vmem %s5, %s225
      %s227 = smul.u32 16, %s16
      %v229 = vld [vmem:[%s220] sm:$0xf]
      %v230 = vld [vmem:[%s220 + $0x4] sm:$0xf]
      %v231 = vld [vmem:[%s220 + $0x8] sm:$0xf]
      %v232 = vld [vmem:[%s220 + $0xc] sm:$0xf]
      %v233 = vld [vmem:[%s220 + $0x10] sm:$0xf]
      %v234 = vld [vmem:[%s220 + $0x14] sm:$0xf]
      %v235 = vld [vmem:[%s220 + $0x18] sm:$0xf]
      %v236 = vld [vmem:[%s220 + $0x1c] sm:$0xf]
      %v237 = vld [vmem:[%s220 + $0x20] sm:$0xf]
      %v238 = vld [vmem:[%s220 + $0x24] sm:$0xf]
      %v239 = vld [vmem:[%s220 + $0x28] sm:$0xf]
      %v240 = vld [vmem:[%s220 + $0x2c] sm:$0xf]
      %v241 = vld [vmem:[%s220 + $0x30] sm:$0xf]
      %v242 = vld [vmem:[%s220 + $0x34] sm:$0xf]
      %v243 = vld [vmem:[%s220 + $0x38] sm:$0xf]
      %v244 = vld [vmem:[%s220 + $0x3c] sm:$0xf]
      %v245 = vunpack.c.l.bf16 %v229
      %v246 = vunpack.c.l.bf16 %v230
      %v247 = vunpack.c.l.bf16 %v231
      %v248 = vunpack.c.l.bf16 %v232
      %v249 = vunpack.c.l.bf16 %v233
      %v250 = vunpack.c.l.bf16 %v234
      %v251 = vunpack.c.l.bf16 %v235
      %v252 = vunpack.c.l.bf16 %v236
      %v253 = vunpack.c.l.bf16 %v237
      %v254 = vunpack.c.l.bf16 %v238
      %v255 = vunpack.c.l.bf16 %v239
      %v256 = vunpack.c.l.bf16 %v240
      %v257 = vunpack.c.l.bf16 %v241
      %v258 = vunpack.c.l.bf16 %v242
      %v259 = vunpack.c.l.bf16 %v243
      %v260 = vunpack.c.l.bf16 %v244
      %v261 = vld [vmem:[%s1] sm:$0x1]
      %v263 = vlaneseq
      %v264 = vshrl.u32 %v263, 7
      %v265 = vsub.s32 0, %v264
      %v266 = vrot.slane %v261, %v265
      %v268 = vmul.f32 %v245, %v266
      %v269 = vmul.f32 %v246, %v266
      %v270 = vmul.f32 %v247, %v266
      %v271 = vmul.f32 %v248, %v266
      %v272 = vmul.f32 %v249, %v266
      %v273 = vmul.f32 %v250, %v266
      %v274 = vmul.f32 %v251, %v266
      %v275 = vmul.f32 %v252, %v266
      %v276 = vmul.f32 %v253, %v266
      %v277 = vmul.f32 %v254, %v266
      %v278 = vmul.f32 %v255, %v266
      %v279 = vmul.f32 %v256, %v266
      %v280 = vmul.f32 %v257, %v266
      %v281 = vmul.f32 %v258, %v266
      %v282 = vmul.f32 %v259, %v266
      %v283 = vmul.f32 %v260, %v266
      %v284 = vld [vmem:[%s2] sm:$0x1]
      %v286 = vlaneseq
      %v287 = vshrl.u32 %v286, 7
      %v288 = vsub.s32 0, %v287
      %v289 = vrot.slane %v284, %v288
      %v291 = vadd.f32 %v268, %v289
      %v292 = vadd.f32 %v269, %v289
      %v293 = vadd.f32 %v270, %v289
      %v294 = vadd.f32 %v271, %v289
      %v295 = vadd.f32 %v272, %v289
      %v296 = vadd.f32 %v273, %v289
      %v297 = vadd.f32 %v274, %v289
      %v298 = vadd.f32 %v275, %v289
      %v299 = vadd.f32 %v276, %v289
      %v300 = vadd.f32 %v277, %v289
      %v301 = vadd.f32 %v278, %v289
      %v302 = vadd.f32 %v279, %v289
      %v303 = vadd.f32 %v280, %v289
      %v304 = vadd.f32 %v281, %v289
      %v305 = vadd.f32 %v282, %v289
      %v306 = vadd.f32 %v283, %v289
      %v307 = vmax.f32 %v291, 0.0
      %v308 = vmax.f32 %v292, 0.0
      %v309 = vmax.f32 %v293, 0.0
      %v310 = vmax.f32 %v294, 0.0
      %v311 = vmax.f32 %v295, 0.0
      %v312 = vmax.f32 %v296, 0.0
      %v313 = vmax.f32 %v297, 0.0
      %v314 = vmax.f32 %v298, 0.0
      %v315 = vmax.f32 %v299, 0.0
      %v316 = vmax.f32 %v300, 0.0
      %v317 = vmax.f32 %v301, 0.0
      %v318 = vmax.f32 %v302, 0.0
      %v319 = vmax.f32 %v303, 0.0
      %v320 = vmax.f32 %v304, 0.0
      %v321 = vmax.f32 %v305, 0.0
      %v322 = vmax.f32 %v306, 0.0
      %v323 = vpack.c.bf16 %v308, %v307
      %v324 = vpack.c.bf16 %v310, %v309
      %v325 = vpack.c.bf16 %v312, %v311
      %v326 = vpack.c.bf16 %v314, %v313
      %v327 = vpack.c.bf16 %v316, %v315
      %v328 = vpack.c.bf16 %v318, %v317
      %v329 = vpack.c.bf16 %v320, %v319
      %v330 = vpack.c.bf16 %v322, %v321
      %v331 = vld [vmem:[%s3] sm:$0xf]
      %v332 = vld [vmem:[%s3 + $0x4] sm:$0xf]
      %v333 = vld [vmem:[%s3 + $0x8] sm:$0xf]
      %v334 = vld [vmem:[%s3 + $0xc] sm:$0xf]
      %v335 = vld [vmem:[%s4] sm:$0x1]
      %v337 = vlaneseq
      %v338 = vshrl.u32 %v337, 7
      %v339 = vsub.s32 0, %v338
      %v340 = vrot.slane %v335, %v339
      %v346 = vunpack.c.l.b16 %v331
      %v347 = vunpack.c.l.b16 %v332
      %v348 = vunpack.c.l.b16 %v333
      %v349 = vunpack.c.l.b16 %v334
      %v350 = vpack.c.b16 %v347, %v346
      %v351 = vpack.c.b16 %v349, %v348
      %vm354 = vcmask 261120
      %v356 = vsel %vm354, %v323, 0
      %v359 = vsel %vm354, %v324, 0
      %v362 = vsel %vm354, %v325, 0
      %v365 = vsel %vm354, %v326, 0
      %v368 = vsel %vm354, %v327, 0
      %v371 = vsel %vm354, %v328, 0
      %v374 = vsel %vm354, %v329, 0
      %v377 = vsel %vm354, %v330, 0
      %379 = vmatprep.subr.bf16.mxu0 0
      %380 = vmatpush1.bf16.msra.mxu0 %v350
      %381 = vmatprep.subr.bf16.mxu0 0
      %382 = vmatpush1.bf16.msra.mxu0 %v351
      %383 = vmatprep.subr.bf16.mxu0 0
      %384 = vmatpush1.bf16.msra.mxu0 0
      %385 = vmatprep.subr.bf16.mxu0 0
      %386 = vmatpush1.bf16.msra.mxu0 0
      %387 = vmatprep.subr.bf16.mxu0 0
      %388 = vmatpush1.bf16.msra.mxu0 0
      %389 = vmatprep.subr.bf16.mxu0 0
      %390 = vmatpush1.bf16.msra.mxu0 0
      %391 = vmatprep.subr.bf16.mxu0 0
      %392 = vmatpush1.bf16.msra.mxu0 0
      %393 = vmatprep.subr.bf16.mxu0 0
      %394 = vmatpush1.bf16.msra.mxu0 0
      %395 = vmatprep.subr.bf16.mxu0 0
      %396 = vmatpush1.bf16.msra.mxu0 0
      %397 = vmatprep.subr.bf16.mxu0 0
      %398 = vmatpush1.bf16.msra.mxu0 0
      %399 = vmatprep.subr.bf16.mxu0 0
      %400 = vmatpush1.bf16.msra.mxu0 0
      %401 = vmatprep.subr.bf16.mxu0 0
      %402 = vmatpush1.bf16.msra.mxu0 0
      %403 = vmatprep.subr.bf16.mxu0 0
      %404 = vmatpush1.bf16.msra.mxu0 0
      %405 = vmatprep.subr.bf16.mxu0 0
      %406 = vmatpush1.bf16.msra.mxu0 0
      %407 = vmatprep.subr.bf16.mxu0 0
      %408 = vmatpush1.bf16.msra.mxu0 0
      %409 = vmatprep.subr.bf16.mxu0 0
      %410 = vmatpush1.bf16.msra.mxu0 0
      %411 = vmatprep.mubr.bf16.mxu0 0
      %412 = vmatmul.mubr.bf16.gmra.mrb[0].mxu0 %v356
      %v413 = vpop.f32.mrb[0].mxu0
      %v414 = vadd.f32 %v340, %v413
      %v415 = vpop.f32.mrb[0].mxu0
      %v416 = vpop.f32.mrb[0].mxu0
      %v417 = vadd.f32 %v340, %v416
      %v418 = vpop.f32.mrb[0].mxu0
      %419 = vmatprep.mubr.bf16.mxu0 0
      %420 = vmatmul.mubr.bf16.gmra.mrb[0].mxu0 %v359
      %v421 = vpop.f32.mrb[0].mxu0
      %v422 = vadd.f32 %v340, %v421
      %v423 = vpop.f32.mrb[0].mxu0
      %v424 = vpop.f32.mrb[0].mxu0
      %v425 = vadd.f32 %v340, %v424
      %v426 = vpop.f32.mrb[0].mxu0
      %427 = vmatprep.mubr.bf16.mxu0 0
      %428 = vmatmul.mubr.bf16.gmra.mrb[0].mxu0 %v362
      %v429 = vpop.f32.mrb[0].mxu0
      %v430 = vadd.f32 %v340, %v429
      %v431 = vpop.f32.mrb[0].mxu0
      %v432 = vpop.f32.mrb[0].mxu0
      %v433 = vadd.f32 %v340, %v432
      %v434 = vpop.f32.mrb[0].mxu0
      %435 = vmatprep.mubr.bf16.mxu0 0
      %436 = vmatmul.mubr.bf16.gmra.mrb[0].mxu0 %v365
      %v437 = vpop.f32.mrb[0].mxu0
      %v438 = vadd.f32 %v340, %v437
      %v439 = vpop.f32.mrb[0].mxu0
      %v440 = vpop.f32.mrb[0].mxu0
      %v441 = vadd.f32 %v340, %v440
      %v442 = vpop.f32.mrb[0].mxu0
      %443 = vmatprep.mubr.bf16.mxu0 0
      %444 = vmatmul.mubr.bf16.gmra.mrb[0].mxu0 %v368
      %v445 = vpop.f32.mrb[0].mxu0
      %v446 = vadd.f32 %v340, %v445
      %v447 = vpop.f32.mrb[0].mxu0
      %v448 = vpop.f32.mrb[0].mxu0
      %v449 = vadd.f32 %v340, %v448
      %v450 = vpop.f32.mrb[0].mxu0
      %451 = vmatprep.mubr.bf16.mxu0 0
      %452 = vmatmul.mubr.bf16.gmra.mrb[0].mxu0 %v371
      %v453 = vpop.f32.mrb[0].mxu0
      %v454 = vadd.f32 %v340, %v453
      %v455 = vpop.f32.mrb[0].mxu0
      %v456 = vpop.f32.mrb[0].mxu0
      %v457 = vadd.f32 %v340, %v456
      %v458 = vpop.f32.mrb[0].mxu0
      %459 = vmatprep.mubr.bf16.mxu0 0
      %460 = vmatmul.mubr.bf16.gmra.mrb[0].mxu0 %v374
      %v461 = vpop.f32.mrb[0].mxu0
      %v462 = vadd.f32 %v340, %v461
      %v463 = vpop.f32.mrb[0].mxu0
      %v464 = vpop.f32.mrb[0].mxu0
      %v465 = vadd.f32 %v340, %v464
      %v466 = vpop.f32.mrb[0].mxu0
      %467 = vmatprep.mubr.bf16.mxu0 0
      %468 = vmatmul.mubr.bf16.gmra.mrb[0].mxu0 %v377
      %v469 = vpop.f32.mrb[0].mxu0
      %v470 = vadd.f32 %v340, %v469
      %v471 = vpop.f32.mrb[0].mxu0
      %v472 = vpop.f32.mrb[0].mxu0
      %v473 = vadd.f32 %v340, %v472
      %v474 = vpop.f32.mrb[0].mxu0
      %475 = vdwg.mxu0
      %v476 = vmax.f32 %v414, 0.0
      %v477 = vmax.f32 %v417, 0.0
      %v478 = vmax.f32 %v422, 0.0
      %v479 = vmax.f32 %v425, 0.0
      %v480 = vmax.f32 %v430, 0.0
      %v481 = vmax.f32 %v433, 0.0
      %v482 = vmax.f32 %v438, 0.0
      %v483 = vmax.f32 %v441, 0.0
      %v484 = vmax.f32 %v446, 0.0
      %v485 = vmax.f32 %v449, 0.0
      %v486 = vmax.f32 %v454, 0.0
      %v487 = vmax.f32 %v457, 0.0
      %v488 = vmax.f32 %v462, 0.0
      %v489 = vmax.f32 %v465, 0.0
      %v490 = vmax.f32 %v470, 0.0
      %v491 = vmax.f32 %v473, 0.0
      %v492 = vpack.c.bf16 %v477, %v476
      %v493 = vpack.c.bf16 %v479, %v478
      %v494 = vpack.c.bf16 %v481, %v480
      %v495 = vpack.c.bf16 %v483, %v482
      %v496 = vpack.c.bf16 %v485, %v484
      %v497 = vpack.c.bf16 %v487, %v486
      %v498 = vpack.c.bf16 %v489, %v488
      %v499 = vpack.c.bf16 %v491, %v490
      %v508 = vunpack.c.l.b16 %v492
      %v509 = vunpack.c.h.b16 %v492
      %v510 = vunpack.c.l.b16 %v493
      %v511 = vunpack.c.h.b16 %v493
      %v512 = vunpack.c.l.b16 %v494
      %v513 = vunpack.c.h.b16 %v494
      %v514 = vunpack.c.l.b16 %v495
      %v515 = vunpack.c.h.b16 %v495
      %v516 = vunpack.c.l.b16 %v496
      %v517 = vunpack.c.h.b16 %v496
      %v518 = vunpack.c.l.b16 %v497
      %v519 = vunpack.c.h.b16 %v497
      %v520 = vunpack.c.l.b16 %v498
      %v521 = vunpack.c.h.b16 %v498
      %v522 = vunpack.c.l.b16 %v499
      %v523 = vunpack.c.h.b16 %v499
      %v524 = vpack.c.b16 %v508, %v508
      %v525 = vpack.c.b16 %v509, %v509
      %v526 = vpack.c.b16 %v510, %v510
      %v527 = vpack.c.b16 %v511, %v511
      %v528 = vpack.c.b16 %v512, %v512
      %v529 = vpack.c.b16 %v513, %v513
      %v530 = vpack.c.b16 %v514, %v514
      %v531 = vpack.c.b16 %v515, %v515
      %v532 = vpack.c.b16 %v516, %v516
      %v533 = vpack.c.b16 %v517, %v517
      %v534 = vpack.c.b16 %v518, %v518
      %v535 = vpack.c.b16 %v519, %v519
      %v536 = vpack.c.b16 %v520, %v520
      %v537 = vpack.c.b16 %v521, %v521
      %v538 = vpack.c.b16 %v522, %v522
      %v539 = vpack.c.b16 %v523, %v523
      %vm556 = vcmask 257024
      %557 = vst.msk [vmem:[%s226] sm:$0xf] %vm556, %v524
      %558 = vst.msk [vmem:[%s226 + $0x4] sm:$0xf] %vm556, %v525
      %559 = vst.msk [vmem:[%s226 + $0x8] sm:$0xf] %vm556, %v526
      %560 = vst.msk [vmem:[%s226 + $0xc] sm:$0xf] %vm556, %v527
      %561 = vst.msk [vmem:[%s226 + $0x10] sm:$0xf] %vm556, %v528
      %562 = vst.msk [vmem:[%s226 + $0x14] sm:$0xf] %vm556, %v529
      %563 = vst.msk [vmem:[%s226 + $0x18] sm:$0xf] %vm556, %v530
      %564 = vst.msk [vmem:[%s226 + $0x1c] sm:$0xf] %vm556, %v531
      %565 = vst.msk [vmem:[%s226 + $0x20] sm:$0xf] %vm556, %v532
      %566 = vst.msk [vmem:[%s226 + $0x24] sm:$0xf] %vm556, %v533
      %567 = vst.msk [vmem:[%s226 + $0x28] sm:$0xf] %vm556, %v534
      %568 = vst.msk [vmem:[%s226 + $0x2c] sm:$0xf] %vm556, %v535
      %569 = vst.msk [vmem:[%s226 + $0x30] sm:$0xf] %vm556, %v536
      %570 = vst.msk [vmem:[%s226 + $0x34] sm:$0xf] %vm556, %v537
      %571 = vst.msk [vmem:[%s226 + $0x38] sm:$0xf] %vm556, %v538
      %572 = vst.msk [vmem:[%s226 + $0x3c] sm:$0xf] %vm556, %v539
      %s573 = smul.u32 16, %s16
      %p574 = scmp.lt.s32.totalorder %s573, 63
      %s575 = scalar_select %p574, %s573, 63
      %s576 = smul.addr %s575, 4
      %s577 = scalar_lea.vmem %s5, %s576
      // Predicated region
      $region41: #{densenet_forward.17} parent=39 // pred_check
        %p578 = pneg %p144
      $region42: #{densenet_forward.17} parent=39 // pred_check_branch
        %580 = sbr.rel (%p578) target = $region44
      $region43: #{densenet_forward.17} parent=39 // pred_region
        %s581 = smul.u32 16, %s16
      $region44: #{densenet_forward.17} parent=39 // pred_fallthru
        _
    $region40: #{densenet_forward.17} parent=5 // pred_fallthru
      _
    %p582 = scmp.le.s32.totalorder 2, %s11
    // Predicated region
    $region45: #{densenet_forward.17} parent=5 // pred_check
      %p583 = pneg %p582
    $region46: #{densenet_forward.17} parent=5 // pred_check_branch
      %585 = sbr.rel (%p583) target = $region48
    $region47: #{densenet_forward.17} parent=5 // pred_region
      %s586 = ssub.s32 %s11, 2
      // Predicated region
      $region49: #{densenet_forward.17} parent=47 // pred_check
        %p587 = pneg %p150
      $region50: #{densenet_forward.17} parent=47 // pred_check_branch
        %589 = sbr.rel (%p587) target = $region52
      $region51: #{densenet_forward.17} parent=47 // pred_region
        %s590 = smul.u32 16, %s17
        %p591 = scmp.lt.s32.totalorder %s590, 63
        %s592 = scalar_select %p591, %s590, 63
        %s593 = smul.addr %s592, 4
        %s594 = scalar_lea.vmem %s5, %s593
      $region52: #{densenet_forward.17} parent=47 // pred_fallthru
        _
    $region48: #{densenet_forward.17} parent=5 // pred_fallthru
      _
  $region6: #{densenet_forward.17} parent=0 // loop_footer
    %s15 = sadd.s32 1, %s11
  $region7: #{densenet_forward.17} parent=0 // loop_footer_branch
    %10 = sbr.rel target = $region3
  $region8: #{densenet_forward.17} parent=0 // loop_exit
    _

// kernel: densenet_forward.16
$region0: #{densenet_forward.16}
  #allocation0 [shape = 'u32[]', space=smem, size = 0x4, offset = 0x4, fixed_abs, tag = 'smem constant byte address 0x4 - core index']
  #allocation1 [shape = 'u32[144,128]{1,0:T(1,128)}', space=vmem, size = 0x12000, scoped, tag = 'internal scratch']
  %s0 = inlined_call_operand.vmem [shape: bf16[2,362,3], index: 0, kind: input, shape index: {}]
  %s1 = inlined_call_operand.vmem [shape: bf16[27,16], index: 1, kind: input, shape index: {}]
  %s2 = inlined_call_operand.vmem [shape: f32[1,16], index: 2, kind: input, shape index: {}]
  %s3 = inlined_call_operand.vmem [shape: bf16[2,288,16], index: 3, kind: output, shape index: {}]
  %s4 = sld [smem:[#allocation0]]
  $region45: #{densenet_forward.16} parent=0
    _
  %s6 = ssub.s32 1, %s4
  %s7 = scalar_select 0, %s6, %s4
  loop: start=0, step=1, limit=4
  $region2: #{densenet_forward.16} parent=0 // loop_pre_header
    _
  $region3: #{densenet_forward.16} parent=0 // loop_header
    %s9 = sphi 0, %s13
    %p10 = scmp.ge.s32.totalorder %s9, 4
    %s19 = sphi 0, %s21
    %s22 = sphi 0, %s19
    %s23 = sphi 0, %s22
    %s39 = sphi 0, %s23
    %s43 = sphi 0, %s43
    %s45 = sphi 0, %s43
    %s46 = sphi 0, %s45
    %s60 = sphi 0, %s46
    %s64 = sphi 0, %s64
    %s66 = sphi 0, %s64
    %s67 = sphi 0, %s66
    %s81 = sphi 0, %s67
    %s87 = sphi 0, %s89
    %s90 = sphi 0, %s87
    %s91 = sphi 0, %s90
    %s107 = sphi 0, %s91
  $region4: #{densenet_forward.16} parent=0 // loop_header_branch
    %12 = sbr.rel (%p10) target = $region8
  $region5: #{densenet_forward.16} parent=0 // loop_body
    %s14 = ssub.s32 %s9, 1
    %s15 = ssub.s32 %s9, 2
    %s16 = sadd.s32 %s9, 1
    %s17 = ssub.s32 %s9, %s16
    %p18 = scmp.eq.s32.totalorder %s17, 0
    %s20 = sadd.s32 %s19, 1
    %s21 = scalar_select %p18, %s19, %s20
    %p24 = pneg %p18
    %p25 = scmp.eq.s32.totalorder %s9, 1
    %p26 = por %p24, %p25
    %p27 = scmp.ne.s32.totalorder %s19, %s22
    %p28 = scmp.eq.s32.totalorder %s9, 0
    %p29 = por %p27, %p28
    %p30 = scmp.ne.s32.totalorder %s19, %s22
    %p31 = scmp.eq.s32.totalorder %s14, 1
    %p32 = por %p30, %p31
    %p33 = scmp.ne.s32.totalorder %s22, %s23
    %p34 = scmp.eq.s32.totalorder %s14, 0
    %p35 = por %p33, %p34
    %p36 = scmp.ne.s32.totalorder %s22, %s23
    %p37 = scmp.eq.s32.totalorder %s15, 1
    %p38 = por %p36, %p37
    %p40 = scmp.ne.s32.totalorder %s23, %s39
    %p41 = scmp.eq.s32.totalorder %s15, 0
    %p42 = por %p40, %p41
    %s44 = sadd.s32 %s43, 1
    %p47 = scmp.eq.s32.totalorder %s9, 1
    %p48 = scmp.ne.s32.totalorder %s43, %s45
    %p49 = scmp.eq.s32.totalorder %s9, 0
    %p50 = por %p48, %p49
    %p51 = scmp.ne.s32.totalorder %s43, %s45
    %p52 = scmp.eq.s32.totalorder %s14, 1
    %p53 = por %p51, %p52
    %p54 = scmp.ne.s32.totalorder %s45, %s46
    %p55 = scmp.eq.s32.totalorder %s14, 0
    %p56 = por %p54, %p55
    %p57 = scmp.ne.s32.totalorder %s45, %s46
    %p58 = scmp.eq.s32.totalorder %s15, 1
    %p59 = por %p57, %p58
    %p61 = scmp.ne.s32.totalorder %s46, %s60
    %p62 = scmp.eq.s32.totalorder %s15, 0
    %p63 = por %p61, %p62
    %s65 = sadd.s32 %s64, 1
    %p68 = scmp.eq.s32.totalorder %s9, 1
    %p69 = scmp.ne.s32.totalorder %s64, %s66
    %p70 = scmp.eq.s32.totalorder %s9, 0
    %p71 = por %p69, %p70
    %p72 = scmp.ne.s32.totalorder %s64, %s66
    %p73 = scmp.eq.s32.totalorder %s14, 1
    %p74 = por %p72, %p73
    %p75 = scmp.ne.s32.totalorder %s66, %s67
    %p76 = scmp.eq.s32.totalorder %s14, 0
    %p77 = por %p75, %p76
    %p78 = scmp.ne.s32.totalorder %s66, %s67
    %p79 = scmp.eq.s32.totalorder %s15, 1
    %p80 = por %p78, %p79
    %p82 = scmp.ne.s32.totalorder %s67, %s81
    %p83 = scmp.eq.s32.totalorder %s15, 0
    %p84 = por %p82, %p83
    %s85 = ssub.s32 %s9, %s16
    %p86 = scmp.eq.s32.totalorder %s85, 0
    %s88 = sadd.s32 %s87, 1
    %s89 = scalar_select %p86, %s87, %s88
    %p92 = pneg %p86
    %p93 = scmp.eq.s32.totalorder %s9, 1
    %p94 = por %p92, %p93
    %p95 = scmp.ne.s32.totalorder %s87, %s90
    %p96 = scmp.eq.s32.totalorder %s9, 0
    %p97 = por %p95, %p96
    %p98 = scmp.ne.s32.totalorder %s87, %s90
    %p99 = scmp.eq.s32.totalorder %s14, 1
    %p100 = por %p98, %p99
    %p101 = scmp.ne.s32.totalorder %s90, %s91
    %p102 = scmp.eq.s32.totalorder %s14, 0
    %p103 = por %p101, %p102
    %p104 = scmp.ne.s32.totalorder %s90, %s91
    %p105 = scmp.eq.s32.totalorder %s15, 1
    %p106 = por %p104, %p105
    %p108 = scmp.ne.s32.totalorder %s91, %s107
    %p109 = scmp.eq.s32.totalorder %s15, 0
    %p110 = por %p108, %p109
    %p111 = scmp.le.s32.totalorder 1, %s9
    %p112 = scmp.lt.s32.totalorder %s9, 3
    %p113 = pnand %p111, %p112
    %p114 = pneg %p113
    // Predicated region
    $region9: #{densenet_forward.16} parent=5 // pred_check
      _
    $region10: #{densenet_forward.16} parent=5 // pred_check_branch
      %116 = sbr.rel (%p113) target = $region12
    $region11: #{densenet_forward.16} parent=5 // pred_region
      %s117 = ssub.s32 %s9, 1
      // Predicated region
      $region13: #{densenet_forward.16} parent=11 // pred_check
        %p118 = pneg %p56
      $region14: #{densenet_forward.16} parent=11 // pred_check_branch
        %120 = sbr.rel (%p118) target = $region16
      $region15: #{densenet_forward.16} parent=11 // pred_region
        _
      $region16: #{densenet_forward.16} parent=11 // pred_fallthru
        _
      // Predicated region
      $region17: #{densenet_forward.16} parent=11 // pred_check
        %p121 = pneg %p77
      $region18: #{densenet_forward.16} parent=11 // pred_check_branch
        %123 = sbr.rel (%p121) target = $region20
      $region19: #{densenet_forward.16} parent=11 // pred_region
        _
      $region20: #{densenet_forward.16} parent=11 // pred_fallthru
        _
    $region12: #{densenet_forward.16} parent=5 // pred_fallthru
      _
    %p124 = scmp.lt.s32.totalorder %s9, 2
    // Predicated region
    $region21: #{densenet_forward.16} parent=5 // pred_check
      %p125 = pneg %p124
    $region22: #{densenet_forward.16} parent=5 // pred_check_branch
      %127 = sbr.rel (%p125) target = $region24
    $region23: #{densenet_forward.16} parent=5 // pred_region
      // Predicated region
      $region25: #{densenet_forward.16} parent=23 // pred_check
        %p128 = pneg %p29
      $region26: #{densenet_forward.16} parent=23 // pred_check_branch
        %130 = sbr.rel (%p128) target = $region28
      $region27: #{densenet_forward.16} parent=23 // pred_region
        %p131 = scmp.lt.s32.totalorder %s9, 1
        %s132 = scalar_select %p131, %s9, 1
        %s133 = smul.addr %s132, 46
        %s134 = smul.addr %s133, 4
        %s135 = scalar_lea.vmem %s0, %s134
      $region28: #{densenet_forward.16} parent=23 // pred_fallthru
        _
    $region24: #{densenet_forward.16} parent=5 // pred_fallthru
      _
    %p136 = scmp.le.s32.totalorder 1, %s9
    %p137 = scmp.lt.s32.totalorder %s9, 3
    %p138 = pnand %p136, %p137
    %p139 = pneg %p138
    // Predicated region
    $region29: #{densenet_forward.16} parent=5 // pred_check
      _
    $region30: #{densenet_forward.16} parent=5 // pred_check_branch
      %141 = sbr.rel (%p138) target = $region32
    $region31: #{densenet_forward.16} parent=5 // pred_region
      %s142 = ssub.s32 %s9, 1
      %p143 = scmp.lt.s32.totalorder %s14, 1
      %s144 = scalar_select %p143, %s14, 1
      %s145 = smul.addr %s144, 46
      %s146 = smul.addr %s145, 4
      %s147 = scalar_lea.vmem %s0, %s146
      %p148 = pneg %p35
      %p149 = pneg %p32
      %p150 = pneg %p56
      %p151 = pneg %p53
      %p152 = pneg %p77
      %p153 = pneg %p74
      %p154 = pneg %p103
      %p155 = pneg %p100
      %p156 = scmp.lt.s32.totalorder %s14, 1
      %s157 = scalar_select %p156, %s14, 1
      %s158 = smul.addr %s157, 36
      %s159 = smul.addr %s158, 4
      %s160 = scalar_lea.vmem %s3, %s159
      %p161 = scmp.lt.s32.totalorder %s14, 1
      %s162 = scalar_select %p161, %s14, 1
      %s163 = smul.addr %s162, 46
      %s164 = smul.addr %s163, 4
      %s165 = scalar_lea.vmem %s0, %s164
      %p166 = scmp.lt.s32.totalorder %s14, 1
      %s167 = scalar_select %p166, %s14, 1
      %s168 = smul.addr %s167, 36
      %s169 = smul.addr %s168, 4
      %s170 = scalar_lea.vmem %s3, %s169
      %v172 = vld [vmem:[%s165] sm:$0xf]
      %v173 = vld [vmem:[%s165 + $0x4] sm:$0xf]
      %v174 = vld [vmem:[%s165 + $0x8] sm:$0xf]
      %v175 = vld [vmem:[%s165 + $0xc] sm:$0xf]
      %v176 = vld [vmem:[%s165 + $0x10] sm:$0xf]
      %v177 = vld [vmem:[%s165 + $0x14] sm:$0xf]
      %v178 = vld [vmem:[%s165 + $0x18] sm:$0xf]
      %v179 = vld [vmem:[%s165 + $0x1c] sm:$0xf]
      %v180 = vld [vmem:[%s165 + $0x20] sm:$0xf]
      %v181 = vld [vmem:[%s165 + $0x24] sm:$0xf]
      %v182 = vld [vmem:[%s165 + $0x28] sm:$0xf]
      %v183 = vld [vmem:[%s165 + $0x2c] sm:$0xf]
      %v184 = vld [vmem:[%s165 + $0x30] sm:$0xf]
      %v185 = vld [vmem:[%s165 + $0x34] sm:$0xf]
      %v186 = vld [vmem:[%s165 + $0x38] sm:$0xf]
      %v187 = vld [vmem:[%s165 + $0x3c] sm:$0xf]
      %v188 = vld [vmem:[%s165 + $0x40] sm:$0xf]
      %v189 = vld [vmem:[%s165 + $0x44] sm:$0xf]
      %v190 = vld [vmem:[%s165 + $0x48] sm:$0xf]
      %v191 = vld [vmem:[%s165 + $0x4c] sm:$0xf]
      %v192 = vld [vmem:[%s165 + $0x50] sm:$0xf]
      %v193 = vld [vmem:[%s165 + $0x54] sm:$0xf]
      %v194 = vld [vmem:[%s165 + $0x58] sm:$0xf]
      %v195 = vld [vmem:[%s165 + $0x5c] sm:$0xf]
      %v196 = vld [vmem:[%s165 + $0x60] sm:$0xf]
      %v197 = vld [vmem:[%s165 + $0x64] sm:$0xf]
      %v198 = vld [vmem:[%s165 + $0x68] sm:$0xf]
      %v199 = vld [vmem:[%s165 + $0x6c] sm:$0xf]
      %v200 = vld [vmem:[%s165 + $0x70] sm:$0xf]
      %v201 = vld [vmem:[%s165 + $0x74] sm:$0xf]
      %v202 = vld [vmem:[%s165 + $0x78] sm:$0xf]
      %v203 = vld [vmem:[%s165 + $0x7c] sm:$0xf]
      %v204 = vld [vmem:[%s165 + $0x80] sm:$0xf]
      %v205 = vld [vmem:[%s165 + $0x84] sm:$0xf]
      %v206 = vld [vmem:[%s165 + $0x88] sm:$0xf]
      %v207 = vld [vmem:[%s165 + $0x8c] sm:$0xf]
      %v208 = vld [vmem:[%s165 + $0x90] sm:$0xf]
      %v209 = vld [vmem:[%s165 + $0x94] sm:$0xf]
      %v210 = vld [vmem:[%s165 + $0x98] sm:$0xf]
      %v211 = vld [vmem:[%s165 + $0x9c] sm:$0xf]
      %v212 = vld [vmem:[%s165 + $0xa0] sm:$0xf]
      %v213 = vld [vmem:[%s1] sm:$0xf]
      %v214 = vld [vmem:[%s1 + $0x4] sm:$0xf]
      %v215 = vld [vmem:[%s1 + $0x8] sm:$0xf]
      %v216 = vld [vmem:[%s1 + $0xc] sm:$0x3]
      %v254 = vunpack.c.l.b16 %v172
      %v255 = vunpack.c.l.b16 %v173
      %v256 = vunpack.c.l.b16 %v174
      %v257 = vunpack.c.l.b16 %v175
      %v258 = vunpack.c.l.b16 %v176
      %v259 = vunpack.c.l.b16 %v177
      %v260 = vunpack.c.l.b16 %v178
      %v261 = vunpack.c.l.b16 %v179
      %v262 = vunpack.c.l.b16 %v180
      %v263 = vunpack.c.l.b16 %v181
      %v264 = vunpack.c.l.b16 %v182
      %v265 = vunpack.c.l.b16 %v183
      %v266 = vunpack.c.l.b16 %v184
      %v267 = vunpack.c.l.b16 %v185
      %v268 = vunpack.c.l.b16 %v186
      %v269 = vunpack.c.l.b16 %v187
      %v270 = vunpack.c.l.b16 %v188
      %v271 = vunpack.c.l.b16 %v189
      %v272 = vunpack.c.l.b16 %v190
      %v273 = vunpack.c.l.b16 %v191
      %v274 = vunpack.c.l.b16 %v192
      %v275 = vunpack.c.l.b16 %v193
      %v276 = vunpack.c.l.b16 %v194
      %v277 = vunpack.c.l.b16 %v195
      %v278 = vunpack.c.l.b16 %v196
      %v279 = vunpack.c.l.b16 %v197
      %v280 = vunpack.c.l.b16 %v198
      %v281 = vunpack.c.l.b16 %v199
      %v282 = vunpack.c.l.b16 %v200
      %v283 = vunpack.c.l.b16 %v201
      %v284 = vunpack.c.l.b16 %v202
      %v285 = vunpack.c.l.b16 %v203
      %v286 = vunpack.c.l.b16 %v204
      %v287 = vunpack.c.l.b16 %v205
      %v288 = vunpack.c.l.b16 %v206
      %v289 = vunpack.c.l.b16 %v207
      %v290 = vunpack.c.l.b16 %v208
      %v291 = vpack.c.b16 %v255, %v254
      %v292 = vpack.c.b16 %v257, %v256
      %v293 = vpack.c.b16 %v259, %v258
      %v294 = vpack.c.b16 %v261, %v260
      %v295 = vpack.c.b16 %v263, %v262
      %v296 = vpack.c.b16 %v265, %v264
      %v297 = vpack.c.b16 %v267, %v266
      %v298 = vpack.c.b16 %v269, %v268
      %v299 = vpack.c.b16 %v271, %v270
      %v300 = vpack.c.b16 %v273, %v272
      %v301 = vpack.c.b16 %v275, %v274
      %v302 = vpack.c.b16 %v277, %v276
      %v303 = vpack.c.b16 %v279, %v278
      %v304 = vpack.c.b16 %v281, %v280
      %v305 = vpack.c.b16 %v283, %v282
      %v306 = vpack.c.b16 %v285, %v284
      %v307 = vpack.c.b16 %v287, %v286
      %v308 = vpack.c.b16 %v289, %v288
      %v309 = vpack.c.b16 %v290, %v290
      %vm310 = vsmask.f32 7424
      %v312 = vshrl.u32 %v291, 16
      %v314 = vshll.u32 %v291, 16
      %v316 = vrot.slane %v314, 1
      %v317 = vor.u32 %v312, %v316
      %v319 = vshll.u32 %v292, 16
      %v321 = vrot.slane %v319, 1
      %v322 = vsel %vm310, %v317, %v321
      %v323 = vshrl.u32 %v292, 16
      %v325 = vor.u32 %v323, %v321
      %v327 = vshll.u32 %v293, 16
      %v329 = vrot.slane %v327, 1
      %v330 = vsel %vm310, %v325, %v329
      %v331 = vshrl.u32 %v293, 16
      %v333 = vor.u32 %v331, %v329
      %v335 = vshll.u32 %v294, 16
      %v337 = vrot.slane %v335, 1
      %v338 = vsel %vm310, %v333, %v337
      %v339 = vshrl.u32 %v294, 16
      %v341 = vor.u32 %v339, %v337
      %v343 = vshll.u32 %v295, 16
      %v345 = vrot.slane %v343, 1
      %v346 = vsel %vm310, %v341, %v345
      %v347 = vshrl.u32 %v295, 16
      %v349 = vor.u32 %v347, %v345
      %v351 = vshll.u32 %v296, 16
      %v353 = vrot.slane %v351, 1
      %v354 = vsel %vm310, %v349, %v353
      %v355 = vshrl.u32 %v296, 16
      %v357 = vor.u32 %v355, %v353
      %v359 = vshll.u32 %v297, 16
      %v361 = vrot.slane %v359, 1
      %v362 = vsel %vm310, %v357, %v361
      %v363 = vshrl.u32 %v297, 16
      %v365 = vor.u32 %v363, %v361
      %v367 = vshll.u32 %v298, 16
      %v369 = vrot.slane %v367, 1
      %v370 = vsel %vm310, %v365, %v369
      %v371 = vshrl.u32 %v298, 16
      %v373 = vor.u32 %v371, %v369
      %v375 = vshll.u32 %v299, 16
      %v377 = vrot.slane %v375, 1
      %v378 = vsel %vm310, %v373, %v377
      %v379 = vshrl.u32 %v299, 16
      %v381 = vor.u32 %v379, %v377
      %v383 = vshll.u32 %v300, 16
      %v385 = vrot.slane %v383, 1
      %v386 = vsel %vm310, %v381, %v385
      %v387 = vshrl.u32 %v300, 16
      %v389 = vor.u32 %v387, %v385
      %v391 = vshll.u32 %v301, 16
      %v393 = vrot.slane %v391, 1
      %v394 = vsel %vm310, %v389, %v393
      %v395 = vshrl.u32 %v301, 16
      %v397 = vor.u32 %v395, %v393
      %v399 = vshll.u32 %v302, 16
      %v401 = vrot.slane %v399, 1
      %v402 = vsel %vm310, %v397, %v401
      %v403 = vshrl.u32 %v302, 16
      %v405 = vor.u32 %v403, %v401
      %v407 = vshll.u32 %v303, 16
      %v409 = vrot.slane %v407, 1
      %v410 = vsel %vm310, %v405, %v409
      %v411 = vshrl.u32 %v303, 16
      %v413 = vor.u32 %v411, %v409
      %v415 = vshll.u32 %v304, 16
      %v417 = vrot.slane %v415, 1
      %v418 = vsel %vm310, %v413, %v417
      %v419 = vshrl.u32 %v304, 16
      %v421 = vor.u32 %v419, %v417
      %v423 = vshll.u32 %v305, 16
      %v425 = vrot.slane %v423, 1
      %v426 = vsel %vm310, %v421, %v425
      %v427 = vshrl.u32 %v305, 16
      %v429 = vor.u32 %v427, %v425
      %v431 = vshll.u32 %v306, 16
      %v433 = vrot.slane %v431, 1
      %v434 = vsel %vm310, %v429, %v433
      %v435 = vshrl.u32 %v306, 16
      %v437 = vor.u32 %v435, %v433
      %v439 = vshll.u32 %v307, 16
      %v441 = vrot.slane %v439, 1
      %v442 = vsel %vm310, %v437, %v441
      %v443 = vshrl.u32 %v307, 16
      %v445 = vor.u32 %v443, %v441
      %v447 = vshll.u32 %v308, 16
      %v449 = vrot.slane %v447, 1
      %v450 = vsel %vm310, %v445, %v449
      %v451 = vshrl.u32 %v308, 16
      %v453 = vor.u32 %v451, %v449
      %v455 = vshll.u32 %v309, 16
      %v457 = vrot.slane %v455, 1
      %v458 = vsel %vm310, %v453, %v457
      %v460 = vunpack.c.l.b16 %v213
      %v461 = vpack.c.b16 %v460, %v460
      %v463 = vshrl.u32 %v461, 16
      %v465 = vrot.slane %v463, 1
      %v466 = vshll.u32 %v461, 16
      %v468 = vrot.slane %v466, 2
      %v469 = vor.u32 %v465, %v468
      %vm470 = vcmask 23552
      %v472 = vsel %vm470, %v322, 0
      %v475 = vsel %vm470, %v330, 0
      %v478 = vsel %vm470, %v338, 0
      %v481 = vsel %vm470, %v346, 0
      %v484 = vsel %vm470, %v354, 0
      %v487 = vsel %vm470, %v362, 0
      %v490 = vsel %vm470, %v370, 0
      %v493 = vsel %vm470, %v378, 0
      %v496 = vsel %vm470, %v386, 0
      %v499 = vsel %vm470, %v394, 0
      %v502 = vsel %vm470, %v402, 0
      %v505 = vsel %vm470, %v410, 0
      %v508 = vsel %vm470, %v418, 0
      %v511 = vsel %vm470, %v426, 0
      %v514 = vsel %vm470, %v434, 0
      %v517 = vsel %vm470, %v442, 0
      %v520 = vsel %vm470, %v450, 0
      %v523 = vsel %vm470, %v458, 0
      %vm525 = vcmask 1040384
      %vm526 = vcmask 1041408
      %v527 = vsel %vm525, 4294967295, 65535
      %v528 = vsel %vm526, %v527, 0
      %v530 = vand.u32 %v469, %v528
      %532 = vmatprep.subr.bf16.mxu0 0
      %533 = vmatpush1.bf16.msra.mxu0 %v530
      %534 = vmatprep.subr.bf16.mxu0 0
      %535 = vmatpush1.bf16.msra.mxu0 0
      %536 = vmatprep.subr.bf16.mxu0 0
      %537 = vmatpush1.bf16.msra.mxu0 0
      %538 = vmatprep.subr.bf16.mxu0 0
      %539 = vmatpush1.bf16.msra.mxu0 0
      %540 = vmatprep.subr.bf16.mxu0 0
      %541 = vmatpush1.bf16.msra.mxu0 0
      %542 = vmatprep.subr.bf16.mxu0 0
      %543 = vmatpush1.bf16.msra.mxu0 0
      %544 = vmatprep.subr.bf16.mxu0 0
      %545 = vmatpush1.bf16.msra.mxu0 0
      %546 = vmatprep.subr.bf16.mxu0 0
      %547 = vmatpush1.bf16.msra.mxu0 0
      %548 = vmatprep.subr.bf16.mxu0 0
      %549 = vmatpush1.bf16.msra.mxu0 0
      %550 = vmatprep.subr.bf16.mxu0 0
      %551 = vmatpush1.bf16.msra.mxu0 0
      %552 = vmatprep.subr.bf16.mxu0 0
      %553 = vmatpush1.bf16.msra.mxu0 0
      %554 = vmatprep.subr.bf16.mxu0 0
      %555 = vmatpush1.bf16.msra.mxu0 0
      %556 = vmatprep.subr.bf16.mxu0 0
      %557 = vmatpush1.bf16.msra.mxu0 0
      %558 = vmatprep.subr.bf16.mxu0 0
      %559 = vmatpush1.bf16.msra.mxu0 0
      %560 = vmatprep.subr.bf16.mxu0 0
      %561 = vmatpush1.bf16.msra.mxu0 0
      %562 = vmatprep.subr.bf16.mxu0 0
      %563 = vmatpush1.bf16.msra.mxu0 0
      %564 = vmatprep.mubr.bf16.mxu0 0
      %565 = vmatmul.mubr.bf16.gmra.mrb[0].mxu0 %v472
      %v566 = vpop.f32.mrb[0].mxu0
      %v567 = vadd.f32 0.0, %v566
      %v568 = vpop.f32.mrb[0].mxu0
      %v569 = vpop.f32.mrb[0].mxu0
      %v570 = vadd.f32 0.0, %v569
      %v571 = vpop.f32.mrb[0].mxu0
      %572 = vmatprep.mubr.bf16.mxu0 0
      %573 = vmatmul.mubr.bf16.gmra.mrb[0].mxu0 %v475
      %v574 = vpop.f32.mrb[0].mxu0
      %v575 = vadd.f32 0.0, %v574
      %v576 = vpop.f32.mrb[0].mxu0
      %v577 = vpop.f32.mrb[0].mxu0
      %v578 = vadd.f32 0.0, %v577
      %v579 = vpop.f32.mrb[0].mxu0
      %580 = vmatprep.mubr.bf16.mxu0 0
      %581 = vmatmul.mubr.bf16.gmra.mrb[0].mxu0 %v478
      %v582 = vpop.f32.mrb[0].mxu0
      %v583 = vadd.f32 0.0, %v582
      %v584 = vpop.f32.mrb[0].mxu0
      %v585 = vpop.f32.mrb[0].mxu0
      %v586 = vadd.f32 0.0, %v585
      %v587 = vpop.f32.mrb[0].mxu0
      %588 = vmatprep.mubr.bf16.mxu0 0
      %589 = vmatmul.mubr.bf16.gmra.mrb[0].mxu0 %v481
      %v590 = vpop.f32.mrb[0].mxu0
      %v591 = vadd.f32 0.0, %v590
      %v592 = vpop.f32.mrb[0].mxu0
      %v593 = vpop.f32.mrb[0].mxu0
      %v594 = vadd.f32 0.0, %v593
      %v595 = vpop.f32.mrb[0].mxu0
      %596 = vmatprep.mubr.bf16.mxu0 0
      %597 = vmatmul.mubr.bf16.gmra.mrb[0].mxu0 %v484
      %v598 = vpop.f32.mrb[0].mxu0
      %v599 = vadd.f32 0.0, %v598
      %v600 = vpop.f32.mrb[0].mxu0
      %v601 = vpop.f32.mrb[0].mxu0
      %v602 = vadd.f32 0.0, %v601
      %v603 = vpop.f32.mrb[0].mxu0
      %604 = vmatprep.mubr.bf16.mxu0 0
      %605 = vmatmul.mubr.bf16.gmra.mrb[0].mxu0 %v487
      %v606 = vpop.f32.mrb[0].mxu0
      %v607 = vadd.f32 0.0, %v606
      %v608 = vpop.f32.mrb[0].mxu0
      %v609 = vpop.f32.mrb[0].mxu0
      %v610 = vadd.f32 0.0, %v609
      %v611 = vpop.f32.mrb[0].mxu0
      %612 = vmatprep.mubr.bf16.mxu0 0
      %613 = vmatmul.mubr.bf16.gmra.mrb[0].mxu0 %v490
      %v614 = vpop.f32.mrb[0].mxu0
      %v615 = vadd.f32 0.0, %v614
      %v616 = vpop.f32.mrb[0].mxu0
      %v617 = vpop.f32.mrb[0].mxu0
      %v618 = vadd.f32 0.0, %v617
      %v619 = vpop.f32.mrb[0].mxu0
      %620 = vmatprep.mubr.bf16.mxu0 0
      %621 = vmatmul.mubr.bf16.gmra.mrb[0].mxu0 %v493
      %v622 = vpop.f32.mrb[0].mxu0
      %v623 = vadd.f32 0.0, %v622
      %v624 = vpop.f32.mrb[0].mxu0
      %v625 = vpop.f32.mrb[0].mxu0
      %v626 = vadd.f32 0.0, %v625
      %v627 = vpop.f32.mrb[0].mxu0
      %628 = vmatprep.mubr.bf16.mxu0 0
      %629 = vmatmul.mubr.bf16.gmra.mrb[0].mxu0 %v496
      %v630 = vpop.f32.mrb[0].mxu0
      %v631 = vadd.f32 0.0, %v630
      %v632 = vpop.f32.mrb[0].mxu0
      %v633 = vpop.f32.mrb[0].mxu0
      %v634 = vadd.f32 0.0, %v633
      %v635 = vpop.f32.mrb[0].mxu0
      %636 = vmatprep.mubr.bf16.mxu0 0
      %637 = vmatmul.mubr.bf16.gmra.mrb[0].mxu0 %v499
      %v638 = vpop.f32.mrb[0].mxu0
      %v639 = vadd.f32 0.0, %v638
      %v640 = vpop.f32.mrb[0].mxu0
      %v641 = vpop.f32.mrb[0].mxu0
      %v642 = vadd.f32 0.0, %v641
      %v643 = vpop.f32.mrb[0].mxu0
      %644 = vmatprep.mubr.bf16.mxu0 0
      %645 = vmatmul.mubr.bf16.gmra.mrb[0].mxu0 %v502
      %v646 = vpop.f32.mrb[0].mxu0
      %v647 = vadd.f32 0.0, %v646
      %v648 = vpop.f32.mrb[0].mxu0
      %v649 = vpop.f32.mrb[0].mxu0
      %v650 = vadd.f32 0.0, %v649
      %v651 = vpop.f32.mrb[0].mxu0
      %652 = vmatprep.mubr.bf16.mxu0 0
      %653 = vmatmul.mubr.bf16.gmra.mrb[0].mxu0 %v505
      %v654 = vpop.f32.mrb[0].mxu0
      %v655 = vadd.f32 0.0, %v654
      %v656 = vpop.f32.mrb[0].mxu0
      %v657 = vpop.f32.mrb[0].mxu0
      %v658 = vadd.f32 0.0, %v657
      %v659 = vpop.f32.mrb[0].mxu0
      %660 = vmatprep.mubr.bf16.mxu0 0
      %661 = vmatmul.mubr.bf16.gmra.mrb[0].mxu0 %v508
      %v662 = vpop.f32.mrb[0].mxu0
      %v663 = vadd.f32 0.0, %v662
      %v664 = vpop.f32.mrb[0].mxu0
      %v665 = vpop.f32.mrb[0].mxu0
      %v666 = vadd.f32 0.0, %v665
      %v667 = vpop.f32.mrb[0].mxu0
      %668 = vmatprep.mubr.bf16.mxu0 0
      %669 = vmatmul.mubr.bf16.gmra.mrb[0].mxu0 %v511
      %v670 = vpop.f32.mrb[0].mxu0
      %v671 = vadd.f32 0.0, %v670
      %v672 = vpop.f32.mrb[0].mxu0
      %v673 = vpop.f32.mrb[0].mxu0
      %v674 = vadd.f32 0.0, %v673
      %v675 = vpop.f32.mrb[0].mxu0
      %676 = vmatprep.mubr.bf16.mxu0 0
      %677 = vmatmul.mubr.bf16.gmra.mrb[0].mxu0 %v514
      %v678 = vpop.f32.mrb[0].mxu0
      %v679 = vadd.f32 0.0, %v678
      %v680 = vpop.f32.mrb[0].mxu0
      %v681 = vpop.f32.mrb[0].mxu0
      %v682 = vadd.f32 0.0, %v681
      %v683 = vpop.f32.mrb[0].mxu0
      %684 = vmatprep.mubr.bf16.mxu0 0
      %685 = vmatmul.mubr.bf16.gmra.mrb[0].mxu0 %v517
      %v686 = vpop.f32.mrb[0].mxu0
      %v687 = vadd.f32 0.0, %v686
      %v688 = vpop.f32.mrb[0].mxu0
      %v689 = vpop.f32.mrb[0].mxu0
      %v690 = vadd.f32 0.0, %v689
      %v691 = vpop.f32.mrb[0].mxu0
      %692 = vmatprep.mubr.bf16.mxu0 0
      %693 = vmatmul.mubr.bf16.gmra.mrb[0].mxu0 %v520
      %v694 = vpop.f32.mrb[0].mxu0
      %v695 = vadd.f32 0.0, %v694
      %v696 = vpop.f32.mrb[0].mxu0
      %v697 = vpop.f32.mrb[0].mxu0
      %v698 = vadd.f32 0.0, %v697
      %v699 = vpop.f32.mrb[0].mxu0
      %700 = vmatprep.mubr.bf16.mxu0 0
      %701 = vmatmul.mubr.bf16.gmra.mrb[0].mxu0 %v523
      %v702 = vpop.f32.mrb[0].mxu0
      %v703 = vadd.f32 0.0, %v702
      %v704 = vpop.f32.mrb[0].mxu0
      %v705 = vpop.f32.mrb[0].mxu0
      %v706 = vadd.f32 0.0, %v705
      %v707 = vpop.f32.mrb[0].mxu0
      %708 = vdwg.mxu0
      %v709 = vsel %vm470, %v291, 0
      %v711 = vsel %vm470, %v292, 0
      %v713 = vsel %vm470, %v293, 0
      %v715 = vsel %vm470, %v294, 0
      %v717 = vsel %vm470, %v295, 0
      %v719 = vsel %vm470, %v296, 0
      %v721 = vsel %vm470, %v297, 0
      %v723 = vsel %vm470, %v298, 0
      %v725 = vsel %vm470, %v299, 0
      %v727 = vsel %vm470, %v300, 0
      %v729 = vsel %vm470, %v301, 0
      %v731 = vsel %vm470, %v302, 0
      %v733 = vsel %vm470, %v303, 0
      %v735 = vsel %vm470, %v304, 0
      %v737 = vsel %vm470, %v305, 0
      %v739 = vsel %vm470, %v306, 0
      %v741 = vsel %vm470, %v307, 0
      %v743 = vsel %vm470, %v308, 0
      %v746 = vand.u32 %v213, %v528
      %748 = vmatprep.subr.bf16.mxu0 0
      %749 = vmatpush1.bf16.msra.mxu0 %v746
      %750 = vmatprep.subr.bf16.mxu0 0
      %751 = vmatpush1.bf16.msra.mxu0 0
      %752 = vmatprep.subr.bf16.mxu0 0
      %753 = vmatpush1.bf16.msra.mxu0 0
      %754 = vmatprep.subr.bf16.mxu0 0
      %755 = vmatpush1.bf16.msra.mxu0 0
      %756 = vmatprep.subr.bf16.mxu0 0
      %757 = vmatpush1.bf16.msra.mxu0 0
      %758 = vmatprep.subr.bf16.mxu0 0
      %759 = vmatpush1.bf16.msra.mxu0 0
      %760 = vmatprep.subr.bf16.mxu0 0
      %761 = vmatpush1.bf16.msra.mxu0 0
      %762 = vmatprep.subr.bf16.mxu0 0
      %763 = vmatpush1.bf16.msra.mxu0 0
      %764 = vmatprep.subr.bf16.mxu0 0
      %765 = vmatpush1.bf16.msra.mxu0 0
      %766 = vmatprep.subr.bf16.mxu0 0
      %767 = vmatpush1.bf16.msra.mxu0 0
      %768 = vmatprep.subr.bf16.mxu0 0
      %769 = vmatpush1.bf16.msra.mxu0 0
      %770 = vmatprep.subr.bf16.mxu0 0
      %771 = vmatpush1.bf16.msra.mxu0 0
      %772 = vmatprep.subr.bf16.mxu0 0
      %773 = vmatpush1.bf16.msra.mxu0 0
      %774 = vmatprep.subr.bf16.mxu0 0
      %775 = vmatpush1.bf16.msra.mxu0 0
      %776 = vmatprep.subr.bf16.mxu0 0
      %777 = vmatpush1.bf16.msra.mxu0 0
      %778 = vmatprep.subr.bf16.mxu0 0
      %779 = vmatpush1.bf16.msra.mxu0 0
      %780 = vmatprep.mubr.bf16.mxu0 0
      %781 = vmatmul.mubr.bf16.gmra.mrb[0].mxu0 %v709
      %v782 = vpop.f32.mrb[0].mxu0
      %v783 = vadd.f32 %v567, %v782
      %v784 = vpop.f32.mrb[0].mxu0
      %v785 = vpop.f32.mrb[0].mxu0
      %v786 = vadd.f32 %v570, %v785
      %v787 = vpop.f32.mrb[0].mxu0
      %788 = vmatprep.mubr.bf16.mxu0 0
      %789 = vmatmul.mubr.bf16.gmra.mrb[0].mxu0 %v711
      %v790 = vpop.f32.mrb[0].mxu0
      %v791 = vadd.f32 %v575, %v790
      %v792 = vpop.f32.mrb[0].mxu0
      %v793 = vpop.f32.mrb[0].mxu0
      %v794 = vadd.f32 %v578, %v793
      %v795 = vpop.f32.mrb[0].mxu0
      %796 = vmatprep.mubr.bf16.mxu0 0
      %797 = vmatmul.mubr.bf16.gmra.mrb[0].mxu0 %v713
      %v798 = vpop.f32.mrb[0].mxu0
      %v799 = vadd.f32 %v583, %v798
      %v800 = vpop.f32.mrb[0].mxu0
      %v801 = vpop.f32.mrb[0].mxu0
      %v802 = vadd.f32 %v586, %v801
      %v803 = vpop.f32.mrb[0].mxu0
      %804 = vmatprep.mubr.bf16.mxu0 0
      %805 = vmatmul.mubr.bf16.gmra.mrb[0].mxu0 %v715
      %v806 = vpop.f32.mrb[0].mxu0
      %v807 = vadd.f32 %v591, %v806
      %v808 = vpop.f32.mrb[0].mxu0
      %v809 = vpop.f32.mrb[0].mxu0
      %v810 = vadd.f32 %v594, %v809
      %v811 = vpop.f32.mrb[0].mxu0
      %812 = vmatprep.mubr.bf16.mxu0 0
      %813 = vmatmul.mubr.bf16.gmra.mrb[0].mxu0 %v717
      %v814 = vpop.f32.mrb[0].mxu0
      %v815 = vadd.f32 %v599, %v814
      %v816 = vpop.f32.mrb[0].mxu0
      %v817 = vpop.f32.mrb[0].mxu0
      %v818 = vadd.f32 %v602, %v817
      %v819 = vpop.f32.mrb[0].mxu0
      %820 = vmatprep.mubr.bf16.mxu0 0
      %821 = vmatmul.mubr.bf16.gmra.mrb[0].mxu0 %v719
      %v822 = vpop.f32.mrb[0].mxu0
      %v823 = vadd.f32 %v607, %v822
      %v824 = vpop.f32.mrb[0].mxu0
      %v825 = vpop.f32.mrb[0].mxu0
      %v826 = vadd.f32 %v610, %v825
      %v827 = vpop.f32.mrb[0].mxu0
      %828 = vmatprep.mubr.bf16.mxu0 0
      %829 = vmatmul.mubr.bf16.gmra.mrb[0].mxu0 %v721
      %v830 = vpop.f32.mrb[0].mxu0
      %v831 = vadd.f32 %v615, %v830
      %v832 = vpop.f32.mrb[0].mxu0
      %v833 = vpop.f32.mrb[0].mxu0
      %v834 = vadd.f32 %v618, %v833
      %v835 = vpop.f32.mrb[0].mxu0
      %836 = vmatprep.mubr.bf16.mxu0 0
      %837 = vmatmul.mubr.bf16.gmra.mrb[0].mxu0 %v723
      %v838 = vpop.f32.mrb[0].mxu0
      %v839 = vadd.f32 %v623, %v838
      %v840 = vpop.f32.mrb[0].mxu0
      %v841 = vpop.f32.mrb[0].mxu0
      %v842 = vadd.f32 %v626, %v841
      %v843 = vpop.f32.mrb[0].mxu0
      %844 = vmatprep.mubr.bf16.mxu0 0
      %845 = vmatmul.mubr.bf16.gmra.mrb[0].mxu0 %v725
      %v846 = vpop.f32.mrb[0].mxu0
      %v847 = vadd.f32 %v631, %v846
      %v848 = vpop.f32.mrb[0].mxu0
      %v849 = vpop.f32.mrb[0].mxu0
      %v850 = vadd.f32 %v634, %v849
      %v851 = vpop.f32.mrb[0].mxu0
      %852 = vmatprep.mubr.bf16.mxu0 0
      %853 = vmatmul.mubr.bf16.gmra.mrb[0].mxu0 %v727
      %v854 = vpop.f32.mrb[0].mxu0
      %v855 = vadd.f32 %v639, %v854
      %v856 = vpop.f32.mrb[0].mxu0
      %v857 = vpop.f32.mrb[0].mxu0
      %v858 = vadd.f32 %v642, %v857
      %v859 = vpop.f32.mrb[0].mxu0
      %860 = vmatprep.mubr.bf16.mxu0 0
      %861 = vmatmul.mubr.bf16.gmra.mrb[0].mxu0 %v729
      %v862 = vpop.f32.mrb[0].mxu0
      %v863 = vadd.f32 %v647, %v862
      %v864 = vpop.f32.mrb[0].mxu0
      %v865 = vpop.f32.mrb[0].mxu0
      %v866 = vadd.f32 %v650, %v865
      %v867 = vpop.f32.mrb[0].mxu0
      %868 = vmatprep.mubr.bf16.mxu0 0
      %869 = vmatmul.mubr.bf16.gmra.mrb[0].mxu0 %v731
      %v870 = vpop.f32.mrb[0].mxu0
      %v871 = vadd.f32 %v655, %v870
      %v872 = vpop.f32.mrb[0].mxu0
      %v873 = vpop.f32.mrb[0].mxu0
      %v874 = vadd.f32 %v658, %v873
      %v875 = vpop.f32.mrb[0].mxu0
      %876 = vmatprep.mubr.bf16.mxu0 0
      %877 = vmatmul.mubr.bf16.gmra.mrb[0].mxu0 %v733
      %v878 = vpop.f32.mrb[0].mxu0
      %v879 = vadd.f32 %v663, %v878
      %v880 = vpop.f32.mrb[0].mxu0
      %v881 = vpop.f32.mrb[0].mxu0
      %v882 = vadd.f32 %v666, %v881
      %v883 = vpop.f32.mrb[0].mxu0
      %884 = vmatprep.mubr.bf16.mxu0 0
      %885 = vmatmul.mubr.bf16.gmra.mrb[0].mxu0 %v735
      %v886 = vpop.f32.mrb[0].mxu0
      %v887 = vadd.f32 %v671, %v886
      %v888 = vpop.f32.mrb[0].mxu0
      %v889 = vpop.f32.mrb[0].mxu0
      %v890 = vadd.f32 %v674, %v889
      %v891 = vpop.f32.mrb[0].mxu0
      %892 = vmatprep.mubr.bf16.mxu0 0
      %893 = vmatmul.mubr.bf16.gmra.mrb[0].mxu0 %v737
      %v894 = vpop.f32.mrb[0].mxu0
      %v895 = vadd.f32 %v679, %v894
      %v896 = vpop.f32.mrb[0].mxu0
      %v897 = vpop.f32.mrb[0].mxu0
      %v898 = vadd.f32 %v682, %v897
      %v899 = vpop.f32.mrb[0].mxu0
      %900 = vmatprep.mubr.bf16.mxu0 0
      %901 = vmatmul.mubr.bf16.gmra.mrb[0].mxu0 %v739
      %v902 = vpop.f32.mrb[0].mxu0
      %v903 = vadd.f32 %v687, %v902
      %v904 = vpop.f32.mrb[0].mxu0
      %v905 = vpop.f32.mrb[0].mxu0
      %v906 = vadd.f32 %v690, %v905
      %v907 = vpop.f32.mrb[0].mxu0
      %908 = vmatprep.mubr.bf16.mxu0 0
      %909 = vmatmul.mubr.bf16.gmra.mrb[0].mxu0 %v741
      %v910 = vpop.f32.mrb[0].mxu0
      %v911 = vadd.f32 %v695, %v910
      %v912 = vpop.f32.mrb[0].mxu0
      %v913 = vpop.f32.mrb[0].mxu0
      %v914 = vadd.f32 %v698, %v913
      %v915 = vpop.f32.mrb[0].mxu0
      %916 = vmatprep.mubr.bf16.mxu0 0
      %917 = vmatmul.mubr.bf16.gmra.mrb[0].mxu0 %v743
      %v918 = vpop.f32.mrb[0].mxu0
      %v919 = vadd.f32 %v703, %v918
      %v920 = vpop.f32.mrb[0].mxu0
      %v921 = vpop.f32.mrb[0].mxu0
      %v922 = vadd.f32 %v706, %v921
      %v923 = vpop.f32.mrb[0].mxu0
      %924 = vdwg.mxu0
      %vm925 = vcmask 1046528
      %v926 = vrot.slane %v291, 1
      %v927 = vrot.slane %v292, 1
      %v928 = vsel %vm925, %v926, %v927
      %v929 = vrot.slane %v293, 1
      %v930 = vsel %vm925, %v927, %v929
      %v931 = vrot.slane %v294, 1
      %v932 = vsel %vm925, %v929, %v931
      %v933 = vrot.slane %v295, 1
      %v934 = vsel %vm925, %v931, %v933
      %v935 = vrot.slane %v296, 1
      %v936 = vsel %vm925, %v933, %v935
      %v937 = vrot.slane %v297, 1
      %v938 = vsel %vm925, %v935, %v937
      %v939 = vrot.slane %v298, 1
      %v940 = vsel %vm925, %v937, %v939
      %v941 = vrot.slane %v299, 1
      %v942 = vsel %vm925, %v939, %v941
      %v943 = vrot.slane %v300, 1
      %v944 = vsel %vm925, %v941, %v943
      %v945 = vrot.slane %v301, 1
      %v946 = vsel %vm925, %v943, %v945
      %v947 = vrot.slane %v302, 1
      %v948 = vsel %vm925, %v945, %v947
      %v949 = vrot.slane %v303, 1
      %v950 = vsel %vm925, %v947, %v949
      %v951 = vrot.slane %v304, 1
      %v952 = vsel %vm925, %v949, %v951
      %v953 = vrot.slane %v305, 1
      %v954 = vsel %vm925, %v951, %v953
      %v955 = vrot.slane %v306, 1
      %v956 = vsel %vm925, %v953, %v955
      %v957 = vrot.slane %v307, 1
      %v958 = vsel %vm925, %v955, %v957
      %v959 = vrot.slane %v308, 1
      %v960 = vsel %vm925, %v957, %v959
      %v961 = vrot.slane %v309, 1
      %v962 = vsel %vm925, %v959, %v961
      %v964 = vunpack.c.l.b16 %v214
      %v965 = vpack.c.b16 %v964, %v460
      %v966 = vrot.slane %v965, 3
      %v968 = vsel %vm470, %v928, 0
      %v971 = vsel %vm470, %v930, 0
      %v974 = vsel %vm470, %v932, 0
      %v977 = vsel %vm470, %v934, 0
      %v980 = vsel %vm470, %v936, 0
      %v983 = vsel %vm470, %v938, 0
      %v986 = vsel %vm470, %v940, 0
      %v989 = vsel %vm470, %v942, 0
      %v992 = vsel %vm470, %v944, 0
      %v995 = vsel %vm470, %v946, 0
      %v998 = vsel %vm470, %v948, 0
      %v1001 = vsel %vm470, %v950, 0
      %v1004 = vsel %vm470, %v952, 0
      %v1007 = vsel %vm470, %v954, 0
      %v1010 = vsel %vm470, %v956, 0
      %v1013 = vsel %vm470, %v958, 0
      %v1016 = vsel %vm470, %v960, 0
      %v1019 = vsel %vm470, %v962, 0
      %v1022 = vand.u32 %v966, %v528
      %1024 = vmatprep.subr.bf16.mxu0 0
      %1025 = vmatpush1.bf16.msra.mxu0 %v1022
      %1026 = vmatprep.subr.bf16.mxu0 0
      %1027 = vmatpush1.bf16.msra.mxu0 0
      %1028 = vmatprep.subr.bf16.mxu0 0
      %1029 = vmatpush1.bf16.msra.mxu0 0
      %1030 = vmatprep.subr.bf16.mxu0 0
      %1031 = vmatpush1.bf16.msra.mxu0 0
      %1032 = vmatprep.subr.bf16.mxu0 0
      %1033 = vmatpush1.bf16.msra.mxu0 0
      %1034 = vmatprep.subr.bf16.mxu0 0
      %1035 = vmatpush1.bf16.msra.mxu0 0
      %1036 = vmatprep.subr.bf16.mxu0 0
      %1037 = vmatpush1.bf16.msra.mxu0 0
      %1038 = vmatprep.subr.bf16.mxu0 0
      %1039 = vmatpush1.bf16.msra.mxu0 0
      %1040 = vmatprep.subr.bf16.mxu0 0
      %1041 = vmatpush1.bf16.msra.mxu0 0
      %1042 = vmatprep.subr.bf16.mxu0 0
      %1043 = vmatpush1.bf16.msra.mxu0 0
      %1044 = vmatprep.subr.bf16.mxu0 0
      %1045 = vmatpush1.bf16.msra.mxu0 0
      %1046 = vmatprep.subr.bf16.mxu0 0
      %1047 = vmatpush1.bf16.msra.mxu0 0
      %1048 = vmatprep.subr.bf16.mxu0 0
      %1049 = vmatpush1.bf16.msra.mxu0 0
      %1050 = vmatprep.subr.bf16.mxu0 0
      %1051 = vmatpush1.bf16.msra.mxu0 0
      %1052 = vmatprep.subr.bf16.mxu0 0
      %1053 = vmatpush1.bf16.msra.mxu0 0
      %1054 = vmatprep.subr.bf16.mxu0 0
      %1055 = vmatpush1.bf16.msra.mxu0 0
      %1056 = vmatprep.mubr.bf16.mxu0 0
      %1057 = vmatmul.mubr.bf16.gmra.mrb[0].mxu0 %v968
      %v1058 = vpop.f32.mrb[0].mxu0
      %v1059 = vadd.f32 0.0, %v1058
      %v1060 = vpop.f32.mrb[0].mxu0
      %v1061 = vpop.f32.mrb[0].mxu0
      %v1062 = vadd.f32 0.0, %v1061
      %v1063 = vpop.f32.mrb[0].mxu0
      %1064 = vmatprep.mubr.bf16.mxu0 0
      %1065 = vmatmul.mubr.bf16.gmra.mrb[0].mxu0 %v971
      %v1066 = vpop.f32.mrb[0].mxu0
      %v1067 = vadd.f32 0.0, %v1066
      %v1068 = vpop.f32.mrb[0].mxu0
      %v1069 = vpop.f32.mrb[0].mxu0
      %v1070 = vadd.f32 0.0, %v1069
      %v1071 = vpop.f32.mrb[0].mxu0
      %1072 = vmatprep.mubr.bf16.mxu0 0
      %1073 = vmatmul.mubr.bf16.gmra.mrb[0].mxu0 %v974
      %v1074 = vpop.f32.mrb[0].mxu0
      %v1075 = vadd.f32 0.0, %v1074
      %v1076 = vpop.f32.mrb[0].mxu0
      %v1077 = vpop.f32.mrb[0].mxu0
      %v1078 = vadd.f32 0.0, %v1077
      %v1079 = vpop.f32.mrb[0].mxu0
      %1080 = vmatprep.mubr.bf16.mxu0 0
      %1081 = vmatmul.mubr.bf16.gmra.mrb[0].mxu0 %v977
      %v1082 = vpop.f32.mrb[0].mxu0
      %v1083 = vadd.f32 0.0, %v1082
      %v1084 = vpop.f32.mrb[0].mxu0
      %v1085 = vpop.f32.mrb[0].mxu0
      %v1086 = vadd.f32 0.0, %v1085
      %v1087 = vpop.f32.mrb[0].mxu0
      %1088 = vmatprep.mubr.bf16.mxu0 0
      %1089 = vmatmul.mubr.bf16.gmra.mrb[0].mxu0 %v980
      %v1090 = vpop.f32.mrb[0].mxu0
      %v1091 = vadd.f32 0.0, %v1090
      %v1092 = vpop.f32.mrb[0].mxu0
      %v1093 = vpop.f32.mrb[0].mxu0
      %v1094 = vadd.f32 0.0, %v1093
      %v1095 = vpop.f32.mrb[0].mxu0
      %1096 = vmatprep.mubr.bf16.mxu0 0
      %1097 = vmatmul.mubr.bf16.gmra.mrb[0].mxu0 %v983
      %v1098 = vpop.f32.mrb[0].mxu0
      %v1099 = vadd.f32 0.0, %v1098
      %v1100 = vpop.f32.mrb[0].mxu0
      %v1101 = vpop.f32.mrb[0].mxu0
      %v1102 = vadd.f32 0.0, %v1101
      %v1103 = vpop.f32.mrb[0].mxu0
      %1104 = vmatprep.mubr.bf16.mxu0 0
      %1105 = vmatmul.mubr.bf16.gmra.mrb[0].mxu0 %v986
      %v1106 = vpop.f32.mrb[0].mxu0
      %v1107 = vadd.f32 0.0, %v1106
      %v1108 = vpop.f32.mrb[0].mxu0
      %v1109 = vpop.f32.mrb[0].mxu0
      %v1110 = vadd.f32 0.0, %v1109
      %v1111 = vpop.f32.mrb[0].mxu0
      %1112 = vmatprep.mubr.bf16.mxu0 0
      %1113 = vmatmul.mubr.bf16.gmra.mrb[0].mxu0 %v989
      %v1114 = vpop.f32.mrb[0].mxu0
      %v1115 = vadd.f32 0.0, %v1114
      %v1116 = vpop.f32.mrb[0].mxu0
      %v1117 = vpop.f32.mrb[0].mxu0
      %v1118 = vadd.f32 0.0, %v1117
      %v1119 = vpop.f32.mrb[0].mxu0
      %1120 = vmatprep.mubr.bf16.mxu0 0
      %1121 = vmatmul.mubr.bf16.gmra.mrb[0].mxu0 %v992
      %v1122 = vpop.f32.mrb[0].mxu0
      %v1123 = vadd.f32 0.0, %v1122
      %v1124 = vpop.f32.mrb[0].mxu0
      %v1125 = vpop.f32.mrb[0].mxu0
      %v1126 = vadd.f32 0.0, %v1125
      %v1127 = vpop.f32.mrb[0].mxu0
      %1128 = vmatprep.mubr.bf16.mxu0 0
      %1129 = vmatmul.mubr.bf16.gmra.mrb[0].mxu0 %v995
      %v1130 = vpop.f32.mrb[0].mxu0
      %v1131 = vadd.f32 0.0, %v1130
      %v1132 = vpop.f32.mrb[0].mxu0
      %v1133 = vpop.f32.mrb[0].mxu0
      %v1134 = vadd.f32 0.0, %v1133
      %v1135 = vpop.f32.mrb[0].mxu0
      %1136 = vmatprep.mubr.bf16.mxu0 0
      %1137 = vmatmul.mubr.bf16.gmra.mrb[0].mxu0 %v998
      %v1138 = vpop.f32.mrb[0].mxu0
      %v1139 = vadd.f32 0.0, %v1138
      %v1140 = vpop.f32.mrb[0].mxu0
      %v1141 = vpop.f32.mrb[0].mxu0
      %v1142 = vadd.f32 0.0, %v1141
      %v1143 = vpop.f32.mrb[0].mxu0
      %1144 = vmatprep.mubr.bf16.mxu0 0
      %1145 = vmatmul.mubr.bf16.gmra.mrb[0].mxu0 %v1001
      %v1146 = vpop.f32.mrb[0].mxu0
      %v1147 = vadd.f32 0.0, %v1146
      %v1148 = vpop.f32.mrb[0].mxu0
      %v1149 = vpop.f32.mrb[0].mxu0
      %v1150 = vadd.f32 0.0, %v1149
      %v1151 = vpop.f32.mrb[0].mxu0
      %1152 = vmatprep.mubr.bf16.mxu0 0
      %1153 = vmatmul.mubr.bf16.gmra.mrb[0].mxu0 %v1004
      %v1154 = vpop.f32.mrb[0].mxu0
      %v1155 = vadd.f32 0.0, %v1154
      %v1156 = vpop.f32.mrb[0].mxu0
      %v1157 = vpop.f32.mrb[0].mxu0
      %v1158 = vadd.f32 0.0, %v1157
      %v1159 = vpop.f32.mrb[0].mxu0
      %1160 = vmatprep.mubr.bf16.mxu0 0
      %1161 = vmatmul.mubr.bf16.gmra.mrb[0].mxu0 %v1007
      %v1162 = vpop.f32.mrb[0].mxu0
      %v1163 = vadd.f32 0.0, %v1162
      %v1164 = vpop.f32.mrb[0].mxu0
      %v1165 = vpop.f32.mrb[0].mxu0
      %v1166 = vadd.f32 0.0, %v1165
      %v1167 = vpop.f32.mrb[0].mxu0
      %1168 = vmatprep.mubr.bf16.mxu0 0
      %1169 = vmatmul.mubr.bf16.gmra.mrb[0].mxu0 %v1010
      %v1170 = vpop.f32.mrb[0].mxu0
      %v1171 = vadd.f32 0.0, %v1170
      %v1172 = vpop.f32.mrb[0].mxu0
      %v1173 = vpop.f32.mrb[0].mxu0
      %v1174 = vadd.f32 0.0, %v1173
      %v1175 = vpop.f32.mrb[0].mxu0
      %1176 = vmatprep.mubr.bf16.mxu0 0
      %1177 = vmatmul.mubr.bf16.gmra.mrb[0].mxu0 %v1013
      %v1178 = vpop.f32.mrb[0].mxu0
      %v1179 = vadd.f32 0.0, %v1178
      %v1180 = vpop.f32.mrb[0].mxu0
      %v1181 = vpop.f32.mrb[0].mxu0
      %v1182 = vadd.f32 0.0, %v1181
      %v1183 = vpop.f32.mrb[0].mxu0
      %1184 = vmatprep.mubr.bf16.mxu0 0
      %1185 = vmatmul.mubr.bf16.gmra.mrb[0].mxu0 %v1016
      %v1186 = vpop.f32.mrb[0].mxu0
      %v1187 = vadd.f32 0.0, %v1186
      %v1188 = vpop.f32.mrb[0].mxu0
      %v1189 = vpop.f32.mrb[0].mxu0
      %v1190 = vadd.f32 0.0, %v1189
      %v1191 = vpop.f32.mrb[0].mxu0
      %1192 = vmatprep.mubr.bf16.mxu0 0
      %1193 = vmatmul.mubr.bf16.gmra.mrb[0].mxu0 %v1019
      %v1194 = vpop.f32.mrb[0].mxu0
      %v1195 = vadd.f32 0.0, %v1194
      %v1196 = vpop.f32.mrb[0].mxu0
      %v1197 = vpop.f32.mrb[0].mxu0
      %v1198 = vadd.f32 0.0, %v1197
      %v1199 = vpop.f32.mrb[0].mxu0
      %1200 = vdwg.mxu0
      %v1201 = vadd.f32 %v783, %v1059
      %v1202 = vadd.f32 %v786, %v1062
      %v1203 = vadd.f32 %v791, %v1067
      %v1204 = vadd.f32 %v794, %v1070
      %v1205 = vadd.f32 %v799, %v1075
      %v1206 = vadd.f32 %v802, %v1078
      %v1207 = vadd.f32 %v807, %v1083
      %v1208 = vadd.f32 %v810, %v1086
      %v1209 = vadd.f32 %v815, %v1091
      %v1210 = vadd.f32 %v818, %v1094
      %v1211 = vadd.f32 %v823, %v1099
      %v1212 = vadd.f32 %v826, %v1102
      %v1213 = vadd.f32 %v831, %v1107
      %v1214 = vadd.f32 %v834, %v1110
      %v1215 = vadd.f32 %v839, %v1115
      %v1216 = vadd.f32 %v842, %v1118
      %v1217 = vadd.f32 %v847, %v1123
      %v1218 = vadd.f32 %v850, %v1126
      %v1219 = vadd.f32 %v855, %v1131
      %v1220 = vadd.f32 %v858, %v1134
      %v1221 = vadd.f32 %v863, %v1139
      %v1222 = vadd.f32 %v866, %v1142
      %v1223 = vadd.f32 %v871, %v1147
      %v1224 = vadd.f32 %v874, %v1150
      %v1225 = vadd.f32 %v879, %v1155
      %v1226 = vadd.f32 %v882, %v1158
      %v1227 = vadd.f32 %v887, %v1163
      %v1228 = vadd.f32 %v890, %v1166
      %v1229 = vadd.f32 %v895, %v1171
      %v1230 = vadd.f32 %v898, %v1174
      %v1231 = vadd.f32 %v903, %v1179
      %v1232 = vadd.f32 %v906, %v1182
      %v1233 = vadd.f32 %v911, %v1187
      %v1234 = vadd.f32 %v914, %v1190
      %v1235 = vadd.f32 %v919, %v1195
      %v1236 = vadd.f32 %v922, %v1198
      %v1239 = vunpack.c.l.b16 %v209
      %v1240 = vunpack.c.l.b16 %v210
      %v1241 = vpack.c.b16 %v1239, %v290
      %v1242 = vpack.c.b16 %v1240, %v1240
      %v1243 = vrot.slane %v1241, 1
      %v1244 = vsel %vm925, %v959, %v1243
      %v1245 = vrot.slane %v1242, 1
      %v1246 = vsel %vm925, %v1243, %v1245
      %v1247 = vpack.c.b16 %v964, %v964
      %v1249 = vshrl.u32 %v1247, 16
      %v1251 = vshll.u32 %v1247, 16
      %v1253 = vrot.slane %v1251, 1
      %v1254 = vor.u32 %v1249, %v1253
      %v1256 = vsel %vm470, %v1244, 0
      %v1259 = vsel %vm470, %v1246, 0
      %v1262 = vand.u32 %v1254, %v528
      %1264 = vmatprep.subr.bf16.mxu0 0
      %1265 = vmatpush1.bf16.msra.mxu0 %v1262
      %1266 = vmatprep.subr.bf16.mxu0 0
      %1267 = vmatpush1.bf16.msra.mxu0 0
      %1268 = vmatprep.subr.bf16.mxu0 0
      %1269 = vmatpush1.bf16.msra.mxu0 0
      %1270 = vmatprep.subr.bf16.mxu0 0
      %1271 = vmatpush1.bf16.msra.mxu0 0
      %1272 = vmatprep.subr.bf16.mxu0 0
      %1273 = vmatpush1.bf16.msra.mxu0 0
      %1274 = vmatprep.subr.bf16.mxu0 0
      %1275 = vmatpush1.bf16.msra.mxu0 0
      %1276 = vmatprep.subr.bf16.mxu0 0
      %1277 = vmatpush1.bf16.msra.mxu0 0
      %1278 = vmatprep.subr.bf16.mxu0 0
      %1279 = vmatpush1.bf16.msra.mxu0 0
      %1280 = vmatprep.subr.bf16.mxu0 0
      %1281 = vmatpush1.bf16.msra.mxu0 0
      %1282 = vmatprep.subr.bf16.mxu0 0
      %1283 = vmatpush1.bf16.msra.mxu0 0
      %1284 = vmatprep.subr.bf16.mxu0 0
      %1285 = vmatpush1.bf16.msra.mxu0 0
      %1286 = vmatprep.subr.bf16.mxu0 0
      %1287 = vmatpush1.bf16.msra.mxu0 0
      %1288 = vmatprep.subr.bf16.mxu0 0
      %1289 = vmatpush1.bf16.msra.mxu0 0
      %1290 = vmatprep.subr.bf16.mxu0 0
      %1291 = vmatpush1.bf16.msra.mxu0 0
      %1292 = vmatprep.subr.bf16.mxu0 0
      %1293 = vmatpush1.bf16.msra.mxu0 0
      %1294 = vmatprep.subr.bf16.mxu0 0
      %1295 = vmatpush1.bf16.msra.mxu0 0
      %1296 = vmatprep.mubr.bf16.mxu0 0
      %1297 = vmatmul.mubr.bf16.gmra.mrb[0].mxu0 %v971
      %v1298 = vpop.f32.mrb[0].mxu0
      %v1299 = vadd.f32 0.0, %v1298
      %v1300 = vpop.f32.mrb[0].mxu0
      %v1301 = vpop.f32.mrb[0].mxu0
      %v1302 = vadd.f32 0.0, %v1301
      %v1303 = vpop.f32.mrb[0].mxu0
      %1304 = vmatprep.mubr.bf16.mxu0 0
      %1305 = vmatmul.mubr.bf16.gmra.mrb[0].mxu0 %v974
      %v1306 = vpop.f32.mrb[0].mxu0
      %v1307 = vadd.f32 0.0, %v1306
      %v1308 = vpop.f32.mrb[0].mxu0
      %v1309 = vpop.f32.mrb[0].mxu0
      %v1310 = vadd.f32 0.0, %v1309
      %v1311 = vpop.f32.mrb[0].mxu0
      %1312 = vmatprep.mubr.bf16.mxu0 0
      %1313 = vmatmul.mubr.bf16.gmra.mrb[0].mxu0 %v977
      %v1314 = vpop.f32.mrb[0].mxu0
      %v1315 = vadd.f32 0.0, %v1314
      %v1316 = vpop.f32.mrb[0].mxu0
      %v1317 = vpop.f32.mrb[0].mxu0
      %v1318 = vadd.f32 0.0, %v1317
      %v1319 = vpop.f32.mrb[0].mxu0
      %1320 = vmatprep.mubr.bf16.mxu0 0
      %1321 = vmatmul.mubr.bf16.gmra.mrb[0].mxu0 %v980
      %v1322 = vpop.f32.mrb[0].mxu0
      %v1323 = vadd.f32 0.0, %v1322
      %v1324 = vpop.f32.mrb[0].mxu0
      %v1325 = vpop.f32.mrb[0].mxu0
      %v1326 = vadd.f32 0.0, %v1325
      %v1327 = vpop.f32.mrb[0].mxu0
      %1328 = vmatprep.mubr.bf16.mxu0 0
      %1329 = vmatmul.mubr.bf16.gmra.mrb[0].mxu0 %v983
      %v1330 = vpop.f32.mrb[0].mxu0
      %v1331 = vadd.f32 0.0, %v1330
      %v1332 = vpop.f32.mrb[0].mxu0
      %v1333 = vpop.f32.mrb[0].mxu0
      %v1334 = vadd.f32 0.0, %v1333
      %v1335 = vpop.f32.mrb[0].mxu0
      %1336 = vmatprep.mubr.bf16.mxu0 0
      %1337 = vmatmul.mubr.bf16.gmra.mrb[0].mxu0 %v986
      %v1338 = vpop.f32.mrb[0].mxu0
      %v1339 = vadd.f32 0.0, %v1338
      %v1340 = vpop.f32.mrb[0].mxu0
      %v1341 = vpop.f32.mrb[0].mxu0
      %v1342 = vadd.f32 0.0, %v1341
      %v1343 = vpop.f32.mrb[0].mxu0
      %1344 = vmatprep.mubr.bf16.mxu0 0
      %1345 = vmatmul.mubr.bf16.gmra.mrb[0].mxu0 %v989
      %v1346 = vpop.f32.mrb[0].mxu0
      %v1347 = vadd.f32 0.0, %v1346
      %v1348 = vpop.f32.mrb[0].mxu0
      %v1349 = vpop.f32.mrb[0].mxu0
      %v1350 = vadd.f32 0.0, %v1349
      %v1351 = vpop.f32.mrb[0].mxu0
      %1352 = vmatprep.mubr.bf16.mxu0 0
      %1353 = vmatmul.mubr.bf16.gmra.mrb[0].mxu0 %v992
      %v1354 = vpop.f32.mrb[0].mxu0
      %v1355 = vadd.f32 0.0, %v1354
      %v1356 = vpop.f32.mrb[0].mxu0
      %v1357 = vpop.f32.mrb[0].mxu0
      %v1358 = vadd.f32 0.0, %v1357
      %v1359 = vpop.f32.mrb[0].mxu0
      %1360 = vmatprep.mubr.bf16.mxu0 0
      %1361 = vmatmul.mubr.bf16.gmra.mrb[0].mxu0 %v995
      %v1362 = vpop.f32.mrb[0].mxu0
      %v1363 = vadd.f32 0.0, %v1362
      %v1364 = vpop.f32.mrb[0].mxu0
      %v1365 = vpop.f32.mrb[0].mxu0
      %v1366 = vadd.f32 0.0, %v1365
      %v1367 = vpop.f32.mrb[0].mxu0
      %1368 = vmatprep.mubr.bf16.mxu0 0
      %1369 = vmatmul.mubr.bf16.gmra.mrb[0].mxu0 %v998
      %v1370 = vpop.f32.mrb[0].mxu0
      %v1371 = vadd.f32 0.0, %v1370
      %v1372 = vpop.f32.mrb[0].mxu0
      %v1373 = vpop.f32.mrb[0].mxu0
      %v1374 = vadd.f32 0.0, %v1373
      %v1375 = vpop.f32.mrb[0].mxu0
      %1376 = vmatprep.mubr.bf16.mxu0 0
      %1377 = vmatmul.mubr.bf16.gmra.mrb[0].mxu0 %v1001
      %v1378 = vpop.f32.mrb[0].mxu0
      %v1379 = vadd.f32 0.0, %v1378
      %v1380 = vpop.f32.mrb[0].mxu0
      %v1381 = vpop.f32.mrb[0].mxu0
      %v1382 = vadd.f32 0.0, %v1381
      %v1383 = vpop.f32.mrb[0].mxu0
      %1384 = vmatprep.mubr.bf16.mxu0 0
      %1385 = vmatmul.mubr.bf16.gmra.mrb[0].mxu0 %v1004
      %v1386 = vpop.f32.mrb[0].mxu0
      %v1387 = vadd.f32 0.0, %v1386
      %v1388 = vpop.f32.mrb[0].mxu0
      %v1389 = vpop.f32.mrb[0].mxu0
      %v1390 = vadd.f32 0.0, %v1389
      %v1391 = vpop.f32.mrb[0].mxu0
      %1392 = vmatprep.mubr.bf16.mxu0 0
      %1393 = vmatmul.mubr.bf16.gmra.mrb[0].mxu0 %v1007
      %v1394 = vpop.f32.mrb[0].mxu0
      %v1395 = vadd.f32 0.0, %v1394
      %v1396 = vpop.f32.mrb[0].mxu0
      %v1397 = vpop.f32.mrb[0].mxu0
      %v1398 = vadd.f32 0.0, %v1397
      %v1399 = vpop.f32.mrb[0].mxu0
      %1400 = vmatprep.mubr.bf16.mxu0 0
      %1401 = vmatmul.mubr.bf16.gmra.mrb[0].mxu0 %v1010
      %v1402 = vpop.f32.mrb[0].mxu0
      %v1403 = vadd.f32 0.0, %v1402
      %v1404 = vpop.f32.mrb[0].mxu0
      %v1405 = vpop.f32.mrb[0].mxu0
      %v1406 = vadd.f32 0.0, %v1405
      %v1407 = vpop.f32.mrb[0].mxu0
      %1408 = vmatprep.mubr.bf16.mxu0 0
      %1409 = vmatmul.mubr.bf16.gmra.mrb[0].mxu0 %v1013
      %v1410 = vpop.f32.mrb[0].mxu0
      %v1411 = vadd.f32 0.0, %v1410
      %v1412 = vpop.f32.mrb[0].mxu0
      %v1413 = vpop.f32.mrb[0].mxu0
      %v1414 = vadd.f32 0.0, %v1413
      %v1415 = vpop.f32.mrb[0].mxu0
      %1416 = vmatprep.mubr.bf16.mxu0 0
      %1417 = vmatmul.mubr.bf16.gmra.mrb[0].mxu0 %v1016
      %v1418 = vpop.f32.mrb[0].mxu0
      %v1419 = vadd.f32 0.0, %v1418
      %v1420 = vpop.f32.mrb[0].mxu0
      %v1421 = vpop.f32.mrb[0].mxu0
      %v1422 = vadd.f32 0.0, %v1421
      %v1423 = vpop.f32.mrb[0].mxu0
      %1424 = vmatprep.mubr.bf16.mxu0 0
      %1425 = vmatmul.mubr.bf16.gmra.mrb[0].mxu0 %v1256
      %v1426 = vpop.f32.mrb[0].mxu0
      %v1427 = vadd.f32 0.0, %v1426
      %v1428 = vpop.f32.mrb[0].mxu0
      %v1429 = vpop.f32.mrb[0].mxu0
      %v1430 = vadd.f32 0.0, %v1429
      %v1431 = vpop.f32.mrb[0].mxu0
      %1432 = vmatprep.mubr.bf16.mxu0 0
      %1433 = vmatmul.mubr.bf16.gmra.mrb[0].mxu0 %v1259
      %v1434 = vpop.f32.mrb[0].mxu0
      %v1435 = vadd.f32 0.0, %v1434
      %v1436 = vpop.f32.mrb[0].mxu0
      %v1437 = vpop.f32.mrb[0].mxu0
      %v1438 = vadd.f32 0.0, %v1437
      %v1439 = vpop.f32.mrb[0].mxu0
      %1440 = vdwg.mxu0
      %v1441 = vadd.f32 %v1201, %v1299
      %v1442 = vadd.f32 %v1202, %v1302
      %v1443 = vadd.f32 %v1203, %v1307
      %v1444 = vadd.f32 %v1204, %v1310
      %v1445 = vadd.f32 %v1205, %v1315
      %v1446 = vadd.f32 %v1206, %v1318
      %v1447 = vadd.f32 %v1207, %v1323
      %v1448 = vadd.f32 %v1208, %v1326
      %v1449 = vadd.f32 %v1209, %v1331
      %v1450 = vadd.f32 %v1210, %v1334
      %v1451 = vadd.f32 %v1211, %v1339
      %v1452 = vadd.f32 %v1212, %v1342
      %v1453 = vadd.f32 %v1213, %v1347
      %v1454 = vadd.f32 %v1214, %v1350
      %v1455 = vadd.f32 %v1215, %v1355
      %v1456 = vadd.f32 %v1216, %v1358
      %v1457 = vadd.f32 %v1217, %v1363
      %v1458 = vadd.f32 %v1218, %v1366
      %v1459 = vadd.f32 %v1219, %v1371
      %v1460 = vadd.f32 %v1220, %v1374
      %v1461 = vadd.f32 %v1221, %v1379
      %v1462 = vadd.f32 %v1222, %v1382
      %v1463 = vadd.f32 %v1223, %v1387
      %v1464 = vadd.f32 %v1224, %v1390
      %v1465 = vadd.f32 %v1225, %v1395
      %v1466 = vadd.f32 %v1226, %v1398
      %v1467 = vadd.f32 %v1227, %v1403
      %v1468 = vadd.f32 %v1228, %v1406
      %v1469 = vadd.f32 %v1229, %v1411
      %v1470 = vadd.f32 %v1230, %v1414
      %v1471 = vadd.f32 %v1231, %v1419
      %v1472 = vadd.f32 %v1232, %v1422
      %v1473 = vadd.f32 %v1233, %v1427
      %v1474 = vadd.f32 %v1234, %v1430
      %v1475 = vadd.f32 %v1235, %v1435
      %v1476 = vadd.f32 %v1236, %v1438
      %vm1477 = vsmask.f32 6400
      %v1478 = vrot.slane %v323, 1
      %v1479 = vrot.slane %v319, 2
      %v1480 = vor.u32 %v1478, %v1479
      %v1481 = vrot.slane %v331, 1
      %v1482 = vrot.slane %v327, 2
      %v1483 = vor.u32 %v1481, %v1482
      %v1484 = vsel %vm1477, %v1480, %v1483
      %v1485 = vrot.slane %v339, 1
      %v1486 = vrot.slane %v335, 2
      %v1487 = vor.u32 %v1485, %v1486
      %v1488 = vsel %vm1477, %v1483, %v1487
      %v1489 = vrot.slane %v347, 1
      %v1490 = vrot.slane %v343, 2
      %v1491 = vor.u32 %v1489, %v1490
      %v1492 = vsel %vm1477, %v1487, %v1491
      %v1493 = vrot.slane %v355, 1
      %v1494 = vrot.slane %v351, 2
      %v1495 = vor.u32 %v1493, %v1494
      %v1496 = vsel %vm1477, %v1491, %v1495
      %v1497 = vrot.slane %v363, 1
      %v1498 = vrot.slane %v359, 2
      %v1499 = vor.u32 %v1497, %v1498
      %v1500 = vsel %vm1477, %v1495, %v1499
      %v1501 = vrot.slane %v371, 1
      %v1502 = vrot.slane %v367, 2
      %v1503 = vor.u32 %v1501, %v1502
      %v1504 = vsel %vm1477, %v1499, %v1503
      %v1505 = vrot.slane %v379, 1
      %v1506 = vrot.slane %v375, 2
      %v1507 = vor.u32 %v1505, %v1506
      %v1508 = vsel %vm1477, %v1503, %v1507
      %v1509 = vrot.slane %v387, 1
      %v1510 = vrot.slane %v383, 2
      %v1511 = vor.u32 %v1509, %v1510
      %v1512 = vsel %vm1477, %v1507, %v1511
      %v1513 = vrot.slane %v395, 1
      %v1514 = vrot.slane %v391, 2
      %v1515 = vor.u32 %v1513, %v1514
      %v1516 = vsel %vm1477, %v1511, %v1515
      %v1517 = vrot.slane %v403, 1
      %v1518 = vrot.slane %v399, 2
      %v1519 = vor.u32 %v1517, %v1518
      %v1520 = vsel %vm1477, %v1515, %v1519
      %v1521 = vrot.slane %v411, 1
      %v1522 = vrot.slane %v407, 2
      %v1523 = vor.u32 %v1521, %v1522
      %v1524 = vsel %vm1477, %v1519, %v1523
      %v1525 = vrot.slane %v419, 1
      %v1526 = vrot.slane %v415, 2
      %v1527 = vor.u32 %v1525, %v1526
      %v1528 = vsel %vm1477, %v1523, %v1527
      %v1529 = vrot.slane %v427, 1
      %v1530 = vrot.slane %v423, 2
      %v1531 = vor.u32 %v1529, %v1530
      %v1532 = vsel %vm1477, %v1527, %v1531
      %v1533 = vrot.slane %v435, 1
      %v1534 = vrot.slane %v431, 2
      %v1535 = vor.u32 %v1533, %v1534
      %v1536 = vsel %vm1477, %v1531, %v1535
      %v1537 = vrot.slane %v443, 1
      %v1538 = vrot.slane %v439, 2
      %v1539 = vor.u32 %v1537, %v1538
      %v1540 = vsel %vm1477, %v1535, %v1539
      %v1541 = vrot.slane %v451, 1
      %v1542 = vrot.slane %v447, 2
      %v1543 = vor.u32 %v1541, %v1542
      %v1544 = vsel %vm1477, %v1539, %v1543
      %v1546 = vshrl.u32 %v1241, 16
      %v1548 = vrot.slane %v1546, 1
      %v1549 = vshll.u32 %v1241, 16
      %v1551 = vrot.slane %v1549, 2
      %v1552 = vor.u32 %v1548, %v1551
      %v1553 = vsel %vm1477, %v1543, %v1552
      %v1555 = vshrl.u32 %v1242, 16
      %v1557 = vrot.slane %v1555, 1
      %v1558 = vshll.u32 %v1242, 16
      %v1560 = vrot.slane %v1558, 2
      %v1561 = vor.u32 %v1557, %v1560
      %v1562 = vsel %vm1477, %v1552, %v1561
      %v1563 = vrot.slane %v1247, 2
      %v1565 = vsel %vm470, %v1484, 0
      %v1568 = vsel %vm470, %v1488, 0
      %v1571 = vsel %vm470, %v1492, 0
      %v1574 = vsel %vm470, %v1496, 0
      %v1577 = vsel %vm470, %v1500, 0
      %v1580 = vsel %vm470, %v1504, 0
      %v1583 = vsel %vm470, %v1508, 0
      %v1586 = vsel %vm470, %v1512, 0
      %v1589 = vsel %vm470, %v1516, 0
      %v1592 = vsel %vm470, %v1520, 0
      %v1595 = vsel %vm470, %v1524, 0
      %v1598 = vsel %vm470, %v1528, 0
      %v1601 = vsel %vm470, %v1532, 0
      %v1604 = vsel %vm470, %v1536, 0
      %v1607 = vsel %vm470, %v1540, 0
      %v1610 = vsel %vm470, %v1544, 0
      %v1613 = vsel %vm470, %v1553, 0
      %v1616 = vsel %vm470, %v1562, 0
      %v1619 = vand.u32 %v1563, %v528
      %1621 = vmatprep.subr.bf16.mxu0 0
      %1622 = vmatpush1.bf16.msra.mxu0 %v1619
      %1623 = vmatprep.subr.bf16.mxu0 0
      %1624 = vmatpush1.bf16.msra.mxu0 0
      %1625 = vmatprep.subr.bf16.mxu0 0
      %1626 = vmatpush1.bf16.msra.mxu0 0
      %1627 = vmatprep.subr.bf16.mxu0 0
      %1628 = vmatpush1.bf16.msra.mxu0 0
      %1629 = vmatprep.subr.bf16.mxu0 0
      %1630 = vmatpush1.bf16.msra.mxu0 0
      %1631 = vmatprep.subr.bf16.mxu0 0
      %1632 = vmatpush1.bf16.msra.mxu0 0
      %1633 = vmatprep.subr.bf16.mxu0 0
      %1634 = vmatpush1.bf16.msra.mxu0 0
      %1635 = vmatprep.subr.bf16.mxu0 0
      %1636 = vmatpush1.bf16.msra.mxu0 0
      %1637 = vmatprep.subr.bf16.mxu0 0
      %1638 = vmatpush1.bf16.msra.mxu0 0
      %1639 = vmatprep.subr.bf16.mxu0 0
      %1640 = vmatpush1.bf16.msra.mxu0 0
      %1641 = vmatprep.subr.bf16.mxu0 0
      %1642 = vmatpush1.bf16.msra.mxu0 0
      %1643 = vmatprep.subr.bf16.mxu0 0
      %1644 = vmatpush1.bf16.msra.mxu0 0
      %1645 = vmatprep.subr.bf16.mxu0 0
      %1646 = vmatpush1.bf16.msra.mxu0 0
      %1647 = vmatprep.subr.bf16.mxu0 0
      %1648 = vmatpush1.bf16.msra.mxu0 0
      %1649 = vmatprep.subr.bf16.mxu0 0
      %1650 = vmatpush1.bf16.msra.mxu0 0
      %1651 = vmatprep.subr.bf16.mxu0 0
      %1652 = vmatpush1.bf16.msra.mxu0 0
      %1653 = vmatprep.mubr.bf16.mxu0 0
      %1654 = vmatmul.mubr.bf16.gmra.mrb[0].mxu0 %v1565
      %v1655 = vpop.f32.mrb[0].mxu0
      %v1656 = vadd.f32 0.0, %v1655
      %v1657 = vpop.f32.mrb[0].mxu0
      %v1658 = vpop.f32.mrb[0].mxu0
      %v1659 = vadd.f32 0.0, %v1658
      %v1660 = vpop.f32.mrb[0].mxu0
      %1661 = vmatprep.mubr.bf16.mxu0 0
      %1662 = vmatmul.mubr.bf16.gmra.mrb[0].mxu0 %v1568
      %v1663 = vpop.f32.mrb[0].mxu0
      %v1664 = vadd.f32 0.0, %v1663
      %v1665 = vpop.f32.mrb[0].mxu0
      %v1666 = vpop.f32.mrb[0].mxu0
      %v1667 = vadd.f32 0.0, %v1666
      %v1668 = vpop.f32.mrb[0].mxu0
      %1669 = vmatprep.mubr.bf16.mxu0 0
      %1670 = vmatmul.mubr.bf16.gmra.mrb[0].mxu0 %v1571
      %v1671 = vpop.f32.mrb[0].mxu0
      %v1672 = vadd.f32 0.0, %v1671
      %v1673 = vpop.f32.mrb[0].mxu0
      %v1674 = vpop.f32.mrb[0].mxu0
      %v1675 = vadd.f32 0.0, %v1674
      %v1676 = vpop.f32.mrb[0].mxu0
      %1677 = vmatprep.mubr.bf16.mxu0 0
      %1678 = vmatmul.mubr.bf16.gmra.mrb[0].mxu0 %v1574
      %v1679 = vpop.f32.mrb[0].mxu0
      %v1680 = vadd.f32 0.0, %v1679
      %v1681 = vpop.f32.mrb[0].mxu0
      %v1682 = vpop.f32.mrb[0].mxu0
      %v1683 = vadd.f32 0.0, %v1682
      %v1684 = vpop.f32.mrb[0].mxu0
      %1685 = vmatprep.mubr.bf16.mxu0 0
      %1686 = vmatmul.mubr.bf16.gmra.mrb[0].mxu0 %v1577
      %v1687 = vpop.f32.mrb[0].mxu0
      %v1688 = vadd.f32 0.0, %v1687
      %v1689 = vpop.f32.mrb[0].mxu0
      %v1690 = vpop.f32.mrb[0].mxu0
      %v1691 = vadd.f32 0.0, %v1690
      %v1692 = vpop.f32.mrb[0].mxu0
      %1693 = vmatprep.mubr.bf16.mxu0 0
      %1694 = vmatmul.mubr.bf16.gmra.mrb[0].mxu0 %v1580
      %v1695 = vpop.f32.mrb[0].mxu0
      %v1696 = vadd.f32 0.0, %v1695
      %v1697 = vpop.f32.mrb[0].mxu0
      %v1698 = vpop.f32.mrb[0].mxu0
      %v1699 = vadd.f32 0.0, %v1698
      %v1700 = vpop.f32.mrb[0].mxu0
      %1701 = vmatprep.mubr.bf16.mxu0 0
      %1702 = vmatmul.mubr.bf16.gmra.mrb[0].mxu0 %v1583
      %v1703 = vpop.f32.mrb[0].mxu0
      %v1704 = vadd.f32 0.0, %v1703
      %v1705 = vpop.f32.mrb[0].mxu0
      %v1706 = vpop.f32.mrb[0].mxu0
      %v1707 = vadd.f32 0.0, %v1706
      %v1708 = vpop.f32.mrb[0].mxu0
      %1709 = vmatprep.mubr.bf16.mxu0 0
      %1710 = vmatmul.mubr.bf16.gmra.mrb[0].mxu0 %v1586
      %v1711 = vpop.f32.mrb[0].mxu0
      %v1712 = vadd.f32 0.0, %v1711
      %v1713 = vpop.f32.mrb[0].mxu0
      %v1714 = vpop.f32.mrb[0].mxu0
      %v1715 = vadd.f32 0.0, %v1714
      %v1716 = vpop.f32.mrb[0].mxu0
      %1717 = vmatprep.mubr.bf16.mxu0 0
      %1718 = vmatmul.mubr.bf16.gmra.mrb[0].mxu0 %v1589
      %v1719 = vpop.f32.mrb[0].mxu0
      %v1720 = vadd.f32 0.0, %v1719
      %v1721 = vpop.f32.mrb[0].mxu0
      %v1722 = vpop.f32.mrb[0].mxu0
      %v1723 = vadd.f32 0.0, %v1722
      %v1724 = vpop.f32.mrb[0].mxu0
      %1725 = vmatprep.mubr.bf16.mxu0 0
      %1726 = vmatmul.mubr.bf16.gmra.mrb[0].mxu0 %v1592
      %v1727 = vpop.f32.mrb[0].mxu0
      %v1728 = vadd.f32 0.0, %v1727
      %v1729 = vpop.f32.mrb[0].mxu0
      %v1730 = vpop.f32.mrb[0].mxu0
      %v1731 = vadd.f32 0.0, %v1730
      %v1732 = vpop.f32.mrb[0].mxu0
      %1733 = vmatprep.mubr.bf16.mxu0 0
      %1734 = vmatmul.mubr.bf16.gmra.mrb[0].mxu0 %v1595
      %v1735 = vpop.f32.mrb[0].mxu0
      %v1736 = vadd.f32 0.0, %v1735
      %v1737 = vpop.f32.mrb[0].mxu0
      %v1738 = vpop.f32.mrb[0].mxu0
      %v1739 = vadd.f32 0.0, %v1738
      %v1740 = vpop.f32.mrb[0].mxu0
      %1741 = vmatprep.mubr.bf16.mxu0 0
      %1742 = vmatmul.mubr.bf16.gmra.mrb[0].mxu0 %v1598
      %v1743 = vpop.f32.mrb[0].mxu0
      %v1744 = vadd.f32 0.0, %v1743
      %v1745 = vpop.f32.mrb[0].mxu0
      %v1746 = vpop.f32.mrb[0].mxu0
      %v1747 = vadd.f32 0.0, %v1746
      %v1748 = vpop.f32.mrb[0].mxu0
      %1749 = vmatprep.mubr.bf16.mxu0 0
      %1750 = vmatmul.mubr.bf16.gmra.mrb[0].mxu0 %v1601
      %v1751 = vpop.f32.mrb[0].mxu0
      %v1752 = vadd.f32 0.0, %v1751
      %v1753 = vpop.f32.mrb[0].mxu0
      %v1754 = vpop.f32.mrb[0].mxu0
      %v1755 = vadd.f32 0.0, %v1754
      %v1756 = vpop.f32.mrb[0].mxu0
      %1757 = vmatprep.mubr.bf16.mxu0 0
      %1758 = vmatmul.mubr.bf16.gmra.mrb[0].mxu0 %v1604
      %v1759 = vpop.f32.mrb[0].mxu0
      %v1760 = vadd.f32 0.0, %v1759
      %v1761 = vpop.f32.mrb[0].mxu0
      %v1762 = vpop.f32.mrb[0].mxu0
      %v1763 = vadd.f32 0.0, %v1762
      %v1764 = vpop.f32.mrb[0].mxu0
      %1765 = vmatprep.mubr.bf16.mxu0 0
      %1766 = vmatmul.mubr.bf16.gmra.mrb[0].mxu0 %v1607
      %v1767 = vpop.f32.mrb[0].mxu0
      %v1768 = vadd.f32 0.0, %v1767
      %v1769 = vpop.f32.mrb[0].mxu0
      %v1770 = vpop.f32.mrb[0].mxu0
      %v1771 = vadd.f32 0.0, %v1770
      %v1772 = vpop.f32.mrb[0].mxu0
      %1773 = vmatprep.mubr.bf16.mxu0 0
      %1774 = vmatmul.mubr.bf16.gmra.mrb[0].mxu0 %v1610
      %v1775 = vpop.f32.mrb[0].mxu0
      %v1776 = vadd.f32 0.0, %v1775
      %v1777 = vpop.f32.mrb[0].mxu0
      %v1778 = vpop.f32.mrb[0].mxu0
      %v1779 = vadd.f32 0.0, %v1778
      %v1780 = vpop.f32.mrb[0].mxu0
      %1781 = vmatprep.mubr.bf16.mxu0 0
      %1782 = vmatmul.mubr.bf16.gmra.mrb[0].mxu0 %v1613
      %v1783 = vpop.f32.mrb[0].mxu0
      %v1784 = vadd.f32 0.0, %v1783
      %v1785 = vpop.f32.mrb[0].mxu0
      %v1786 = vpop.f32.mrb[0].mxu0
      %v1787 = vadd.f32 0.0, %v1786
      %v1788 = vpop.f32.mrb[0].mxu0
      %1789 = vmatprep.mubr.bf16.mxu0 0
      %1790 = vmatmul.mubr.bf16.gmra.mrb[0].mxu0 %v1616
      %v1791 = vpop.f32.mrb[0].mxu0
      %v1792 = vadd.f32 0.0, %v1791
      %v1793 = vpop.f32.mrb[0].mxu0
      %v1794 = vpop.f32.mrb[0].mxu0
      %v1795 = vadd.f32 0.0, %v1794
      %v1796 = vpop.f32.mrb[0].mxu0
      %1797 = vdwg.mxu0
      %v1798 = vadd.f32 %v1441, %v1656
      %v1799 = vadd.f32 %v1442, %v1659
      %v1800 = vadd.f32 %v1443, %v1664
      %v1801 = vadd.f32 %v1444, %v1667
      %v1802 = vadd.f32 %v1445, %v1672
      %v1803 = vadd.f32 %v1446, %v1675
      %v1804 = vadd.f32 %v1447, %v1680
      %v1805 = vadd.f32 %v1448, %v1683
      %v1806 = vadd.f32 %v1449, %v1688
      %v1807 = vadd.f32 %v1450, %v1691
      %v1808 = vadd.f32 %v1451, %v1696
      %v1809 = vadd.f32 %v1452, %v1699
      %v1810 = vadd.f32 %v1453, %v1704
      %v1811 = vadd.f32 %v1454, %v1707
      %v1812 = vadd.f32 %v1455, %v1712
      %v1813 = vadd.f32 %v1456, %v1715
      %v1814 = vadd.f32 %v1457, %v1720
      %v1815 = vadd.f32 %v1458, %v1723
      %v1816 = vadd.f32 %v1459, %v1728
      %v1817 = vadd.f32 %v1460, %v1731
      %v1818 = vadd.f32 %v1461, %v1736
      %v1819 = vadd.f32 %v1462, %v1739
      %v1820 = vadd.f32 %v1463, %v1744
      %v1821 = vadd.f32 %v1464, %v1747
      %v1822 = vadd.f32 %v1465, %v1752
      %v1823 = vadd.f32 %v1466, %v1755
      %v1824 = vadd.f32 %v1467, %v1760
      %v1825 = vadd.f32 %v1468, %v1763
      %v1826 = vadd.f32 %v1469, %v1768
      %v1827 = vadd.f32 %v1470, %v1771
      %v1828 = vadd.f32 %v1471, %v1776
      %v1829 = vadd.f32 %v1472, %v1779
      %v1830 = vadd.f32 %v1473, %v1784
      %v1831 = vadd.f32 %v1474, %v1787
      %v1832 = vadd.f32 %v1475, %v1792
      %v1833 = vadd.f32 %v1476, %v1795
      %vm1834 = vcmask 1045504
      %v1835 = vrot.slane %v292, 2
      %v1836 = vrot.slane %v293, 2
      %v1837 = vsel %vm1834, %v1835, %v1836
      %v1838 = vrot.slane %v294, 2
      %v1839 = vsel %vm1834, %v1836, %v1838
      %v1840 = vrot.slane %v295, 2
      %v1841 = vsel %vm1834, %v1838, %v1840
      %v1842 = vrot.slane %v296, 2
      %v1843 = vsel %vm1834, %v1840, %v1842
      %v1844 = vrot.slane %v297, 2
      %v1845 = vsel %vm1834, %v1842, %v1844
      %v1846 = vrot.slane %v298, 2
      %v1847 = vsel %vm1834, %v1844, %v1846
      %v1848 = vrot.slane %v299, 2
      %v1849 = vsel %vm1834, %v1846, %v1848
      %v1850 = vrot.slane %v300, 2
      %v1851 = vsel %vm1834, %v1848, %v1850
      %v1852 = vrot.slane %v301, 2
      %v1853 = vsel %vm1834, %v1850, %v1852
      %v1854 = vrot.slane %v302, 2
      %v1855 = vsel %vm1834, %v1852, %v1854
      %v1856 = vrot.slane %v303, 2
      %v1857 = vsel %vm1834, %v1854, %v1856
      %v1858 = vrot.slane %v304, 2
      %v1859 = vsel %vm1834, %v1856, %v1858
      %v1860 = vrot.slane %v305, 2
      %v1861 = vsel %vm1834, %v1858, %v1860
      %v1862 = vrot.slane %v306, 2
      %v1863 = vsel %vm1834, %v1860, %v1862
      %v1864 = vrot.slane %v307, 2
      %v1865 = vsel %vm1834, %v1862, %v1864
      %v1866 = vrot.slane %v308, 2
      %v1867 = vsel %vm1834, %v1864, %v1866
      %v1868 = vrot.slane %v1241, 2
      %v1869 = vsel %vm1834, %v1866, %v1868
      %v1870 = vrot.slane %v1242, 2
      %v1871 = vsel %vm1834, %v1868, %v1870
      %v1873 = vunpack.c.l.b16 %v215
      %v1874 = vpack.c.b16 %v1873, %v964
      %v1876 = vshrl.u32 %v1874, 16
      %v1878 = vrot.slane %v1876, 3
      %v1879 = vshll.u32 %v1874, 16
      %v1881 = vrot.slane %v1879, 4
      %v1882 = vor.u32 %v1878, %v1881
      %v1884 = vsel %vm470, %v1837, 0
      %v1887 = vsel %vm470, %v1839, 0
      %v1890 = vsel %vm470, %v1841, 0
      %v1893 = vsel %vm470, %v1843, 0
      %v1896 = vsel %vm470, %v1845, 0
      %v1899 = vsel %vm470, %v1847, 0
      %v1902 = vsel %vm470, %v1849, 0
      %v1905 = vsel %vm470, %v1851, 0
      %v1908 = vsel %vm470, %v1853, 0
      %v1911 = vsel %vm470, %v1855, 0
      %v1914 = vsel %vm470, %v1857, 0
      %v1917 = vsel %vm470, %v1859, 0
      %v1920 = vsel %vm470, %v1861, 0
      %v1923 = vsel %vm470, %v1863, 0
      %v1926 = vsel %vm470, %v1865, 0
      %v1929 = vsel %vm470, %v1867, 0
      %v1932 = vsel %vm470, %v1869, 0
      %v1935 = vsel %vm470, %v1871, 0
      %v1938 = vand.u32 %v1882, %v528
      %1940 = vmatprep.subr.bf16.mxu0 0
      %1941 = vmatpush1.bf16.msra.mxu0 %v1938
      %1942 = vmatprep.subr.bf16.mxu0 0
      %1943 = vmatpush1.bf16.msra.mxu0 0
      %1944 = vmatprep.subr.bf16.mxu0 0
      %1945 = vmatpush1.bf16.msra.mxu0 0
      %1946 = vmatprep.subr.bf16.mxu0 0
      %1947 = vmatpush1.bf16.msra.mxu0 0
      %1948 = vmatprep.subr.bf16.mxu0 0
      %1949 = vmatpush1.bf16.msra.mxu0 0
      %1950 = vmatprep.subr.bf16.mxu0 0
      %1951 = vmatpush1.bf16.msra.mxu0 0
      %1952 = vmatprep.subr.bf16.mxu0 0
      %1953 = vmatpush1.bf16.msra.mxu0 0
      %1954 = vmatprep.subr.bf16.mxu0 0
      %1955 = vmatpush1.bf16.msra.mxu0 0
      %1956 = vmatprep.subr.bf16.mxu0 0
      %1957 = vmatpush1.bf16.msra.mxu0 0
      %1958 = vmatprep.subr.bf16.mxu0 0
      %1959 = vmatpush1.bf16.msra.mxu0 0
      %1960 = vmatprep.subr.bf16.mxu0 0
      %1961 = vmatpush1.bf16.msra.mxu0 0
      %1962 = vmatprep.subr.bf16.mxu0 0
      %1963 = vmatpush1.bf16.msra.mxu0 0
      %1964 = vmatprep.subr.bf16.mxu0 0
      %1965 = vmatpush1.bf16.msra.mxu0 0
      %1966 = vmatprep.subr.bf16.mxu0 0
      %1967 = vmatpush1.bf16.msra.mxu0 0
      %1968 = vmatprep.subr.bf16.mxu0 0
      %1969 = vmatpush1.bf16.msra.mxu0 0
      %1970 = vmatprep.subr.bf16.mxu0 0
      %1971 = vmatpush1.bf16.msra.mxu0 0
      %1972 = vmatprep.mubr.bf16.mxu0 0
      %1973 = vmatmul.mubr.bf16.gmra.mrb[0].mxu0 %v1884
      %v1974 = vpop.f32.mrb[0].mxu0
      %v1975 = vadd.f32 0.0, %v1974
      %v1976 = vpop.f32.mrb[0].mxu0
      %v1977 = vpop.f32.mrb[0].mxu0
      %v1978 = vadd.f32 0.0, %v1977
      %v1979 = vpop.f32.mrb[0].mxu0
      %1980 = vmatprep.mubr.bf16.mxu0 0
      %1981 = vmatmul.mubr.bf16.gmra.mrb[0].mxu0 %v1887
      %v1982 = vpop.f32.mrb[0].mxu0
      %v1983 = vadd.f32 0.0, %v1982
      %v1984 = vpop.f32.mrb[0].mxu0
      %v1985 = vpop.f32.mrb[0].mxu0
      %v1986 = vadd.f32 0.0, %v1985
      %v1987 = vpop.f32.mrb[0].mxu0
      %1988 = vmatprep.mubr.bf16.mxu0 0
      %1989 = vmatmul.mubr.bf16.gmra.mrb[0].mxu0 %v1890
      %v1990 = vpop.f32.mrb[0].mxu0
      %v1991 = vadd.f32 0.0, %v1990
      %v1992 = vpop.f32.mrb[0].mxu0
      %v1993 = vpop.f32.mrb[0].mxu0
      %v1994 = vadd.f32 0.0, %v1993
      %v1995 = vpop.f32.mrb[0].mxu0
      %1996 = vmatprep.mubr.bf16.mxu0 0
      %1997 = vmatmul.mubr.bf16.gmra.mrb[0].mxu0 %v1893
      %v1998 = vpop.f32.mrb[0].mxu0
      %v1999 = vadd.f32 0.0, %v1998
      %v2000 = vpop.f32.mrb[0].mxu0
      %v2001 = vpop.f32.mrb[0].mxu0
      %v2002 = vadd.f32 0.0, %v2001
      %v2003 = vpop.f32.mrb[0].mxu0
      %2004 = vmatprep.mubr.bf16.mxu0 0
      %2005 = vmatmul.mubr.bf16.gmra.mrb[0].mxu0 %v1896
      %v2006 = vpop.f32.mrb[0].mxu0
      %v2007 = vadd.f32 0.0, %v2006
      %v2008 = vpop.f32.mrb[0].mxu0
      %v2009 = vpop.f32.mrb[0].mxu0
      %v2010 = vadd.f32 0.0, %v2009
      %v2011 = vpop.f32.mrb[0].mxu0
      %2012 = vmatprep.mubr.bf16.mxu0 0
      %2013 = vmatmul.mubr.bf16.gmra.mrb[0].mxu0 %v1899
      %v2014 = vpop.f32.mrb[0].mxu0
      %v2015 = vadd.f32 0.0, %v2014
      %v2016 = vpop.f32.mrb[0].mxu0
      %v2017 = vpop.f32.mrb[0].mxu0
      %v2018 = vadd.f32 0.0, %v2017
      %v2019 = vpop.f32.mrb[0].mxu0
      %2020 = vmatprep.mubr.bf16.mxu0 0
      %2021 = vmatmul.mubr.bf16.gmra.mrb[0].mxu0 %v1902
      %v2022 = vpop.f32.mrb[0].mxu0
      %v2023 = vadd.f32 0.0, %v2022
      %v2024 = vpop.f32.mrb[0].mxu0
      %v2025 = vpop.f32.mrb[0].mxu0
      %v2026 = vadd.f32 0.0, %v2025
      %v2027 = vpop.f32.mrb[0].mxu0
      %2028 = vmatprep.mubr.bf16.mxu0 0
      %2029 = vmatmul.mubr.bf16.gmra.mrb[0].mxu0 %v1905
      %v2030 = vpop.f32.mrb[0].mxu0
      %v2031 = vadd.f32 0.0, %v2030
      %v2032 = vpop.f32.mrb[0].mxu0
      %v2033 = vpop.f32.mrb[0].mxu0
      %v2034 = vadd.f32 0.0, %v2033
      %v2035 = vpop.f32.mrb[0].mxu0
      %2036 = vmatprep.mubr.bf16.mxu0 0
      %2037 = vmatmul.mubr.bf16.gmra.mrb[0].mxu0 %v1908
      %v2038 = vpop.f32.mrb[0].mxu0
      %v2039 = vadd.f32 0.0, %v2038
      %v2040 = vpop.f32.mrb[0].mxu0
      %v2041 = vpop.f32.mrb[0].mxu0
      %v2042 = vadd.f32 0.0, %v2041
      %v2043 = vpop.f32.mrb[0].mxu0
      %2044 = vmatprep.mubr.bf16.mxu0 0
      %2045 = vmatmul.mubr.bf16.gmra.mrb[0].mxu0 %v1911
      %v2046 = vpop.f32.mrb[0].mxu0
      %v2047 = vadd.f32 0.0, %v2046
      %v2048 = vpop.f32.mrb[0].mxu0
      %v2049 = vpop.f32.mrb[0].mxu0
      %v2050 = vadd.f32 0.0, %v2049
      %v2051 = vpop.f32.mrb[0].mxu0
      %2052 = vmatprep.mubr.bf16.mxu0 0
      %2053 = vmatmul.mubr.bf16.gmra.mrb[0].mxu0 %v1914
      %v2054 = vpop.f32.mrb[0].mxu0
      %v2055 = vadd.f32 0.0, %v2054
      %v2056 = vpop.f32.mrb[0].mxu0
      %v2057 = vpop.f32.mrb[0].mxu0
      %v2058 = vadd.f32 0.0, %v2057
      %v2059 = vpop.f32.mrb[0].mxu0
      %2060 = vmatprep.mubr.bf16.mxu0 0
      %2061 = vmatmul.mubr.bf16.gmra.mrb[0].mxu0 %v1917
      %v2062 = vpop.f32.mrb[0].mxu0
      %v2063 = vadd.f32 0.0, %v2062
      %v2064 = vpop.f32.mrb[0].mxu0
      %v2065 = vpop.f32.mrb[0].mxu0
      %v2066 = vadd.f32 0.0, %v2065
      %v2067 = vpop.f32.mrb[0].mxu0
      %2068 = vmatprep.mubr.bf16.mxu0 0
      %2069 = vmatmul.mubr.bf16.gmra.mrb[0].mxu0 %v1920
      %v2070 = vpop.f32.mrb[0].mxu0
      %v2071 = vadd.f32 0.0, %v2070
      %v2072 = vpop.f32.mrb[0].mxu0
      %v2073 = vpop.f32.mrb[0].mxu0
      %v2074 = vadd.f32 0.0, %v2073
      %v2075 = vpop.f32.mrb[0].mxu0
      %2076 = vmatprep.mubr.bf16.mxu0 0
      %2077 = vmatmul.mubr.bf16.gmra.mrb[0].mxu0 %v1923
      %v2078 = vpop.f32.mrb[0].mxu0
      %v2079 = vadd.f32 0.0, %v2078
      %v2080 = vpop.f32.mrb[0].mxu0
      %v2081 = vpop.f32.mrb[0].mxu0
      %v2082 = vadd.f32 0.0, %v2081
      %v2083 = vpop.f32.mrb[0].mxu0
      %2084 = vmatprep.mubr.bf16.mxu0 0
      %2085 = vmatmul.mubr.bf16.gmra.mrb[0].mxu0 %v1926
      %v2086 = vpop.f32.mrb[0].mxu0
      %v2087 = vadd.f32 0.0, %v2086
      %v2088 = vpop.f32.mrb[0].mxu0
      %v2089 = vpop.f32.mrb[0].mxu0
      %v2090 = vadd.f32 0.0, %v2089
      %v2091 = vpop.f32.mrb[0].mxu0
      %2092 = vmatprep.mubr.bf16.mxu0 0
      %2093 = vmatmul.mubr.bf16.gmra.mrb[0].mxu0 %v1929
      %v2094 = vpop.f32.mrb[0].mxu0
      %v2095 = vadd.f32 0.0, %v2094
      %v2096 = vpop.f32.mrb[0].mxu0
      %v2097 = vpop.f32.mrb[0].mxu0
      %v2098 = vadd.f32 0.0, %v2097
      %v2099 = vpop.f32.mrb[0].mxu0
      %2100 = vmatprep.mubr.bf16.mxu0 0
      %2101 = vmatmul.mubr.bf16.gmra.mrb[0].mxu0 %v1932
      %v2102 = vpop.f32.mrb[0].mxu0
      %v2103 = vadd.f32 0.0, %v2102
      %v2104 = vpop.f32.mrb[0].mxu0
      %v2105 = vpop.f32.mrb[0].mxu0
      %v2106 = vadd.f32 0.0, %v2105
      %v2107 = vpop.f32.mrb[0].mxu0
      %2108 = vmatprep.mubr.bf16.mxu0 0
      %2109 = vmatmul.mubr.bf16.gmra.mrb[0].mxu0 %v1935
      %v2110 = vpop.f32.mrb[0].mxu0
      %v2111 = vadd.f32 0.0, %v2110
      %v2112 = vpop.f32.mrb[0].mxu0
      %v2113 = vpop.f32.mrb[0].mxu0
      %v2114 = vadd.f32 0.0, %v2113
      %v2115 = vpop.f32.mrb[0].mxu0
      %2116 = vdwg.mxu0
      %v2117 = vadd.f32 %v1798, %v1975
      %v2118 = vadd.f32 %v1799, %v1978
      %v2119 = vadd.f32 %v1800, %v1983
      %v2120 = vadd.f32 %v1801, %v1986
      %v2121 = vadd.f32 %v1802, %v1991
      %v2122 = vadd.f32 %v1803, %v1994
      %v2123 = vadd.f32 %v1804, %v1999
      %v2124 = vadd.f32 %v1805, %v2002
      %v2125 = vadd.f32 %v1806, %v2007
      %v2126 = vadd.f32 %v1807, %v2010
      %v2127 = vadd.f32 %v1808, %v2015
      %v2128 = vadd.f32 %v1809, %v2018
      %v2129 = vadd.f32 %v1810, %v2023
      %v2130 = vadd.f32 %v1811, %v2026
      %v2131 = vadd.f32 %v1812, %v2031
      %v2132 = vadd.f32 %v1813, %v2034
      %v2133 = vadd.f32 %v1814, %v2039
      %v2134 = vadd.f32 %v1815, %v2042
      %v2135 = vadd.f32 %v1816, %v2047
      %v2136 = vadd.f32 %v1817, %v2050
      %v2137 = vadd.f32 %v1818, %v2055
      %v2138 = vadd.f32 %v1819, %v2058
      %v2139 = vadd.f32 %v1820, %v2063
      %v2140 = vadd.f32 %v1821, %v2066
      %v2141 = vadd.f32 %v1822, %v2071
      %v2142 = vadd.f32 %v1823, %v2074
      %v2143 = vadd.f32 %v1824, %v2079
      %v2144 = vadd.f32 %v1825, %v2082
      %v2145 = vadd.f32 %v1826, %v2087
      %v2146 = vadd.f32 %v1827, %v2090
      %v2147 = vadd.f32 %v1828, %v2095
      %v2148 = vadd.f32 %v1829, %v2098
      %v2149 = vadd.f32 %v1830, %v2103
      %v2150 = vadd.f32 %v1831, %v2106
      %v2151 = vadd.f32 %v1832, %v2111
      %v2152 = vadd.f32 %v1833, %v2114
      %v2155 = vunpack.c.l.b16 %v211
      %v2156 = vunpack.c.l.b16 %v212
      %v2157 = vpack.c.b16 %v2155, %v1240
      %v2158 = vpack.c.b16 %v2156, %v2156
      %v2159 = vrot.slane %v2157, 2
      %v2160 = vsel %vm1834, %v1868, %v2159
      %v2161 = vrot.slane %v2158, 2
      %v2162 = vsel %vm1834, %v2159, %v2161
      %v2163 = vpack.c.b16 %v1873, %v1873
      %v2164 = vrot.slane %v2163, 1
      %v2166 = vsel %vm470, %v2160, 0
      %v2169 = vsel %vm470, %v2162, 0
      %v2172 = vand.u32 %v2164, %v528
      %2174 = vmatprep.subr.bf16.mxu0 0
      %2175 = vmatpush1.bf16.msra.mxu0 %v2172
      %2176 = vmatprep.subr.bf16.mxu0 0
      %2177 = vmatpush1.bf16.msra.mxu0 0
      %2178 = vmatprep.subr.bf16.mxu0 0
      %2179 = vmatpush1.bf16.msra.mxu0 0
      %2180 = vmatprep.subr.bf16.mxu0 0
      %2181 = vmatpush1.bf16.msra.mxu0 0
      %2182 = vmatprep.subr.bf16.mxu0 0
      %2183 = vmatpush1.bf16.msra.mxu0 0
      %2184 = vmatprep.subr.bf16.mxu0 0
      %2185 = vmatpush1.bf16.msra.mxu0 0
      %2186 = vmatprep.subr.bf16.mxu0 0
      %2187 = vmatpush1.bf16.msra.mxu0 0
      %2188 = vmatprep.subr.bf16.mxu0 0
      %2189 = vmatpush1.bf16.msra.mxu0 0
      %2190 = vmatprep.subr.bf16.mxu0 0
      %2191 = vmatpush1.bf16.msra.mxu0 0
      %2192 = vmatprep.subr.bf16.mxu0 0
      %2193 = vmatpush1.bf16.msra.mxu0 0
      %2194 = vmatprep.subr.bf16.mxu0 0
      %2195 = vmatpush1.bf16.msra.mxu0 0
      %2196 = vmatprep.subr.bf16.mxu0 0
      %2197 = vmatpush1.bf16.msra.mxu0 0
      %2198 = vmatprep.subr.bf16.mxu0 0
      %2199 = vmatpush1.bf16.msra.mxu0 0
      %2200 = vmatprep.subr.bf16.mxu0 0
      %2201 = vmatpush1.bf16.msra.mxu0 0
      %2202 = vmatprep.subr.bf16.mxu0 0
      %2203 = vmatpush1.bf16.msra.mxu0 0
      %2204 = vmatprep.subr.bf16.mxu0 0
      %2205 = vmatpush1.bf16.msra.mxu0 0
      %2206 = vmatprep.mubr.bf16.mxu0 0
      %2207 = vmatmul.mubr.bf16.gmra.mrb[0].mxu0 %v1887
      %v2208 = vpop.f32.mrb[0].mxu0
      %v2209 = vadd.f32 0.0, %v2208
      %v2210 = vpop.f32.mrb[0].mxu0
      %v2211 = vpop.f32.mrb[0].mxu0
      %v2212 = vadd.f32 0.0, %v2211
      %v2213 = vpop.f32.mrb[0].mxu0
      %2214 = vmatprep.mubr.bf16.mxu0 0
      %2215 = vmatmul.mubr.bf16.gmra.mrb[0].mxu0 %v1890
      %v2216 = vpop.f32.mrb[0].mxu0
      %v2217 = vadd.f32 0.0, %v2216
      %v2218 = vpop.f32.mrb[0].mxu0
      %v2219 = vpop.f32.mrb[0].mxu0
      %v2220 = vadd.f32 0.0, %v2219
      %v2221 = vpop.f32.mrb[0].mxu0
      %2222 = vmatprep.mubr.bf16.mxu0 0
      %2223 = vmatmul.mubr.bf16.gmra.mrb[0].mxu0 %v1893
      %v2224 = vpop.f32.mrb[0].mxu0
      %v2225 = vadd.f32 0.0, %v2224
      %v2226 = vpop.f32.mrb[0].mxu0
      %v2227 = vpop.f32.mrb[0].mxu0
      %v2228 = vadd.f32 0.0, %v2227
      %v2229 = vpop.f32.mrb[0].mxu0
      %2230 = vmatprep.mubr.bf16.mxu0 0
      %2231 = vmatmul.mubr.bf16.gmra.mrb[0].mxu0 %v1896
      %v2232 = vpop.f32.mrb[0].mxu0
      %v2233 = vadd.f32 0.0, %v2232
      %v2234 = vpop.f32.mrb[0].mxu0
      %v2235 = vpop.f32.mrb[0].mxu0
      %v2236 = vadd.f32 0.0, %v2235
      %v2237 = vpop.f32.mrb[0].mxu0
      %2238 = vmatprep.mubr.bf16.mxu0 0
      %2239 = vmatmul.mubr.bf16.gmra.mrb[0].mxu0 %v1899
      %v2240 = vpop.f32.mrb[0].mxu0
      %v2241 = vadd.f32 0.0, %v2240
      %v2242 = vpop.f32.mrb[0].mxu0
      %v2243 = vpop.f32.mrb[0].mxu0
      %v2244 = vadd.f32 0.0, %v2243
      %v2245 = vpop.f32.mrb[0].mxu0
      %2246 = vmatprep.mubr.bf16.mxu0 0
      %2247 = vmatmul.mubr.bf16.gmra.mrb[0].mxu0 %v1902
      %v2248 = vpop.f32.mrb[0].mxu0
      %v2249 = vadd.f32 0.0, %v2248
      %v2250 = vpop.f32.mrb[0].mxu0
      %v2251 = vpop.f32.mrb[0].mxu0
      %v2252 = vadd.f32 0.0, %v2251
      %v2253 = vpop.f32.mrb[0].mxu0
      %2254 = vmatprep.mubr.bf16.mxu0 0
      %2255 = vmatmul.mubr.bf16.gmra.mrb[0].mxu0 %v1905
      %v2256 = vpop.f32.mrb[0].mxu0
      %v2257 = vadd.f32 0.0, %v2256
      %v2258 = vpop.f32.mrb[0].mxu0
      %v2259 = vpop.f32.mrb[0].mxu0
      %v2260 = vadd.f32 0.0, %v2259
      %v2261 = vpop.f32.mrb[0].mxu0
      %2262 = vmatprep.mubr.bf16.mxu0 0
      %2263 = vmatmul.mubr.bf16.gmra.mrb[0].mxu0 %v1908
      %v2264 = vpop.f32.mrb[0].mxu0
      %v2265 = vadd.f32 0.0, %v2264
      %v2266 = vpop.f32.mrb[0].mxu0
      %v2267 = vpop.f32.mrb[0].mxu0
      %v2268 = vadd.f32 0.0, %v2267
      %v2269 = vpop.f32.mrb[0].mxu0
      %2270 = vmatprep.mubr.bf16.mxu0 0
      %2271 = vmatmul.mubr.bf16.gmra.mrb[0].mxu0 %v1911
      %v2272 = vpop.f32.mrb[0].mxu0
      %v2273 = vadd.f32 0.0, %v2272
      %v2274 = vpop.f32.mrb[0].mxu0
      %v2275 = vpop.f32.mrb[0].mxu0
      %v2276 = vadd.f32 0.0, %v2275
      %v2277 = vpop.f32.mrb[0].mxu0
      %2278 = vmatprep.mubr.bf16.mxu0 0
      %2279 = vmatmul.mubr.bf16.gmra.mrb[0].mxu0 %v1914
      %v2280 = vpop.f32.mrb[0].mxu0
      %v2281 = vadd.f32 0.0, %v2280
      %v2282 = vpop.f32.mrb[0].mxu0
      %v2283 = vpop.f32.mrb[0].mxu0
      %v2284 = vadd.f32 0.0, %v2283
      %v2285 = vpop.f32.mrb[0].mxu0
      %2286 = vmatprep.mubr.bf16.mxu0 0
      %2287 = vmatmul.mubr.bf16.gmra.mrb[0].mxu0 %v1917
      %v2288 = vpop.f32.mrb[0].mxu0
      %v2289 = vadd.f32 0.0, %v2288
      %v2290 = vpop.f32.mrb[0].mxu0
      %v2291 = vpop.f32.mrb[0].mxu0
      %v2292 = vadd.f32 0.0, %v2291
      %v2293 = vpop.f32.mrb[0].mxu0
      %2294 = vmatprep.mubr.bf16.mxu0 0
      %2295 = vmatmul.mubr.bf16.gmra.mrb[0].mxu0 %v1920
      %v2296 = vpop.f32.mrb[0].mxu0
      %v2297 = vadd.f32 0.0, %v2296
      %v2298 = vpop.f32.mrb[0].mxu0
      %v2299 = vpop.f32.mrb[0].mxu0
      %v2300 = vadd.f32 0.0, %v2299
      %v2301 = vpop.f32.mrb[0].mxu0
      %2302 = vmatprep.mubr.bf16.mxu0 0
      %2303 = vmatmul.mubr.bf16.gmra.mrb[0].mxu0 %v1923
      %v2304 = vpop.f32.mrb[0].mxu0
      %v2305 = vadd.f32 0.0, %v2304
      %v2306 = vpop.f32.mrb[0].mxu0
      %v2307 = vpop.f32.mrb[0].mxu0
      %v2308 = vadd.f32 0.0, %v2307
      %v2309 = vpop.f32.mrb[0].mxu0
      %2310 = vmatprep.mubr.bf16.mxu0 0
      %2311 = vmatmul.mubr.bf16.gmra.mrb[0].mxu0 %v1926
      %v2312 = vpop.f32.mrb[0].mxu0
      %v2313 = vadd.f32 0.0, %v2312
      %v2314 = vpop.f32.mrb[0].mxu0
      %v2315 = vpop.f32.mrb[0].mxu0
      %v2316 = vadd.f32 0.0, %v2315
      %v2317 = vpop.f32.mrb[0].mxu0
      %2318 = vmatprep.mubr.bf16.mxu0 0
      %2319 = vmatmul.mubr.bf16.gmra.mrb[0].mxu0 %v1929
      %v2320 = vpop.f32.mrb[0].mxu0
      %v2321 = vadd.f32 0.0, %v2320
      %v2322 = vpop.f32.mrb[0].mxu0
      %v2323 = vpop.f32.mrb[0].mxu0
      %v2324 = vadd.f32 0.0, %v2323
      %v2325 = vpop.f32.mrb[0].mxu0
      %2326 = vmatprep.mubr.bf16.mxu0 0
      %2327 = vmatmul.mubr.bf16.gmra.mrb[0].mxu0 %v1932
      %v2328 = vpop.f32.mrb[0].mxu0
      %v2329 = vadd.f32 0.0, %v2328
      %v2330 = vpop.f32.mrb[0].mxu0
      %v2331 = vpop.f32.mrb[0].mxu0
      %v2332 = vadd.f32 0.0, %v2331
      %v2333 = vpop.f32.mrb[0].mxu0
      %2334 = vmatprep.mubr.bf16.mxu0 0
      %2335 = vmatmul.mubr.bf16.gmra.mrb[0].mxu0 %v2166
      %v2336 = vpop.f32.mrb[0].mxu0
      %v2337 = vadd.f32 0.0, %v2336
      %v2338 = vpop.f32.mrb[0].mxu0
      %v2339 = vpop.f32.mrb[0].mxu0
      %v2340 = vadd.f32 0.0, %v2339
      %v2341 = vpop.f32.mrb[0].mxu0
      %2342 = vmatprep.mubr.bf16.mxu0 0
      %2343 = vmatmul.mubr.bf16.gmra.mrb[0].mxu0 %v2169
      %v2344 = vpop.f32.mrb[0].mxu0
      %v2345 = vadd.f32 0.0, %v2344
      %v2346 = vpop.f32.mrb[0].mxu0
      %v2347 = vpop.f32.mrb[0].mxu0
      %v2348 = vadd.f32 0.0, %v2347
      %v2349 = vpop.f32.mrb[0].mxu0
      %2350 = vdwg.mxu0
      %v2351 = vadd.f32 %v2117, %v2209
      %v2352 = vadd.f32 %v2118, %v2212
      %v2353 = vadd.f32 %v2119, %v2217
      %v2354 = vadd.f32 %v2120, %v2220
      %v2355 = vadd.f32 %v2121, %v2225
      %v2356 = vadd.f32 %v2122, %v2228
      %v2357 = vadd.f32 %v2123, %v2233
      %v2358 = vadd.f32 %v2124, %v2236
      %v2359 = vadd.f32 %v2125, %v2241
      %v2360 = vadd.f32 %v2126, %v2244
      %v2361 = vadd.f32 %v2127, %v2249
      %v2362 = vadd.f32 %v2128, %v2252
      %v2363 = vadd.f32 %v2129, %v2257
      %v2364 = vadd.f32 %v2130, %v2260
      %v2365 = vadd.f32 %v2131, %v2265
      %v2366 = vadd.f32 %v2132, %v2268
      %v2367 = vadd.f32 %v2133, %v2273
      %v2368 = vadd.f32 %v2134, %v2276
      %v2369 = vadd.f32 %v2135, %v2281
      %v2370 = vadd.f32 %v2136, %v2284
      %v2371 = vadd.f32 %v2137, %v2289
      %v2372 = vadd.f32 %v2138, %v2292
      %v2373 = vadd.f32 %v2139, %v2297
      %v2374 = vadd.f32 %v2140, %v2300
      %v2375 = vadd.f32 %v2141, %v2305
      %v2376 = vadd.f32 %v2142, %v2308
      %v2377 = vadd.f32 %v2143, %v2313
      %v2378 = vadd.f32 %v2144, %v2316
      %v2379 = vadd.f32 %v2145, %v2321
      %v2380 = vadd.f32 %v2146, %v2324
      %v2381 = vadd.f32 %v2147, %v2329
      %v2382 = vadd.f32 %v2148, %v2332
      %v2383 = vadd.f32 %v2149, %v2337
      %v2384 = vadd.f32 %v2150, %v2340
      %v2385 = vadd.f32 %v2151, %v2345
      %v2386 = vadd.f32 %v2152, %v2348
      %vm2387 = vsmask.f32 5376
      %v2388 = vrot.slane %v331, 2
      %v2389 = vrot.slane %v327, 3
      %v2390 = vor.u32 %v2388, %v2389
      %v2391 = vrot.slane %v339, 2
      %v2392 = vrot.slane %v335, 3
      %v2393 = vor.u32 %v2391, %v2392
      %v2394 = vsel %vm2387, %v2390, %v2393
      %v2395 = vrot.slane %v347, 2
      %v2396 = vrot.slane %v343, 3
      %v2397 = vor.u32 %v2395, %v2396
      %v2398 = vsel %vm2387, %v2393, %v2397
      %v2399 = vrot.slane %v355, 2
      %v2400 = vrot.slane %v351, 3
      %v2401 = vor.u32 %v2399, %v2400
      %v2402 = vsel %vm2387, %v2397, %v2401
      %v2403 = vrot.slane %v363, 2
      %v2404 = vrot.slane %v359, 3
      %v2405 = vor.u32 %v2403, %v2404
      %v2406 = vsel %vm2387, %v2401, %v2405
      %v2407 = vrot.slane %v371, 2
      %v2408 = vrot.slane %v367, 3
      %v2409 = vor.u32 %v2407, %v2408
      %v2410 = vsel %vm2387, %v2405, %v2409
      %v2411 = vrot.slane %v379, 2
      %v2412 = vrot.slane %v375, 3
      %v2413 = vor.u32 %v2411, %v2412
      %v2414 = vsel %vm2387, %v2409, %v2413
      %v2415 = vrot.slane %v387, 2
      %v2416 = vrot.slane %v383, 3
      %v2417 = vor.u32 %v2415, %v2416
      %v2418 = vsel %vm2387, %v2413, %v2417
      %v2419 = vrot.slane %v395, 2
      %v2420 = vrot.slane %v391, 3
      %v2421 = vor.u32 %v2419, %v2420
      %v2422 = vsel %vm2387, %v2417, %v2421
      %v2423 = vrot.slane %v403, 2
      %v2424 = vrot.slane %v399, 3
      %v2425 = vor.u32 %v2423, %v2424
      %v2426 = vsel %vm2387, %v2421, %v2425
      %v2427 = vrot.slane %v411, 2
      %v2428 = vrot.slane %v407, 3
      %v2429 = vor.u32 %v2427, %v2428
      %v2430 = vsel %vm2387, %v2425, %v2429
      %v2431 = vrot.slane %v419, 2
      %v2432 = vrot.slane %v415, 3
      %v2433 = vor.u32 %v2431, %v2432
      %v2434 = vsel %vm2387, %v2429, %v2433
      %v2435 = vrot.slane %v427, 2
      %v2436 = vrot.slane %v423, 3
      %v2437 = vor.u32 %v2435, %v2436
      %v2438 = vsel %vm2387, %v2433, %v2437
      %v2439 = vrot.slane %v435, 2
      %v2440 = vrot.slane %v431, 3
      %v2441 = vor.u32 %v2439, %v2440
      %v2442 = vsel %vm2387, %v2437, %v2441
      %v2443 = vrot.slane %v443, 2
      %v2444 = vrot.slane %v439, 3
      %v2445 = vor.u32 %v2443, %v2444
      %v2446 = vsel %vm2387, %v2441, %v2445
      %v2447 = vrot.slane %v451, 2
      %v2448 = vrot.slane %v447, 3
      %v2449 = vor.u32 %v2447, %v2448
      %v2450 = vsel %vm2387, %v2445, %v2449
      %v2451 = vrot.slane %v1546, 2
      %v2452 = vrot.slane %v1549, 3
      %v2453 = vor.u32 %v2451, %v2452
      %v2454 = vsel %vm2387, %v2449, %v2453
      %v2456 = vshrl.u32 %v2157, 16
      %v2458 = vrot.slane %v2456, 2
      %v2459 = vshll.u32 %v2157, 16
      %v2461 = vrot.slane %v2459, 3
      %v2462 = vor.u32 %v2458, %v2461
      %v2463 = vsel %vm2387, %v2453, %v2462
      %v2465 = vshrl.u32 %v2158, 16
      %v2467 = vrot.slane %v2465, 2
      %v2468 = vshll.u32 %v2158, 16
      %v2470 = vrot.slane %v2468, 3
      %v2471 = vor.u32 %v2467, %v2470
      %v2472 = vsel %vm2387, %v2462, %v2471
      %v2474 = vshrl.u32 %v2163, 16
      %v2476 = vrot.slane %v2474, 2
      %v2477 = vshll.u32 %v2163, 16
      %v2479 = vrot.slane %v2477, 3
      %v2480 = vor.u32 %v2476, %v2479
      %v2482 = vsel %vm470, %v2394, 0
      %v2485 = vsel %vm470, %v2398, 0
      %v2488 = vsel %vm470, %v2402, 0
      %v2491 = vsel %vm470, %v2406, 0
      %v2494 = vsel %vm470, %v2410, 0
      %v2497 = vsel %vm470, %v2414, 0
      %v2500 = vsel %vm470, %v2418, 0
      %v2503 = vsel %vm470, %v2422, 0
      %v2506 = vsel %vm470, %v2426, 0
      %v2509 = vsel %vm470, %v2430, 0
      %v2512 = vsel %vm470, %v2434, 0
      %v2515 = vsel %vm470, %v2438, 0
      %v2518 = vsel %vm470, %v2442, 0
      %v2521 = vsel %vm470, %v2446, 0
      %v2524 = vsel %vm470, %v2450, 0
      %v2527 = vsel %vm470, %v2454, 0
      %v2530 = vsel %vm470, %v2463, 0
      %v2533 = vsel %vm470, %v2472, 0
      %v2536 = vand.u32 %v2480, %v528
      %2538 = vmatprep.subr.bf16.mxu0 0
      %2539 = vmatpush1.bf16.msra.mxu0 %v2536
      %2540 = vmatprep.subr.bf16.mxu0 0
      %2541 = vmatpush1.bf16.msra.mxu0 0
      %2542 = vmatprep.subr.bf16.mxu0 0
      %2543 = vmatpush1.bf16.msra.mxu0 0
      %2544 = vmatprep.subr.bf16.mxu0 0
      %2545 = vmatpush1.bf16.msra.mxu0 0
      %2546 = vmatprep.subr.bf16.mxu0 0
      %2547 = vmatpush1.bf16.msra.mxu0 0
      %2548 = vmatprep.subr.bf16.mxu0 0
      %2549 = vmatpush1.bf16.msra.mxu0 0
      %2550 = vmatprep.subr.bf16.mxu0 0
      %2551 = vmatpush1.bf16.msra.mxu0 0
      %2552 = vmatprep.subr.bf16.mxu0 0
      %2553 = vmatpush1.bf16.msra.mxu0 0
      %2554 = vmatprep.subr.bf16.mxu0 0
      %2555 = vmatpush1.bf16.msra.mxu0 0
      %2556 = vmatprep.subr.bf16.mxu0 0
      %2557 = vmatpush1.bf16.msra.mxu0 0
      %2558 = vmatprep.subr.bf16.mxu0 0
      %2559 = vmatpush1.bf16.msra.mxu0 0
      %2560 = vmatprep.subr.bf16.mxu0 0
      %2561 = vmatpush1.bf16.msra.mxu0 0
      %2562 = vmatprep.subr.bf16.mxu0 0
      %2563 = vmatpush1.bf16.msra.mxu0 0
      %2564 = vmatprep.subr.bf16.mxu0 0
      %2565 = vmatpush1.bf16.msra.mxu0 0
      %2566 = vmatprep.subr.bf16.mxu0 0
      %2567 = vmatpush1.bf16.msra.mxu0 0
      %2568 = vmatprep.subr.bf16.mxu0 0
      %2569 = vmatpush1.bf16.msra.mxu0 0
      %2570 = vmatprep.mubr.bf16.mxu0 0
      %2571 = vmatmul.mubr.bf16.gmra.mrb[0].mxu0 %v2482
      %v2572 = vpop.f32.mrb[0].mxu0
      %v2573 = vadd.f32 0.0, %v2572
      %v2574 = vpop.f32.mrb[0].mxu0
      %v2575 = vpop.f32.mrb[0].mxu0
      %v2576 = vadd.f32 0.0, %v2575
      %v2577 = vpop.f32.mrb[0].mxu0
      %2578 = vmatprep.mubr.bf16.mxu0 0
      %2579 = vmatmul.mubr.bf16.gmra.mrb[0].mxu0 %v2485
      %v2580 = vpop.f32.mrb[0].mxu0
      %v2581 = vadd.f32 0.0, %v2580
      %v2582 = vpop.f32.mrb[0].mxu0
      %v2583 = vpop.f32.mrb[0].mxu0
      %v2584 = vadd.f32 0.0, %v2583
      %v2585 = vpop.f32.mrb[0].mxu0
      %2586 = vmatprep.mubr.bf16.mxu0 0
      %2587 = vmatmul.mubr.bf16.gmra.mrb[0].mxu0 %v2488
      %v2588 = vpop.f32.mrb[0].mxu0
      %v2589 = vadd.f32 0.0, %v2588
      %v2590 = vpop.f32.mrb[0].mxu0
      %v2591 = vpop.f32.mrb[0].mxu0
      %v2592 = vadd.f32 0.0, %v2591
      %v2593 = vpop.f32.mrb[0].mxu0
      %2594 = vmatprep.mubr.bf16.mxu0 0
      %2595 = vmatmul.mubr.bf16.gmra.mrb[0].mxu0 %v2491
      %v2596 = vpop.f32.mrb[0].mxu0
      %v2597 = vadd.f32 0.0, %v2596
      %v2598 = vpop.f32.mrb[0].mxu0
      %v2599 = vpop.f32.mrb[0].mxu0
      %v2600 = vadd.f32 0.0, %v2599
      %v2601 = vpop.f32.mrb[0].mxu0
      %2602 = vmatprep.mubr.bf16.mxu0 0
      %2603 = vmatmul.mubr.bf16.gmra.mrb[0].mxu0 %v2494
      %v2604 = vpop.f32.mrb[0].mxu0
      %v2605 = vadd.f32 0.0, %v2604
      %v2606 = vpop.f32.mrb[0].mxu0
      %v2607 = vpop.f32.mrb[0].mxu0
      %v2608 = vadd.f32 0.0, %v2607
      %v2609 = vpop.f32.mrb[0].mxu0
      %2610 = vmatprep.mubr.bf16.mxu0 0
      %2611 = vmatmul.mubr.bf16.gmra.mrb[0].mxu0 %v2497
      %v2612 = vpop.f32.mrb[0].mxu0
      %v2613 = vadd.f32 0.0, %v2612
      %v2614 = vpop.f32.mrb[0].mxu0
      %v2615 = vpop.f32.mrb[0].mxu0
      %v2616 = vadd.f32 0.0, %v2615
      %v2617 = vpop.f32.mrb[0].mxu0
      %2618 = vmatprep.mubr.bf16.mxu0 0
      %2619 = vmatmul.mubr.bf16.gmra.mrb[0].mxu0 %v2500
      %v2620 = vpop.f32.mrb[0].mxu0
      %v2621 = vadd.f32 0.0, %v2620
      %v2622 = vpop.f32.mrb[0].mxu0
      %v2623 = vpop.f32.mrb[0].mxu0
      %v2624 = vadd.f32 0.0, %v2623
      %v2625 = vpop.f32.mrb[0].mxu0
      %2626 = vmatprep.mubr.bf16.mxu0 0
      %2627 = vmatmul.mubr.bf16.gmra.mrb[0].mxu0 %v2503
      %v2628 = vpop.f32.mrb[0].mxu0
      %v2629 = vadd.f32 0.0, %v2628
      %v2630 = vpop.f32.mrb[0].mxu0
      %v2631 = vpop.f32.mrb[0].mxu0
      %v2632 = vadd.f32 0.0, %v2631
      %v2633 = vpop.f32.mrb[0].mxu0
      %2634 = vmatprep.mubr.bf16.mxu0 0
      %2635 = vmatmul.mubr.bf16.gmra.mrb[0].mxu0 %v2506
      %v2636 = vpop.f32.mrb[0].mxu0
      %v2637 = vadd.f32 0.0, %v2636
      %v2638 = vpop.f32.mrb[0].mxu0
      %v2639 = vpop.f32.mrb[0].mxu0
      %v2640 = vadd.f32 0.0, %v2639
      %v2641 = vpop.f32.mrb[0].mxu0
      %2642 = vmatprep.mubr.bf16.mxu0 0
      %2643 = vmatmul.mubr.bf16.gmra.mrb[0].mxu0 %v2509
      %v2644 = vpop.f32.mrb[0].mxu0
      %v2645 = vadd.f32 0.0, %v2644
      %v2646 = vpop.f32.mrb[0].mxu0
      %v2647 = vpop.f32.mrb[0].mxu0
      %v2648 = vadd.f32 0.0, %v2647
      %v2649 = vpop.f32.mrb[0].mxu0
      %2650 = vmatprep.mubr.bf16.mxu0 0
      %2651 = vmatmul.mubr.bf16.gmra.mrb[0].mxu0 %v2512
      %v2652 = vpop.f32.mrb[0].mxu0
      %v2653 = vadd.f32 0.0, %v2652
      %v2654 = vpop.f32.mrb[0].mxu0
      %v2655 = vpop.f32.mrb[0].mxu0
      %v2656 = vadd.f32 0.0, %v2655
      %v2657 = vpop.f32.mrb[0].mxu0
      %2658 = vmatprep.mubr.bf16.mxu0 0
      %2659 = vmatmul.mubr.bf16.gmra.mrb[0].mxu0 %v2515
      %v2660 = vpop.f32.mrb[0].mxu0
      %v2661 = vadd.f32 0.0, %v2660
      %v2662 = vpop.f32.mrb[0].mxu0
      %v2663 = vpop.f32.mrb[0].mxu0
      %v2664 = vadd.f32 0.0, %v2663
      %v2665 = vpop.f32.mrb[0].mxu0
      %2666 = vmatprep.mubr.bf16.mxu0 0
      %2667 = vmatmul.mubr.bf16.gmra.mrb[0].mxu0 %v2518
      %v2668 = vpop.f32.mrb[0].mxu0
      %v2669 = vadd.f32 0.0, %v2668
      %v2670 = vpop.f32.mrb[0].mxu0
      %v2671 = vpop.f32.mrb[0].mxu0
      %v2672 = vadd.f32 0.0, %v2671
      %v2673 = vpop.f32.mrb[0].mxu0
      %2674 = vmatprep.mubr.bf16.mxu0 0
      %2675 = vmatmul.mubr.bf16.gmra.mrb[0].mxu0 %v2521
      %v2676 = vpop.f32.mrb[0].mxu0
      %v2677 = vadd.f32 0.0, %v2676
      %v2678 = vpop.f32.mrb[0].mxu0
      %v2679 = vpop.f32.mrb[0].mxu0
      %v2680 = vadd.f32 0.0, %v2679
      %v2681 = vpop.f32.mrb[0].mxu0
      %2682 = vmatprep.mubr.bf16.mxu0 0
      %2683 = vmatmul.mubr.bf16.gmra.mrb[0].mxu0 %v2524
      %v2684 = vpop.f32.mrb[0].mxu0
      %v2685 = vadd.f32 0.0, %v2684
      %v2686 = vpop.f32.mrb[0].mxu0
      %v2687 = vpop.f32.mrb[0].mxu0
      %v2688 = vadd.f32 0.0, %v2687
      %v2689 = vpop.f32.mrb[0].mxu0
      %2690 = vmatprep.mubr.bf16.mxu0 0
      %2691 = vmatmul.mubr.bf16.gmra.mrb[0].mxu0 %v2527
      %v2692 = vpop.f32.mrb[0].mxu0
      %v2693 = vadd.f32 0.0, %v2692
      %v2694 = vpop.f32.mrb[0].mxu0
      %v2695 = vpop.f32.mrb[0].mxu0
      %v2696 = vadd.f32 0.0, %v2695
      %v2697 = vpop.f32.mrb[0].mxu0
      %2698 = vmatprep.mubr.bf16.mxu0 0
      %2699 = vmatmul.mubr.bf16.gmra.mrb[0].mxu0 %v2530
      %v2700 = vpop.f32.mrb[0].mxu0
      %v2701 = vadd.f32 0.0, %v2700
      %v2702 = vpop.f32.mrb[0].mxu0
      %v2703 = vpop.f32.mrb[0].mxu0
      %v2704 = vadd.f32 0.0, %v2703
      %v2705 = vpop.f32.mrb[0].mxu0
      %2706 = vmatprep.mubr.bf16.mxu0 0
      %2707 = vmatmul.mubr.bf16.gmra.mrb[0].mxu0 %v2533
      %v2708 = vpop.f32.mrb[0].mxu0
      %v2709 = vadd.f32 0.0, %v2708
      %v2710 = vpop.f32.mrb[0].mxu0
      %v2711 = vpop.f32.mrb[0].mxu0
      %v2712 = vadd.f32 0.0, %v2711
      %v2713 = vpop.f32.mrb[0].mxu0
      %2714 = vdwg.mxu0
      %v2715 = vadd.f32 %v2351, %v2573
      %v2716 = vadd.f32 %v2352, %v2576
      %v2717 = vadd.f32 %v2353, %v2581
      %v2718 = vadd.f32 %v2354, %v2584
      %v2719 = vadd.f32 %v2355, %v2589
      %v2720 = vadd.f32 %v2356, %v2592
      %v2721 = vadd.f32 %v2357, %v2597
      %v2722 = vadd.f32 %v2358, %v2600
      %v2723 = vadd.f32 %v2359, %v2605
      %v2724 = vadd.f32 %v2360, %v2608
      %v2725 = vadd.f32 %v2361, %v2613
      %v2726 = vadd.f32 %v2362, %v2616
      %v2727 = vadd.f32 %v2363, %v2621
      %v2728 = vadd.f32 %v2364, %v2624
      %v2729 = vadd.f32 %v2365, %v2629
      %v2730 = vadd.f32 %v2366, %v2632
      %v2731 = vadd.f32 %v2367, %v2637
      %v2732 = vadd.f32 %v2368, %v2640
      %v2733 = vadd.f32 %v2369, %v2645
      %v2734 = vadd.f32 %v2370, %v2648
      %v2735 = vadd.f32 %v2371, %v2653
      %v2736 = vadd.f32 %v2372, %v2656
      %v2737 = vadd.f32 %v2373, %v2661
      %v2738 = vadd.f32 %v2374, %v2664
      %v2739 = vadd.f32 %v2375, %v2669
      %v2740 = vadd.f32 %v2376, %v2672
      %v2741 = vadd.f32 %v2377, %v2677
      %v2742 = vadd.f32 %v2378, %v2680
      %v2743 = vadd.f32 %v2379, %v2685
      %v2744 = vadd.f32 %v2380, %v2688
      %v2745 = vadd.f32 %v2381, %v2693
      %v2746 = vadd.f32 %v2382, %v2696
      %v2747 = vadd.f32 %v2383, %v2701
      %v2748 = vadd.f32 %v2384, %v2704
      %v2749 = vadd.f32 %v2385, %v2709
      %v2750 = vadd.f32 %v2386, %v2712
      %vm2751 = vcmask 1044480
      %v2752 = vrot.slane %v293, 3
      %v2753 = vrot.slane %v294, 3
      %v2754 = vsel %vm2751, %v2752, %v2753
      %v2755 = vrot.slane %v295, 3
      %v2756 = vsel %vm2751, %v2753, %v2755
      %v2757 = vrot.slane %v296, 3
      %v2758 = vsel %vm2751, %v2755, %v2757
      %v2759 = vrot.slane %v297, 3
      %v2760 = vsel %vm2751, %v2757, %v2759
      %v2761 = vrot.slane %v298, 3
      %v2762 = vsel %vm2751, %v2759, %v2761
      %v2763 = vrot.slane %v299, 3
      %v2764 = vsel %vm2751, %v2761, %v2763
      %v2765 = vrot.slane %v300, 3
      %v2766 = vsel %vm2751, %v2763, %v2765
      %v2767 = vrot.slane %v301, 3
      %v2768 = vsel %vm2751, %v2765, %v2767
      %v2769 = vrot.slane %v302, 3
      %v2770 = vsel %vm2751, %v2767, %v2769
      %v2771 = vrot.slane %v303, 3
      %v2772 = vsel %vm2751, %v2769, %v2771
      %v2773 = vrot.slane %v304, 3
      %v2774 = vsel %vm2751, %v2771, %v2773
      %v2775 = vrot.slane %v305, 3
      %v2776 = vsel %vm2751, %v2773, %v2775
      %v2777 = vrot.slane %v306, 3
      %v2778 = vsel %vm2751, %v2775, %v2777
      %v2779 = vrot.slane %v307, 3
      %v2780 = vsel %vm2751, %v2777, %v2779
      %v2781 = vrot.slane %v308, 3
      %v2782 = vsel %vm2751, %v2779, %v2781
      %v2783 = vrot.slane %v1241, 3
      %v2784 = vsel %vm2751, %v2781, %v2783
      %v2785 = vrot.slane %v2157, 3
      %v2786 = vsel %vm2751, %v2783, %v2785
      %v2787 = vrot.slane %v2158, 3
      %v2788 = vsel %vm2751, %v2785, %v2787
      %v2790 = vsel %vm470, %v2754, 0
      %v2793 = vsel %vm470, %v2756, 0
      %v2796 = vsel %vm470, %v2758, 0
      %v2799 = vsel %vm470, %v2760, 0
      %v2802 = vsel %vm470, %v2762, 0
      %v2805 = vsel %vm470, %v2764, 0
      %v2808 = vsel %vm470, %v2766, 0
      %v2811 = vsel %vm470, %v2768, 0
      %v2814 = vsel %vm470, %v2770, 0
      %v2817 = vsel %vm470, %v2772, 0
      %v2820 = vsel %vm470, %v2774, 0
      %v2823 = vsel %vm470, %v2776, 0
      %v2826 = vsel %vm470, %v2778, 0
      %v2829 = vsel %vm470, %v2780, 0
      %v2832 = vsel %vm470, %v2782, 0
      %v2835 = vsel %vm470, %v2784, 0
      %v2838 = vsel %vm470, %v2786, 0
      %v2841 = vsel %vm470, %v2788, 0
      %v2844 = vand.u32 %v216, %v528
      %2846 = vmatprep.subr.bf16.mxu0 0
      %2847 = vmatpush1.bf16.msra.mxu0 %v2844
      %2848 = vmatprep.subr.bf16.mxu0 0
      %2849 = vmatpush1.bf16.msra.mxu0 0
      %2850 = vmatprep.subr.bf16.mxu0 0
      %2851 = vmatpush1.bf16.msra.mxu0 0
      %2852 = vmatprep.subr.bf16.mxu0 0
      %2853 = vmatpush1.bf16.msra.mxu0 0
      %2854 = vmatprep.subr.bf16.mxu0 0
      %2855 = vmatpush1.bf16.msra.mxu0 0
      %2856 = vmatprep.subr.bf16.mxu0 0
      %2857 = vmatpush1.bf16.msra.mxu0 0
      %2858 = vmatprep.subr.bf16.mxu0 0
      %2859 = vmatpush1.bf16.msra.mxu0 0
      %2860 = vmatprep.subr.bf16.mxu0 0
      %2861 = vmatpush1.bf16.msra.mxu0 0
      %2862 = vmatprep.subr.bf16.mxu0 0
      %2863 = vmatpush1.bf16.msra.mxu0 0
      %2864 = vmatprep.subr.bf16.mxu0 0
      %2865 = vmatpush1.bf16.msra.mxu0 0
      %2866 = vmatprep.subr.bf16.mxu0 0
      %2867 = vmatpush1.bf16.msra.mxu0 0
      %2868 = vmatprep.subr.bf16.mxu0 0
      %2869 = vmatpush1.bf16.msra.mxu0 0
      %2870 = vmatprep.subr.bf16.mxu0 0
      %2871 = vmatpush1.bf16.msra.mxu0 0
      %2872 = vmatprep.subr.bf16.mxu0 0
      %2873 = vmatpush1.bf16.msra.mxu0 0
      %2874 = vmatprep.subr.bf16.mxu0 0
      %2875 = vmatpush1.bf16.msra.mxu0 0
      %2876 = vmatprep.subr.bf16.mxu0 0
      %2877 = vmatpush1.bf16.msra.mxu0 0
      %2878 = vmatprep.mubr.bf16.mxu0 0
      %2879 = vmatmul.mubr.bf16.gmra.mrb[0].mxu0 %v2790
      %v2880 = vpop.f32.mrb[0].mxu0
      %v2881 = vadd.f32 0.0, %v2880
      %v2882 = vpop.f32.mrb[0].mxu0
      %v2883 = vpop.f32.mrb[0].mxu0
      %v2884 = vadd.f32 0.0, %v2883
      %v2885 = vpop.f32.mrb[0].mxu0
      %2886 = vmatprep.mubr.bf16.mxu0 0
      %2887 = vmatmul.mubr.bf16.gmra.mrb[0].mxu0 %v2793
      %v2888 = vpop.f32.mrb[0].mxu0
      %v2889 = vadd.f32 0.0, %v2888
      %v2890 = vpop.f32.mrb[0].mxu0
      %v2891 = vpop.f32.mrb[0].mxu0
      %v2892 = vadd.f32 0.0, %v2891
      %v2893 = vpop.f32.mrb[0].mxu0
      %2894 = vmatprep.mubr.bf16.mxu0 0
      %2895 = vmatmul.mubr.bf16.gmra.mrb[0].mxu0 %v2796
      %v2896 = vpop.f32.mrb[0].mxu0
      %v2897 = vadd.f32 0.0, %v2896
      %v2898 = vpop.f32.mrb[0].mxu0
      %v2899 = vpop.f32.mrb[0].mxu0
      %v2900 = vadd.f32 0.0, %v2899
      %v2901 = vpop.f32.mrb[0].mxu0
      %2902 = vmatprep.mubr.bf16.mxu0 0
      %2903 = vmatmul.mubr.bf16.gmra.mrb[0].mxu0 %v2799
      %v2904 = vpop.f32.mrb[0].mxu0
      %v2905 = vadd.f32 0.0, %v2904
      %v2906 = vpop.f32.mrb[0].mxu0
      %v2907 = vpop.f32.mrb[0].mxu0
      %v2908 = vadd.f32 0.0, %v2907
      %v2909 = vpop.f32.mrb[0].mxu0
      %2910 = vmatprep.mubr.bf16.mxu0 0
      %2911 = vmatmul.mubr.bf16.gmra.mrb[0].mxu0 %v2802
      %v2912 = vpop.f32.mrb[0].mxu0
      %v2913 = vadd.f32 0.0, %v2912
      %v2914 = vpop.f32.mrb[0].mxu0
      %v2915 = vpop.f32.mrb[0].mxu0
      %v2916 = vadd.f32 0.0, %v2915
      %v2917 = vpop.f32.mrb[0].mxu0
      %2918 = vmatprep.mubr.bf16.mxu0 0
      %2919 = vmatmul.mubr.bf16.gmra.mrb[0].mxu0 %v2805
      %v2920 = vpop.f32.mrb[0].mxu0
      %v2921 = vadd.f32 0.0, %v2920
      %v2922 = vpop.f32.mrb[0].mxu0
      %v2923 = vpop.f32.mrb[0].mxu0
      %v2924 = vadd.f32 0.0, %v2923
      %v2925 = vpop.f32.mrb[0].mxu0
      %2926 = vmatprep.mubr.bf16.mxu0 0
      %2927 = vmatmul.mubr.bf16.gmra.mrb[0].mxu0 %v2808
      %v2928 = vpop.f32.mrb[0].mxu0
      %v2929 = vadd.f32 0.0, %v2928
      %v2930 = vpop.f32.mrb[0].mxu0
      %v2931 = vpop.f32.mrb[0].mxu0
      %v2932 = vadd.f32 0.0, %v2931
      %v2933 = vpop.f32.mrb[0].mxu0
      %2934 = vmatprep.mubr.bf16.mxu0 0
      %2935 = vmatmul.mubr.bf16.gmra.mrb[0].mxu0 %v2811
      %v2936 = vpop.f32.mrb[0].mxu0
      %v2937 = vadd.f32 0.0, %v2936
      %v2938 = vpop.f32.mrb[0].mxu0
      %v2939 = vpop.f32.mrb[0].mxu0
      %v2940 = vadd.f32 0.0, %v2939
      %v2941 = vpop.f32.mrb[0].mxu0
      %2942 = vmatprep.mubr.bf16.mxu0 0
      %2943 = vmatmul.mubr.bf16.gmra.mrb[0].mxu0 %v2814
      %v2944 = vpop.f32.mrb[0].mxu0
      %v2945 = vadd.f32 0.0, %v2944
      %v2946 = vpop.f32.mrb[0].mxu0
      %v2947 = vpop.f32.mrb[0].mxu0
      %v2948 = vadd.f32 0.0, %v2947
      %v2949 = vpop.f32.mrb[0].mxu0
      %2950 = vmatprep.mubr.bf16.mxu0 0
      %2951 = vmatmul.mubr.bf16.gmra.mrb[0].mxu0 %v2817
      %v2952 = vpop.f32.mrb[0].mxu0
      %v2953 = vadd.f32 0.0, %v2952
      %v2954 = vpop.f32.mrb[0].mxu0
      %v2955 = vpop.f32.mrb[0].mxu0
      %v2956 = vadd.f32 0.0, %v2955
      %v2957 = vpop.f32.mrb[0].mxu0
      %2958 = vmatprep.mubr.bf16.mxu0 0
      %2959 = vmatmul.mubr.bf16.gmra.mrb[0].mxu0 %v2820
      %v2960 = vpop.f32.mrb[0].mxu0
      %v2961 = vadd.f32 0.0, %v2960
      %v2962 = vpop.f32.mrb[0].mxu0
      %v2963 = vpop.f32.mrb[0].mxu0
      %v2964 = vadd.f32 0.0, %v2963
      %v2965 = vpop.f32.mrb[0].mxu0
      %2966 = vmatprep.mubr.bf16.mxu0 0
      %2967 = vmatmul.mubr.bf16.gmra.mrb[0].mxu0 %v2823
      %v2968 = vpop.f32.mrb[0].mxu0
      %v2969 = vadd.f32 0.0, %v2968
      %v2970 = vpop.f32.mrb[0].mxu0
      %v2971 = vpop.f32.mrb[0].mxu0
      %v2972 = vadd.f32 0.0, %v2971
      %v2973 = vpop.f32.mrb[0].mxu0
      %2974 = vmatprep.mubr.bf16.mxu0 0
      %2975 = vmatmul.mubr.bf16.gmra.mrb[0].mxu0 %v2826
      %v2976 = vpop.f32.mrb[0].mxu0
      %v2977 = vadd.f32 0.0, %v2976
      %v2978 = vpop.f32.mrb[0].mxu0
      %v2979 = vpop.f32.mrb[0].mxu0
      %v2980 = vadd.f32 0.0, %v2979
      %v2981 = vpop.f32.mrb[0].mxu0
      %2982 = vmatprep.mubr.bf16.mxu0 0
      %2983 = vmatmul.mubr.bf16.gmra.mrb[0].mxu0 %v2829
      %v2984 = vpop.f32.mrb[0].mxu0
      %v2985 = vadd.f32 0.0, %v2984
      %v2986 = vpop.f32.mrb[0].mxu0
      %v2987 = vpop.f32.mrb[0].mxu0
      %v2988 = vadd.f32 0.0, %v2987
      %v2989 = vpop.f32.mrb[0].mxu0
      %2990 = vmatprep.mubr.bf16.mxu0 0
      %2991 = vmatmul.mubr.bf16.gmra.mrb[0].mxu0 %v2832
      %v2992 = vpop.f32.mrb[0].mxu0
      %v2993 = vadd.f32 0.0, %v2992
      %v2994 = vpop.f32.mrb[0].mxu0
      %v2995 = vpop.f32.mrb[0].mxu0
      %v2996 = vadd.f32 0.0, %v2995
      %v2997 = vpop.f32.mrb[0].mxu0
      %2998 = vmatprep.mubr.bf16.mxu0 0
      %2999 = vmatmul.mubr.bf16.gmra.mrb[0].mxu0 %v2835
      %v3000 = vpop.f32.mrb[0].mxu0
      %v3001 = vadd.f32 0.0, %v3000
      %v3002 = vpop.f32.mrb[0].mxu0
      %v3003 = vpop.f32.mrb[0].mxu0
      %v3004 = vadd.f32 0.0, %v3003
      %v3005 = vpop.f32.mrb[0].mxu0
      %3006 = vmatprep.mubr.bf16.mxu0 0
      %3007 = vmatmul.mubr.bf16.gmra.mrb[0].mxu0 %v2838
      %v3008 = vpop.f32.mrb[0].mxu0
      %v3009 = vadd.f32 0.0, %v3008
      %v3010 = vpop.f32.mrb[0].mxu0
      %v3011 = vpop.f32.mrb[0].mxu0
      %v3012 = vadd.f32 0.0, %v3011
      %v3013 = vpop.f32.mrb[0].mxu0
      %3014 = vmatprep.mubr.bf16.mxu0 0
      %3015 = vmatmul.mubr.bf16.gmra.mrb[0].mxu0 %v2841
      %v3016 = vpop.f32.mrb[0].mxu0
      %v3017 = vadd.f32 0.0, %v3016
      %v3018 = vpop.f32.mrb[0].mxu0
      %v3019 = vpop.f32.mrb[0].mxu0
      %v3020 = vadd.f32 0.0, %v3019
      %v3021 = vpop.f32.mrb[0].mxu0
      %3022 = vdwg.mxu0
      %v3023 = vadd.f32 %v2715, %v2881
      %v3024 = vadd.f32 %v2716, %v2884
      %v3025 = vadd.f32 %v2717, %v2889
      %v3026 = vadd.f32 %v2718, %v2892
      %v3027 = vadd.f32 %v2719, %v2897
      %v3028 = vadd.f32 %v2720, %v2900
      %v3029 = vadd.f32 %v2721, %v2905
      %v3030 = vadd.f32 %v2722, %v2908
      %v3031 = vadd.f32 %v2723, %v2913
      %v3032 = vadd.f32 %v2724, %v2916
      %v3033 = vadd.f32 %v2725, %v2921
      %v3034 = vadd.f32 %v2726, %v2924
      %v3035 = vadd.f32 %v2727, %v2929
      %v3036 = vadd.f32 %v2728, %v2932
      %v3037 = vadd.f32 %v2729, %v2937
      %v3038 = vadd.f32 %v2730, %v2940
      %v3039 = vadd.f32 %v2731, %v2945
      %v3040 = vadd.f32 %v2732, %v2948
      %v3041 = vadd.f32 %v2733, %v2953
      %v3042 = vadd.f32 %v2734, %v2956
      %v3043 = vadd.f32 %v2735, %v2961
      %v3044 = vadd.f32 %v2736, %v2964
      %v3045 = vadd.f32 %v2737, %v2969
      %v3046 = vadd.f32 %v2738, %v2972
      %v3047 = vadd.f32 %v2739, %v2977
      %v3048 = vadd.f32 %v2740, %v2980
      %v3049 = vadd.f32 %v2741, %v2985
      %v3050 = vadd.f32 %v2742, %v2988
      %v3051 = vadd.f32 %v2743, %v2993
      %v3052 = vadd.f32 %v2744, %v2996
      %v3053 = vadd.f32 %v2745, %v3001
      %v3054 = vadd.f32 %v2746, %v3004
      %v3055 = vadd.f32 %v2747, %v3009
      %v3056 = vadd.f32 %v2748, %v3012
      %v3057 = vadd.f32 %v2749, %v3017
      %v3058 = vadd.f32 %v2750, %v3020
      %v3059 = vld [vmem:[%s2] sm:$0x1]
      %v3061 = vlaneseq
      %v3062 = vshrl.u32 %v3061, 7
      %v3063 = vsub.s32 0, %v3062
      %v3064 = vrot.slane %v3059, %v3063
      %v3066 = vadd.f32 %v3023, %v3064
      %v3067 = vadd.f32 %v3024, %v3064
      %v3068 = vadd.f32 %v3025, %v3064
      %v3069 = vadd.f32 %v3026, %v3064
      %v3070 = vadd.f32 %v3027, %v3064
      %v3071 = vadd.f32 %v3028, %v3064
      %v3072 = vadd.f32 %v3029, %v3064
      %v3073 = vadd.f32 %v3030, %v3064
      %v3074 = vadd.f32 %v3031, %v3064
      %v3075 = vadd.f32 %v3032, %v3064
      %v3076 = vadd.f32 %v3033, %v3064
      %v3077 = vadd.f32 %v3034, %v3064
      %v3078 = vadd.f32 %v3035, %v3064
      %v3079 = vadd.f32 %v3036, %v3064
      %v3080 = vadd.f32 %v3037, %v3064
      %v3081 = vadd.f32 %v3038, %v3064
      %v3082 = vadd.f32 %v3039, %v3064
      %v3083 = vadd.f32 %v3040, %v3064
      %v3084 = vadd.f32 %v3041, %v3064
      %v3085 = vadd.f32 %v3042, %v3064
      %v3086 = vadd.f32 %v3043, %v3064
      %v3087 = vadd.f32 %v3044, %v3064
      %v3088 = vadd.f32 %v3045, %v3064
      %v3089 = vadd.f32 %v3046, %v3064
      %v3090 = vadd.f32 %v3047, %v3064
      %v3091 = vadd.f32 %v3048, %v3064
      %v3092 = vadd.f32 %v3049, %v3064
      %v3093 = vadd.f32 %v3050, %v3064
      %v3094 = vadd.f32 %v3051, %v3064
      %v3095 = vadd.f32 %v3052, %v3064
      %v3096 = vadd.f32 %v3053, %v3064
      %v3097 = vadd.f32 %v3054, %v3064
      %v3098 = vadd.f32 %v3055, %v3064
      %v3099 = vadd.f32 %v3056, %v3064
      %v3100 = vadd.f32 %v3057, %v3064
      %v3101 = vadd.f32 %v3058, %v3064
      %v3102 = vpack.c.bf16 %v3067, %v3066
      %v3103 = vpack.c.bf16 %v3069, %v3068
      %v3104 = vpack.c.bf16 %v3071, %v3070
      %v3105 = vpack.c.bf16 %v3073, %v3072
      %v3106 = vpack.c.bf16 %v3075, %v3074
      %v3107 = vpack.c.bf16 %v3077, %v3076
      %v3108 = vpack.c.bf16 %v3079, %v3078
      %v3109 = vpack.c.bf16 %v3081, %v3080
      %v3110 = vpack.c.bf16 %v3083, %v3082
      %v3111 = vpack.c.bf16 %v3085, %v3084
      %v3112 = vpack.c.bf16 %v3087, %v3086
      %v3113 = vpack.c.bf16 %v3089, %v3088
      %v3114 = vpack.c.bf16 %v3091, %v3090
      %v3115 = vpack.c.bf16 %v3093, %v3092
      %v3116 = vpack.c.bf16 %v3095, %v3094
      %v3117 = vpack.c.bf16 %v3097, %v3096
      %v3118 = vpack.c.bf16 %v3099, %v3098
      %v3119 = vpack.c.bf16 %v3101, %v3100
      %v3138 = vunpack.c.l.b16 %v3102
      %v3139 = vunpack.c.h.b16 %v3102
      %v3140 = vunpack.c.l.b16 %v3103
      %v3141 = vunpack.c.h.b16 %v3103
      %v3142 = vunpack.c.l.b16 %v3104
      %v3143 = vunpack.c.h.b16 %v3104
      %v3144 = vunpack.c.l.b16 %v3105
      %v3145 = vunpack.c.h.b16 %v3105
      %v3146 = vunpack.c.l.b16 %v3106
      %v3147 = vunpack.c.h.b16 %v3106
      %v3148 = vunpack.c.l.b16 %v3107
      %v3149 = vunpack.c.h.b16 %v3107
      %v3150 = vunpack.c.l.b16 %v3108
      %v3151 = vunpack.c.h.b16 %v3108
      %v3152 = vunpack.c.l.b16 %v3109
      %v3153 = vunpack.c.h.b16 %v3109
      %v3154 = vunpack.c.l.b16 %v3110
      %v3155 = vunpack.c.h.b16 %v3110
      %v3156 = vunpack.c.l.b16 %v3111
      %v3157 = vunpack.c.h.b16 %v3111
      %v3158 = vunpack.c.l.b16 %v3112
      %v3159 = vunpack.c.h.b16 %v3112
      %v3160 = vunpack.c.l.b16 %v3113
      %v3161 = vunpack.c.h.b16 %v3113
      %v3162 = vunpack.c.l.b16 %v3114
      %v3163 = vunpack.c.h.b16 %v3114
      %v3164 = vunpack.c.l.b16 %v3115
      %v3165 = vunpack.c.h.b16 %v3115
      %v3166 = vunpack.c.l.b16 %v3116
      %v3167 = vunpack.c.h.b16 %v3116
      %v3168 = vunpack.c.l.b16 %v3117
      %v3169 = vunpack.c.h.b16 %v3117
      %v3170 = vunpack.c.l.b16 %v3118
      %v3171 = vunpack.c.h.b16 %v3118
      %v3172 = vunpack.c.l.b16 %v3119
      %v3173 = vunpack.c.h.b16 %v3119
      %v3174 = vpack.c.b16 %v3138, %v3138
      %v3175 = vpack.c.b16 %v3139, %v3139
      %v3176 = vpack.c.b16 %v3140, %v3140
      %v3177 = vpack.c.b16 %v3141, %v3141
      %v3178 = vpack.c.b16 %v3142, %v3142
      %v3179 = vpack.c.b16 %v3143, %v3143
      %v3180 = vpack.c.b16 %v3144, %v3144
      %v3181 = vpack.c.b16 %v3145, %v3145
      %v3182 = vpack.c.b16 %v3146, %v3146
      %v3183 = vpack.c.b16 %v3147, %v3147
      %v3184 = vpack.c.b16 %v3148, %v3148
      %v3185 = vpack.c.b16 %v3149, %v3149
      %v3186 = vpack.c.b16 %v3150, %v3150
      %v3187 = vpack.c.b16 %v3151, %v3151
      %v3188 = vpack.c.b16 %v3152, %v3152
      %v3189 = vpack.c.b16 %v3153, %v3153
      %v3190 = vpack.c.b16 %v3154, %v3154
      %v3191 = vpack.c.b16 %v3155, %v3155
      %v3192 = vpack.c.b16 %v3156, %v3156
      %v3193 = vpack.c.b16 %v3157, %v3157
      %v3194 = vpack.c.b16 %v3158, %v3158
      %v3195 = vpack.c.b16 %v3159, %v3159
      %v3196 = vpack.c.b16 %v3160, %v3160
      %v3197 = vpack.c.b16 %v3161, %v3161
      %v3198 = vpack.c.b16 %v3162, %v3162
      %v3199 = vpack.c.b16 %v3163, %v3163
      %v3200 = vpack.c.b16 %v3164, %v3164
      %v3201 = vpack.c.b16 %v3165, %v3165
      %v3202 = vpack.c.b16 %v3166, %v3166
      %v3203 = vpack.c.b16 %v3167, %v3167
      %v3204 = vpack.c.b16 %v3168, %v3168
      %v3205 = vpack.c.b16 %v3169, %v3169
      %v3206 = vpack.c.b16 %v3170, %v3170
      %v3207 = vpack.c.b16 %v3171, %v3171
      %v3208 = vpack.c.b16 %v3172, %v3172
      %v3209 = vpack.c.b16 %v3173, %v3173
      %vm3246 = vcmask 125952
      %3247 = vst.msk [vmem:[%s170] sm:$0xf] %vm3246, %v3174
      %3248 = vst.msk [vmem:[%s170 + $0x4] sm:$0xf] %vm3246, %v3175
      %3249 = vst.msk [vmem:[%s170 + $0x8] sm:$0xf] %vm3246, %v3176
      %3250 = vst.msk [vmem:[%s170 + $0xc] sm:$0xf] %vm3246, %v3177
      %3251 = vst.msk [vmem:[%s170 + $0x10] sm:$0xf] %vm3246, %v3178
      %3252 = vst.msk [vmem:[%s170 + $0x14] sm:$0xf] %vm3246, %v3179
      %3253 = vst.msk [vmem:[%s170 + $0x18] sm:$0xf] %vm3246, %v3180
      %3254 = vst.msk [vmem:[%s170 + $0x1c] sm:$0xf] %vm3246, %v3181
      %3255 = vst.msk [vmem:[%s170 + $0x20] sm:$0xf] %vm3246, %v3182
      %3256 = vst.msk [vmem:[%s170 + $0x24] sm:$0xf] %vm3246, %v3183
      %3257 = vst.msk [vmem:[%s170 + $0x28] sm:$0xf] %vm3246, %v3184
      %3258 = vst.msk [vmem:[%s170 + $0x2c] sm:$0xf] %vm3246, %v3185
      %3259 = vst.msk [vmem:[%s170 + $0x30] sm:$0xf] %vm3246, %v3186
      %3260 = vst.msk [vmem:[%s170 + $0x34] sm:$0xf] %vm3246, %v3187
      %3261 = vst.msk [vmem:[%s170 + $0x38] sm:$0xf] %vm3246, %v3188
      %3262 = vst.msk [vmem:[%s170 + $0x3c] sm:$0xf] %vm3246, %v3189
      %3263 = vst.msk [vmem:[%s170 + $0x40] sm:$0xf] %vm3246, %v3190
      %3264 = vst.msk [vmem:[%s170 + $0x44] sm:$0xf] %vm3246, %v3191
      %3265 = vst.msk [vmem:[%s170 + $0x48] sm:$0xf] %vm3246, %v3192
      %3266 = vst.msk [vmem:[%s170 + $0x4c] sm:$0xf] %vm3246, %v3193
      %3267 = vst.msk [vmem:[%s170 + $0x50] sm:$0xf] %vm3246, %v3194
      %3268 = vst.msk [vmem:[%s170 + $0x54] sm:$0xf] %vm3246, %v3195
      %3269 = vst.msk [vmem:[%s170 + $0x58] sm:$0xf] %vm3246, %v3196
      %3270 = vst.msk [vmem:[%s170 + $0x5c] sm:$0xf] %vm3246, %v3197
      %3271 = vst.msk [vmem:[%s170 + $0x60] sm:$0xf] %vm3246, %v3198
      %3272 = vst.msk [vmem:[%s170 + $0x64] sm:$0xf] %vm3246, %v3199
      %3273 = vst.msk [vmem:[%s170 + $0x68] sm:$0xf] %vm3246, %v3200
      %3274 = vst.msk [vmem:[%s170 + $0x6c] sm:$0xf] %vm3246, %v3201
      %3275 = vst.msk [vmem:[%s170 + $0x70] sm:$0xf] %vm3246, %v3202
      %3276 = vst.msk [vmem:[%s170 + $0x74] sm:$0xf] %vm3246, %v3203
      %3277 = vst.msk [vmem:[%s170 + $0x78] sm:$0xf] %vm3246, %v3204
      %3278 = vst.msk [vmem:[%s170 + $0x7c] sm:$0xf] %vm3246, %v3205
      %3279 = vst.msk [vmem:[%s170 + $0x80] sm:$0xf] %vm3246, %v3206
      %3280 = vst.msk [vmem:[%s170 + $0x84] sm:$0xf] %vm3246, %v3207
      %3281 = vst.msk [vmem:[%s170 + $0x88] sm:$0xf] %vm3246, %v3208
      %3282 = vst.msk [vmem:[%s170 + $0x8c] sm:$0xf] %vm3246, %v3209
      %p3283 = scmp.lt.s32.totalorder %s14, 1
      %s3284 = scalar_select %p3283, %s14, 1
      %s3285 = smul.addr %s3284, 36
      %s3286 = smul.addr %s3285, 4
      %s3287 = scalar_lea.vmem %s3, %s3286
      // Predicated region
      $region33: #{densenet_forward.16} parent=31 // pred_check
        %p3288 = pneg %p100
      $region34: #{densenet_forward.16} parent=31 // pred_check_branch
        %3290 = sbr.rel (%p3288) target = $region36
      $region35: #{densenet_forward.16} parent=31 // pred_region
        _
      $region36: #{densenet_forward.16} parent=31 // pred_fallthru
        _
    $region32: #{densenet_forward.16} parent=5 // pred_fallthru
      _
    %p3291 = scmp.le.s32.totalorder 2, %s9
    // Predicated region
    $region37: #{densenet_forward.16} parent=5 // pred_check
      %p3292 = pneg %p3291
    $region38: #{densenet_forward.16} parent=5 // pred_check_branch
      %3294 = sbr.rel (%p3292) target = $region40
    $region39: #{densenet_forward.16} parent=5 // pred_region
      %s3295 = ssub.s32 %s9, 2
      // Predicated region
      $region41: #{densenet_forward.16} parent=39 // pred_check
        %p3296 = pneg %p106
      $region42: #{densenet_forward.16} parent=39 // pred_check_branch
        %3298 = sbr.rel (%p3296) target = $region44
      $region43: #{densenet_forward.16} parent=39 // pred_region
        %p3299 = scmp.lt.s32.totalorder %s15, 1
        %s3300 = scalar_select %p3299, %s15, 1
        %s3301 = smul.addr %s3300, 36
        %s3302 = smul.addr %s3301, 4
        %s3303 = scalar_lea.vmem %s3, %s3302
      $region44: #{densenet_forward.16} parent=39 // pred_fallthru
        _
    $region40: #{densenet_forward.16} parent=5 // pred_fallthru
      _
  $region6: #{densenet_forward.16} parent=0 // loop_footer
    %s13 = sadd.s32 1, %s9
  $region7: #{densenet_forward.16} parent=0 // loop_footer_branch
    %8 = sbr.rel target = $region3
  $region8: #{densenet_forward.16} parent=0 // loop_exit
    _

// kernel: densenet_forward.21
$region0: #{densenet_forward.21}
  #allocation0 [shape = 'u32[]', space=smem, size = 0x4, offset = 0x4, fixed_abs, tag = 'smem constant byte address 0x4 - core index']
  #allocation1 [shape = 'u32[144,128]{1,0:T(1,128)}', space=vmem, size = 0x12000, scoped, tag = 'internal scratch']
  %s0 = inlined_call_operand.vmem [shape: bf16[256,64], index: 0, kind: input, shape index: {}]
  %s1 = inlined_call_operand.vmem [shape: f32[1,64], index: 1, kind: input, shape index: {}]
  %s2 = inlined_call_operand.vmem [shape: f32[1,64], index: 2, kind: input, shape index: {}]
  %s3 = inlined_call_operand.vmem [shape: bf16[256,32], index: 3, kind: output, shape index: {}]
  %s4 = sld [smem:[#allocation0]]
  $region45: #{densenet_forward.21} parent=0
    _
  %s6 = ssub.s32 1, %s4
  %s7 = scalar_select 0, %s6, %s4
  loop: start=0, step=1, limit=6
  $region2: #{densenet_forward.21} parent=0 // loop_pre_header
    _
  $region3: #{densenet_forward.21} parent=0 // loop_header
    %s9 = sphi 0, %s13
    %p10 = scmp.ge.s32.totalorder %s9, 6
    %s19 = sphi 0, %s21
    %s22 = sphi 0, %s19
    %s23 = sphi 0, %s22
    %s39 = sphi 0, %s23
    %s43 = sphi 0, %s43
    %s45 = sphi 0, %s43
    %s46 = sphi 0, %s45
    %s60 = sphi 0, %s46
    %s64 = sphi 0, %s64
    %s66 = sphi 0, %s64
    %s67 = sphi 0, %s66
    %s81 = sphi 0, %s67
    %s87 = sphi 0, %s89
    %s90 = sphi 0, %s87
    %s91 = sphi 0, %s90
    %s107 = sphi 0, %s91
  $region4: #{densenet_forward.21} parent=0 // loop_header_branch
    %12 = sbr.rel (%p10) target = $region8
  $region5: #{densenet_forward.21} parent=0 // loop_body
    %s14 = ssub.s32 %s9, 1
    %s15 = ssub.s32 %s9, 2
    %s16 = sadd.s32 %s9, 1
    %s17 = ssub.s32 %s9, %s16
    %p18 = scmp.eq.s32.totalorder %s17, 0
    %s20 = sadd.s32 %s19, 1
    %s21 = scalar_select %p18, %s19, %s20
    %p24 = pneg %p18
    %p25 = scmp.eq.s32.totalorder %s9, 3
    %p26 = por %p24, %p25
    %p27 = scmp.ne.s32.totalorder %s19, %s22
    %p28 = scmp.eq.s32.totalorder %s9, 0
    %p29 = por %p27, %p28
    %p30 = scmp.ne.s32.totalorder %s19, %s22
    %p31 = scmp.eq.s32.totalorder %s14, 3
    %p32 = por %p30, %p31
    %p33 = scmp.ne.s32.totalorder %s22, %s23
    %p34 = scmp.eq.s32.totalorder %s14, 0
    %p35 = por %p33, %p34
    %p36 = scmp.ne.s32.totalorder %s22, %s23
    %p37 = scmp.eq.s32.totalorder %s15, 3
    %p38 = por %p36, %p37
    %p40 = scmp.ne.s32.totalorder %s23, %s39
    %p41 = scmp.eq.s32.totalorder %s15, 0
    %p42 = por %p40, %p41
    %s44 = sadd.s32 %s43, 1
    %p47 = scmp.eq.s32.totalorder %s9, 3
    %p48 = scmp.ne.s32.totalorder %s43, %s45
    %p49 = scmp.eq.s32.totalorder %s9, 0
    %p50 = por %p48, %p49
    %p51 = scmp.ne.s32.totalorder %s43, %s45
    %p52 = scmp.eq.s32.totalorder %s14, 3
    %p53 = por %p51, %p52
    %p54 = scmp.ne.s32.totalorder %s45, %s46
    %p55 = scmp.eq.s32.totalorder %s14, 0
    %p56 = por %p54, %p55
    %p57 = scmp.ne.s32.totalorder %s45, %s46
    %p58 = scmp.eq.s32.totalorder %s15, 3
    %p59 = por %p57, %p58
    %p61 = scmp.ne.s32.totalorder %s46, %s60
    %p62 = scmp.eq.s32.totalorder %s15, 0
    %p63 = por %p61, %p62
    %s65 = sadd.s32 %s64, 1
    %p68 = scmp.eq.s32.totalorder %s9, 3
    %p69 = scmp.ne.s32.totalorder %s64, %s66
    %p70 = scmp.eq.s32.totalorder %s9, 0
    %p71 = por %p69, %p70
    %p72 = scmp.ne.s32.totalorder %s64, %s66
    %p73 = scmp.eq.s32.totalorder %s14, 3
    %p74 = por %p72, %p73
    %p75 = scmp.ne.s32.totalorder %s66, %s67
    %p76 = scmp.eq.s32.totalorder %s14, 0
    %p77 = por %p75, %p76
    %p78 = scmp.ne.s32.totalorder %s66, %s67
    %p79 = scmp.eq.s32.totalorder %s15, 3
    %p80 = por %p78, %p79
    %p82 = scmp.ne.s32.totalorder %s67, %s81
    %p83 = scmp.eq.s32.totalorder %s15, 0
    %p84 = por %p82, %p83
    %s85 = ssub.s32 %s9, %s16
    %p86 = scmp.eq.s32.totalorder %s85, 0
    %s88 = sadd.s32 %s87, 1
    %s89 = scalar_select %p86, %s87, %s88
    %p92 = pneg %p86
    %p93 = scmp.eq.s32.totalorder %s9, 3
    %p94 = por %p92, %p93
    %p95 = scmp.ne.s32.totalorder %s87, %s90
    %p96 = scmp.eq.s32.totalorder %s9, 0
    %p97 = por %p95, %p96
    %p98 = scmp.ne.s32.totalorder %s87, %s90
    %p99 = scmp.eq.s32.totalorder %s14, 3
    %p100 = por %p98, %p99
    %p101 = scmp.ne.s32.totalorder %s90, %s91
    %p102 = scmp.eq.s32.totalorder %s14, 0
    %p103 = por %p101, %p102
    %p104 = scmp.ne.s32.totalorder %s90, %s91
    %p105 = scmp.eq.s32.totalorder %s15, 3
    %p106 = por %p104, %p105
    %p108 = scmp.ne.s32.totalorder %s91, %s107
    %p109 = scmp.eq.s32.totalorder %s15, 0
    %p110 = por %p108, %p109
    %p111 = scmp.le.s32.totalorder 1, %s9
    %p112 = scmp.lt.s32.totalorder %s9, 5
    %p113 = pnand %p111, %p112
    %p114 = pneg %p113
    // Predicated region
    $region9: #{densenet_forward.21} parent=5 // pred_check
      _
    $region10: #{densenet_forward.21} parent=5 // pred_check_branch
      %116 = sbr.rel (%p113) target = $region12
    $region11: #{densenet_forward.21} parent=5 // pred_region
      %s117 = ssub.s32 %s9, 1
      // Predicated region
      $region13: #{densenet_forward.21} parent=11 // pred_check
        %p118 = pneg %p56
      $region14: #{densenet_forward.21} parent=11 // pred_check_branch
        %120 = sbr.rel (%p118) target = $region16
      $region15: #{densenet_forward.21} parent=11 // pred_region
        _
      $region16: #{densenet_forward.21} parent=11 // pred_fallthru
        _
      // Predicated region
      $region17: #{densenet_forward.21} parent=11 // pred_check
        %p121 = pneg %p77
      $region18: #{densenet_forward.21} parent=11 // pred_check_branch
        %123 = sbr.rel (%p121) target = $region20
      $region19: #{densenet_forward.21} parent=11 // pred_region
        _
      $region20: #{densenet_forward.21} parent=11 // pred_fallthru
        _
    $region12: #{densenet_forward.21} parent=5 // pred_fallthru
      _
    %p124 = scmp.lt.s32.totalorder %s9, 4
    // Predicated region
    $region21: #{densenet_forward.21} parent=5 // pred_check
      %p125 = pneg %p124
    $region22: #{densenet_forward.21} parent=5 // pred_check_branch
      %127 = sbr.rel (%p125) target = $region24
    $region23: #{densenet_forward.21} parent=5 // pred_region
      // Predicated region
      $region25: #{densenet_forward.21} parent=23 // pred_check
        %p128 = pneg %p29
      $region26: #{densenet_forward.21} parent=23 // pred_check_branch
        %130 = sbr.rel (%p128) target = $region28
      $region27: #{densenet_forward.21} parent=23 // pred_region
        %s131 = smul.u32 8, %s9
        %p132 = scmp.lt.s32.totalorder %s131, 31
        %s133 = scalar_select %p132, %s131, 31
        %s134 = smul.addr %s133, 4
        %s135 = scalar_lea.vmem %s0, %s134
        %s136 = smul.u32 8, %s9
      $region28: #{densenet_forward.21} parent=23 // pred_fallthru
        _
    $region24: #{densenet_forward.21} parent=5 // pred_fallthru
      _
    %p137 = scmp.le.s32.totalorder 1, %s9
    %p138 = scmp.lt.s32.totalorder %s9, 5
    %p139 = pnand %p137, %p138
    %p140 = pneg %p139
    // Predicated region
    $region29: #{densenet_forward.21} parent=5 // pred_check
      _
    $region30: #{densenet_forward.21} parent=5 // pred_check_branch
      %142 = sbr.rel (%p139) target = $region32
    $region31: #{densenet_forward.21} parent=5 // pred_region
      %s143 = ssub.s32 %s9, 1
      %s144 = smul.u32 8, %s14
      %p145 = scmp.lt.s32.totalorder %s144, 31
      %s146 = scalar_select %p145, %s144, 31
      %s147 = smul.addr %s146, 4
      %s148 = scalar_lea.vmem %s0, %s147
      %p149 = pneg %p35
      %p150 = pneg %p32
      %p151 = pneg %p56
      %p152 = pneg %p53
      %p153 = pneg %p77
      %p154 = pneg %p74
      %p155 = pneg %p103
      %p156 = pneg %p100
      %s157 = smul.u32 8, %s14
      %p158 = scmp.lt.s32.totalorder %s157, 31
      %s159 = scalar_select %p158, %s157, 31
      %s160 = smul.addr %s159, 4
      %s161 = scalar_lea.vmem %s3, %s160
      %s162 = smul.u32 8, %s14
      %p163 = scmp.lt.s32.totalorder %s162, 31
      %s164 = scalar_select %p163, %s162, 31
      %s165 = smul.addr %s164, 4
      %s166 = scalar_lea.vmem %s0, %s165
      %s167 = smul.u32 8, %s14
      %s168 = smul.u32 8, %s14
      %p169 = scmp.lt.s32.totalorder %s168, 31
      %s170 = scalar_select %p169, %s168, 31
      %s171 = smul.addr %s170, 4
      %s172 = scalar_lea.vmem %s3, %s171
      %s173 = smul.u32 8, %s14
      %v174 = vld [vmem:[%s166] sm:$0xf]
      %v175 = vld [vmem:[%s166 + $0x4] sm:$0xf]
      %v176 = vld [vmem:[%s166 + $0x8] sm:$0xf]
      %v177 = vld [vmem:[%s166 + $0xc] sm:$0xf]
      %v178 = vld [vmem:[%s166 + $0x10] sm:$0xf]
      %v179 = vld [vmem:[%s166 + $0x14] sm:$0xf]
      %v180 = vld [vmem:[%s166 + $0x18] sm:$0xf]
      %v181 = vld [vmem:[%s166 + $0x1c] sm:$0xf]
      %v182 = vunpack.c.l.bf16 %v174
      %v183 = vunpack.c.l.bf16 %v175
      %v184 = vunpack.c.l.bf16 %v176
      %v185 = vunpack.c.l.bf16 %v177
      %v186 = vunpack.c.l.bf16 %v178
      %v187 = vunpack.c.l.bf16 %v179
      %v188 = vunpack.c.l.bf16 %v180
      %v189 = vunpack.c.l.bf16 %v181
      %v190 = vld [vmem:[%s1] sm:$0x1]
      %v192 = vlaneseq
      %v193 = vshrl.u32 %v192, 7
      %v194 = vsub.s32 0, %v193
      %v195 = vrot.slane %v190, %v194
      %v197 = vmul.f32 %v182, %v195
      %v198 = vmul.f32 %v183, %v195
      %v199 = vmul.f32 %v184, %v195
      %v200 = vmul.f32 %v185, %v195
      %v201 = vmul.f32 %v186, %v195
      %v202 = vmul.f32 %v187, %v195
      %v203 = vmul.f32 %v188, %v195
      %v204 = vmul.f32 %v189, %v195
      %v205 = vld [vmem:[%s2] sm:$0x1]
      %v207 = vlaneseq
      %v208 = vshrl.u32 %v207, 7
      %v209 = vsub.s32 0, %v208
      %v210 = vrot.slane %v205, %v209
      %v212 = vadd.f32 %v197, %v210
      %v213 = vadd.f32 %v198, %v210
      %v214 = vadd.f32 %v199, %v210
      %v215 = vadd.f32 %v200, %v210
      %v216 = vadd.f32 %v201, %v210
      %v217 = vadd.f32 %v202, %v210
      %v218 = vadd.f32 %v203, %v210
      %v219 = vadd.f32 %v204, %v210
      %v220 = vmax.f32 %v212, 0.0
      %v221 = vmax.f32 %v213, 0.0
      %v222 = vmax.f32 %v214, 0.0
      %v223 = vmax.f32 %v215, 0.0
      %v224 = vmax.f32 %v216, 0.0
      %v225 = vmax.f32 %v217, 0.0
      %v226 = vmax.f32 %v218, 0.0
      %v227 = vmax.f32 %v219, 0.0
      %236 = vrot.lane.b32.xlu0 %v220, 96
      %v237 = vpop.permute.xlu0 %236
      %238 = vrot.lane.b32.xlu0 %v221, 96
      %v239 = vpop.permute.xlu0 %238
      %240 = vrot.lane.b32.xlu0 %v222, 96
      %v241 = vpop.permute.xlu0 %240
      %242 = vrot.lane.b32.xlu0 %v223, 96
      %v243 = vpop.permute.xlu0 %242
      %244 = vrot.lane.b32.xlu0 %v224, 96
      %v245 = vpop.permute.xlu0 %244
      %246 = vrot.lane.b32.xlu0 %v225, 96
      %v247 = vpop.permute.xlu0 %246
      %248 = vrot.lane.b32.xlu0 %v226, 96
      %v249 = vpop.permute.xlu0 %248
      %250 = vrot.lane.b32.xlu0 %v227, 96
      %v251 = vpop.permute.xlu0 %250
      %v260 = vadd.f32 %v220, %v237
      %v261 = vadd.f32 %v221, %v239
      %v262 = vadd.f32 %v222, %v241
      %v263 = vadd.f32 %v223, %v243
      %v264 = vadd.f32 %v224, %v245
      %v265 = vadd.f32 %v225, %v247
      %v266 = vadd.f32 %v226, %v249
      %v267 = vadd.f32 %v227, %v251
      %v268 = vmul.f32 %v260, 0.5
      %v269 = vmul.f32 %v261, 0.5
      %v270 = vmul.f32 %v262, 0.5
      %v271 = vmul.f32 %v263, 0.5
      %v272 = vmul.f32 %v264, 0.5
      %v273 = vmul.f32 %v265, 0.5
      %v274 = vmul.f32 %v266, 0.5
      %v275 = vmul.f32 %v267, 0.5
      %v276 = vpack.c.bf16 %v269, %v268
      %v277 = vpack.c.bf16 %v271, %v270
      %v278 = vpack.c.bf16 %v273, %v272
      %v279 = vpack.c.bf16 %v275, %v274
      %v284 = vunpack.c.l.b16 %v276
      %v285 = vunpack.c.h.b16 %v276
      %v286 = vunpack.c.l.b16 %v277
      %v287 = vunpack.c.h.b16 %v277
      %v288 = vunpack.c.l.b16 %v278
      %v289 = vunpack.c.h.b16 %v278
      %v290 = vunpack.c.l.b16 %v279
      %v291 = vunpack.c.h.b16 %v279
      %v292 = vpack.c.b16 %v284, %v284
      %v293 = vpack.c.b16 %v285, %v285
      %v294 = vpack.c.b16 %v286, %v286
      %v295 = vpack.c.b16 %v287, %v287
      %v296 = vpack.c.b16 %v288, %v288
      %v297 = vpack.c.b16 %v289, %v289
      %v298 = vpack.c.b16 %v290, %v290
      %v299 = vpack.c.b16 %v291, %v291
      %vm308 = vcmask 257024
      %309 = vst.msk [vmem:[%s172] sm:$0xf] %vm308, %v292
      %310 = vst.msk [vmem:[%s172 + $0x4] sm:$0xf] %vm308, %v293
      %311 = vst.msk [vmem:[%s172 + $0x8] sm:$0xf] %vm308, %v294
      %312 = vst.msk [vmem:[%s172 + $0xc] sm:$0xf] %vm308, %v295
      %313 = vst.msk [vmem:[%s172 + $0x10] sm:$0xf] %vm308, %v296
      %314 = vst.msk [vmem:[%s172 + $0x14] sm:$0xf] %vm308, %v297
      %315 = vst.msk [vmem:[%s172 + $0x18] sm:$0xf] %vm308, %v298
      %316 = vst.msk [vmem:[%s172 + $0x1c] sm:$0xf] %vm308, %v299
      %s317 = smul.u32 8, %s14
      %p318 = scmp.lt.s32.totalorder %s317, 31
      %s319 = scalar_select %p318, %s317, 31
      %s320 = smul.addr %s319, 4
      %s321 = scalar_lea.vmem %s3, %s320
      // Predicated region
      $region33: #{densenet_forward.21} parent=31 // pred_check
        %p322 = pneg %p100
      $region34: #{densenet_forward.21} parent=31 // pred_check_branch
        %324 = sbr.rel (%p322) target = $region36
      $region35: #{densenet_forward.21} parent=31 // pred_region
        %s325 = smul.u32 8, %s14
      $region36: #{densenet_forward.21} parent=31 // pred_fallthru
        _
    $region32: #{densenet_forward.21} parent=5 // pred_fallthru
      _
    %p326 = scmp.le.s32.totalorder 2, %s9
    // Predicated region
    $region37: #{densenet_forward.21} parent=5 // pred_check
      %p327 = pneg %p326
    $region38: #{densenet_forward.21} parent=5 // pred_check_branch
      %329 = sbr.rel (%p327) target = $region40
    $region39: #{densenet_forward.21} parent=5 // pred_region
      %s330 = ssub.s32 %s9, 2
      // Predicated region
      $region41: #{densenet_forward.21} parent=39 // pred_check
        %p331 = pneg %p106
      $region42: #{densenet_forward.21} parent=39 // pred_check_branch
        %333 = sbr.rel (%p331) target = $region44
      $region43: #{densenet_forward.21} parent=39 // pred_region
        %s334 = smul.u32 8, %s15
        %p335 = scmp.lt.s32.totalorder %s334, 31
        %s336 = scalar_select %p335, %s334, 31
        %s337 = smul.addr %s336, 4
        %s338 = scalar_lea.vmem %s3, %s337
      $region44: #{densenet_forward.21} parent=39 // pred_fallthru
        _
    $region40: #{densenet_forward.21} parent=5 // pred_fallthru
      _
  $region6: #{densenet_forward.21} parent=0 // loop_footer
    %s13 = sadd.s32 1, %s9
  $region7: #{densenet_forward.21} parent=0 // loop_footer_branch
    %8 = sbr.rel target = $region3
  $region8: #{densenet_forward.21} parent=0 // loop_exit
    _

// kernel: densenet_forward.22
$region0: #{densenet_forward.22}
  #allocation0 [shape = 'u32[]', space=smem, size = 0x4, offset = 0x4, fixed_abs, tag = 'smem constant byte address 0x4 - core index']
  #allocation1 [shape = 'u32[144,128]{1,0:T(1,128)}', space=vmem, size = 0x12000, scoped, tag = 'internal scratch']
  %s0 = inlined_call_operand.vmem [shape: bf16[16,512], index: 0, kind: input, shape index: {}]
  %s1 = inlined_call_operand.vmem [shape: bf16[16,256], index: 1, kind: output, shape index: {}]
  %s2 = sld [smem:[#allocation0]]
  $region14: #{densenet_forward.22} parent=0
    _
  %s4 = ssub.s32 1, %s2
  %s5 = scalar_select 0, %s4, %s2
  // Predicated region
  $region2: #{densenet_forward.22} parent=0 // pred_check
    _
  $region3: #{densenet_forward.22} parent=0 // pred_check_branch
    %7 = sbr.rel (0) target = $region5
  $region4: #{densenet_forward.22} parent=0 // pred_region
    _
  $region5: #{densenet_forward.22} parent=0 // pred_fallthru
    _
  %v8 = vld [vmem:[%s0] sm:$0xff]
  %v9 = vld [vmem:[%s0 + $0x8] sm:$0xff]
  %v10 = vld [vmem:[%s0 + $0x10] sm:$0xff]
  %v11 = vld [vmem:[%s0 + $0x18] sm:$0xff]
  %v12 = vunpack.c.l.bf16 %v8
  %v13 = vunpack.c.h.bf16 %v8
  %v14 = vunpack.c.l.bf16 %v9
  %v15 = vunpack.c.h.bf16 %v9
  %v16 = vunpack.c.l.bf16 %v10
  %v17 = vunpack.c.h.bf16 %v10
  %v18 = vunpack.c.l.bf16 %v11
  %v19 = vunpack.c.h.bf16 %v11
  %v20 = vadd.f32 %v12, %v14
  %v21 = vadd.f32 %v13, %v15
  %v22 = vadd.f32 %v16, %v18
  %v23 = vadd.f32 %v17, %v19
  %v24 = vmul.f32 %v20, 0.5
  %v25 = vmul.f32 %v21, 0.5
  %v26 = vmul.f32 %v22, 0.5
  %v27 = vmul.f32 %v23, 0.5
  %v28 = vpack.c.bf16 %v26, %v24
  %v29 = vpack.c.bf16 %v27, %v25
  %v32 = vunpack.c.l.b16 %v28
  %v33 = vunpack.c.l.b16 %v29
  %v34 = vunpack.c.h.b16 %v28
  %v35 = vunpack.c.h.b16 %v29
  %v36 = vpack.c.b16 %v33, %v32
  %v37 = vpack.c.b16 %v35, %v34
  %40 = vst [vmem:[%s1] sm:$0xff] %v36
  %41 = vst [vmem:[%s1 + $0x8] sm:$0xff] %v37
  // Predicated region
  $region6: #{densenet_forward.22} parent=0 // pred_check
    _
  $region7: #{densenet_forward.22} parent=0 // pred_check_branch
    %43 = sbr.rel (0) target = $region9
  $region8: #{densenet_forward.22} parent=0 // pred_region
    _
  $region9: #{densenet_forward.22} parent=0 // pred_fallthru
    _
  // Predicated region
  $region10: #{densenet_forward.22} parent=0 // pred_check
    _
  $region11: #{densenet_forward.22} parent=0 // pred_check_branch
    %45 = sbr.rel (0) target = $region13
  $region12: #{densenet_forward.22} parent=0 // pred_region
    _
  $region13: #{densenet_forward.22} parent=0 // pred_fallthru
    _

// kernel: densenet_forward.24
$region0: #{densenet_forward.24}
  #allocation0 [shape = 'u32[]', space=smem, size = 0x4, offset = 0x4, fixed_abs, tag = 'smem constant byte address 0x4 - core index']
  #allocation1 [shape = 'u32[144,128]{1,0:T(1,128)}', space=vmem, size = 0x12000, scoped, tag = 'internal scratch']
  %s0 = inlined_call_operand.vmem [shape: bf16[128,32], index: 0, kind: input, shape index: {}]
  %s1 = inlined_call_operand.vmem [shape: f32[1,32], index: 1, kind: input, shape index: {}]
  %s2 = inlined_call_operand.vmem [shape: f32[1,32], index: 2, kind: input, shape index: {}]
  %s3 = inlined_call_operand.vmem [shape: bf16[32,32], index: 3, kind: input, shape index: {}]
  %s4 = inlined_call_operand.vmem [shape: f32[1,32], index: 4, kind: input, shape index: {}]
  %s5 = inlined_call_operand.vmem [shape: bf16[128,32], index: 5, kind: output, shape index: {}]
  %s6 = sld [smem:[#allocation0]]
  $region53: #{densenet_forward.24} parent=0
    _
  %s8 = ssub.s32 1, %s6
  %s9 = scalar_select 0, %s8, %s6
  loop: start=0, step=1, limit=6
  $region2: #{densenet_forward.24} parent=0 // loop_pre_header
    _
  $region3: #{densenet_forward.24} parent=0 // loop_header
    %s11 = sphi 0, %s15
    %p12 = scmp.ge.s32.totalorder %s11, 6
    %s21 = sphi 0, %s23
    %s24 = sphi 0, %s21
    %s25 = sphi 0, %s24
    %s41 = sphi 0, %s25
    %s45 = sphi 0, %s45
    %s47 = sphi 0, %s45
    %s48 = sphi 0, %s47
    %s62 = sphi 0, %s48
    %s66 = sphi 0, %s66
    %s68 = sphi 0, %s66
    %s69 = sphi 0, %s68
    %s83 = sphi 0, %s69
    %s87 = sphi 0, %s87
    %s89 = sphi 0, %s87
    %s90 = sphi 0, %s89
    %s104 = sphi 0, %s90
    %s108 = sphi 0, %s108
    %s110 = sphi 0, %s108
    %s111 = sphi 0, %s110
    %s125 = sphi 0, %s111
    %s131 = sphi 0, %s133
    %s134 = sphi 0, %s131
    %s135 = sphi 0, %s134
    %s151 = sphi 0, %s135
  $region4: #{densenet_forward.24} parent=0 // loop_header_branch
    %14 = sbr.rel (%p12) target = $region8
  $region5: #{densenet_forward.24} parent=0 // loop_body
    %s16 = ssub.s32 %s11, 1
    %s17 = ssub.s32 %s11, 2
    %s18 = sadd.s32 %s11, 1
    %s19 = ssub.s32 %s11, %s18
    %p20 = scmp.eq.s32.totalorder %s19, 0
    %s22 = sadd.s32 %s21, 1
    %s23 = scalar_select %p20, %s21, %s22
    %p26 = pneg %p20
    %p27 = scmp.eq.s32.totalorder %s11, 3
    %p28 = por %p26, %p27
    %p29 = scmp.ne.s32.totalorder %s21, %s24
    %p30 = scmp.eq.s32.totalorder %s11, 0
    %p31 = por %p29, %p30
    %p32 = scmp.ne.s32.totalorder %s21, %s24
    %p33 = scmp.eq.s32.totalorder %s16, 3
    %p34 = por %p32, %p33
    %p35 = scmp.ne.s32.totalorder %s24, %s25
    %p36 = scmp.eq.s32.totalorder %s16, 0
    %p37 = por %p35, %p36
    %p38 = scmp.ne.s32.totalorder %s24, %s25
    %p39 = scmp.eq.s32.totalorder %s17, 3
    %p40 = por %p38, %p39
    %p42 = scmp.ne.s32.totalorder %s25, %s41
    %p43 = scmp.eq.s32.totalorder %s17, 0
    %p44 = por %p42, %p43
    %s46 = sadd.s32 %s45, 1
    %p49 = scmp.eq.s32.totalorder %s11, 3
    %p50 = scmp.ne.s32.totalorder %s45, %s47
    %p51 = scmp.eq.s32.totalorder %s11, 0
    %p52 = por %p50, %p51
    %p53 = scmp.ne.s32.totalorder %s45, %s47
    %p54 = scmp.eq.s32.totalorder %s16, 3
    %p55 = por %p53, %p54
    %p56 = scmp.ne.s32.totalorder %s47, %s48
    %p57 = scmp.eq.s32.totalorder %s16, 0
    %p58 = por %p56, %p57
    %p59 = scmp.ne.s32.totalorder %s47, %s48
    %p60 = scmp.eq.s32.totalorder %s17, 3
    %p61 = por %p59, %p60
    %p63 = scmp.ne.s32.totalorder %s48, %s62
    %p64 = scmp.eq.s32.totalorder %s17, 0
    %p65 = por %p63, %p64
    %s67 = sadd.s32 %s66, 1
    %p70 = scmp.eq.s32.totalorder %s11, 3
    %p71 = scmp.ne.s32.totalorder %s66, %s68
    %p72 = scmp.eq.s32.totalorder %s11, 0
    %p73 = por %p71, %p72
    %p74 = scmp.ne.s32.totalorder %s66, %s68
    %p75 = scmp.eq.s32.totalorder %s16, 3
    %p76 = por %p74, %p75
    %p77 = scmp.ne.s32.totalorder %s68, %s69
    %p78 = scmp.eq.s32.totalorder %s16, 0
    %p79 = por %p77, %p78
    %p80 = scmp.ne.s32.totalorder %s68, %s69
    %p81 = scmp.eq.s32.totalorder %s17, 3
    %p82 = por %p80, %p81
    %p84 = scmp.ne.s32.totalorder %s69, %s83
    %p85 = scmp.eq.s32.totalorder %s17, 0
    %p86 = por %p84, %p85
    %s88 = sadd.s32 %s87, 1
    %p91 = scmp.eq.s32.totalorder %s11, 3
    %p92 = scmp.ne.s32.totalorder %s87, %s89
    %p93 = scmp.eq.s32.totalorder %s11, 0
    %p94 = por %p92, %p93
    %p95 = scmp.ne.s32.totalorder %s87, %s89
    %p96 = scmp.eq.s32.totalorder %s16, 3
    %p97 = por %p95, %p96
    %p98 = scmp.ne.s32.totalorder %s89, %s90
    %p99 = scmp.eq.s32.totalorder %s16, 0
    %p100 = por %p98, %p99
    %p101 = scmp.ne.s32.totalorder %s89, %s90
    %p102 = scmp.eq.s32.totalorder %s17, 3
    %p103 = por %p101, %p102
    %p105 = scmp.ne.s32.totalorder %s90, %s104
    %p106 = scmp.eq.s32.totalorder %s17, 0
    %p107 = por %p105, %p106
    %s109 = sadd.s32 %s108, 1
    %p112 = scmp.eq.s32.totalorder %s11, 3
    %p113 = scmp.ne.s32.totalorder %s108, %s110
    %p114 = scmp.eq.s32.totalorder %s11, 0
    %p115 = por %p113, %p114
    %p116 = scmp.ne.s32.totalorder %s108, %s110
    %p117 = scmp.eq.s32.totalorder %s16, 3
    %p118 = por %p116, %p117
    %p119 = scmp.ne.s32.totalorder %s110, %s111
    %p120 = scmp.eq.s32.totalorder %s16, 0
    %p121 = por %p119, %p120
    %p122 = scmp.ne.s32.totalorder %s110, %s111
    %p123 = scmp.eq.s32.totalorder %s17, 3
    %p124 = por %p122, %p123
    %p126 = scmp.ne.s32.totalorder %s111, %s125
    %p127 = scmp.eq.s32.totalorder %s17, 0
    %p128 = por %p126, %p127
    %s129 = ssub.s32 %s11, %s18
    %p130 = scmp.eq.s32.totalorder %s129, 0
    %s132 = sadd.s32 %s131, 1
    %s133 = scalar_select %p130, %s131, %s132
    %p136 = pneg %p130
    %p137 = scmp.eq.s32.totalorder %s11, 3
    %p138 = por %p136, %p137
    %p139 = scmp.ne.s32.totalorder %s131, %s134
    %p140 = scmp.eq.s32.totalorder %s11, 0
    %p141 = por %p139, %p140
    %p142 = scmp.ne.s32.totalorder %s131, %s134
    %p143 = scmp.eq.s32.totalorder %s16, 3
    %p144 = por %p142, %p143
    %p145 = scmp.ne.s32.totalorder %s134, %s135
    %p146 = scmp.eq.s32.totalorder %s16, 0
    %p147 = por %p145, %p146
    %p148 = scmp.ne.s32.totalorder %s134, %s135
    %p149 = scmp.eq.s32.totalorder %s17, 3
    %p150 = por %p148, %p149
    %p152 = scmp.ne.s32.totalorder %s135, %s151
    %p153 = scmp.eq.s32.totalorder %s17, 0
    %p154 = por %p152, %p153
    %p155 = scmp.le.s32.totalorder 1, %s11
    %p156 = scmp.lt.s32.totalorder %s11, 5
    %p157 = pnand %p155, %p156
    %p158 = pneg %p157
    // Predicated region
    $region9: #{densenet_forward.24} parent=5 // pred_check
      _
    $region10: #{densenet_forward.24} parent=5 // pred_check_branch
      %160 = sbr.rel (%p157) target = $region12
    $region11: #{densenet_forward.24} parent=5 // pred_region
      %s161 = ssub.s32 %s11, 1
      // Predicated region
      $region13: #{densenet_forward.24} parent=11 // pred_check
        %p162 = pneg %p58
      $region14: #{densenet_forward.24} parent=11 // pred_check_branch
        %164 = sbr.rel (%p162) target = $region16
      $region15: #{densenet_forward.24} parent=11 // pred_region
        _
      $region16: #{densenet_forward.24} parent=11 // pred_fallthru
        _
      // Predicated region
      $region17: #{densenet_forward.24} parent=11 // pred_check
        %p165 = pneg %p79
      $region18: #{densenet_forward.24} parent=11 // pred_check_branch
        %167 = sbr.rel (%p165) target = $region20
      $region19: #{densenet_forward.24} parent=11 // pred_region
        _
      $region20: #{densenet_forward.24} parent=11 // pred_fallthru
        _
      // Predicated region
      $region21: #{densenet_forward.24} parent=11 // pred_check
        %p168 = pneg %p100
      $region22: #{densenet_forward.24} parent=11 // pred_check_branch
        %170 = sbr.rel (%p168) target = $region24
      $region23: #{densenet_forward.24} parent=11 // pred_region
        _
      $region24: #{densenet_forward.24} parent=11 // pred_fallthru
        _
      // Predicated region
      $region25: #{densenet_forward.24} parent=11 // pred_check
        %p171 = pneg %p121
      $region26: #{densenet_forward.24} parent=11 // pred_check_branch
        %173 = sbr.rel (%p171) target = $region28
      $region27: #{densenet_forward.24} parent=11 // pred_region
        _
      $region28: #{densenet_forward.24} parent=11 // pred_fallthru
        _
    $region12: #{densenet_forward.24} parent=5 // pred_fallthru
      _
    %p174 = scmp.lt.s32.totalorder %s11, 4
    // Predicated region
    $region29: #{densenet_forward.24} parent=5 // pred_check
      %p175 = pneg %p174
    $region30: #{densenet_forward.24} parent=5 // pred_check_branch
      %177 = sbr.rel (%p175) target = $region32
    $region31: #{densenet_forward.24} parent=5 // pred_region
      // Predicated region
      $region33: #{densenet_forward.24} parent=31 // pred_check
        %p178 = pneg %p31
      $region34: #{densenet_forward.24} parent=31 // pred_check_branch
        %180 = sbr.rel (%p178) target = $region36
      $region35: #{densenet_forward.24} parent=31 // pred_region
        %s181 = smul.u32 4, %s11
        %p182 = scmp.lt.s32.totalorder %s181, 15
        %s183 = scalar_select %p182, %s181, 15
        %s184 = smul.addr %s183, 4
        %s185 = scalar_lea.vmem %s0, %s184
        %s186 = smul.u32 4, %s11
      $region36: #{densenet_forward.24} parent=31 // pred_fallthru
        _
    $region32: #{densenet_forward.24} parent=5 // pred_fallthru
      _
    %p187 = scmp.le.s32.totalorder 1, %s11
    %p188 = scmp.lt.s32.totalorder %s11, 5
    %p189 = pnand %p187, %p188
    %p190 = pneg %p189
    // Predicated region
    $region37: #{densenet_forward.24} parent=5 // pred_check
      _
    $region38: #{densenet_forward.24} parent=5 // pred_check_branch
      %192 = sbr.rel (%p189) target = $region40
    $region39: #{densenet_forward.24} parent=5 // pred_region
      %s193 = ssub.s32 %s11, 1
      %s194 = smul.u32 4, %s16
      %p195 = scmp.lt.s32.totalorder %s194, 15
      %s196 = scalar_select %p195, %s194, 15
      %s197 = smul.addr %s196, 4
      %s198 = scalar_lea.vmem %s0, %s197
      %p199 = pneg %p37
      %p200 = pneg %p34
      %p201 = pneg %p58
      %p202 = pneg %p55
      %p203 = pneg %p79
      %p204 = pneg %p76
      %p205 = pneg %p100
      %p206 = pneg %p97
      %p207 = pneg %p121
      %p208 = pneg %p118
      %p209 = pneg %p147
      %p210 = pneg %p144
      %s211 = smul.u32 4, %s16
      %p212 = scmp.lt.s32.totalorder %s211, 15
      %s213 = scalar_select %p212, %s211, 15
      %s214 = smul.addr %s213, 4
      %s215 = scalar_lea.vmem %s5, %s214
      %s216 = smul.u32 4, %s16
      %p217 = scmp.lt.s32.totalorder %s216, 15
      %s218 = scalar_select %p217, %s216, 15
      %s219 = smul.addr %s218, 4
      %s220 = scalar_lea.vmem %s0, %s219
      %s221 = smul.u32 4, %s16
      %s222 = smul.u32 4, %s16
      %p223 = scmp.lt.s32.totalorder %s222, 15
      %s224 = scalar_select %p223, %s222, 15
      %s225 = smul.addr %s224, 4
      %s226 = scalar_lea.vmem %s5, %s225
      %s227 = smul.u32 4, %s16
      %v229 = vld [vmem:[%s220] sm:$0xf]
      %v230 = vld [vmem:[%s220 + $0x4] sm:$0xf]
      %v231 = vld [vmem:[%s220 + $0x8] sm:$0xf]
      %v232 = vld [vmem:[%s220 + $0xc] sm:$0xf]
      %v233 = vunpack.c.l.bf16 %v229
      %v234 = vunpack.c.l.bf16 %v230
      %v235 = vunpack.c.l.bf16 %v231
      %v236 = vunpack.c.l.bf16 %v232
      %v237 = vld [vmem:[%s1] sm:$0x1]
      %v239 = vlaneseq
      %v240 = vshrl.u32 %v239, 7
      %v241 = vsub.s32 0, %v240
      %v242 = vrot.slane %v237, %v241
      %v244 = vmul.f32 %v233, %v242
      %v245 = vmul.f32 %v234, %v242
      %v246 = vmul.f32 %v235, %v242
      %v247 = vmul.f32 %v236, %v242
      %v248 = vld [vmem:[%s2] sm:$0x1]
      %v250 = vlaneseq
      %v251 = vshrl.u32 %v250, 7
      %v252 = vsub.s32 0, %v251
      %v253 = vrot.slane %v248, %v252
      %v255 = vadd.f32 %v244, %v253
      %v256 = vadd.f32 %v245, %v253
      %v257 = vadd.f32 %v246, %v253
      %v258 = vadd.f32 %v247, %v253
      %v259 = vmax.f32 %v255, 0.0
      %v260 = vmax.f32 %v256, 0.0
      %v261 = vmax.f32 %v257, 0.0
      %v262 = vmax.f32 %v258, 0.0
      %v263 = vpack.c.bf16 %v260, %v259
      %v264 = vpack.c.bf16 %v262, %v261
      %v265 = vld [vmem:[%s3] sm:$0xf]
      %v266 = vld [vmem:[%s3 + $0x4] sm:$0xf]
      %v267 = vld [vmem:[%s3 + $0x8] sm:$0xf]
      %v268 = vld [vmem:[%s3 + $0xc] sm:$0xf]
      %v269 = vld [vmem:[%s4] sm:$0x1]
      %v271 = vlaneseq
      %v272 = vshrl.u32 %v271, 7
      %v273 = vsub.s32 0, %v272
      %v274 = vrot.slane %v269, %v273
      %v280 = vunpack.c.l.b16 %v265
      %v281 = vunpack.c.l.b16 %v266
      %v282 = vunpack.c.l.b16 %v267
      %v283 = vunpack.c.l.b16 %v268
      %v284 = vpack.c.b16 %v281, %v280
      %v285 = vpack.c.b16 %v283, %v282
      %vm288 = vcmask 261120
      %v290 = vsel %vm288, %v263, 0
      %v293 = vsel %vm288, %v264, 0
      %295 = vmatprep.subr.bf16.mxu0 0
      %296 = vmatpush1.bf16.msra.mxu0 %v284
      %297 = vmatprep.subr.bf16.mxu0 0
      %298 = vmatpush1.bf16.msra.mxu0 %v285
      %299 = vmatprep.subr.bf16.mxu0 0
      %300 = vmatpush1.bf16.msra.mxu0 0
      %301 = vmatprep.subr.bf16.mxu0 0
      %302 = vmatpush1.bf16.msra.mxu0 0
      %303 = vmatprep.subr.bf16.mxu0 0
      %304 = vmatpush1.bf16.msra.mxu0 0
      %305 = vmatprep.subr.bf16.mxu0 0
      %306 = vmatpush1.bf16.msra.mxu0 0
      %307 = vmatprep.subr.bf16.mxu0 0
      %308 = vmatpush1.bf16.msra.mxu0 0
      %309 = vmatprep.subr.bf16.mxu0 0
      %310 = vmatpush1.bf16.msra.mxu0 0
      %311 = vmatprep.subr.bf16.mxu0 0
      %312 = vmatpush1.bf16.msra.mxu0 0
      %313 = vmatprep.subr.bf16.mxu0 0
      %314 = vmatpush1.bf16.msra.mxu0 0
      %315 = vmatprep.subr.bf16.mxu0 0
      %316 = vmatpush1.bf16.msra.mxu0 0
      %317 = vmatprep.subr.bf16.mxu0 0
      %318 = vmatpush1.bf16.msra.mxu0 0
      %319 = vmatprep.subr.bf16.mxu0 0
      %320 = vmatpush1.bf16.msra.mxu0 0
      %321 = vmatprep.subr.bf16.mxu0 0
      %322 = vmatpush1.bf16.msra.mxu0 0
      %323 = vmatprep.subr.bf16.mxu0 0
      %324 = vmatpush1.bf16.msra.mxu0 0
      %325 = vmatprep.subr.bf16.mxu0 0
      %326 = vmatpush1.bf16.msra.mxu0 0
      %327 = vmatprep.mubr.bf16.mxu0 0
      %328 = vmatmul.mubr.bf16.gmra.mrb[0].mxu0 %v290
      %v329 = vpop.f32.mrb[0].mxu0
      %v330 = vadd.f32 %v274, %v329
      %v331 = vpop.f32.mrb[0].mxu0
      %v332 = vpop.f32.mrb[0].mxu0
      %v333 = vadd.f32 %v274, %v332
      %v334 = vpop.f32.mrb[0].mxu0
      %335 = vmatprep.mubr.bf16.mxu0 0
      %336 = vmatmul.mubr.bf16.gmra.mrb[0].mxu0 %v293
      %v337 = vpop.f32.mrb[0].mxu0
      %v338 = vadd.f32 %v274, %v337
      %v339 = vpop.f32.mrb[0].mxu0
      %v340 = vpop.f32.mrb[0].mxu0
      %v341 = vadd.f32 %v274, %v340
      %v342 = vpop.f32.mrb[0].mxu0
      %343 = vdwg.mxu0
      %v344 = vmax.f32 %v330, 0.0
      %v345 = vmax.f32 %v333, 0.0
      %v346 = vmax.f32 %v338, 0.0
      %v347 = vmax.f32 %v341, 0.0
      %v348 = vpack.c.bf16 %v345, %v344
      %v349 = vpack.c.bf16 %v347, %v346
      %v352 = vunpack.c.l.b16 %v348
      %v353 = vunpack.c.h.b16 %v348
      %v354 = vunpack.c.l.b16 %v349
      %v355 = vunpack.c.h.b16 %v349
      %v356 = vpack.c.b16 %v352, %v352
      %v357 = vpack.c.b16 %v353, %v353
      %v358 = vpack.c.b16 %v354, %v354
      %v359 = vpack.c.b16 %v355, %v355
      %vm364 = vcmask 257024
      %365 = vst.msk [vmem:[%s226] sm:$0xf] %vm364, %v356
      %366 = vst.msk [vmem:[%s226 + $0x4] sm:$0xf] %vm364, %v357
      %367 = vst.msk [vmem:[%s226 + $0x8] sm:$0xf] %vm364, %v358
      %368 = vst.msk [vmem:[%s226 + $0xc] sm:$0xf] %vm364, %v359
      %s369 = smul.u32 4, %s16
      %p370 = scmp.lt.s32.totalorder %s369, 15
      %s371 = scalar_select %p370, %s369, 15
      %s372 = smul.addr %s371, 4
      %s373 = scalar_lea.vmem %s5, %s372
      // Predicated region
      $region41: #{densenet_forward.24} parent=39 // pred_check
        %p374 = pneg %p144
      $region42: #{densenet_forward.24} parent=39 // pred_check_branch
        %376 = sbr.rel (%p374) target = $region44
      $region43: #{densenet_forward.24} parent=39 // pred_region
        %s377 = smul.u32 4, %s16
      $region44: #{densenet_forward.24} parent=39 // pred_fallthru
        _
    $region40: #{densenet_forward.24} parent=5 // pred_fallthru
      _
    %p378 = scmp.le.s32.totalorder 2, %s11
    // Predicated region
    $region45: #{densenet_forward.24} parent=5 // pred_check
      %p379 = pneg %p378
    $region46: #{densenet_forward.24} parent=5 // pred_check_branch
      %381 = sbr.rel (%p379) target = $region48
    $region47: #{densenet_forward.24} parent=5 // pred_region
      %s382 = ssub.s32 %s11, 2
      // Predicated region
      $region49: #{densenet_forward.24} parent=47 // pred_check
        %p383 = pneg %p150
      $region50: #{densenet_forward.24} parent=47 // pred_check_branch
        %385 = sbr.rel (%p383) target = $region52
      $region51: #{densenet_forward.24} parent=47 // pred_region
        %s386 = smul.u32 4, %s17
        %p387 = scmp.lt.s32.totalorder %s386, 15
        %s388 = scalar_select %p387, %s386, 15
        %s389 = smul.addr %s388, 4
        %s390 = scalar_lea.vmem %s5, %s389
      $region52: #{densenet_forward.24} parent=47 // pred_fallthru
        _
    $region48: #{densenet_forward.24} parent=5 // pred_fallthru
      _
  $region6: #{densenet_forward.24} parent=0 // loop_footer
    %s15 = sadd.s32 1, %s11
  $region7: #{densenet_forward.24} parent=0 // loop_footer_branch
    %10 = sbr.rel target = $region3
  $region8: #{densenet_forward.24} parent=0 // loop_exit
    _

// kernel: densenet_forward.23
$region0: #{densenet_forward.23}
  #allocation0 [shape = 'u32[]', space=smem, size = 0x4, offset = 0x4, fixed_abs, tag = 'smem constant byte address 0x4 - core index']
  #allocation1 [shape = 'u32[144,128]{1,0:T(1,128)}', space=vmem, size = 0x12000, scoped, tag = 'internal scratch']
  %s0 = inlined_call_operand.vmem [shape: bf16[128,32], index: 0, kind: input, shape index: {}]
  %s1 = inlined_call_operand.vmem [shape: bf16[32,16], index: 1, kind: input, shape index: {}]
  %s2 = inlined_call_operand.vmem [shape: f32[1,16], index: 2, kind: input, shape index: {}]
  %s3 = inlined_call_operand.vmem [shape: bf16[128,16], index: 3, kind: output, shape index: {}]
  %s4 = sld [smem:[#allocation0]]
  $region45: #{densenet_forward.23} parent=0
    _
  %s6 = ssub.s32 1, %s4
  %s7 = scalar_select 0, %s6, %s4
  loop: start=0, step=1, limit=6
  $region2: #{densenet_forward.23} parent=0 // loop_pre_header
    _
  $region3: #{densenet_forward.23} parent=0 // loop_header
    %s9 = sphi 0, %s13
    %p10 = scmp.ge.s32.totalorder %s9, 6
    %s19 = sphi 0, %s21
    %s22 = sphi 0, %s19
    %s23 = sphi 0, %s22
    %s39 = sphi 0, %s23
    %s43 = sphi 0, %s43
    %s45 = sphi 0, %s43
    %s46 = sphi 0, %s45
    %s60 = sphi 0, %s46
    %s64 = sphi 0, %s64
    %s66 = sphi 0, %s64
    %s67 = sphi 0, %s66
    %s81 = sphi 0, %s67
    %s87 = sphi 0, %s89
    %s90 = sphi 0, %s87
    %s91 = sphi 0, %s90
    %s107 = sphi 0, %s91
  $region4: #{densenet_forward.23} parent=0 // loop_header_branch
    %12 = sbr.rel (%p10) target = $region8
  $region5: #{densenet_forward.23} parent=0 // loop_body
    %s14 = ssub.s32 %s9, 1
    %s15 = ssub.s32 %s9, 2
    %s16 = sadd.s32 %s9, 1
    %s17 = ssub.s32 %s9, %s16
    %p18 = scmp.eq.s32.totalorder %s17, 0
    %s20 = sadd.s32 %s19, 1
    %s21 = scalar_select %p18, %s19, %s20
    %p24 = pneg %p18
    %p25 = scmp.eq.s32.totalorder %s9, 3
    %p26 = por %p24, %p25
    %p27 = scmp.ne.s32.totalorder %s19, %s22
    %p28 = scmp.eq.s32.totalorder %s9, 0
    %p29 = por %p27, %p28
    %p30 = scmp.ne.s32.totalorder %s19, %s22
    %p31 = scmp.eq.s32.totalorder %s14, 3
    %p32 = por %p30, %p31
    %p33 = scmp.ne.s32.totalorder %s22, %s23
    %p34 = scmp.eq.s32.totalorder %s14, 0
    %p35 = por %p33, %p34
    %p36 = scmp.ne.s32.totalorder %s22, %s23
    %p37 = scmp.eq.s32.totalorder %s15, 3
    %p38 = por %p36, %p37
    %p40 = scmp.ne.s32.totalorder %s23, %s39
    %p41 = scmp.eq.s32.totalorder %s15, 0
    %p42 = por %p40, %p41
    %s44 = sadd.s32 %s43, 1
    %p47 = scmp.eq.s32.totalorder %s9, 3
    %p48 = scmp.ne.s32.totalorder %s43, %s45
    %p49 = scmp.eq.s32.totalorder %s9, 0
    %p50 = por %p48, %p49
    %p51 = scmp.ne.s32.totalorder %s43, %s45
    %p52 = scmp.eq.s32.totalorder %s14, 3
    %p53 = por %p51, %p52
    %p54 = scmp.ne.s32.totalorder %s45, %s46
    %p55 = scmp.eq.s32.totalorder %s14, 0
    %p56 = por %p54, %p55
    %p57 = scmp.ne.s32.totalorder %s45, %s46
    %p58 = scmp.eq.s32.totalorder %s15, 3
    %p59 = por %p57, %p58
    %p61 = scmp.ne.s32.totalorder %s46, %s60
    %p62 = scmp.eq.s32.totalorder %s15, 0
    %p63 = por %p61, %p62
    %s65 = sadd.s32 %s64, 1
    %p68 = scmp.eq.s32.totalorder %s9, 3
    %p69 = scmp.ne.s32.totalorder %s64, %s66
    %p70 = scmp.eq.s32.totalorder %s9, 0
    %p71 = por %p69, %p70
    %p72 = scmp.ne.s32.totalorder %s64, %s66
    %p73 = scmp.eq.s32.totalorder %s14, 3
    %p74 = por %p72, %p73
    %p75 = scmp.ne.s32.totalorder %s66, %s67
    %p76 = scmp.eq.s32.totalorder %s14, 0
    %p77 = por %p75, %p76
    %p78 = scmp.ne.s32.totalorder %s66, %s67
    %p79 = scmp.eq.s32.totalorder %s15, 3
    %p80 = por %p78, %p79
    %p82 = scmp.ne.s32.totalorder %s67, %s81
    %p83 = scmp.eq.s32.totalorder %s15, 0
    %p84 = por %p82, %p83
    %s85 = ssub.s32 %s9, %s16
    %p86 = scmp.eq.s32.totalorder %s85, 0
    %s88 = sadd.s32 %s87, 1
    %s89 = scalar_select %p86, %s87, %s88
    %p92 = pneg %p86
    %p93 = scmp.eq.s32.totalorder %s9, 3
    %p94 = por %p92, %p93
    %p95 = scmp.ne.s32.totalorder %s87, %s90
    %p96 = scmp.eq.s32.totalorder %s9, 0
    %p97 = por %p95, %p96
    %p98 = scmp.ne.s32.totalorder %s87, %s90
    %p99 = scmp.eq.s32.totalorder %s14, 3
    %p100 = por %p98, %p99
    %p101 = scmp.ne.s32.totalorder %s90, %s91
    %p102 = scmp.eq.s32.totalorder %s14, 0
    %p103 = por %p101, %p102
    %p104 = scmp.ne.s32.totalorder %s90, %s91
    %p105 = scmp.eq.s32.totalorder %s15, 3
    %p106 = por %p104, %p105
    %p108 = scmp.ne.s32.totalorder %s91, %s107
    %p109 = scmp.eq.s32.totalorder %s15, 0
    %p110 = por %p108, %p109
    %p111 = scmp.le.s32.totalorder 1, %s9
    %p112 = scmp.lt.s32.totalorder %s9, 5
    %p113 = pnand %p111, %p112
    %p114 = pneg %p113
    // Predicated region
    $region9: #{densenet_forward.23} parent=5 // pred_check
      _
    $region10: #{densenet_forward.23} parent=5 // pred_check_branch
      %116 = sbr.rel (%p113) target = $region12
    $region11: #{densenet_forward.23} parent=5 // pred_region
      %s117 = ssub.s32 %s9, 1
      // Predicated region
      $region13: #{densenet_forward.23} parent=11 // pred_check
        %p118 = pneg %p56
      $region14: #{densenet_forward.23} parent=11 // pred_check_branch
        %120 = sbr.rel (%p118) target = $region16
      $region15: #{densenet_forward.23} parent=11 // pred_region
        _
      $region16: #{densenet_forward.23} parent=11 // pred_fallthru
        _
      // Predicated region
      $region17: #{densenet_forward.23} parent=11 // pred_check
        %p121 = pneg %p77
      $region18: #{densenet_forward.23} parent=11 // pred_check_branch
        %123 = sbr.rel (%p121) target = $region20
      $region19: #{densenet_forward.23} parent=11 // pred_region
        _
      $region20: #{densenet_forward.23} parent=11 // pred_fallthru
        _
    $region12: #{densenet_forward.23} parent=5 // pred_fallthru
      _
    %p124 = scmp.lt.s32.totalorder %s9, 4
    // Predicated region
    $region21: #{densenet_forward.23} parent=5 // pred_check
      %p125 = pneg %p124
    $region22: #{densenet_forward.23} parent=5 // pred_check_branch
      %127 = sbr.rel (%p125) target = $region24
    $region23: #{densenet_forward.23} parent=5 // pred_region
      // Predicated region
      $region25: #{densenet_forward.23} parent=23 // pred_check
        %p128 = pneg %p29
      $region26: #{densenet_forward.23} parent=23 // pred_check_branch
        %130 = sbr.rel (%p128) target = $region28
      $region27: #{densenet_forward.23} parent=23 // pred_region
        %s131 = smul.u32 4, %s9
        %p132 = scmp.lt.s32.totalorder %s131, 15
        %s133 = scalar_select %p132, %s131, 15
        %s134 = smul.addr %s133, 4
        %s135 = scalar_lea.vmem %s0, %s134
        %s136 = smul.u32 4, %s9
      $region28: #{densenet_forward.23} parent=23 // pred_fallthru
        _
    $region24: #{densenet_forward.23} parent=5 // pred_fallthru
      _
    %p137 = scmp.le.s32.totalorder 1, %s9
    %p138 = scmp.lt.s32.totalorder %s9, 5
    %p139 = pnand %p137, %p138
    %p140 = pneg %p139
    // Predicated region
    $region29: #{densenet_forward.23} parent=5 // pred_check
      _
    $region30: #{densenet_forward.23} parent=5 // pred_check_branch
      %142 = sbr.rel (%p139) target = $region32
    $region31: #{densenet_forward.23} parent=5 // pred_region
      %s143 = ssub.s32 %s9, 1
      %s144 = smul.u32 4, %s14
      %p145 = scmp.lt.s32.totalorder %s144, 15
      %s146 = scalar_select %p145, %s144, 15
      %s147 = smul.addr %s146, 4
      %s148 = scalar_lea.vmem %s0, %s147
      %p149 = pneg %p35
      %p150 = pneg %p32
      %p151 = pneg %p56
      %p152 = pneg %p53
      %p153 = pneg %p77
      %p154 = pneg %p74
      %p155 = pneg %p103
      %p156 = pneg %p100
      %s157 = smul.u32 4, %s14
      %p158 = scmp.lt.s32.totalorder %s157, 15
      %s159 = scalar_select %p158, %s157, 15
      %s160 = smul.addr %s159, 4
      %s161 = scalar_lea.vmem %s3, %s160
      %s162 = smul.u32 4, %s14
      %p163 = scmp.lt.s32.totalorder %s162, 15
      %s164 = scalar_select %p163, %s162, 15
      %s165 = smul.addr %s164, 4
      %s166 = scalar_lea.vmem %s0, %s165
      %s167 = smul.u32 4, %s14
      %s168 = smul.u32 4, %s14
      %p169 = scmp.lt.s32.totalorder %s168, 15
      %s170 = scalar_select %p169, %s168, 15
      %s171 = smul.addr %s170, 4
      %s172 = scalar_lea.vmem %s3, %s171
      %s173 = smul.u32 4, %s14
      %v175 = vld [vmem:[%s166] sm:$0xf]
      %v176 = vld [vmem:[%s166 + $0x4] sm:$0xf]
      %v177 = vld [vmem:[%s166 + $0x8] sm:$0xf]
      %v178 = vld [vmem:[%s166 + $0xc] sm:$0xf]
      %v179 = vld [vmem:[%s1] sm:$0xf]
      %v180 = vld [vmem:[%s1 + $0x4] sm:$0xf]
      %v181 = vld [vmem:[%s1 + $0x8] sm:$0xf]
      %v182 = vld [vmem:[%s1 + $0xc] sm:$0xf]
      %v183 = vld [vmem:[%s2] sm:$0x1]
      %v185 = vlaneseq
      %v186 = vshrl.u32 %v185, 7
      %v187 = vsub.s32 0, %v186
      %v188 = vrot.slane %v183, %v187
      %v194 = vunpack.c.l.b16 %v175
      %v195 = vunpack.c.l.b16 %v176
      %v196 = vunpack.c.l.b16 %v177
      %v197 = vunpack.c.l.b16 %v178
      %v198 = vpack.c.b16 %v195, %v194
      %v199 = vpack.c.b16 %v197, %v196
      %v204 = vunpack.c.l.b16 %v179
      %v205 = vunpack.c.l.b16 %v180
      %v206 = vunpack.c.l.b16 %v181
      %v207 = vunpack.c.l.b16 %v182
      %v208 = vpack.c.b16 %v205, %v204
      %v209 = vpack.c.b16 %v207, %v206
      %vm212 = vcmask 261120
      %v214 = vsel %vm212, %v198, 0
      %v217 = vsel %vm212, %v199, 0
      %219 = vmatprep.subr.bf16.mxu0 0
      %220 = vmatpush1.bf16.msra.mxu0 %v208
      %221 = vmatprep.subr.bf16.mxu0 0
      %222 = vmatpush1.bf16.msra.mxu0 %v209
      %223 = vmatprep.subr.bf16.mxu0 0
      %224 = vmatpush1.bf16.msra.mxu0 0
      %225 = vmatprep.subr.bf16.mxu0 0
      %226 = vmatpush1.bf16.msra.mxu0 0
      %227 = vmatprep.subr.bf16.mxu0 0
      %228 = vmatpush1.bf16.msra.mxu0 0
      %229 = vmatprep.subr.bf16.mxu0 0
      %230 = vmatpush1.bf16.msra.mxu0 0
      %231 = vmatprep.subr.bf16.mxu0 0
      %232 = vmatpush1.bf16.msra.mxu0 0
      %233 = vmatprep.subr.bf16.mxu0 0
      %234 = vmatpush1.bf16.msra.mxu0 0
      %235 = vmatprep.subr.bf16.mxu0 0
      %236 = vmatpush1.bf16.msra.mxu0 0
      %237 = vmatprep.subr.bf16.mxu0 0
      %238 = vmatpush1.bf16.msra.mxu0 0
      %239 = vmatprep.subr.bf16.mxu0 0
      %240 = vmatpush1.bf16.msra.mxu0 0
      %241 = vmatprep.subr.bf16.mxu0 0
      %242 = vmatpush1.bf16.msra.mxu0 0
      %243 = vmatprep.subr.bf16.mxu0 0
      %244 = vmatpush1.bf16.msra.mxu0 0
      %245 = vmatprep.subr.bf16.mxu0 0
      %246 = vmatpush1.bf16.msra.mxu0 0
      %247 = vmatprep.subr.bf16.mxu0 0
      %248 = vmatpush1.bf16.msra.mxu0 0
      %249 = vmatprep.subr.bf16.mxu0 0
      %250 = vmatpush1.bf16.msra.mxu0 0
      %251 = vmatprep.mubr.bf16.mxu0 0
      %252 = vmatmul.mubr.bf16.gmra.mrb[0].mxu0 %v214
      %v253 = vpop.f32.mrb[0].mxu0
      %v254 = vadd.f32 %v188, %v253
      %v255 = vpop.f32.mrb[0].mxu0
      %v256 = vpop.f32.mrb[0].mxu0
      %v257 = vadd.f32 %v188, %v256
      %v258 = vpop.f32.mrb[0].mxu0
      %259 = vmatprep.mubr.bf16.mxu0 0
      %260 = vmatmul.mubr.bf16.gmra.mrb[0].mxu0 %v217
      %v261 = vpop.f32.mrb[0].mxu0
      %v262 = vadd.f32 %v188, %v261
      %v263 = vpop.f32.mrb[0].mxu0
      %v264 = vpop.f32.mrb[0].mxu0
      %v265 = vadd.f32 %v188, %v264
      %v266 = vpop.f32.mrb[0].mxu0
      %267 = vdwg.mxu0
      %v268 = vpack.c.bf16 %v257, %v254
      %v269 = vpack.c.bf16 %v265, %v262
      %v272 = vunpack.c.l.b16 %v268
      %v273 = vunpack.c.h.b16 %v268
      %v274 = vunpack.c.l.b16 %v269
      %v275 = vunpack.c.h.b16 %v269
      %v276 = vpack.c.b16 %v272, %v272
      %v277 = vpack.c.b16 %v273, %v273
      %v278 = vpack.c.b16 %v274, %v274
      %v279 = vpack.c.b16 %v275, %v275
      %vm284 = vcmask 125952
      %285 = vst.msk [vmem:[%s172] sm:$0xf] %vm284, %v276
      %286 = vst.msk [vmem:[%s172 + $0x4] sm:$0xf] %vm284, %v277
      %287 = vst.msk [vmem:[%s172 + $0x8] sm:$0xf] %vm284, %v278
      %288 = vst.msk [vmem:[%s172 + $0xc] sm:$0xf] %vm284, %v279
      %s289 = smul.u32 4, %s14
      %p290 = scmp.lt.s32.totalorder %s289, 15
      %s291 = scalar_select %p290, %s289, 15
      %s292 = smul.addr %s291, 4
      %s293 = scalar_lea.vmem %s3, %s292
      // Predicated region
      $region33: #{densenet_forward.23} parent=31 // pred_check
        %p294 = pneg %p100
      $region34: #{densenet_forward.23} parent=31 // pred_check_branch
        %296 = sbr.rel (%p294) target = $region36
      $region35: #{densenet_forward.23} parent=31 // pred_region
        %s297 = smul.u32 4, %s14
      $region36: #{densenet_forward.23} parent=31 // pred_fallthru
        _
    $region32: #{densenet_forward.23} parent=5 // pred_fallthru
      _
    %p298 = scmp.le.s32.totalorder 2, %s9
    // Predicated region
    $region37: #{densenet_forward.23} parent=5 // pred_check
      %p299 = pneg %p298
    $region38: #{densenet_forward.23} parent=5 // pred_check_branch
      %301 = sbr.rel (%p299) target = $region40
    $region39: #{densenet_forward.23} parent=5 // pred_region
      %s302 = ssub.s32 %s9, 2
      // Predicated region
      $region41: #{densenet_forward.23} parent=39 // pred_check
        %p303 = pneg %p106
      $region42: #{densenet_forward.23} parent=39 // pred_check_branch
        %305 = sbr.rel (%p303) target = $region44
      $region43: #{densenet_forward.23} parent=39 // pred_region
        %s306 = smul.u32 4, %s15
        %p307 = scmp.lt.s32.totalorder %s306, 15
        %s308 = scalar_select %p307, %s306, 15
        %s309 = smul.addr %s308, 4
        %s310 = scalar_lea.vmem %s3, %s309
      $region44: #{densenet_forward.23} parent=39 // pred_fallthru
        _
    $region40: #{densenet_forward.23} parent=5 // pred_fallthru
      _
  $region6: #{densenet_forward.23} parent=0 // loop_footer
    %s13 = sadd.s32 1, %s9
  $region7: #{densenet_forward.23} parent=0 // loop_footer_branch
    %8 = sbr.rel target = $region3
  $region8: #{densenet_forward.23} parent=0 // loop_exit
    _

// kernel: densenet_forward.18
$region0: #{densenet_forward.18}
  #allocation0 [shape = 'u32[]', space=smem, size = 0x4, offset = 0x4, fixed_abs, tag = 'smem constant byte address 0x4 - core index']
  #allocation1 [shape = 'u32[144,128]{1,0:T(1,128)}', space=vmem, size = 0x12000, scoped, tag = 'internal scratch']
  %s0 = inlined_call_operand.vmem [shape: bf16[2,362,32], index: 0, kind: input, shape index: {}]
  %s1 = inlined_call_operand.vmem [shape: bf16[288,8], index: 1, kind: input, shape index: {}]
  %s2 = inlined_call_operand.vmem [shape: f32[1,8], index: 2, kind: input, shape index: {}]
  %s3 = inlined_call_operand.vmem [shape: bf16[2,288,8], index: 3, kind: output, shape index: {}]
  %s4 = sld [smem:[#allocation0]]
  $region45: #{densenet_forward.18} parent=0
    _
  %s6 = ssub.s32 1, %s4
  %s7 = scalar_select 0, %s6, %s4
  loop: start=0, step=1, limit=4
  $region2: #{densenet_forward.18} parent=0 // loop_pre_header
    _
  $region3: #{densenet_forward.18} parent=0 // loop_header
    %s9 = sphi 0, %s13
    %p10 = scmp.ge.s32.totalorder %s9, 4
    %s19 = sphi 0, %s21
    %s22 = sphi 0, %s19
    %s23 = sphi 0, %s22
    %s39 = sphi 0, %s23
    %s43 = sphi 0, %s43
    %s45 = sphi 0, %s43
    %s46 = sphi 0, %s45
    %s60 = sphi 0, %s46
    %s64 = sphi 0, %s64
    %s66 = sphi 0, %s64
    %s67 = sphi 0, %s66
    %s81 = sphi 0, %s67
    %s87 = sphi 0, %s89
    %s90 = sphi 0, %s87
    %s91 = sphi 0, %s90
    %s107 = sphi 0, %s91
  $region4: #{densenet_forward.18} parent=0 // loop_header_branch
    %12 = sbr.rel (%p10) target = $region8
  $region5: #{densenet_forward.18} parent=0 // loop_body
    %s14 = ssub.s32 %s9, 1
    %s15 = ssub.s32 %s9, 2
    %s16 = sadd.s32 %s9, 1
    %s17 = ssub.s32 %s9, %s16
    %p18 = scmp.eq.s32.totalorder %s17, 0
    %s20 = sadd.s32 %s19, 1
    %s21 = scalar_select %p18, %s19, %s20
    %p24 = pneg %p18
    %p25 = scmp.eq.s32.totalorder %s9, 1
    %p26 = por %p24, %p25
    %p27 = scmp.ne.s32.totalorder %s19, %s22
    %p28 = scmp.eq.s32.totalorder %s9, 0
    %p29 = por %p27, %p28
    %p30 = scmp.ne.s32.totalorder %s19, %s22
    %p31 = scmp.eq.s32.totalorder %s14, 1
    %p32 = por %p30, %p31
    %p33 = scmp.ne.s32.totalorder %s22, %s23
    %p34 = scmp.eq.s32.totalorder %s14, 0
    %p35 = por %p33, %p34
    %p36 = scmp.ne.s32.totalorder %s22, %s23
    %p37 = scmp.eq.s32.totalorder %s15, 1
    %p38 = por %p36, %p37
    %p40 = scmp.ne.s32.totalorder %s23, %s39
    %p41 = scmp.eq.s32.totalorder %s15, 0
    %p42 = por %p40, %p41
    %s44 = sadd.s32 %s43, 1
    %p47 = scmp.eq.s32.totalorder %s9, 1
    %p48 = scmp.ne.s32.totalorder %s43, %s45
    %p49 = scmp.eq.s32.totalorder %s9, 0
    %p50 = por %p48, %p49
    %p51 = scmp.ne.s32.totalorder %s43, %s45
    %p52 = scmp.eq.s32.totalorder %s14, 1
    %p53 = por %p51, %p52
    %p54 = scmp.ne.s32.totalorder %s45, %s46
    %p55 = scmp.eq.s32.totalorder %s14, 0
    %p56 = por %p54, %p55
    %p57 = scmp.ne.s32.totalorder %s45, %s46
    %p58 = scmp.eq.s32.totalorder %s15, 1
    %p59 = por %p57, %p58
    %p61 = scmp.ne.s32.totalorder %s46, %s60
    %p62 = scmp.eq.s32.totalorder %s15, 0
    %p63 = por %p61, %p62
    %s65 = sadd.s32 %s64, 1
    %p68 = scmp.eq.s32.totalorder %s9, 1
    %p69 = scmp.ne.s32.totalorder %s64, %s66
    %p70 = scmp.eq.s32.totalorder %s9, 0
    %p71 = por %p69, %p70
    %p72 = scmp.ne.s32.totalorder %s64, %s66
    %p73 = scmp.eq.s32.totalorder %s14, 1
    %p74 = por %p72, %p73
    %p75 = scmp.ne.s32.totalorder %s66, %s67
    %p76 = scmp.eq.s32.totalorder %s14, 0
    %p77 = por %p75, %p76
    %p78 = scmp.ne.s32.totalorder %s66, %s67
    %p79 = scmp.eq.s32.totalorder %s15, 1
    %p80 = por %p78, %p79
    %p82 = scmp.ne.s32.totalorder %s67, %s81
    %p83 = scmp.eq.s32.totalorder %s15, 0
    %p84 = por %p82, %p83
    %s85 = ssub.s32 %s9, %s16
    %p86 = scmp.eq.s32.totalorder %s85, 0
    %s88 = sadd.s32 %s87, 1
    %s89 = scalar_select %p86, %s87, %s88
    %p92 = pneg %p86
    %p93 = scmp.eq.s32.totalorder %s9, 1
    %p94 = por %p92, %p93
    %p95 = scmp.ne.s32.totalorder %s87, %s90
    %p96 = scmp.eq.s32.totalorder %s9, 0
    %p97 = por %p95, %p96
    %p98 = scmp.ne.s32.totalorder %s87, %s90
    %p99 = scmp.eq.s32.totalorder %s14, 1
    %p100 = por %p98, %p99
    %p101 = scmp.ne.s32.totalorder %s90, %s91
    %p102 = scmp.eq.s32.totalorder %s14, 0
    %p103 = por %p101, %p102
    %p104 = scmp.ne.s32.totalorder %s90, %s91
    %p105 = scmp.eq.s32.totalorder %s15, 1
    %p106 = por %p104, %p105
    %p108 = scmp.ne.s32.totalorder %s91, %s107
    %p109 = scmp.eq.s32.totalorder %s15, 0
    %p110 = por %p108, %p109
    %p111 = scmp.le.s32.totalorder 1, %s9
    %p112 = scmp.lt.s32.totalorder %s9, 3
    %p113 = pnand %p111, %p112
    %p114 = pneg %p113
    // Predicated region
    $region9: #{densenet_forward.18} parent=5 // pred_check
      _
    $region10: #{densenet_forward.18} parent=5 // pred_check_branch
      %116 = sbr.rel (%p113) target = $region12
    $region11: #{densenet_forward.18} parent=5 // pred_region
      %s117 = ssub.s32 %s9, 1
      // Predicated region
      $region13: #{densenet_forward.18} parent=11 // pred_check
        %p118 = pneg %p56
      $region14: #{densenet_forward.18} parent=11 // pred_check_branch
        %120 = sbr.rel (%p118) target = $region16
      $region15: #{densenet_forward.18} parent=11 // pred_region
        _
      $region16: #{densenet_forward.18} parent=11 // pred_fallthru
        _
      // Predicated region
      $region17: #{densenet_forward.18} parent=11 // pred_check
        %p121 = pneg %p77
      $region18: #{densenet_forward.18} parent=11 // pred_check_branch
        %123 = sbr.rel (%p121) target = $region20
      $region19: #{densenet_forward.18} parent=11 // pred_region
        _
      $region20: #{densenet_forward.18} parent=11 // pred_fallthru
        _
    $region12: #{densenet_forward.18} parent=5 // pred_fallthru
      _
    %p124 = scmp.lt.s32.totalorder %s9, 2
    // Predicated region
    $region21: #{densenet_forward.18} parent=5 // pred_check
      %p125 = pneg %p124
    $region22: #{densenet_forward.18} parent=5 // pred_check_branch
      %127 = sbr.rel (%p125) target = $region24
    $region23: #{densenet_forward.18} parent=5 // pred_region
      // Predicated region
      $region25: #{densenet_forward.18} parent=23 // pred_check
        %p128 = pneg %p29
      $region26: #{densenet_forward.18} parent=23 // pred_check_branch
        %130 = sbr.rel (%p128) target = $region28
      $region27: #{densenet_forward.18} parent=23 // pred_region
        %p131 = scmp.lt.s32.totalorder %s9, 1
        %s132 = scalar_select %p131, %s9, 1
        %s133 = smul.addr %s132, 46
        %s134 = smul.addr %s133, 4
        %s135 = scalar_lea.vmem %s0, %s134
      $region28: #{densenet_forward.18} parent=23 // pred_fallthru
        _
    $region24: #{densenet_forward.18} parent=5 // pred_fallthru
      _
    %p136 = scmp.le.s32.totalorder 1, %s9
    %p137 = scmp.lt.s32.totalorder %s9, 3
    %p138 = pnand %p136, %p137
    %p139 = pneg %p138
    // Predicated region
    $region29: #{densenet_forward.18} parent=5 // pred_check
      _
    $region30: #{densenet_forward.18} parent=5 // pred_check_branch
      %141 = sbr.rel (%p138) target = $region32
    $region31: #{densenet_forward.18} parent=5 // pred_region
      %s142 = ssub.s32 %s9, 1
      %p143 = scmp.lt.s32.totalorder %s14, 1
      %s144 = scalar_select %p143, %s14, 1
      %s145 = smul.addr %s144, 46
      %s146 = smul.addr %s145, 4
      %s147 = scalar_lea.vmem %s0, %s146
      %p148 = pneg %p35
      %p149 = pneg %p32
      %p150 = pneg %p56
      %p151 = pneg %p53
      %p152 = pneg %p77
      %p153 = pneg %p74
      %p154 = pneg %p103
      %p155 = pneg %p100
      %p156 = scmp.lt.s32.totalorder %s14, 1
      %s157 = scalar_select %p156, %s14, 1
      %s158 = smul.addr %s157, 36
      %s159 = smul.addr %s158, 4
      %s160 = scalar_lea.vmem %s3, %s159
      %p161 = scmp.lt.s32.totalorder %s14, 1
      %s162 = scalar_select %p161, %s14, 1
      %s163 = smul.addr %s162, 46
      %s164 = smul.addr %s163, 4
      %s165 = scalar_lea.vmem %s0, %s164
      %p166 = scmp.lt.s32.totalorder %s14, 1
      %s167 = scalar_select %p166, %s14, 1
      %s168 = smul.addr %s167, 36
      %s169 = smul.addr %s168, 4
      %s170 = scalar_lea.vmem %s3, %s169
      %v172 = vld [vmem:[%s165] sm:$0xf]
      %v173 = vld [vmem:[%s165 + $0x4] sm:$0xf]
      %v174 = vld [vmem:[%s165 + $0x8] sm:$0xf]
      %v175 = vld [vmem:[%s165 + $0xc] sm:$0xf]
      %v176 = vld [vmem:[%s165 + $0x10] sm:$0xf]
      %v177 = vld [vmem:[%s165 + $0x14] sm:$0xf]
      %v178 = vld [vmem:[%s165 + $0x18] sm:$0xf]
      %v179 = vld [vmem:[%s165 + $0x1c] sm:$0xf]
      %v180 = vld [vmem:[%s165 + $0x20] sm:$0xf]
      %v181 = vld [vmem:[%s165 + $0x24] sm:$0xf]
      %v182 = vld [vmem:[%s165 + $0x28] sm:$0xf]
      %v183 = vld [vmem:[%s165 + $0x2c] sm:$0xf]
      %v184 = vld [vmem:[%s165 + $0x30] sm:$0xf]
      %v185 = vld [vmem:[%s165 + $0x34] sm:$0xf]
      %v186 = vld [vmem:[%s165 + $0x38] sm:$0xf]
      %v187 = vld [vmem:[%s165 + $0x3c] sm:$0xf]
      %v188 = vld [vmem:[%s165 + $0x40] sm:$0xf]
      %v189 = vld [vmem:[%s165 + $0x44] sm:$0xf]
      %v190 = vld [vmem:[%s165 + $0x48] sm:$0xf]
      %v191 = vld [vmem:[%s165 + $0x4c] sm:$0xf]
      %v192 = vld [vmem:[%s165 + $0x50] sm:$0xf]
      %v193 = vld [vmem:[%s165 + $0x54] sm:$0xf]
      %v194 = vld [vmem:[%s165 + $0x58] sm:$0xf]
      %v195 = vld [vmem:[%s165 + $0x5c] sm:$0xf]
      %v196 = vld [vmem:[%s165 + $0x60] sm:$0xf]
      %v197 = vld [vmem:[%s165 + $0x64] sm:$0xf]
      %v198 = vld [vmem:[%s165 + $0x68] sm:$0xf]
      %v199 = vld [vmem:[%s165 + $0x6c] sm:$0xf]
      %v200 = vld [vmem:[%s165 + $0x70] sm:$0xf]
      %v201 = vld [vmem:[%s165 + $0x74] sm:$0xf]
      %v202 = vld [vmem:[%s165 + $0x78] sm:$0xf]
      %v203 = vld [vmem:[%s165 + $0x7c] sm:$0xf]
      %v204 = vld [vmem:[%s165 + $0x80] sm:$0xf]
      %v205 = vld [vmem:[%s165 + $0x84] sm:$0xf]
      %v206 = vld [vmem:[%s165 + $0x88] sm:$0xf]
      %v207 = vld [vmem:[%s165 + $0x8c] sm:$0xf]
      %v208 = vld [vmem:[%s165 + $0x90] sm:$0xf]
      %v209 = vld [vmem:[%s165 + $0x94] sm:$0xf]
      %v210 = vld [vmem:[%s165 + $0x98] sm:$0xf]
      %v211 = vld [vmem:[%s165 + $0x9c] sm:$0xf]
      %v212 = vld [vmem:[%s165 + $0xa0] sm:$0xf]
      %v213 = vld [vmem:[%s1] sm:$0xf]
      %v214 = vld [vmem:[%s1 + $0x4] sm:$0xf]
      %v215 = vld [vmem:[%s1 + $0x8] sm:$0xf]
      %v216 = vld [vmem:[%s1 + $0xc] sm:$0xf]
      %v217 = vld [vmem:[%s1 + $0x10] sm:$0xf]
      %v218 = vld [vmem:[%s1 + $0x14] sm:$0xf]
      %v219 = vld [vmem:[%s1 + $0x18] sm:$0xf]
      %v220 = vld [vmem:[%s1 + $0x1c] sm:$0xf]
      %v221 = vld [vmem:[%s1 + $0x20] sm:$0xf]
      %v222 = vld [vmem:[%s1 + $0x24] sm:$0xf]
      %v223 = vld [vmem:[%s1 + $0x28] sm:$0xf]
      %v224 = vld [vmem:[%s1 + $0x2c] sm:$0xf]
      %v225 = vld [vmem:[%s1 + $0x30] sm:$0xf]
      %v226 = vld [vmem:[%s1 + $0x34] sm:$0xf]
      %v227 = vld [vmem:[%s1 + $0x38] sm:$0xf]
      %v228 = vld [vmem:[%s1 + $0x3c] sm:$0xf]
      %v229 = vld [vmem:[%s1 + $0x40] sm:$0xf]
      %v230 = vld [vmem:[%s1 + $0x44] sm:$0xf]
      %v231 = vld [vmem:[%s1 + $0x48] sm:$0xf]
      %v232 = vld [vmem:[%s1 + $0x4c] sm:$0xf]
      %v233 = vld [vmem:[%s1 + $0x50] sm:$0xf]
      %v234 = vld [vmem:[%s1 + $0x54] sm:$0xf]
      %v235 = vld [vmem:[%s1 + $0x58] sm:$0xf]
      %v236 = vld [vmem:[%s1 + $0x5c] sm:$0xf]
      %v237 = vld [vmem:[%s1 + $0x60] sm:$0xf]
      %v238 = vld [vmem:[%s1 + $0x64] sm:$0xf]
      %v239 = vld [vmem:[%s1 + $0x68] sm:$0xf]
      %v240 = vld [vmem:[%s1 + $0x6c] sm:$0xf]
      %v241 = vld [vmem:[%s1 + $0x70] sm:$0xf]
      %v242 = vld [vmem:[%s1 + $0x74] sm:$0xf]
      %v243 = vld [vmem:[%s1 + $0x78] sm:$0xf]
      %v244 = vld [vmem:[%s1 + $0x7c] sm:$0xf]
      %v245 = vld [vmem:[%s1 + $0x80] sm:$0xf]
      %v246 = vld [vmem:[%s1 + $0x84] sm:$0xf]
      %v247 = vld [vmem:[%s1 + $0x88] sm:$0xf]
      %v248 = vld [vmem:[%s1 + $0x8c] sm:$0xf]
      %v286 = vunpack.c.l.b16 %v172
      %v287 = vunpack.c.l.b16 %v173
      %v288 = vunpack.c.l.b16 %v174
      %v289 = vunpack.c.l.b16 %v175
      %v290 = vunpack.c.l.b16 %v176
      %v291 = vunpack.c.l.b16 %v177
      %v292 = vunpack.c.l.b16 %v178
      %v293 = vunpack.c.l.b16 %v179
      %v294 = vunpack.c.l.b16 %v180
      %v295 = vunpack.c.l.b16 %v181
      %v296 = vunpack.c.l.b16 %v182
      %v297 = vunpack.c.l.b16 %v183
      %v298 = vunpack.c.l.b16 %v184
      %v299 = vunpack.c.l.b16 %v185
      %v300 = vunpack.c.l.b16 %v186
      %v301 = vunpack.c.l.b16 %v187
      %v302 = vunpack.c.l.b16 %v188
      %v303 = vunpack.c.l.b16 %v189
      %v304 = vunpack.c.l.b16 %v190
      %v305 = vunpack.c.l.b16 %v191
      %v306 = vunpack.c.l.b16 %v192
      %v307 = vunpack.c.l.b16 %v193
      %v308 = vunpack.c.l.b16 %v194
      %v309 = vunpack.c.l.b16 %v195
      %v310 = vunpack.c.l.b16 %v196
      %v311 = vunpack.c.l.b16 %v197
      %v312 = vunpack.c.l.b16 %v198
      %v313 = vunpack.c.l.b16 %v199
      %v314 = vunpack.c.l.b16 %v200
      %v315 = vunpack.c.l.b16 %v201
      %v316 = vunpack.c.l.b16 %v202
      %v317 = vunpack.c.l.b16 %v203
      %v318 = vunpack.c.l.b16 %v204
      %v319 = vunpack.c.l.b16 %v205
      %v320 = vunpack.c.l.b16 %v206
      %v321 = vunpack.c.l.b16 %v207
      %v322 = vunpack.c.l.b16 %v208
      %v323 = vpack.c.b16 %v287, %v286
      %v324 = vpack.c.b16 %v289, %v288
      %v325 = vpack.c.b16 %v291, %v290
      %v326 = vpack.c.b16 %v293, %v292
      %v327 = vpack.c.b16 %v295, %v294
      %v328 = vpack.c.b16 %v297, %v296
      %v329 = vpack.c.b16 %v299, %v298
      %v330 = vpack.c.b16 %v301, %v300
      %v331 = vpack.c.b16 %v303, %v302
      %v332 = vpack.c.b16 %v305, %v304
      %v333 = vpack.c.b16 %v307, %v306
      %v334 = vpack.c.b16 %v309, %v308
      %v335 = vpack.c.b16 %v311, %v310
      %v336 = vpack.c.b16 %v313, %v312
      %v337 = vpack.c.b16 %v315, %v314
      %v338 = vpack.c.b16 %v317, %v316
      %v339 = vpack.c.b16 %v319, %v318
      %v340 = vpack.c.b16 %v321, %v320
      %v341 = vpack.c.b16 %v322, %v322
      %vm342 = vsmask.f32 7424
      %v344 = vshrl.u32 %v323, 16
      %v346 = vshll.u32 %v323, 16
      %v348 = vrot.slane %v346, 1
      %v349 = vor.u32 %v344, %v348
      %v351 = vshll.u32 %v324, 16
      %v353 = vrot.slane %v351, 1
      %v354 = vsel %vm342, %v349, %v353
      %v355 = vshrl.u32 %v324, 16
      %v357 = vor.u32 %v355, %v353
      %v359 = vshll.u32 %v325, 16
      %v361 = vrot.slane %v359, 1
      %v362 = vsel %vm342, %v357, %v361
      %v363 = vshrl.u32 %v325, 16
      %v365 = vor.u32 %v363, %v361
      %v367 = vshll.u32 %v326, 16
      %v369 = vrot.slane %v367, 1
      %v370 = vsel %vm342, %v365, %v369
      %v371 = vshrl.u32 %v326, 16
      %v373 = vor.u32 %v371, %v369
      %v375 = vshll.u32 %v327, 16
      %v377 = vrot.slane %v375, 1
      %v378 = vsel %vm342, %v373, %v377
      %v379 = vshrl.u32 %v327, 16
      %v381 = vor.u32 %v379, %v377
      %v383 = vshll.u32 %v328, 16
      %v385 = vrot.slane %v383, 1
      %v386 = vsel %vm342, %v381, %v385
      %v387 = vshrl.u32 %v328, 16
      %v389 = vor.u32 %v387, %v385
      %v391 = vshll.u32 %v329, 16
      %v393 = vrot.slane %v391, 1
      %v394 = vsel %vm342, %v389, %v393
      %v395 = vshrl.u32 %v329, 16
      %v397 = vor.u32 %v395, %v393
      %v399 = vshll.u32 %v330, 16
      %v401 = vrot.slane %v399, 1
      %v402 = vsel %vm342, %v397, %v401
      %v403 = vshrl.u32 %v330, 16
      %v405 = vor.u32 %v403, %v401
      %v407 = vshll.u32 %v331, 16
      %v409 = vrot.slane %v407, 1
      %v410 = vsel %vm342, %v405, %v409
      %v411 = vshrl.u32 %v331, 16
      %v413 = vor.u32 %v411, %v409
      %v415 = vshll.u32 %v332, 16
      %v417 = vrot.slane %v415, 1
      %v418 = vsel %vm342, %v413, %v417
      %v419 = vshrl.u32 %v332, 16
      %v421 = vor.u32 %v419, %v417
      %v423 = vshll.u32 %v333, 16
      %v425 = vrot.slane %v423, 1
      %v426 = vsel %vm342, %v421, %v425
      %v427 = vshrl.u32 %v333, 16
      %v429 = vor.u32 %v427, %v425
      %v431 = vshll.u32 %v334, 16
      %v433 = vrot.slane %v431, 1
      %v434 = vsel %vm342, %v429, %v433
      %v435 = vshrl.u32 %v334, 16
      %v437 = vor.u32 %v435, %v433
      %v439 = vshll.u32 %v335, 16
      %v441 = vrot.slane %v439, 1
      %v442 = vsel %vm342, %v437, %v441
      %v443 = vshrl.u32 %v335, 16
      %v445 = vor.u32 %v443, %v441
      %v447 = vshll.u32 %v336, 16
      %v449 = vrot.slane %v447, 1
      %v450 = vsel %vm342, %v445, %v449
      %v451 = vshrl.u32 %v336, 16
      %v453 = vor.u32 %v451, %v449
      %v455 = vshll.u32 %v337, 16
      %v457 = vrot.slane %v455, 1
      %v458 = vsel %vm342, %v453, %v457
      %v459 = vshrl.u32 %v337, 16
      %v461 = vor.u32 %v459, %v457
      %v463 = vshll.u32 %v338, 16
      %v465 = vrot.slane %v463, 1
      %v466 = vsel %vm342, %v461, %v465
      %v467 = vshrl.u32 %v338, 16
      %v469 = vor.u32 %v467, %v465
      %v471 = vshll.u32 %v339, 16
      %v473 = vrot.slane %v471, 1
      %v474 = vsel %vm342, %v469, %v473
      %v475 = vshrl.u32 %v339, 16
      %v477 = vor.u32 %v475, %v473
      %v479 = vshll.u32 %v340, 16
      %v481 = vrot.slane %v479, 1
      %v482 = vsel %vm342, %v477, %v481
      %v483 = vshrl.u32 %v340, 16
      %v485 = vor.u32 %v483, %v481
      %v487 = vshll.u32 %v341, 16
      %v489 = vrot.slane %v487, 1
      %v490 = vsel %vm342, %v485, %v489
      %v495 = vunpack.c.l.b16 %v217
      %v496 = vunpack.c.l.b16 %v218
      %v497 = vunpack.c.l.b16 %v219
      %v498 = vunpack.c.l.b16 %v220
      %v499 = vpack.c.b16 %v496, %v495
      %v500 = vpack.c.b16 %v498, %v497
      %vm503 = vcmask 261120
      %v505 = vsel %vm503, %v354, 0
      %v508 = vsel %vm503, %v362, 0
      %v511 = vsel %vm503, %v370, 0
      %v514 = vsel %vm503, %v378, 0
      %v517 = vsel %vm503, %v386, 0
      %v520 = vsel %vm503, %v394, 0
      %v523 = vsel %vm503, %v402, 0
      %v526 = vsel %vm503, %v410, 0
      %v529 = vsel %vm503, %v418, 0
      %v532 = vsel %vm503, %v426, 0
      %v535 = vsel %vm503, %v434, 0
      %v538 = vsel %vm503, %v442, 0
      %v541 = vsel %vm503, %v450, 0
      %v544 = vsel %vm503, %v458, 0
      %v547 = vsel %vm503, %v466, 0
      %v550 = vsel %vm503, %v474, 0
      %v553 = vsel %vm503, %v482, 0
      %v556 = vsel %vm503, %v490, 0
      %558 = vmatprep.subr.bf16.mxu0 0
      %559 = vmatpush1.bf16.msra.mxu0 %v499
      %560 = vmatprep.subr.bf16.mxu0 0
      %561 = vmatpush1.bf16.msra.mxu0 %v500
      %562 = vmatprep.subr.bf16.mxu0 0
      %563 = vmatpush1.bf16.msra.mxu0 0
      %564 = vmatprep.subr.bf16.mxu0 0
      %565 = vmatpush1.bf16.msra.mxu0 0
      %566 = vmatprep.subr.bf16.mxu0 0
      %567 = vmatpush1.bf16.msra.mxu0 0
      %568 = vmatprep.subr.bf16.mxu0 0
      %569 = vmatpush1.bf16.msra.mxu0 0
      %570 = vmatprep.subr.bf16.mxu0 0
      %571 = vmatpush1.bf16.msra.mxu0 0
      %572 = vmatprep.subr.bf16.mxu0 0
      %573 = vmatpush1.bf16.msra.mxu0 0
      %574 = vmatprep.subr.bf16.mxu0 0
      %575 = vmatpush1.bf16.msra.mxu0 0
      %576 = vmatprep.subr.bf16.mxu0 0
      %577 = vmatpush1.bf16.msra.mxu0 0
      %578 = vmatprep.subr.bf16.mxu0 0
      %579 = vmatpush1.bf16.msra.mxu0 0
      %580 = vmatprep.subr.bf16.mxu0 0
      %581 = vmatpush1.bf16.msra.mxu0 0
      %582 = vmatprep.subr.bf16.mxu0 0
      %583 = vmatpush1.bf16.msra.mxu0 0
      %584 = vmatprep.subr.bf16.mxu0 0
      %585 = vmatpush1.bf16.msra.mxu0 0
      %586 = vmatprep.subr.bf16.mxu0 0
      %587 = vmatpush1.bf16.msra.mxu0 0
      %588 = vmatprep.subr.bf16.mxu0 0
      %589 = vmatpush1.bf16.msra.mxu0 0
      %590 = vmatprep.mubr.bf16.mxu0 0
      %591 = vmatmul.mubr.bf16.gmra.mrb[0].mxu0 %v505
      %v592 = vpop.f32.mrb[0].mxu0
      %v593 = vadd.f32 0.0, %v592
      %v594 = vpop.f32.mrb[0].mxu0
      %v595 = vpop.f32.mrb[0].mxu0
      %v596 = vadd.f32 0.0, %v595
      %v597 = vpop.f32.mrb[0].mxu0
      %598 = vmatprep.mubr.bf16.mxu0 0
      %599 = vmatmul.mubr.bf16.gmra.mrb[0].mxu0 %v508
      %v600 = vpop.f32.mrb[0].mxu0
      %v601 = vadd.f32 0.0, %v600
      %v602 = vpop.f32.mrb[0].mxu0
      %v603 = vpop.f32.mrb[0].mxu0
      %v604 = vadd.f32 0.0, %v603
      %v605 = vpop.f32.mrb[0].mxu0
      %606 = vmatprep.mubr.bf16.mxu0 0
      %607 = vmatmul.mubr.bf16.gmra.mrb[0].mxu0 %v511
      %v608 = vpop.f32.mrb[0].mxu0
      %v609 = vadd.f32 0.0, %v608
      %v610 = vpop.f32.mrb[0].mxu0
      %v611 = vpop.f32.mrb[0].mxu0
      %v612 = vadd.f32 0.0, %v611
      %v613 = vpop.f32.mrb[0].mxu0
      %614 = vmatprep.mubr.bf16.mxu0 0
      %615 = vmatmul.mubr.bf16.gmra.mrb[0].mxu0 %v514
      %v616 = vpop.f32.mrb[0].mxu0
      %v617 = vadd.f32 0.0, %v616
      %v618 = vpop.f32.mrb[0].mxu0
      %v619 = vpop.f32.mrb[0].mxu0
      %v620 = vadd.f32 0.0, %v619
      %v621 = vpop.f32.mrb[0].mxu0
      %622 = vmatprep.mubr.bf16.mxu0 0
      %623 = vmatmul.mubr.bf16.gmra.mrb[0].mxu0 %v517
      %v624 = vpop.f32.mrb[0].mxu0
      %v625 = vadd.f32 0.0, %v624
      %v626 = vpop.f32.mrb[0].mxu0
      %v627 = vpop.f32.mrb[0].mxu0
      %v628 = vadd.f32 0.0, %v627
      %v629 = vpop.f32.mrb[0].mxu0
      %630 = vmatprep.mubr.bf16.mxu0 0
      %631 = vmatmul.mubr.bf16.gmra.mrb[0].mxu0 %v520
      %v632 = vpop.f32.mrb[0].mxu0
      %v633 = vadd.f32 0.0, %v632
      %v634 = vpop.f32.mrb[0].mxu0
      %v635 = vpop.f32.mrb[0].mxu0
      %v636 = vadd.f32 0.0, %v635
      %v637 = vpop.f32.mrb[0].mxu0
      %638 = vmatprep.mubr.bf16.mxu0 0
      %639 = vmatmul.mubr.bf16.gmra.mrb[0].mxu0 %v523
      %v640 = vpop.f32.mrb[0].mxu0
      %v641 = vadd.f32 0.0, %v640
      %v642 = vpop.f32.mrb[0].mxu0
      %v643 = vpop.f32.mrb[0].mxu0
      %v644 = vadd.f32 0.0, %v643
      %v645 = vpop.f32.mrb[0].mxu0
      %646 = vmatprep.mubr.bf16.mxu0 0
      %647 = vmatmul.mubr.bf16.gmra.mrb[0].mxu0 %v526
      %v648 = vpop.f32.mrb[0].mxu0
      %v649 = vadd.f32 0.0, %v648
      %v650 = vpop.f32.mrb[0].mxu0
      %v651 = vpop.f32.mrb[0].mxu0
      %v652 = vadd.f32 0.0, %v651
      %v653 = vpop.f32.mrb[0].mxu0
      %654 = vmatprep.mubr.bf16.mxu0 0
      %655 = vmatmul.mubr.bf16.gmra.mrb[0].mxu0 %v529
      %v656 = vpop.f32.mrb[0].mxu0
      %v657 = vadd.f32 0.0, %v656
      %v658 = vpop.f32.mrb[0].mxu0
      %v659 = vpop.f32.mrb[0].mxu0
      %v660 = vadd.f32 0.0, %v659
      %v661 = vpop.f32.mrb[0].mxu0
      %662 = vmatprep.mubr.bf16.mxu0 0
      %663 = vmatmul.mubr.bf16.gmra.mrb[0].mxu0 %v532
      %v664 = vpop.f32.mrb[0].mxu0
      %v665 = vadd.f32 0.0, %v664
      %v666 = vpop.f32.mrb[0].mxu0
      %v667 = vpop.f32.mrb[0].mxu0
      %v668 = vadd.f32 0.0, %v667
      %v669 = vpop.f32.mrb[0].mxu0
      %670 = vmatprep.mubr.bf16.mxu0 0
      %671 = vmatmul.mubr.bf16.gmra.mrb[0].mxu0 %v535
      %v672 = vpop.f32.mrb[0].mxu0
      %v673 = vadd.f32 0.0, %v672
      %v674 = vpop.f32.mrb[0].mxu0
      %v675 = vpop.f32.mrb[0].mxu0
      %v676 = vadd.f32 0.0, %v675
      %v677 = vpop.f32.mrb[0].mxu0
      %678 = vmatprep.mubr.bf16.mxu0 0
      %679 = vmatmul.mubr.bf16.gmra.mrb[0].mxu0 %v538
      %v680 = vpop.f32.mrb[0].mxu0
      %v681 = vadd.f32 0.0, %v680
      %v682 = vpop.f32.mrb[0].mxu0
      %v683 = vpop.f32.mrb[0].mxu0
      %v684 = vadd.f32 0.0, %v683
      %v685 = vpop.f32.mrb[0].mxu0
      %686 = vmatprep.mubr.bf16.mxu0 0
      %687 = vmatmul.mubr.bf16.gmra.mrb[0].mxu0 %v541
      %v688 = vpop.f32.mrb[0].mxu0
      %v689 = vadd.f32 0.0, %v688
      %v690 = vpop.f32.mrb[0].mxu0
      %v691 = vpop.f32.mrb[0].mxu0
      %v692 = vadd.f32 0.0, %v691
      %v693 = vpop.f32.mrb[0].mxu0
      %694 = vmatprep.mubr.bf16.mxu0 0
      %695 = vmatmul.mubr.bf16.gmra.mrb[0].mxu0 %v544
      %v696 = vpop.f32.mrb[0].mxu0
      %v697 = vadd.f32 0.0, %v696
      %v698 = vpop.f32.mrb[0].mxu0
      %v699 = vpop.f32.mrb[0].mxu0
      %v700 = vadd.f32 0.0, %v699
      %v701 = vpop.f32.mrb[0].mxu0
      %702 = vmatprep.mubr.bf16.mxu0 0
      %703 = vmatmul.mubr.bf16.gmra.mrb[0].mxu0 %v547
      %v704 = vpop.f32.mrb[0].mxu0
      %v705 = vadd.f32 0.0, %v704
      %v706 = vpop.f32.mrb[0].mxu0
      %v707 = vpop.f32.mrb[0].mxu0
      %v708 = vadd.f32 0.0, %v707
      %v709 = vpop.f32.mrb[0].mxu0
      %710 = vmatprep.mubr.bf16.mxu0 0
      %711 = vmatmul.mubr.bf16.gmra.mrb[0].mxu0 %v550
      %v712 = vpop.f32.mrb[0].mxu0
      %v713 = vadd.f32 0.0, %v712
      %v714 = vpop.f32.mrb[0].mxu0
      %v715 = vpop.f32.mrb[0].mxu0
      %v716 = vadd.f32 0.0, %v715
      %v717 = vpop.f32.mrb[0].mxu0
      %718 = vmatprep.mubr.bf16.mxu0 0
      %719 = vmatmul.mubr.bf16.gmra.mrb[0].mxu0 %v553
      %v720 = vpop.f32.mrb[0].mxu0
      %v721 = vadd.f32 0.0, %v720
      %v722 = vpop.f32.mrb[0].mxu0
      %v723 = vpop.f32.mrb[0].mxu0
      %v724 = vadd.f32 0.0, %v723
      %v725 = vpop.f32.mrb[0].mxu0
      %726 = vmatprep.mubr.bf16.mxu0 0
      %727 = vmatmul.mubr.bf16.gmra.mrb[0].mxu0 %v556
      %v728 = vpop.f32.mrb[0].mxu0
      %v729 = vadd.f32 0.0, %v728
      %v730 = vpop.f32.mrb[0].mxu0
      %v731 = vpop.f32.mrb[0].mxu0
      %v732 = vadd.f32 0.0, %v731
      %v733 = vpop.f32.mrb[0].mxu0
      %734 = vdwg.mxu0
      %v739 = vunpack.c.l.b16 %v213
      %v740 = vunpack.c.l.b16 %v214
      %v741 = vunpack.c.l.b16 %v215
      %v742 = vunpack.c.l.b16 %v216
      %v743 = vpack.c.b16 %v740, %v739
      %v744 = vpack.c.b16 %v742, %v741
      %v747 = vsel %vm503, %v323, 0
      %v749 = vsel %vm503, %v324, 0
      %v751 = vsel %vm503, %v325, 0
      %v753 = vsel %vm503, %v326, 0
      %v755 = vsel %vm503, %v327, 0
      %v757 = vsel %vm503, %v328, 0
      %v759 = vsel %vm503, %v329, 0
      %v761 = vsel %vm503, %v330, 0
      %v763 = vsel %vm503, %v331, 0
      %v765 = vsel %vm503, %v332, 0
      %v767 = vsel %vm503, %v333, 0
      %v769 = vsel %vm503, %v334, 0
      %v771 = vsel %vm503, %v335, 0
      %v773 = vsel %vm503, %v336, 0
      %v775 = vsel %vm503, %v337, 0
      %v777 = vsel %vm503, %v338, 0
      %v779 = vsel %vm503, %v339, 0
      %v781 = vsel %vm503, %v340, 0
      %783 = vmatprep.subr.bf16.mxu0 0
      %784 = vmatpush1.bf16.msra.mxu0 %v743
      %785 = vmatprep.subr.bf16.mxu0 0
      %786 = vmatpush1.bf16.msra.mxu0 %v744
      %787 = vmatprep.subr.bf16.mxu0 0
      %788 = vmatpush1.bf16.msra.mxu0 0
      %789 = vmatprep.subr.bf16.mxu0 0
      %790 = vmatpush1.bf16.msra.mxu0 0
      %791 = vmatprep.subr.bf16.mxu0 0
      %792 = vmatpush1.bf16.msra.mxu0 0
      %793 = vmatprep.subr.bf16.mxu0 0
      %794 = vmatpush1.bf16.msra.mxu0 0
      %795 = vmatprep.subr.bf16.mxu0 0
      %796 = vmatpush1.bf16.msra.mxu0 0
      %797 = vmatprep.subr.bf16.mxu0 0
      %798 = vmatpush1.bf16.msra.mxu0 0
      %799 = vmatprep.subr.bf16.mxu0 0
      %800 = vmatpush1.bf16.msra.mxu0 0
      %801 = vmatprep.subr.bf16.mxu0 0
      %802 = vmatpush1.bf16.msra.mxu0 0
      %803 = vmatprep.subr.bf16.mxu0 0
      %804 = vmatpush1.bf16.msra.mxu0 0
      %805 = vmatprep.subr.bf16.mxu0 0
      %806 = vmatpush1.bf16.msra.mxu0 0
      %807 = vmatprep.subr.bf16.mxu0 0
      %808 = vmatpush1.bf16.msra.mxu0 0
      %809 = vmatprep.subr.bf16.mxu0 0
      %810 = vmatpush1.bf16.msra.mxu0 0
      %811 = vmatprep.subr.bf16.mxu0 0
      %812 = vmatpush1.bf16.msra.mxu0 0
      %813 = vmatprep.subr.bf16.mxu0 0
      %814 = vmatpush1.bf16.msra.mxu0 0
      %815 = vmatprep.mubr.bf16.mxu0 0
      %816 = vmatmul.mubr.bf16.gmra.mrb[0].mxu0 %v747
      %v817 = vpop.f32.mrb[0].mxu0
      %v818 = vadd.f32 %v593, %v817
      %v819 = vpop.f32.mrb[0].mxu0
      %v820 = vpop.f32.mrb[0].mxu0
      %v821 = vadd.f32 %v596, %v820
      %v822 = vpop.f32.mrb[0].mxu0
      %823 = vmatprep.mubr.bf16.mxu0 0
      %824 = vmatmul.mubr.bf16.gmra.mrb[0].mxu0 %v749
      %v825 = vpop.f32.mrb[0].mxu0
      %v826 = vadd.f32 %v601, %v825
      %v827 = vpop.f32.mrb[0].mxu0
      %v828 = vpop.f32.mrb[0].mxu0
      %v829 = vadd.f32 %v604, %v828
      %v830 = vpop.f32.mrb[0].mxu0
      %831 = vmatprep.mubr.bf16.mxu0 0
      %832 = vmatmul.mubr.bf16.gmra.mrb[0].mxu0 %v751
      %v833 = vpop.f32.mrb[0].mxu0
      %v834 = vadd.f32 %v609, %v833
      %v835 = vpop.f32.mrb[0].mxu0
      %v836 = vpop.f32.mrb[0].mxu0
      %v837 = vadd.f32 %v612, %v836
      %v838 = vpop.f32.mrb[0].mxu0
      %839 = vmatprep.mubr.bf16.mxu0 0
      %840 = vmatmul.mubr.bf16.gmra.mrb[0].mxu0 %v753
      %v841 = vpop.f32.mrb[0].mxu0
      %v842 = vadd.f32 %v617, %v841
      %v843 = vpop.f32.mrb[0].mxu0
      %v844 = vpop.f32.mrb[0].mxu0
      %v845 = vadd.f32 %v620, %v844
      %v846 = vpop.f32.mrb[0].mxu0
      %847 = vmatprep.mubr.bf16.mxu0 0
      %848 = vmatmul.mubr.bf16.gmra.mrb[0].mxu0 %v755
      %v849 = vpop.f32.mrb[0].mxu0
      %v850 = vadd.f32 %v625, %v849
      %v851 = vpop.f32.mrb[0].mxu0
      %v852 = vpop.f32.mrb[0].mxu0
      %v853 = vadd.f32 %v628, %v852
      %v854 = vpop.f32.mrb[0].mxu0
      %855 = vmatprep.mubr.bf16.mxu0 0
      %856 = vmatmul.mubr.bf16.gmra.mrb[0].mxu0 %v757
      %v857 = vpop.f32.mrb[0].mxu0
      %v858 = vadd.f32 %v633, %v857
      %v859 = vpop.f32.mrb[0].mxu0
      %v860 = vpop.f32.mrb[0].mxu0
      %v861 = vadd.f32 %v636, %v860
      %v862 = vpop.f32.mrb[0].mxu0
      %863 = vmatprep.mubr.bf16.mxu0 0
      %864 = vmatmul.mubr.bf16.gmra.mrb[0].mxu0 %v759
      %v865 = vpop.f32.mrb[0].mxu0
      %v866 = vadd.f32 %v641, %v865
      %v867 = vpop.f32.mrb[0].mxu0
      %v868 = vpop.f32.mrb[0].mxu0
      %v869 = vadd.f32 %v644, %v868
      %v870 = vpop.f32.mrb[0].mxu0
      %871 = vmatprep.mubr.bf16.mxu0 0
      %872 = vmatmul.mubr.bf16.gmra.mrb[0].mxu0 %v761
      %v873 = vpop.f32.mrb[0].mxu0
      %v874 = vadd.f32 %v649, %v873
      %v875 = vpop.f32.mrb[0].mxu0
      %v876 = vpop.f32.mrb[0].mxu0
      %v877 = vadd.f32 %v652, %v876
      %v878 = vpop.f32.mrb[0].mxu0
      %879 = vmatprep.mubr.bf16.mxu0 0
      %880 = vmatmul.mubr.bf16.gmra.mrb[0].mxu0 %v763
      %v881 = vpop.f32.mrb[0].mxu0
      %v882 = vadd.f32 %v657, %v881
      %v883 = vpop.f32.mrb[0].mxu0
      %v884 = vpop.f32.mrb[0].mxu0
      %v885 = vadd.f32 %v660, %v884
      %v886 = vpop.f32.mrb[0].mxu0
      %887 = vmatprep.mubr.bf16.mxu0 0
      %888 = vmatmul.mubr.bf16.gmra.mrb[0].mxu0 %v765
      %v889 = vpop.f32.mrb[0].mxu0
      %v890 = vadd.f32 %v665, %v889
      %v891 = vpop.f32.mrb[0].mxu0
      %v892 = vpop.f32.mrb[0].mxu0
      %v893 = vadd.f32 %v668, %v892
      %v894 = vpop.f32.mrb[0].mxu0
      %895 = vmatprep.mubr.bf16.mxu0 0
      %896 = vmatmul.mubr.bf16.gmra.mrb[0].mxu0 %v767
      %v897 = vpop.f32.mrb[0].mxu0
      %v898 = vadd.f32 %v673, %v897
      %v899 = vpop.f32.mrb[0].mxu0
      %v900 = vpop.f32.mrb[0].mxu0
      %v901 = vadd.f32 %v676, %v900
      %v902 = vpop.f32.mrb[0].mxu0
      %903 = vmatprep.mubr.bf16.mxu0 0
      %904 = vmatmul.mubr.bf16.gmra.mrb[0].mxu0 %v769
      %v905 = vpop.f32.mrb[0].mxu0
      %v906 = vadd.f32 %v681, %v905
      %v907 = vpop.f32.mrb[0].mxu0
      %v908 = vpop.f32.mrb[0].mxu0
      %v909 = vadd.f32 %v684, %v908
      %v910 = vpop.f32.mrb[0].mxu0
      %911 = vmatprep.mubr.bf16.mxu0 0
      %912 = vmatmul.mubr.bf16.gmra.mrb[0].mxu0 %v771
      %v913 = vpop.f32.mrb[0].mxu0
      %v914 = vadd.f32 %v689, %v913
      %v915 = vpop.f32.mrb[0].mxu0
      %v916 = vpop.f32.mrb[0].mxu0
      %v917 = vadd.f32 %v692, %v916
      %v918 = vpop.f32.mrb[0].mxu0
      %919 = vmatprep.mubr.bf16.mxu0 0
      %920 = vmatmul.mubr.bf16.gmra.mrb[0].mxu0 %v773
      %v921 = vpop.f32.mrb[0].mxu0
      %v922 = vadd.f32 %v697, %v921
      %v923 = vpop.f32.mrb[0].mxu0
      %v924 = vpop.f32.mrb[0].mxu0
      %v925 = vadd.f32 %v700, %v924
      %v926 = vpop.f32.mrb[0].mxu0
      %927 = vmatprep.mubr.bf16.mxu0 0
      %928 = vmatmul.mubr.bf16.gmra.mrb[0].mxu0 %v775
      %v929 = vpop.f32.mrb[0].mxu0
      %v930 = vadd.f32 %v705, %v929
      %v931 = vpop.f32.mrb[0].mxu0
      %v932 = vpop.f32.mrb[0].mxu0
      %v933 = vadd.f32 %v708, %v932
      %v934 = vpop.f32.mrb[0].mxu0
      %935 = vmatprep.mubr.bf16.mxu0 0
      %936 = vmatmul.mubr.bf16.gmra.mrb[0].mxu0 %v777
      %v937 = vpop.f32.mrb[0].mxu0
      %v938 = vadd.f32 %v713, %v937
      %v939 = vpop.f32.mrb[0].mxu0
      %v940 = vpop.f32.mrb[0].mxu0
      %v941 = vadd.f32 %v716, %v940
      %v942 = vpop.f32.mrb[0].mxu0
      %943 = vmatprep.mubr.bf16.mxu0 0
      %944 = vmatmul.mubr.bf16.gmra.mrb[0].mxu0 %v779
      %v945 = vpop.f32.mrb[0].mxu0
      %v946 = vadd.f32 %v721, %v945
      %v947 = vpop.f32.mrb[0].mxu0
      %v948 = vpop.f32.mrb[0].mxu0
      %v949 = vadd.f32 %v724, %v948
      %v950 = vpop.f32.mrb[0].mxu0
      %951 = vmatprep.mubr.bf16.mxu0 0
      %952 = vmatmul.mubr.bf16.gmra.mrb[0].mxu0 %v781
      %v953 = vpop.f32.mrb[0].mxu0
      %v954 = vadd.f32 %v729, %v953
      %v955 = vpop.f32.mrb[0].mxu0
      %v956 = vpop.f32.mrb[0].mxu0
      %v957 = vadd.f32 %v732, %v956
      %v958 = vpop.f32.mrb[0].mxu0
      %959 = vdwg.mxu0
      %vm960 = vcmask 1046528
      %v961 = vrot.slane %v323, 1
      %v962 = vrot.slane %v324, 1
      %v963 = vsel %vm960, %v961, %v962
      %v964 = vrot.slane %v325, 1
      %v965 = vsel %vm960, %v962, %v964
      %v966 = vrot.slane %v326, 1
      %v967 = vsel %vm960, %v964, %v966
      %v968 = vrot.slane %v327, 1
      %v969 = vsel %vm960, %v966, %v968
      %v970 = vrot.slane %v328, 1
      %v971 = vsel %vm960, %v968, %v970
      %v972 = vrot.slane %v329, 1
      %v973 = vsel %vm960, %v970, %v972
      %v974 = vrot.slane %v330, 1
      %v975 = vsel %vm960, %v972, %v974
      %v976 = vrot.slane %v331, 1
      %v977 = vsel %vm960, %v974, %v976
      %v978 = vrot.slane %v332, 1
      %v979 = vsel %vm960, %v976, %v978
      %v980 = vrot.slane %v333, 1
      %v981 = vsel %vm960, %v978, %v980
      %v982 = vrot.slane %v334, 1
      %v983 = vsel %vm960, %v980, %v982
      %v984 = vrot.slane %v335, 1
      %v985 = vsel %vm960, %v982, %v984
      %v986 = vrot.slane %v336, 1
      %v987 = vsel %vm960, %v984, %v986
      %v988 = vrot.slane %v337, 1
      %v989 = vsel %vm960, %v986, %v988
      %v990 = vrot.slane %v338, 1
      %v991 = vsel %vm960, %v988, %v990
      %v992 = vrot.slane %v339, 1
      %v993 = vsel %vm960, %v990, %v992
      %v994 = vrot.slane %v340, 1
      %v995 = vsel %vm960, %v992, %v994
      %v996 = vrot.slane %v341, 1
      %v997 = vsel %vm960, %v994, %v996
      %v1002 = vunpack.c.l.b16 %v221
      %v1003 = vunpack.c.l.b16 %v222
      %v1004 = vunpack.c.l.b16 %v223
      %v1005 = vunpack.c.l.b16 %v224
      %v1006 = vpack.c.b16 %v1003, %v1002
      %v1007 = vpack.c.b16 %v1005, %v1004
      %v1011 = vsel %vm503, %v963, 0
      %v1014 = vsel %vm503, %v965, 0
      %v1017 = vsel %vm503, %v967, 0
      %v1020 = vsel %vm503, %v969, 0
      %v1023 = vsel %vm503, %v971, 0
      %v1026 = vsel %vm503, %v973, 0
      %v1029 = vsel %vm503, %v975, 0
      %v1032 = vsel %vm503, %v977, 0
      %v1035 = vsel %vm503, %v979, 0
      %v1038 = vsel %vm503, %v981, 0
      %v1041 = vsel %vm503, %v983, 0
      %v1044 = vsel %vm503, %v985, 0
      %v1047 = vsel %vm503, %v987, 0
      %v1050 = vsel %vm503, %v989, 0
      %v1053 = vsel %vm503, %v991, 0
      %v1056 = vsel %vm503, %v993, 0
      %v1059 = vsel %vm503, %v995, 0
      %v1062 = vsel %vm503, %v997, 0
      %1064 = vmatprep.subr.bf16.mxu0 0
      %1065 = vmatpush1.bf16.msra.mxu0 %v1006
      %1066 = vmatprep.subr.bf16.mxu0 0
      %1067 = vmatpush1.bf16.msra.mxu0 %v1007
      %1068 = vmatprep.subr.bf16.mxu0 0
      %1069 = vmatpush1.bf16.msra.mxu0 0
      %1070 = vmatprep.subr.bf16.mxu0 0
      %1071 = vmatpush1.bf16.msra.mxu0 0
      %1072 = vmatprep.subr.bf16.mxu0 0
      %1073 = vmatpush1.bf16.msra.mxu0 0
      %1074 = vmatprep.subr.bf16.mxu0 0
      %1075 = vmatpush1.bf16.msra.mxu0 0
      %1076 = vmatprep.subr.bf16.mxu0 0
      %1077 = vmatpush1.bf16.msra.mxu0 0
      %1078 = vmatprep.subr.bf16.mxu0 0
      %1079 = vmatpush1.bf16.msra.mxu0 0
      %1080 = vmatprep.subr.bf16.mxu0 0
      %1081 = vmatpush1.bf16.msra.mxu0 0
      %1082 = vmatprep.subr.bf16.mxu0 0
      %1083 = vmatpush1.bf16.msra.mxu0 0
      %1084 = vmatprep.subr.bf16.mxu0 0
      %1085 = vmatpush1.bf16.msra.mxu0 0
      %1086 = vmatprep.subr.bf16.mxu0 0
      %1087 = vmatpush1.bf16.msra.mxu0 0
      %1088 = vmatprep.subr.bf16.mxu0 0
      %1089 = vmatpush1.bf16.msra.mxu0 0
      %1090 = vmatprep.subr.bf16.mxu0 0
      %1091 = vmatpush1.bf16.msra.mxu0 0
      %1092 = vmatprep.subr.bf16.mxu0 0
      %1093 = vmatpush1.bf16.msra.mxu0 0
      %1094 = vmatprep.subr.bf16.mxu0 0
      %1095 = vmatpush1.bf16.msra.mxu0 0
      %1096 = vmatprep.mubr.bf16.mxu0 0
      %1097 = vmatmul.mubr.bf16.gmra.mrb[0].mxu0 %v1011
      %v1098 = vpop.f32.mrb[0].mxu0
      %v1099 = vadd.f32 0.0, %v1098
      %v1100 = vpop.f32.mrb[0].mxu0
      %v1101 = vpop.f32.mrb[0].mxu0
      %v1102 = vadd.f32 0.0, %v1101
      %v1103 = vpop.f32.mrb[0].mxu0
      %1104 = vmatprep.mubr.bf16.mxu0 0
      %1105 = vmatmul.mubr.bf16.gmra.mrb[0].mxu0 %v1014
      %v1106 = vpop.f32.mrb[0].mxu0
      %v1107 = vadd.f32 0.0, %v1106
      %v1108 = vpop.f32.mrb[0].mxu0
      %v1109 = vpop.f32.mrb[0].mxu0
      %v1110 = vadd.f32 0.0, %v1109
      %v1111 = vpop.f32.mrb[0].mxu0
      %1112 = vmatprep.mubr.bf16.mxu0 0
      %1113 = vmatmul.mubr.bf16.gmra.mrb[0].mxu0 %v1017
      %v1114 = vpop.f32.mrb[0].mxu0
      %v1115 = vadd.f32 0.0, %v1114
      %v1116 = vpop.f32.mrb[0].mxu0
      %v1117 = vpop.f32.mrb[0].mxu0
      %v1118 = vadd.f32 0.0, %v1117
      %v1119 = vpop.f32.mrb[0].mxu0
      %1120 = vmatprep.mubr.bf16.mxu0 0
      %1121 = vmatmul.mubr.bf16.gmra.mrb[0].mxu0 %v1020
      %v1122 = vpop.f32.mrb[0].mxu0
      %v1123 = vadd.f32 0.0, %v1122
      %v1124 = vpop.f32.mrb[0].mxu0
      %v1125 = vpop.f32.mrb[0].mxu0
      %v1126 = vadd.f32 0.0, %v1125
      %v1127 = vpop.f32.mrb[0].mxu0
      %1128 = vmatprep.mubr.bf16.mxu0 0
      %1129 = vmatmul.mubr.bf16.gmra.mrb[0].mxu0 %v1023
      %v1130 = vpop.f32.mrb[0].mxu0
      %v1131 = vadd.f32 0.0, %v1130
      %v1132 = vpop.f32.mrb[0].mxu0
      %v1133 = vpop.f32.mrb[0].mxu0
      %v1134 = vadd.f32 0.0, %v1133
      %v1135 = vpop.f32.mrb[0].mxu0
      %1136 = vmatprep.mubr.bf16.mxu0 0
      %1137 = vmatmul.mubr.bf16.gmra.mrb[0].mxu0 %v1026
      %v1138 = vpop.f32.mrb[0].mxu0
      %v1139 = vadd.f32 0.0, %v1138
      %v1140 = vpop.f32.mrb[0].mxu0
      %v1141 = vpop.f32.mrb[0].mxu0
      %v1142 = vadd.f32 0.0, %v1141
      %v1143 = vpop.f32.mrb[0].mxu0
      %1144 = vmatprep.mubr.bf16.mxu0 0
      %1145 = vmatmul.mubr.bf16.gmra.mrb[0].mxu0 %v1029
      %v1146 = vpop.f32.mrb[0].mxu0
      %v1147 = vadd.f32 0.0, %v1146
      %v1148 = vpop.f32.mrb[0].mxu0
      %v1149 = vpop.f32.mrb[0].mxu0
      %v1150 = vadd.f32 0.0, %v1149
      %v1151 = vpop.f32.mrb[0].mxu0
      %1152 = vmatprep.mubr.bf16.mxu0 0
      %1153 = vmatmul.mubr.bf16.gmra.mrb[0].mxu0 %v1032
      %v1154 = vpop.f32.mrb[0].mxu0
      %v1155 = vadd.f32 0.0, %v1154
      %v1156 = vpop.f32.mrb[0].mxu0
      %v1157 = vpop.f32.mrb[0].mxu0
      %v1158 = vadd.f32 0.0, %v1157
      %v1159 = vpop.f32.mrb[0].mxu0
      %1160 = vmatprep.mubr.bf16.mxu0 0
      %1161 = vmatmul.mubr.bf16.gmra.mrb[0].mxu0 %v1035
      %v1162 = vpop.f32.mrb[0].mxu0
      %v1163 = vadd.f32 0.0, %v1162
      %v1164 = vpop.f32.mrb[0].mxu0
      %v1165 = vpop.f32.mrb[0].mxu0
      %v1166 = vadd.f32 0.0, %v1165
      %v1167 = vpop.f32.mrb[0].mxu0
      %1168 = vmatprep.mubr.bf16.mxu0 0
      %1169 = vmatmul.mubr.bf16.gmra.mrb[0].mxu0 %v1038
      %v1170 = vpop.f32.mrb[0].mxu0
      %v1171 = vadd.f32 0.0, %v1170
      %v1172 = vpop.f32.mrb[0].mxu0
      %v1173 = vpop.f32.mrb[0].mxu0
      %v1174 = vadd.f32 0.0, %v1173
      %v1175 = vpop.f32.mrb[0].mxu0
      %1176 = vmatprep.mubr.bf16.mxu0 0
      %1177 = vmatmul.mubr.bf16.gmra.mrb[0].mxu0 %v1041
      %v1178 = vpop.f32.mrb[0].mxu0
      %v1179 = vadd.f32 0.0, %v1178
      %v1180 = vpop.f32.mrb[0].mxu0
      %v1181 = vpop.f32.mrb[0].mxu0
      %v1182 = vadd.f32 0.0, %v1181
      %v1183 = vpop.f32.mrb[0].mxu0
      %1184 = vmatprep.mubr.bf16.mxu0 0
      %1185 = vmatmul.mubr.bf16.gmra.mrb[0].mxu0 %v1044
      %v1186 = vpop.f32.mrb[0].mxu0
      %v1187 = vadd.f32 0.0, %v1186
      %v1188 = vpop.f32.mrb[0].mxu0
      %v1189 = vpop.f32.mrb[0].mxu0
      %v1190 = vadd.f32 0.0, %v1189
      %v1191 = vpop.f32.mrb[0].mxu0
      %1192 = vmatprep.mubr.bf16.mxu0 0
      %1193 = vmatmul.mubr.bf16.gmra.mrb[0].mxu0 %v1047
      %v1194 = vpop.f32.mrb[0].mxu0
      %v1195 = vadd.f32 0.0, %v1194
      %v1196 = vpop.f32.mrb[0].mxu0
      %v1197 = vpop.f32.mrb[0].mxu0
      %v1198 = vadd.f32 0.0, %v1197
      %v1199 = vpop.f32.mrb[0].mxu0
      %1200 = vmatprep.mubr.bf16.mxu0 0
      %1201 = vmatmul.mubr.bf16.gmra.mrb[0].mxu0 %v1050
      %v1202 = vpop.f32.mrb[0].mxu0
      %v1203 = vadd.f32 0.0, %v1202
      %v1204 = vpop.f32.mrb[0].mxu0
      %v1205 = vpop.f32.mrb[0].mxu0
      %v1206 = vadd.f32 0.0, %v1205
      %v1207 = vpop.f32.mrb[0].mxu0
      %1208 = vmatprep.mubr.bf16.mxu0 0
      %1209 = vmatmul.mubr.bf16.gmra.mrb[0].mxu0 %v1053
      %v1210 = vpop.f32.mrb[0].mxu0
      %v1211 = vadd.f32 0.0, %v1210
      %v1212 = vpop.f32.mrb[0].mxu0
      %v1213 = vpop.f32.mrb[0].mxu0
      %v1214 = vadd.f32 0.0, %v1213
      %v1215 = vpop.f32.mrb[0].mxu0
      %1216 = vmatprep.mubr.bf16.mxu0 0
      %1217 = vmatmul.mubr.bf16.gmra.mrb[0].mxu0 %v1056
      %v1218 = vpop.f32.mrb[0].mxu0
      %v1219 = vadd.f32 0.0, %v1218
      %v1220 = vpop.f32.mrb[0].mxu0
      %v1221 = vpop.f32.mrb[0].mxu0
      %v1222 = vadd.f32 0.0, %v1221
      %v1223 = vpop.f32.mrb[0].mxu0
      %1224 = vmatprep.mubr.bf16.mxu0 0
      %1225 = vmatmul.mubr.bf16.gmra.mrb[0].mxu0 %v1059
      %v1226 = vpop.f32.mrb[0].mxu0
      %v1227 = vadd.f32 0.0, %v1226
      %v1228 = vpop.f32.mrb[0].mxu0
      %v1229 = vpop.f32.mrb[0].mxu0
      %v1230 = vadd.f32 0.0, %v1229
      %v1231 = vpop.f32.mrb[0].mxu0
      %1232 = vmatprep.mubr.bf16.mxu0 0
      %1233 = vmatmul.mubr.bf16.gmra.mrb[0].mxu0 %v1062
      %v1234 = vpop.f32.mrb[0].mxu0
      %v1235 = vadd.f32 0.0, %v1234
      %v1236 = vpop.f32.mrb[0].mxu0
      %v1237 = vpop.f32.mrb[0].mxu0
      %v1238 = vadd.f32 0.0, %v1237
      %v1239 = vpop.f32.mrb[0].mxu0
      %1240 = vdwg.mxu0
      %v1241 = vadd.f32 %v818, %v1099
      %v1242 = vadd.f32 %v821, %v1102
      %v1243 = vadd.f32 %v826, %v1107
      %v1244 = vadd.f32 %v829, %v1110
      %v1245 = vadd.f32 %v834, %v1115
      %v1246 = vadd.f32 %v837, %v1118
      %v1247 = vadd.f32 %v842, %v1123
      %v1248 = vadd.f32 %v845, %v1126
      %v1249 = vadd.f32 %v850, %v1131
      %v1250 = vadd.f32 %v853, %v1134
      %v1251 = vadd.f32 %v858, %v1139
      %v1252 = vadd.f32 %v861, %v1142
      %v1253 = vadd.f32 %v866, %v1147
      %v1254 = vadd.f32 %v869, %v1150
      %v1255 = vadd.f32 %v874, %v1155
      %v1256 = vadd.f32 %v877, %v1158
      %v1257 = vadd.f32 %v882, %v1163
      %v1258 = vadd.f32 %v885, %v1166
      %v1259 = vadd.f32 %v890, %v1171
      %v1260 = vadd.f32 %v893, %v1174
      %v1261 = vadd.f32 %v898, %v1179
      %v1262 = vadd.f32 %v901, %v1182
      %v1263 = vadd.f32 %v906, %v1187
      %v1264 = vadd.f32 %v909, %v1190
      %v1265 = vadd.f32 %v914, %v1195
      %v1266 = vadd.f32 %v917, %v1198
      %v1267 = vadd.f32 %v922, %v1203
      %v1268 = vadd.f32 %v925, %v1206
      %v1269 = vadd.f32 %v930, %v1211
      %v1270 = vadd.f32 %v933, %v1214
      %v1271 = vadd.f32 %v938, %v1219
      %v1272 = vadd.f32 %v941, %v1222
      %v1273 = vadd.f32 %v946, %v1227
      %v1274 = vadd.f32 %v949, %v1230
      %v1275 = vadd.f32 %v954, %v1235
      %v1276 = vadd.f32 %v957, %v1238
      %v1279 = vunpack.c.l.b16 %v209
      %v1280 = vunpack.c.l.b16 %v210
      %v1281 = vpack.c.b16 %v1279, %v322
      %v1282 = vpack.c.b16 %v1280, %v1280
      %v1283 = vrot.slane %v1281, 1
      %v1284 = vsel %vm960, %v994, %v1283
      %v1285 = vrot.slane %v1282, 1
      %v1286 = vsel %vm960, %v1283, %v1285
      %v1291 = vunpack.c.l.b16 %v225
      %v1292 = vunpack.c.l.b16 %v226
      %v1293 = vunpack.c.l.b16 %v227
      %v1294 = vunpack.c.l.b16 %v228
      %v1295 = vpack.c.b16 %v1292, %v1291
      %v1296 = vpack.c.b16 %v1294, %v1293
      %v1300 = vsel %vm503, %v1284, 0
      %v1303 = vsel %vm503, %v1286, 0
      %1305 = vmatprep.subr.bf16.mxu0 0
      %1306 = vmatpush1.bf16.msra.mxu0 %v1295
      %1307 = vmatprep.subr.bf16.mxu0 0
      %1308 = vmatpush1.bf16.msra.mxu0 %v1296
      %1309 = vmatprep.subr.bf16.mxu0 0
      %1310 = vmatpush1.bf16.msra.mxu0 0
      %1311 = vmatprep.subr.bf16.mxu0 0
      %1312 = vmatpush1.bf16.msra.mxu0 0
      %1313 = vmatprep.subr.bf16.mxu0 0
      %1314 = vmatpush1.bf16.msra.mxu0 0
      %1315 = vmatprep.subr.bf16.mxu0 0
      %1316 = vmatpush1.bf16.msra.mxu0 0
      %1317 = vmatprep.subr.bf16.mxu0 0
      %1318 = vmatpush1.bf16.msra.mxu0 0
      %1319 = vmatprep.subr.bf16.mxu0 0
      %1320 = vmatpush1.bf16.msra.mxu0 0
      %1321 = vmatprep.subr.bf16.mxu0 0
      %1322 = vmatpush1.bf16.msra.mxu0 0
      %1323 = vmatprep.subr.bf16.mxu0 0
      %1324 = vmatpush1.bf16.msra.mxu0 0
      %1325 = vmatprep.subr.bf16.mxu0 0
      %1326 = vmatpush1.bf16.msra.mxu0 0
      %1327 = vmatprep.subr.bf16.mxu0 0
      %1328 = vmatpush1.bf16.msra.mxu0 0
      %1329 = vmatprep.subr.bf16.mxu0 0
      %1330 = vmatpush1.bf16.msra.mxu0 0
      %1331 = vmatprep.subr.bf16.mxu0 0
      %1332 = vmatpush1.bf16.msra.mxu0 0
      %1333 = vmatprep.subr.bf16.mxu0 0
      %1334 = vmatpush1.bf16.msra.mxu0 0
      %1335 = vmatprep.subr.bf16.mxu0 0
      %1336 = vmatpush1.bf16.msra.mxu0 0
      %1337 = vmatprep.mubr.bf16.mxu0 0
      %1338 = vmatmul.mubr.bf16.gmra.mrb[0].mxu0 %v1014
      %v1339 = vpop.f32.mrb[0].mxu0
      %v1340 = vadd.f32 0.0, %v1339
      %v1341 = vpop.f32.mrb[0].mxu0
      %v1342 = vpop.f32.mrb[0].mxu0
      %v1343 = vadd.f32 0.0, %v1342
      %v1344 = vpop.f32.mrb[0].mxu0
      %1345 = vmatprep.mubr.bf16.mxu0 0
      %1346 = vmatmul.mubr.bf16.gmra.mrb[0].mxu0 %v1017
      %v1347 = vpop.f32.mrb[0].mxu0
      %v1348 = vadd.f32 0.0, %v1347
      %v1349 = vpop.f32.mrb[0].mxu0
      %v1350 = vpop.f32.mrb[0].mxu0
      %v1351 = vadd.f32 0.0, %v1350
      %v1352 = vpop.f32.mrb[0].mxu0
      %1353 = vmatprep.mubr.bf16.mxu0 0
      %1354 = vmatmul.mubr.bf16.gmra.mrb[0].mxu0 %v1020
      %v1355 = vpop.f32.mrb[0].mxu0
      %v1356 = vadd.f32 0.0, %v1355
      %v1357 = vpop.f32.mrb[0].mxu0
      %v1358 = vpop.f32.mrb[0].mxu0
      %v1359 = vadd.f32 0.0, %v1358
      %v1360 = vpop.f32.mrb[0].mxu0
      %1361 = vmatprep.mubr.bf16.mxu0 0
      %1362 = vmatmul.mubr.bf16.gmra.mrb[0].mxu0 %v1023
      %v1363 = vpop.f32.mrb[0].mxu0
      %v1364 = vadd.f32 0.0, %v1363
      %v1365 = vpop.f32.mrb[0].mxu0
      %v1366 = vpop.f32.mrb[0].mxu0
      %v1367 = vadd.f32 0.0, %v1366
      %v1368 = vpop.f32.mrb[0].mxu0
      %1369 = vmatprep.mubr.bf16.mxu0 0
      %1370 = vmatmul.mubr.bf16.gmra.mrb[0].mxu0 %v1026
      %v1371 = vpop.f32.mrb[0].mxu0
      %v1372 = vadd.f32 0.0, %v1371
      %v1373 = vpop.f32.mrb[0].mxu0
      %v1374 = vpop.f32.mrb[0].mxu0
      %v1375 = vadd.f32 0.0, %v1374
      %v1376 = vpop.f32.mrb[0].mxu0
      %1377 = vmatprep.mubr.bf16.mxu0 0
      %1378 = vmatmul.mubr.bf16.gmra.mrb[0].mxu0 %v1029
      %v1379 = vpop.f32.mrb[0].mxu0
      %v1380 = vadd.f32 0.0, %v1379
      %v1381 = vpop.f32.mrb[0].mxu0
      %v1382 = vpop.f32.mrb[0].mxu0
      %v1383 = vadd.f32 0.0, %v1382
      %v1384 = vpop.f32.mrb[0].mxu0
      %1385 = vmatprep.mubr.bf16.mxu0 0
      %1386 = vmatmul.mubr.bf16.gmra.mrb[0].mxu0 %v1032
      %v1387 = vpop.f32.mrb[0].mxu0
      %v1388 = vadd.f32 0.0, %v1387
      %v1389 = vpop.f32.mrb[0].mxu0
      %v1390 = vpop.f32.mrb[0].mxu0
      %v1391 = vadd.f32 0.0, %v1390
      %v1392 = vpop.f32.mrb[0].mxu0
      %1393 = vmatprep.mubr.bf16.mxu0 0
      %1394 = vmatmul.mubr.bf16.gmra.mrb[0].mxu0 %v1035
      %v1395 = vpop.f32.mrb[0].mxu0
      %v1396 = vadd.f32 0.0, %v1395
      %v1397 = vpop.f32.mrb[0].mxu0
      %v1398 = vpop.f32.mrb[0].mxu0
      %v1399 = vadd.f32 0.0, %v1398
      %v1400 = vpop.f32.mrb[0].mxu0
      %1401 = vmatprep.mubr.bf16.mxu0 0
      %1402 = vmatmul.mubr.bf16.gmra.mrb[0].mxu0 %v1038
      %v1403 = vpop.f32.mrb[0].mxu0
      %v1404 = vadd.f32 0.0, %v1403
      %v1405 = vpop.f32.mrb[0].mxu0
      %v1406 = vpop.f32.mrb[0].mxu0
      %v1407 = vadd.f32 0.0, %v1406
      %v1408 = vpop.f32.mrb[0].mxu0
      %1409 = vmatprep.mubr.bf16.mxu0 0
      %1410 = vmatmul.mubr.bf16.gmra.mrb[0].mxu0 %v1041
      %v1411 = vpop.f32.mrb[0].mxu0
      %v1412 = vadd.f32 0.0, %v1411
      %v1413 = vpop.f32.mrb[0].mxu0
      %v1414 = vpop.f32.mrb[0].mxu0
      %v1415 = vadd.f32 0.0, %v1414
      %v1416 = vpop.f32.mrb[0].mxu0
      %1417 = vmatprep.mubr.bf16.mxu0 0
      %1418 = vmatmul.mubr.bf16.gmra.mrb[0].mxu0 %v1044
      %v1419 = vpop.f32.mrb[0].mxu0
      %v1420 = vadd.f32 0.0, %v1419
      %v1421 = vpop.f32.mrb[0].mxu0
      %v1422 = vpop.f32.mrb[0].mxu0
      %v1423 = vadd.f32 0.0, %v1422
      %v1424 = vpop.f32.mrb[0].mxu0
      %1425 = vmatprep.mubr.bf16.mxu0 0
      %1426 = vmatmul.mubr.bf16.gmra.mrb[0].mxu0 %v1047
      %v1427 = vpop.f32.mrb[0].mxu0
      %v1428 = vadd.f32 0.0, %v1427
      %v1429 = vpop.f32.mrb[0].mxu0
      %v1430 = vpop.f32.mrb[0].mxu0
      %v1431 = vadd.f32 0.0, %v1430
      %v1432 = vpop.f32.mrb[0].mxu0
      %1433 = vmatprep.mubr.bf16.mxu0 0
      %1434 = vmatmul.mubr.bf16.gmra.mrb[0].mxu0 %v1050
      %v1435 = vpop.f32.mrb[0].mxu0
      %v1436 = vadd.f32 0.0, %v1435
      %v1437 = vpop.f32.mrb[0].mxu0
      %v1438 = vpop.f32.mrb[0].mxu0
      %v1439 = vadd.f32 0.0, %v1438
      %v1440 = vpop.f32.mrb[0].mxu0
      %1441 = vmatprep.mubr.bf16.mxu0 0
      %1442 = vmatmul.mubr.bf16.gmra.mrb[0].mxu0 %v1053
      %v1443 = vpop.f32.mrb[0].mxu0
      %v1444 = vadd.f32 0.0, %v1443
      %v1445 = vpop.f32.mrb[0].mxu0
      %v1446 = vpop.f32.mrb[0].mxu0
      %v1447 = vadd.f32 0.0, %v1446
      %v1448 = vpop.f32.mrb[0].mxu0
      %1449 = vmatprep.mubr.bf16.mxu0 0
      %1450 = vmatmul.mubr.bf16.gmra.mrb[0].mxu0 %v1056
      %v1451 = vpop.f32.mrb[0].mxu0
      %v1452 = vadd.f32 0.0, %v1451
      %v1453 = vpop.f32.mrb[0].mxu0
      %v1454 = vpop.f32.mrb[0].mxu0
      %v1455 = vadd.f32 0.0, %v1454
      %v1456 = vpop.f32.mrb[0].mxu0
      %1457 = vmatprep.mubr.bf16.mxu0 0
      %1458 = vmatmul.mubr.bf16.gmra.mrb[0].mxu0 %v1059
      %v1459 = vpop.f32.mrb[0].mxu0
      %v1460 = vadd.f32 0.0, %v1459
      %v1461 = vpop.f32.mrb[0].mxu0
      %v1462 = vpop.f32.mrb[0].mxu0
      %v1463 = vadd.f32 0.0, %v1462
      %v1464 = vpop.f32.mrb[0].mxu0
      %1465 = vmatprep.mubr.bf16.mxu0 0
      %1466 = vmatmul.mubr.bf16.gmra.mrb[0].mxu0 %v1300
      %v1467 = vpop.f32.mrb[0].mxu0
      %v1468 = vadd.f32 0.0, %v1467
      %v1469 = vpop.f32.mrb[0].mxu0
      %v1470 = vpop.f32.mrb[0].mxu0
      %v1471 = vadd.f32 0.0, %v1470
      %v1472 = vpop.f32.mrb[0].mxu0
      %1473 = vmatprep.mubr.bf16.mxu0 0
      %1474 = vmatmul.mubr.bf16.gmra.mrb[0].mxu0 %v1303
      %v1475 = vpop.f32.mrb[0].mxu0
      %v1476 = vadd.f32 0.0, %v1475
      %v1477 = vpop.f32.mrb[0].mxu0
      %v1478 = vpop.f32.mrb[0].mxu0
      %v1479 = vadd.f32 0.0, %v1478
      %v1480 = vpop.f32.mrb[0].mxu0
      %1481 = vdwg.mxu0
      %v1482 = vadd.f32 %v1241, %v1340
      %v1483 = vadd.f32 %v1242, %v1343
      %v1484 = vadd.f32 %v1243, %v1348
      %v1485 = vadd.f32 %v1244, %v1351
      %v1486 = vadd.f32 %v1245, %v1356
      %v1487 = vadd.f32 %v1246, %v1359
      %v1488 = vadd.f32 %v1247, %v1364
      %v1489 = vadd.f32 %v1248, %v1367
      %v1490 = vadd.f32 %v1249, %v1372
      %v1491 = vadd.f32 %v1250, %v1375
      %v1492 = vadd.f32 %v1251, %v1380
      %v1493 = vadd.f32 %v1252, %v1383
      %v1494 = vadd.f32 %v1253, %v1388
      %v1495 = vadd.f32 %v1254, %v1391
      %v1496 = vadd.f32 %v1255, %v1396
      %v1497 = vadd.f32 %v1256, %v1399
      %v1498 = vadd.f32 %v1257, %v1404
      %v1499 = vadd.f32 %v1258, %v1407
      %v1500 = vadd.f32 %v1259, %v1412
      %v1501 = vadd.f32 %v1260, %v1415
      %v1502 = vadd.f32 %v1261, %v1420
      %v1503 = vadd.f32 %v1262, %v1423
      %v1504 = vadd.f32 %v1263, %v1428
      %v1505 = vadd.f32 %v1264, %v1431
      %v1506 = vadd.f32 %v1265, %v1436
      %v1507 = vadd.f32 %v1266, %v1439
      %v1508 = vadd.f32 %v1267, %v1444
      %v1509 = vadd.f32 %v1268, %v1447
      %v1510 = vadd.f32 %v1269, %v1452
      %v1511 = vadd.f32 %v1270, %v1455
      %v1512 = vadd.f32 %v1271, %v1460
      %v1513 = vadd.f32 %v1272, %v1463
      %v1514 = vadd.f32 %v1273, %v1468
      %v1515 = vadd.f32 %v1274, %v1471
      %v1516 = vadd.f32 %v1275, %v1476
      %v1517 = vadd.f32 %v1276, %v1479
      %vm1518 = vsmask.f32 6400
      %v1519 = vrot.slane %v355, 1
      %v1520 = vrot.slane %v351, 2
      %v1521 = vor.u32 %v1519, %v1520
      %v1522 = vrot.slane %v363, 1
      %v1523 = vrot.slane %v359, 2
      %v1524 = vor.u32 %v1522, %v1523
      %v1525 = vsel %vm1518, %v1521, %v1524
      %v1526 = vrot.slane %v371, 1
      %v1527 = vrot.slane %v367, 2
      %v1528 = vor.u32 %v1526, %v1527
      %v1529 = vsel %vm1518, %v1524, %v1528
      %v1530 = vrot.slane %v379, 1
      %v1531 = vrot.slane %v375, 2
      %v1532 = vor.u32 %v1530, %v1531
      %v1533 = vsel %vm1518, %v1528, %v1532
      %v1534 = vrot.slane %v387, 1
      %v1535 = vrot.slane %v383, 2
      %v1536 = vor.u32 %v1534, %v1535
      %v1537 = vsel %vm1518, %v1532, %v1536
      %v1538 = vrot.slane %v395, 1
      %v1539 = vrot.slane %v391, 2
      %v1540 = vor.u32 %v1538, %v1539
      %v1541 = vsel %vm1518, %v1536, %v1540
      %v1542 = vrot.slane %v403, 1
      %v1543 = vrot.slane %v399, 2
      %v1544 = vor.u32 %v1542, %v1543
      %v1545 = vsel %vm1518, %v1540, %v1544
      %v1546 = vrot.slane %v411, 1
      %v1547 = vrot.slane %v407, 2
      %v1548 = vor.u32 %v1546, %v1547
      %v1549 = vsel %vm1518, %v1544, %v1548
      %v1550 = vrot.slane %v419, 1
      %v1551 = vrot.slane %v415, 2
      %v1552 = vor.u32 %v1550, %v1551
      %v1553 = vsel %vm1518, %v1548, %v1552
      %v1554 = vrot.slane %v427, 1
      %v1555 = vrot.slane %v423, 2
      %v1556 = vor.u32 %v1554, %v1555
      %v1557 = vsel %vm1518, %v1552, %v1556
      %v1558 = vrot.slane %v435, 1
      %v1559 = vrot.slane %v431, 2
      %v1560 = vor.u32 %v1558, %v1559
      %v1561 = vsel %vm1518, %v1556, %v1560
      %v1562 = vrot.slane %v443, 1
      %v1563 = vrot.slane %v439, 2
      %v1564 = vor.u32 %v1562, %v1563
      %v1565 = vsel %vm1518, %v1560, %v1564
      %v1566 = vrot.slane %v451, 1
      %v1567 = vrot.slane %v447, 2
      %v1568 = vor.u32 %v1566, %v1567
      %v1569 = vsel %vm1518, %v1564, %v1568
      %v1570 = vrot.slane %v459, 1
      %v1571 = vrot.slane %v455, 2
      %v1572 = vor.u32 %v1570, %v1571
      %v1573 = vsel %vm1518, %v1568, %v1572
      %v1574 = vrot.slane %v467, 1
      %v1575 = vrot.slane %v463, 2
      %v1576 = vor.u32 %v1574, %v1575
      %v1577 = vsel %vm1518, %v1572, %v1576
      %v1578 = vrot.slane %v475, 1
      %v1579 = vrot.slane %v471, 2
      %v1580 = vor.u32 %v1578, %v1579
      %v1581 = vsel %vm1518, %v1576, %v1580
      %v1582 = vrot.slane %v483, 1
      %v1583 = vrot.slane %v479, 2
      %v1584 = vor.u32 %v1582, %v1583
      %v1585 = vsel %vm1518, %v1580, %v1584
      %v1587 = vshrl.u32 %v1281, 16
      %v1589 = vrot.slane %v1587, 1
      %v1590 = vshll.u32 %v1281, 16
      %v1592 = vrot.slane %v1590, 2
      %v1593 = vor.u32 %v1589, %v1592
      %v1594 = vsel %vm1518, %v1584, %v1593
      %v1596 = vshrl.u32 %v1282, 16
      %v1598 = vrot.slane %v1596, 1
      %v1599 = vshll.u32 %v1282, 16
      %v1601 = vrot.slane %v1599, 2
      %v1602 = vor.u32 %v1598, %v1601
      %v1603 = vsel %vm1518, %v1593, %v1602
      %v1608 = vunpack.c.l.b16 %v229
      %v1609 = vunpack.c.l.b16 %v230
      %v1610 = vunpack.c.l.b16 %v231
      %v1611 = vunpack.c.l.b16 %v232
      %v1612 = vpack.c.b16 %v1609, %v1608
      %v1613 = vpack.c.b16 %v1611, %v1610
      %v1617 = vsel %vm503, %v1525, 0
      %v1620 = vsel %vm503, %v1529, 0
      %v1623 = vsel %vm503, %v1533, 0
      %v1626 = vsel %vm503, %v1537, 0
      %v1629 = vsel %vm503, %v1541, 0
      %v1632 = vsel %vm503, %v1545, 0
      %v1635 = vsel %vm503, %v1549, 0
      %v1638 = vsel %vm503, %v1553, 0
      %v1641 = vsel %vm503, %v1557, 0
      %v1644 = vsel %vm503, %v1561, 0
      %v1647 = vsel %vm503, %v1565, 0
      %v1650 = vsel %vm503, %v1569, 0
      %v1653 = vsel %vm503, %v1573, 0
      %v1656 = vsel %vm503, %v1577, 0
      %v1659 = vsel %vm503, %v1581, 0
      %v1662 = vsel %vm503, %v1585, 0
      %v1665 = vsel %vm503, %v1594, 0
      %v1668 = vsel %vm503, %v1603, 0
      %1670 = vmatprep.subr.bf16.mxu0 0
      %1671 = vmatpush1.bf16.msra.mxu0 %v1612
      %1672 = vmatprep.subr.bf16.mxu0 0
      %1673 = vmatpush1.bf16.msra.mxu0 %v1613
      %1674 = vmatprep.subr.bf16.mxu0 0
      %1675 = vmatpush1.bf16.msra.mxu0 0
      %1676 = vmatprep.subr.bf16.mxu0 0
      %1677 = vmatpush1.bf16.msra.mxu0 0
      %1678 = vmatprep.subr.bf16.mxu0 0
      %1679 = vmatpush1.bf16.msra.mxu0 0
      %1680 = vmatprep.subr.bf16.mxu0 0
      %1681 = vmatpush1.bf16.msra.mxu0 0
      %1682 = vmatprep.subr.bf16.mxu0 0
      %1683 = vmatpush1.bf16.msra.mxu0 0
      %1684 = vmatprep.subr.bf16.mxu0 0
      %1685 = vmatpush1.bf16.msra.mxu0 0
      %1686 = vmatprep.subr.bf16.mxu0 0
      %1687 = vmatpush1.bf16.msra.mxu0 0
      %1688 = vmatprep.subr.bf16.mxu0 0
      %1689 = vmatpush1.bf16.msra.mxu0 0
      %1690 = vmatprep.subr.bf16.mxu0 0
      %1691 = vmatpush1.bf16.msra.mxu0 0
      %1692 = vmatprep.subr.bf16.mxu0 0
      %1693 = vmatpush1.bf16.msra.mxu0 0
      %1694 = vmatprep.subr.bf16.mxu0 0
      %1695 = vmatpush1.bf16.msra.mxu0 0
      %1696 = vmatprep.subr.bf16.mxu0 0
      %1697 = vmatpush1.bf16.msra.mxu0 0
      %1698 = vmatprep.subr.bf16.mxu0 0
      %1699 = vmatpush1.bf16.msra.mxu0 0
      %1700 = vmatprep.subr.bf16.mxu0 0
      %1701 = vmatpush1.bf16.msra.mxu0 0
      %1702 = vmatprep.mubr.bf16.mxu0 0
      %1703 = vmatmul.mubr.bf16.gmra.mrb[0].mxu0 %v1617
      %v1704 = vpop.f32.mrb[0].mxu0
      %v1705 = vadd.f32 0.0, %v1704
      %v1706 = vpop.f32.mrb[0].mxu0
      %v1707 = vpop.f32.mrb[0].mxu0
      %v1708 = vadd.f32 0.0, %v1707
      %v1709 = vpop.f32.mrb[0].mxu0
      %1710 = vmatprep.mubr.bf16.mxu0 0
      %1711 = vmatmul.mubr.bf16.gmra.mrb[0].mxu0 %v1620
      %v1712 = vpop.f32.mrb[0].mxu0
      %v1713 = vadd.f32 0.0, %v1712
      %v1714 = vpop.f32.mrb[0].mxu0
      %v1715 = vpop.f32.mrb[0].mxu0
      %v1716 = vadd.f32 0.0, %v1715
      %v1717 = vpop.f32.mrb[0].mxu0
      %1718 = vmatprep.mubr.bf16.mxu0 0
      %1719 = vmatmul.mubr.bf16.gmra.mrb[0].mxu0 %v1623
      %v1720 = vpop.f32.mrb[0].mxu0
      %v1721 = vadd.f32 0.0, %v1720
      %v1722 = vpop.f32.mrb[0].mxu0
      %v1723 = vpop.f32.mrb[0].mxu0
      %v1724 = vadd.f32 0.0, %v1723
      %v1725 = vpop.f32.mrb[0].mxu0
      %1726 = vmatprep.mubr.bf16.mxu0 0
      %1727 = vmatmul.mubr.bf16.gmra.mrb[0].mxu0 %v1626
      %v1728 = vpop.f32.mrb[0].mxu0
      %v1729 = vadd.f32 0.0, %v1728
      %v1730 = vpop.f32.mrb[0].mxu0
      %v1731 = vpop.f32.mrb[0].mxu0
      %v1732 = vadd.f32 0.0, %v1731
      %v1733 = vpop.f32.mrb[0].mxu0
      %1734 = vmatprep.mubr.bf16.mxu0 0
      %1735 = vmatmul.mubr.bf16.gmra.mrb[0].mxu0 %v1629
      %v1736 = vpop.f32.mrb[0].mxu0
      %v1737 = vadd.f32 0.0, %v1736
      %v1738 = vpop.f32.mrb[0].mxu0
      %v1739 = vpop.f32.mrb[0].mxu0
      %v1740 = vadd.f32 0.0, %v1739
      %v1741 = vpop.f32.mrb[0].mxu0
      %1742 = vmatprep.mubr.bf16.mxu0 0
      %1743 = vmatmul.mubr.bf16.gmra.mrb[0].mxu0 %v1632
      %v1744 = vpop.f32.mrb[0].mxu0
      %v1745 = vadd.f32 0.0, %v1744
      %v1746 = vpop.f32.mrb[0].mxu0
      %v1747 = vpop.f32.mrb[0].mxu0
      %v1748 = vadd.f32 0.0, %v1747
      %v1749 = vpop.f32.mrb[0].mxu0
      %1750 = vmatprep.mubr.bf16.mxu0 0
      %1751 = vmatmul.mubr.bf16.gmra.mrb[0].mxu0 %v1635
      %v1752 = vpop.f32.mrb[0].mxu0
      %v1753 = vadd.f32 0.0, %v1752
      %v1754 = vpop.f32.mrb[0].mxu0
      %v1755 = vpop.f32.mrb[0].mxu0
      %v1756 = vadd.f32 0.0, %v1755
      %v1757 = vpop.f32.mrb[0].mxu0
      %1758 = vmatprep.mubr.bf16.mxu0 0
      %1759 = vmatmul.mubr.bf16.gmra.mrb[0].mxu0 %v1638
      %v1760 = vpop.f32.mrb[0].mxu0
      %v1761 = vadd.f32 0.0, %v1760
      %v1762 = vpop.f32.mrb[0].mxu0
      %v1763 = vpop.f32.mrb[0].mxu0
      %v1764 = vadd.f32 0.0, %v1763
      %v1765 = vpop.f32.mrb[0].mxu0
      %1766 = vmatprep.mubr.bf16.mxu0 0
      %1767 = vmatmul.mubr.bf16.gmra.mrb[0].mxu0 %v1641
      %v1768 = vpop.f32.mrb[0].mxu0
      %v1769 = vadd.f32 0.0, %v1768
      %v1770 = vpop.f32.mrb[0].mxu0
      %v1771 = vpop.f32.mrb[0].mxu0
      %v1772 = vadd.f32 0.0, %v1771
      %v1773 = vpop.f32.mrb[0].mxu0
      %1774 = vmatprep.mubr.bf16.mxu0 0
      %1775 = vmatmul.mubr.bf16.gmra.mrb[0].mxu0 %v1644
      %v1776 = vpop.f32.mrb[0].mxu0
      %v1777 = vadd.f32 0.0, %v1776
      %v1778 = vpop.f32.mrb[0].mxu0
      %v1779 = vpop.f32.mrb[0].mxu0
      %v1780 = vadd.f32 0.0, %v1779
      %v1781 = vpop.f32.mrb[0].mxu0
      %1782 = vmatprep.mubr.bf16.mxu0 0
      %1783 = vmatmul.mubr.bf16.gmra.mrb[0].mxu0 %v1647
      %v1784 = vpop.f32.mrb[0].mxu0
      %v1785 = vadd.f32 0.0, %v1784
      %v1786 = vpop.f32.mrb[0].mxu0
      %v1787 = vpop.f32.mrb[0].mxu0
      %v1788 = vadd.f32 0.0, %v1787
      %v1789 = vpop.f32.mrb[0].mxu0
      %1790 = vmatprep.mubr.bf16.mxu0 0
      %1791 = vmatmul.mubr.bf16.gmra.mrb[0].mxu0 %v1650
      %v1792 = vpop.f32.mrb[0].mxu0
      %v1793 = vadd.f32 0.0, %v1792
      %v1794 = vpop.f32.mrb[0].mxu0
      %v1795 = vpop.f32.mrb[0].mxu0
      %v1796 = vadd.f32 0.0, %v1795
      %v1797 = vpop.f32.mrb[0].mxu0
      %1798 = vmatprep.mubr.bf16.mxu0 0
      %1799 = vmatmul.mubr.bf16.gmra.mrb[0].mxu0 %v1653
      %v1800 = vpop.f32.mrb[0].mxu0
      %v1801 = vadd.f32 0.0, %v1800
      %v1802 = vpop.f32.mrb[0].mxu0
      %v1803 = vpop.f32.mrb[0].mxu0
      %v1804 = vadd.f32 0.0, %v1803
      %v1805 = vpop.f32.mrb[0].mxu0
      %1806 = vmatprep.mubr.bf16.mxu0 0
      %1807 = vmatmul.mubr.bf16.gmra.mrb[0].mxu0 %v1656
      %v1808 = vpop.f32.mrb[0].mxu0
      %v1809 = vadd.f32 0.0, %v1808
      %v1810 = vpop.f32.mrb[0].mxu0
      %v1811 = vpop.f32.mrb[0].mxu0
      %v1812 = vadd.f32 0.0, %v1811
      %v1813 = vpop.f32.mrb[0].mxu0
      %1814 = vmatprep.mubr.bf16.mxu0 0
      %1815 = vmatmul.mubr.bf16.gmra.mrb[0].mxu0 %v1659
      %v1816 = vpop.f32.mrb[0].mxu0
      %v1817 = vadd.f32 0.0, %v1816
      %v1818 = vpop.f32.mrb[0].mxu0
      %v1819 = vpop.f32.mrb[0].mxu0
      %v1820 = vadd.f32 0.0, %v1819
      %v1821 = vpop.f32.mrb[0].mxu0
      %1822 = vmatprep.mubr.bf16.mxu0 0
      %1823 = vmatmul.mubr.bf16.gmra.mrb[0].mxu0 %v1662
      %v1824 = vpop.f32.mrb[0].mxu0
      %v1825 = vadd.f32 0.0, %v1824
      %v1826 = vpop.f32.mrb[0].mxu0
      %v1827 = vpop.f32.mrb[0].mxu0
      %v1828 = vadd.f32 0.0, %v1827
      %v1829 = vpop.f32.mrb[0].mxu0
      %1830 = vmatprep.mubr.bf16.mxu0 0
      %1831 = vmatmul.mubr.bf16.gmra.mrb[0].mxu0 %v1665
      %v1832 = vpop.f32.mrb[0].mxu0
      %v1833 = vadd.f32 0.0, %v1832
      %v1834 = vpop.f32.mrb[0].mxu0
      %v1835 = vpop.f32.mrb[0].mxu0
      %v1836 = vadd.f32 0.0, %v1835
      %v1837 = vpop.f32.mrb[0].mxu0
      %1838 = vmatprep.mubr.bf16.mxu0 0
      %1839 = vmatmul.mubr.bf16.gmra.mrb[0].mxu0 %v1668
      %v1840 = vpop.f32.mrb[0].mxu0
      %v1841 = vadd.f32 0.0, %v1840
      %v1842 = vpop.f32.mrb[0].mxu0
      %v1843 = vpop.f32.mrb[0].mxu0
      %v1844 = vadd.f32 0.0, %v1843
      %v1845 = vpop.f32.mrb[0].mxu0
      %1846 = vdwg.mxu0
      %v1847 = vadd.f32 %v1482, %v1705
      %v1848 = vadd.f32 %v1483, %v1708
      %v1849 = vadd.f32 %v1484, %v1713
      %v1850 = vadd.f32 %v1485, %v1716
      %v1851 = vadd.f32 %v1486, %v1721
      %v1852 = vadd.f32 %v1487, %v1724
      %v1853 = vadd.f32 %v1488, %v1729
      %v1854 = vadd.f32 %v1489, %v1732
      %v1855 = vadd.f32 %v1490, %v1737
      %v1856 = vadd.f32 %v1491, %v1740
      %v1857 = vadd.f32 %v1492, %v1745
      %v1858 = vadd.f32 %v1493, %v1748
      %v1859 = vadd.f32 %v1494, %v1753
      %v1860 = vadd.f32 %v1495, %v1756
      %v1861 = vadd.f32 %v1496, %v1761
      %v1862 = vadd.f32 %v1497, %v1764
      %v1863 = vadd.f32 %v1498, %v1769
      %v1864 = vadd.f32 %v1499, %v1772
      %v1865 = vadd.f32 %v1500, %v1777
      %v1866 = vadd.f32 %v1501, %v1780
      %v1867 = vadd.f32 %v1502, %v1785
      %v1868 = vadd.f32 %v1503, %v1788
      %v1869 = vadd.f32 %v1504, %v1793
      %v1870 = vadd.f32 %v1505, %v1796
      %v1871 = vadd.f32 %v1506, %v1801
      %v1872 = vadd.f32 %v1507, %v1804
      %v1873 = vadd.f32 %v1508, %v1809
      %v1874 = vadd.f32 %v1509, %v1812
      %v1875 = vadd.f32 %v1510, %v1817
      %v1876 = vadd.f32 %v1511, %v1820
      %v1877 = vadd.f32 %v1512, %v1825
      %v1878 = vadd.f32 %v1513, %v1828
      %v1879 = vadd.f32 %v1514, %v1833
      %v1880 = vadd.f32 %v1515, %v1836
      %v1881 = vadd.f32 %v1516, %v1841
      %v1882 = vadd.f32 %v1517, %v1844
      %vm1883 = vcmask 1045504
      %v1884 = vrot.slane %v324, 2
      %v1885 = vrot.slane %v325, 2
      %v1886 = vsel %vm1883, %v1884, %v1885
      %v1887 = vrot.slane %v326, 2
      %v1888 = vsel %vm1883, %v1885, %v1887
      %v1889 = vrot.slane %v327, 2
      %v1890 = vsel %vm1883, %v1887, %v1889
      %v1891 = vrot.slane %v328, 2
      %v1892 = vsel %vm1883, %v1889, %v1891
      %v1893 = vrot.slane %v329, 2
      %v1894 = vsel %vm1883, %v1891, %v1893
      %v1895 = vrot.slane %v330, 2
      %v1896 = vsel %vm1883, %v1893, %v1895
      %v1897 = vrot.slane %v331, 2
      %v1898 = vsel %vm1883, %v1895, %v1897
      %v1899 = vrot.slane %v332, 2
      %v1900 = vsel %vm1883, %v1897, %v1899
      %v1901 = vrot.slane %v333, 2
      %v1902 = vsel %vm1883, %v1899, %v1901
      %v1903 = vrot.slane %v334, 2
      %v1904 = vsel %vm1883, %v1901, %v1903
      %v1905 = vrot.slane %v335, 2
      %v1906 = vsel %vm1883, %v1903, %v1905
      %v1907 = vrot.slane %v336, 2
      %v1908 = vsel %vm1883, %v1905, %v1907
      %v1909 = vrot.slane %v337, 2
      %v1910 = vsel %vm1883, %v1907, %v1909
      %v1911 = vrot.slane %v338, 2
      %v1912 = vsel %vm1883, %v1909, %v1911
      %v1913 = vrot.slane %v339, 2
      %v1914 = vsel %vm1883, %v1911, %v1913
      %v1915 = vrot.slane %v340, 2
      %v1916 = vsel %vm1883, %v1913, %v1915
      %v1917 = vrot.slane %v1281, 2
      %v1918 = vsel %vm1883, %v1915, %v1917
      %v1919 = vrot.slane %v1282, 2
      %v1920 = vsel %vm1883, %v1917, %v1919
      %v1925 = vunpack.c.l.b16 %v233
      %v1926 = vunpack.c.l.b16 %v234
      %v1927 = vunpack.c.l.b16 %v235
      %v1928 = vunpack.c.l.b16 %v236
      %v1929 = vpack.c.b16 %v1926, %v1925
      %v1930 = vpack.c.b16 %v1928, %v1927
      %v1934 = vsel %vm503, %v1886, 0
      %v1937 = vsel %vm503, %v1888, 0
      %v1940 = vsel %vm503, %v1890, 0
      %v1943 = vsel %vm503, %v1892, 0
      %v1946 = vsel %vm503, %v1894, 0
      %v1949 = vsel %vm503, %v1896, 0
      %v1952 = vsel %vm503, %v1898, 0
      %v1955 = vsel %vm503, %v1900, 0
      %v1958 = vsel %vm503, %v1902, 0
      %v1961 = vsel %vm503, %v1904, 0
      %v1964 = vsel %vm503, %v1906, 0
      %v1967 = vsel %vm503, %v1908, 0
      %v1970 = vsel %vm503, %v1910, 0
      %v1973 = vsel %vm503, %v1912, 0
      %v1976 = vsel %vm503, %v1914, 0
      %v1979 = vsel %vm503, %v1916, 0
      %v1982 = vsel %vm503, %v1918, 0
      %v1985 = vsel %vm503, %v1920, 0
      %1987 = vmatprep.subr.bf16.mxu0 0
      %1988 = vmatpush1.bf16.msra.mxu0 %v1929
      %1989 = vmatprep.subr.bf16.mxu0 0
      %1990 = vmatpush1.bf16.msra.mxu0 %v1930
      %1991 = vmatprep.subr.bf16.mxu0 0
      %1992 = vmatpush1.bf16.msra.mxu0 0
      %1993 = vmatprep.subr.bf16.mxu0 0
      %1994 = vmatpush1.bf16.msra.mxu0 0
      %1995 = vmatprep.subr.bf16.mxu0 0
      %1996 = vmatpush1.bf16.msra.mxu0 0
      %1997 = vmatprep.subr.bf16.mxu0 0
      %1998 = vmatpush1.bf16.msra.mxu0 0
      %1999 = vmatprep.subr.bf16.mxu0 0
      %2000 = vmatpush1.bf16.msra.mxu0 0
      %2001 = vmatprep.subr.bf16.mxu0 0
      %2002 = vmatpush1.bf16.msra.mxu0 0
      %2003 = vmatprep.subr.bf16.mxu0 0
      %2004 = vmatpush1.bf16.msra.mxu0 0
      %2005 = vmatprep.subr.bf16.mxu0 0
      %2006 = vmatpush1.bf16.msra.mxu0 0
      %2007 = vmatprep.subr.bf16.mxu0 0
      %2008 = vmatpush1.bf16.msra.mxu0 0
      %2009 = vmatprep.subr.bf16.mxu0 0
      %2010 = vmatpush1.bf16.msra.mxu0 0
      %2011 = vmatprep.subr.bf16.mxu0 0
      %2012 = vmatpush1.bf16.msra.mxu0 0
      %2013 = vmatprep.subr.bf16.mxu0 0
      %2014 = vmatpush1.bf16.msra.mxu0 0
      %2015 = vmatprep.subr.bf16.mxu0 0
      %2016 = vmatpush1.bf16.msra.mxu0 0
      %2017 = vmatprep.subr.bf16.mxu0 0
      %2018 = vmatpush1.bf16.msra.mxu0 0
      %2019 = vmatprep.mubr.bf16.mxu0 0
      %2020 = vmatmul.mubr.bf16.gmra.mrb[0].mxu0 %v1934
      %v2021 = vpop.f32.mrb[0].mxu0
      %v2022 = vadd.f32 0.0, %v2021
      %v2023 = vpop.f32.mrb[0].mxu0
      %v2024 = vpop.f32.mrb[0].mxu0
      %v2025 = vadd.f32 0.0, %v2024
      %v2026 = vpop.f32.mrb[0].mxu0
      %2027 = vmatprep.mubr.bf16.mxu0 0
      %2028 = vmatmul.mubr.bf16.gmra.mrb[0].mxu0 %v1937
      %v2029 = vpop.f32.mrb[0].mxu0
      %v2030 = vadd.f32 0.0, %v2029
      %v2031 = vpop.f32.mrb[0].mxu0
      %v2032 = vpop.f32.mrb[0].mxu0
      %v2033 = vadd.f32 0.0, %v2032
      %v2034 = vpop.f32.mrb[0].mxu0
      %2035 = vmatprep.mubr.bf16.mxu0 0
      %2036 = vmatmul.mubr.bf16.gmra.mrb[0].mxu0 %v1940
      %v2037 = vpop.f32.mrb[0].mxu0
      %v2038 = vadd.f32 0.0, %v2037
      %v2039 = vpop.f32.mrb[0].mxu0
      %v2040 = vpop.f32.mrb[0].mxu0
      %v2041 = vadd.f32 0.0, %v2040
      %v2042 = vpop.f32.mrb[0].mxu0
      %2043 = vmatprep.mubr.bf16.mxu0 0
      %2044 = vmatmul.mubr.bf16.gmra.mrb[0].mxu0 %v1943
      %v2045 = vpop.f32.mrb[0].mxu0
      %v2046 = vadd.f32 0.0, %v2045
      %v2047 = vpop.f32.mrb[0].mxu0
      %v2048 = vpop.f32.mrb[0].mxu0
      %v2049 = vadd.f32 0.0, %v2048
      %v2050 = vpop.f32.mrb[0].mxu0
      %2051 = vmatprep.mubr.bf16.mxu0 0
      %2052 = vmatmul.mubr.bf16.gmra.mrb[0].mxu0 %v1946
      %v2053 = vpop.f32.mrb[0].mxu0
      %v2054 = vadd.f32 0.0, %v2053
      %v2055 = vpop.f32.mrb[0].mxu0
      %v2056 = vpop.f32.mrb[0].mxu0
      %v2057 = vadd.f32 0.0, %v2056
      %v2058 = vpop.f32.mrb[0].mxu0
      %2059 = vmatprep.mubr.bf16.mxu0 0
      %2060 = vmatmul.mubr.bf16.gmra.mrb[0].mxu0 %v1949
      %v2061 = vpop.f32.mrb[0].mxu0
      %v2062 = vadd.f32 0.0, %v2061
      %v2063 = vpop.f32.mrb[0].mxu0
      %v2064 = vpop.f32.mrb[0].mxu0
      %v2065 = vadd.f32 0.0, %v2064
      %v2066 = vpop.f32.mrb[0].mxu0
      %2067 = vmatprep.mubr.bf16.mxu0 0
      %2068 = vmatmul.mubr.bf16.gmra.mrb[0].mxu0 %v1952
      %v2069 = vpop.f32.mrb[0].mxu0
      %v2070 = vadd.f32 0.0, %v2069
      %v2071 = vpop.f32.mrb[0].mxu0
      %v2072 = vpop.f32.mrb[0].mxu0
      %v2073 = vadd.f32 0.0, %v2072
      %v2074 = vpop.f32.mrb[0].mxu0
      %2075 = vmatprep.mubr.bf16.mxu0 0
      %2076 = vmatmul.mubr.bf16.gmra.mrb[0].mxu0 %v1955
      %v2077 = vpop.f32.mrb[0].mxu0
      %v2078 = vadd.f32 0.0, %v2077
      %v2079 = vpop.f32.mrb[0].mxu0
      %v2080 = vpop.f32.mrb[0].mxu0
      %v2081 = vadd.f32 0.0, %v2080
      %v2082 = vpop.f32.mrb[0].mxu0
      %2083 = vmatprep.mubr.bf16.mxu0 0
      %2084 = vmatmul.mubr.bf16.gmra.mrb[0].mxu0 %v1958
      %v2085 = vpop.f32.mrb[0].mxu0
      %v2086 = vadd.f32 0.0, %v2085
      %v2087 = vpop.f32.mrb[0].mxu0
      %v2088 = vpop.f32.mrb[0].mxu0
      %v2089 = vadd.f32 0.0, %v2088
      %v2090 = vpop.f32.mrb[0].mxu0
      %2091 = vmatprep.mubr.bf16.mxu0 0
      %2092 = vmatmul.mubr.bf16.gmra.mrb[0].mxu0 %v1961
      %v2093 = vpop.f32.mrb[0].mxu0
      %v2094 = vadd.f32 0.0, %v2093
      %v2095 = vpop.f32.mrb[0].mxu0
      %v2096 = vpop.f32.mrb[0].mxu0
      %v2097 = vadd.f32 0.0, %v2096
      %v2098 = vpop.f32.mrb[0].mxu0
      %2099 = vmatprep.mubr.bf16.mxu0 0
      %2100 = vmatmul.mubr.bf16.gmra.mrb[0].mxu0 %v1964
      %v2101 = vpop.f32.mrb[0].mxu0
      %v2102 = vadd.f32 0.0, %v2101
      %v2103 = vpop.f32.mrb[0].mxu0
      %v2104 = vpop.f32.mrb[0].mxu0
      %v2105 = vadd.f32 0.0, %v2104
      %v2106 = vpop.f32.mrb[0].mxu0
      %2107 = vmatprep.mubr.bf16.mxu0 0
      %2108 = vmatmul.mubr.bf16.gmra.mrb[0].mxu0 %v1967
      %v2109 = vpop.f32.mrb[0].mxu0
      %v2110 = vadd.f32 0.0, %v2109
      %v2111 = vpop.f32.mrb[0].mxu0
      %v2112 = vpop.f32.mrb[0].mxu0
      %v2113 = vadd.f32 0.0, %v2112
      %v2114 = vpop.f32.mrb[0].mxu0
      %2115 = vmatprep.mubr.bf16.mxu0 0
      %2116 = vmatmul.mubr.bf16.gmra.mrb[0].mxu0 %v1970
      %v2117 = vpop.f32.mrb[0].mxu0
      %v2118 = vadd.f32 0.0, %v2117
      %v2119 = vpop.f32.mrb[0].mxu0
      %v2120 = vpop.f32.mrb[0].mxu0
      %v2121 = vadd.f32 0.0, %v2120
      %v2122 = vpop.f32.mrb[0].mxu0
      %2123 = vmatprep.mubr.bf16.mxu0 0
      %2124 = vmatmul.mubr.bf16.gmra.mrb[0].mxu0 %v1973
      %v2125 = vpop.f32.mrb[0].mxu0
      %v2126 = vadd.f32 0.0, %v2125
      %v2127 = vpop.f32.mrb[0].mxu0
      %v2128 = vpop.f32.mrb[0].mxu0
      %v2129 = vadd.f32 0.0, %v2128
      %v2130 = vpop.f32.mrb[0].mxu0
      %2131 = vmatprep.mubr.bf16.mxu0 0
      %2132 = vmatmul.mubr.bf16.gmra.mrb[0].mxu0 %v1976
      %v2133 = vpop.f32.mrb[0].mxu0
      %v2134 = vadd.f32 0.0, %v2133
      %v2135 = vpop.f32.mrb[0].mxu0
      %v2136 = vpop.f32.mrb[0].mxu0
      %v2137 = vadd.f32 0.0, %v2136
      %v2138 = vpop.f32.mrb[0].mxu0
      %2139 = vmatprep.mubr.bf16.mxu0 0
      %2140 = vmatmul.mubr.bf16.gmra.mrb[0].mxu0 %v1979
      %v2141 = vpop.f32.mrb[0].mxu0
      %v2142 = vadd.f32 0.0, %v2141
      %v2143 = vpop.f32.mrb[0].mxu0
      %v2144 = vpop.f32.mrb[0].mxu0
      %v2145 = vadd.f32 0.0, %v2144
      %v2146 = vpop.f32.mrb[0].mxu0
      %2147 = vmatprep.mubr.bf16.mxu0 0
      %2148 = vmatmul.mubr.bf16.gmra.mrb[0].mxu0 %v1982
      %v2149 = vpop.f32.mrb[0].mxu0
      %v2150 = vadd.f32 0.0, %v2149
      %v2151 = vpop.f32.mrb[0].mxu0
      %v2152 = vpop.f32.mrb[0].mxu0
      %v2153 = vadd.f32 0.0, %v2152
      %v2154 = vpop.f32.mrb[0].mxu0
      %2155 = vmatprep.mubr.bf16.mxu0 0
      %2156 = vmatmul.mubr.bf16.gmra.mrb[0].mxu0 %v1985
      %v2157 = vpop.f32.mrb[0].mxu0
      %v2158 = vadd.f32 0.0, %v2157
      %v2159 = vpop.f32.mrb[0].mxu0
      %v2160 = vpop.f32.mrb[0].mxu0
      %v2161 = vadd.f32 0.0, %v2160
      %v2162 = vpop.f32.mrb[0].mxu0
      %2163 = vdwg.mxu0
      %v2164 = vadd.f32 %v1847, %v2022
      %v2165 = vadd.f32 %v1848, %v2025
      %v2166 = vadd.f32 %v1849, %v2030
      %v2167 = vadd.f32 %v1850, %v2033
      %v2168 = vadd.f32 %v1851, %v2038
      %v2169 = vadd.f32 %v1852, %v2041
      %v2170 = vadd.f32 %v1853, %v2046
      %v2171 = vadd.f32 %v1854, %v2049
      %v2172 = vadd.f32 %v1855, %v2054
      %v2173 = vadd.f32 %v1856, %v2057
      %v2174 = vadd.f32 %v1857, %v2062
      %v2175 = vadd.f32 %v1858, %v2065
      %v2176 = vadd.f32 %v1859, %v2070
      %v2177 = vadd.f32 %v1860, %v2073
      %v2178 = vadd.f32 %v1861, %v2078
      %v2179 = vadd.f32 %v1862, %v2081
      %v2180 = vadd.f32 %v1863, %v2086
      %v2181 = vadd.f32 %v1864, %v2089
      %v2182 = vadd.f32 %v1865, %v2094
      %v2183 = vadd.f32 %v1866, %v2097
      %v2184 = vadd.f32 %v1867, %v2102
      %v2185 = vadd.f32 %v1868, %v2105
      %v2186 = vadd.f32 %v1869, %v2110
      %v2187 = vadd.f32 %v1870, %v2113
      %v2188 = vadd.f32 %v1871, %v2118
      %v2189 = vadd.f32 %v1872, %v2121
      %v2190 = vadd.f32 %v1873, %v2126
      %v2191 = vadd.f32 %v1874, %v2129
      %v2192 = vadd.f32 %v1875, %v2134
      %v2193 = vadd.f32 %v1876, %v2137
      %v2194 = vadd.f32 %v1877, %v2142
      %v2195 = vadd.f32 %v1878, %v2145
      %v2196 = vadd.f32 %v1879, %v2150
      %v2197 = vadd.f32 %v1880, %v2153
      %v2198 = vadd.f32 %v1881, %v2158
      %v2199 = vadd.f32 %v1882, %v2161
      %v2202 = vunpack.c.l.b16 %v211
      %v2203 = vunpack.c.l.b16 %v212
      %v2204 = vpack.c.b16 %v2202, %v1280
      %v2205 = vpack.c.b16 %v2203, %v2203
      %v2206 = vrot.slane %v2204, 2
      %v2207 = vsel %vm1883, %v1917, %v2206
      %v2208 = vrot.slane %v2205, 2
      %v2209 = vsel %vm1883, %v2206, %v2208
      %v2214 = vunpack.c.l.b16 %v237
      %v2215 = vunpack.c.l.b16 %v238
      %v2216 = vunpack.c.l.b16 %v239
      %v2217 = vunpack.c.l.b16 %v240
      %v2218 = vpack.c.b16 %v2215, %v2214
      %v2219 = vpack.c.b16 %v2217, %v2216
      %v2223 = vsel %vm503, %v2207, 0
      %v2226 = vsel %vm503, %v2209, 0
      %2228 = vmatprep.subr.bf16.mxu0 0
      %2229 = vmatpush1.bf16.msra.mxu0 %v2218
      %2230 = vmatprep.subr.bf16.mxu0 0
      %2231 = vmatpush1.bf16.msra.mxu0 %v2219
      %2232 = vmatprep.subr.bf16.mxu0 0
      %2233 = vmatpush1.bf16.msra.mxu0 0
      %2234 = vmatprep.subr.bf16.mxu0 0
      %2235 = vmatpush1.bf16.msra.mxu0 0
      %2236 = vmatprep.subr.bf16.mxu0 0
      %2237 = vmatpush1.bf16.msra.mxu0 0
      %2238 = vmatprep.subr.bf16.mxu0 0
      %2239 = vmatpush1.bf16.msra.mxu0 0
      %2240 = vmatprep.subr.bf16.mxu0 0
      %2241 = vmatpush1.bf16.msra.mxu0 0
      %2242 = vmatprep.subr.bf16.mxu0 0
      %2243 = vmatpush1.bf16.msra.mxu0 0
      %2244 = vmatprep.subr.bf16.mxu0 0
      %2245 = vmatpush1.bf16.msra.mxu0 0
      %2246 = vmatprep.subr.bf16.mxu0 0
      %2247 = vmatpush1.bf16.msra.mxu0 0
      %2248 = vmatprep.subr.bf16.mxu0 0
      %2249 = vmatpush1.bf16.msra.mxu0 0
      %2250 = vmatprep.subr.bf16.mxu0 0
      %2251 = vmatpush1.bf16.msra.mxu0 0
      %2252 = vmatprep.subr.bf16.mxu0 0
      %2253 = vmatpush1.bf16.msra.mxu0 0
      %2254 = vmatprep.subr.bf16.mxu0 0
      %2255 = vmatpush1.bf16.msra.mxu0 0
      %2256 = vmatprep.subr.bf16.mxu0 0
      %2257 = vmatpush1.bf16.msra.mxu0 0
      %2258 = vmatprep.subr.bf16.mxu0 0
      %2259 = vmatpush1.bf16.msra.mxu0 0
      %2260 = vmatprep.mubr.bf16.mxu0 0
      %2261 = vmatmul.mubr.bf16.gmra.mrb[0].mxu0 %v1937
      %v2262 = vpop.f32.mrb[0].mxu0
      %v2263 = vadd.f32 0.0, %v2262
      %v2264 = vpop.f32.mrb[0].mxu0
      %v2265 = vpop.f32.mrb[0].mxu0
      %v2266 = vadd.f32 0.0, %v2265
      %v2267 = vpop.f32.mrb[0].mxu0
      %2268 = vmatprep.mubr.bf16.mxu0 0
      %2269 = vmatmul.mubr.bf16.gmra.mrb[0].mxu0 %v1940
      %v2270 = vpop.f32.mrb[0].mxu0
      %v2271 = vadd.f32 0.0, %v2270
      %v2272 = vpop.f32.mrb[0].mxu0
      %v2273 = vpop.f32.mrb[0].mxu0
      %v2274 = vadd.f32 0.0, %v2273
      %v2275 = vpop.f32.mrb[0].mxu0
      %2276 = vmatprep.mubr.bf16.mxu0 0
      %2277 = vmatmul.mubr.bf16.gmra.mrb[0].mxu0 %v1943
      %v2278 = vpop.f32.mrb[0].mxu0
      %v2279 = vadd.f32 0.0, %v2278
      %v2280 = vpop.f32.mrb[0].mxu0
      %v2281 = vpop.f32.mrb[0].mxu0
      %v2282 = vadd.f32 0.0, %v2281
      %v2283 = vpop.f32.mrb[0].mxu0
      %2284 = vmatprep.mubr.bf16.mxu0 0
      %2285 = vmatmul.mubr.bf16.gmra.mrb[0].mxu0 %v1946
      %v2286 = vpop.f32.mrb[0].mxu0
      %v2287 = vadd.f32 0.0, %v2286
      %v2288 = vpop.f32.mrb[0].mxu0
      %v2289 = vpop.f32.mrb[0].mxu0
      %v2290 = vadd.f32 0.0, %v2289
      %v2291 = vpop.f32.mrb[0].mxu0
      %2292 = vmatprep.mubr.bf16.mxu0 0
      %2293 = vmatmul.mubr.bf16.gmra.mrb[0].mxu0 %v1949
      %v2294 = vpop.f32.mrb[0].mxu0
      %v2295 = vadd.f32 0.0, %v2294
      %v2296 = vpop.f32.mrb[0].mxu0
      %v2297 = vpop.f32.mrb[0].mxu0
      %v2298 = vadd.f32 0.0, %v2297
      %v2299 = vpop.f32.mrb[0].mxu0
      %2300 = vmatprep.mubr.bf16.mxu0 0
      %2301 = vmatmul.mubr.bf16.gmra.mrb[0].mxu0 %v1952
      %v2302 = vpop.f32.mrb[0].mxu0
      %v2303 = vadd.f32 0.0, %v2302
      %v2304 = vpop.f32.mrb[0].mxu0
      %v2305 = vpop.f32.mrb[0].mxu0
      %v2306 = vadd.f32 0.0, %v2305
      %v2307 = vpop.f32.mrb[0].mxu0
      %2308 = vmatprep.mubr.bf16.mxu0 0
      %2309 = vmatmul.mubr.bf16.gmra.mrb[0].mxu0 %v1955
      %v2310 = vpop.f32.mrb[0].mxu0
      %v2311 = vadd.f32 0.0, %v2310
      %v2312 = vpop.f32.mrb[0].mxu0
      %v2313 = vpop.f32.mrb[0].mxu0
      %v2314 = vadd.f32 0.0, %v2313
      %v2315 = vpop.f32.mrb[0].mxu0
      %2316 = vmatprep.mubr.bf16.mxu0 0
      %2317 = vmatmul.mubr.bf16.gmra.mrb[0].mxu0 %v1958
      %v2318 = vpop.f32.mrb[0].mxu0
      %v2319 = vadd.f32 0.0, %v2318
      %v2320 = vpop.f32.mrb[0].mxu0
      %v2321 = vpop.f32.mrb[0].mxu0
      %v2322 = vadd.f32 0.0, %v2321
      %v2323 = vpop.f32.mrb[0].mxu0
      %2324 = vmatprep.mubr.bf16.mxu0 0
      %2325 = vmatmul.mubr.bf16.gmra.mrb[0].mxu0 %v1961
      %v2326 = vpop.f32.mrb[0].mxu0
      %v2327 = vadd.f32 0.0, %v2326
      %v2328 = vpop.f32.mrb[0].mxu0
      %v2329 = vpop.f32.mrb[0].mxu0
      %v2330 = vadd.f32 0.0, %v2329
      %v2331 = vpop.f32.mrb[0].mxu0
      %2332 = vmatprep.mubr.bf16.mxu0 0
      %2333 = vmatmul.mubr.bf16.gmra.mrb[0].mxu0 %v1964
      %v2334 = vpop.f32.mrb[0].mxu0
      %v2335 = vadd.f32 0.0, %v2334
      %v2336 = vpop.f32.mrb[0].mxu0
      %v2337 = vpop.f32.mrb[0].mxu0
      %v2338 = vadd.f32 0.0, %v2337
      %v2339 = vpop.f32.mrb[0].mxu0
      %2340 = vmatprep.mubr.bf16.mxu0 0
      %2341 = vmatmul.mubr.bf16.gmra.mrb[0].mxu0 %v1967
      %v2342 = vpop.f32.mrb[0].mxu0
      %v2343 = vadd.f32 0.0, %v2342
      %v2344 = vpop.f32.mrb[0].mxu0
      %v2345 = vpop.f32.mrb[0].mxu0
      %v2346 = vadd.f32 0.0, %v2345
      %v2347 = vpop.f32.mrb[0].mxu0
      %2348 = vmatprep.mubr.bf16.mxu0 0
      %2349 = vmatmul.mubr.bf16.gmra.mrb[0].mxu0 %v1970
      %v2350 = vpop.f32.mrb[0].mxu0
      %v2351 = vadd.f32 0.0, %v2350
      %v2352 = vpop.f32.mrb[0].mxu0
      %v2353 = vpop.f32.mrb[0].mxu0
      %v2354 = vadd.f32 0.0, %v2353
      %v2355 = vpop.f32.mrb[0].mxu0
      %2356 = vmatprep.mubr.bf16.mxu0 0
      %2357 = vmatmul.mubr.bf16.gmra.mrb[0].mxu0 %v1973
      %v2358 = vpop.f32.mrb[0].mxu0
      %v2359 = vadd.f32 0.0, %v2358
      %v2360 = vpop.f32.mrb[0].mxu0
      %v2361 = vpop.f32.mrb[0].mxu0
      %v2362 = vadd.f32 0.0, %v2361
      %v2363 = vpop.f32.mrb[0].mxu0
      %2364 = vmatprep.mubr.bf16.mxu0 0
      %2365 = vmatmul.mubr.bf16.gmra.mrb[0].mxu0 %v1976
      %v2366 = vpop.f32.mrb[0].mxu0
      %v2367 = vadd.f32 0.0, %v2366
      %v2368 = vpop.f32.mrb[0].mxu0
      %v2369 = vpop.f32.mrb[0].mxu0
      %v2370 = vadd.f32 0.0, %v2369
      %v2371 = vpop.f32.mrb[0].mxu0
      %2372 = vmatprep.mubr.bf16.mxu0 0
      %2373 = vmatmul.mubr.bf16.gmra.mrb[0].mxu0 %v1979
      %v2374 = vpop.f32.mrb[0].mxu0
      %v2375 = vadd.f32 0.0, %v2374
      %v2376 = vpop.f32.mrb[0].mxu0
      %v2377 = vpop.f32.mrb[0].mxu0
      %v2378 = vadd.f32 0.0, %v2377
      %v2379 = vpop.f32.mrb[0].mxu0
      %2380 = vmatprep.mubr.bf16.mxu0 0
      %2381 = vmatmul.mubr.bf16.gmra.mrb[0].mxu0 %v1982
      %v2382 = vpop.f32.mrb[0].mxu0
      %v2383 = vadd.f32 0.0, %v2382
      %v2384 = vpop.f32.mrb[0].mxu0
      %v2385 = vpop.f32.mrb[0].mxu0
      %v2386 = vadd.f32 0.0, %v2385
      %v2387 = vpop.f32.mrb[0].mxu0
      %2388 = vmatprep.mubr.bf16.mxu0 0
      %2389 = vmatmul.mubr.bf16.gmra.mrb[0].mxu0 %v2223
      %v2390 = vpop.f32.mrb[0].mxu0
      %v2391 = vadd.f32 0.0, %v2390
      %v2392 = vpop.f32.mrb[0].mxu0
      %v2393 = vpop.f32.mrb[0].mxu0
      %v2394 = vadd.f32 0.0, %v2393
      %v2395 = vpop.f32.mrb[0].mxu0
      %2396 = vmatprep.mubr.bf16.mxu0 0
      %2397 = vmatmul.mubr.bf16.gmra.mrb[0].mxu0 %v2226
      %v2398 = vpop.f32.mrb[0].mxu0
      %v2399 = vadd.f32 0.0, %v2398
      %v2400 = vpop.f32.mrb[0].mxu0
      %v2401 = vpop.f32.mrb[0].mxu0
      %v2402 = vadd.f32 0.0, %v2401
      %v2403 = vpop.f32.mrb[0].mxu0
      %2404 = vdwg.mxu0
      %v2405 = vadd.f32 %v2164, %v2263
      %v2406 = vadd.f32 %v2165, %v2266
      %v2407 = vadd.f32 %v2166, %v2271
      %v2408 = vadd.f32 %v2167, %v2274
      %v2409 = vadd.f32 %v2168, %v2279
      %v2410 = vadd.f32 %v2169, %v2282
      %v2411 = vadd.f32 %v2170, %v2287
      %v2412 = vadd.f32 %v2171, %v2290
      %v2413 = vadd.f32 %v2172, %v2295
      %v2414 = vadd.f32 %v2173, %v2298
      %v2415 = vadd.f32 %v2174, %v2303
      %v2416 = vadd.f32 %v2175, %v2306
      %v2417 = vadd.f32 %v2176, %v2311
      %v2418 = vadd.f32 %v2177, %v2314
      %v2419 = vadd.f32 %v2178, %v2319
      %v2420 = vadd.f32 %v2179, %v2322
      %v2421 = vadd.f32 %v2180, %v2327
      %v2422 = vadd.f32 %v2181, %v2330
      %v2423 = vadd.f32 %v2182, %v2335
      %v2424 = vadd.f32 %v2183, %v2338
      %v2425 = vadd.f32 %v2184, %v2343
      %v2426 = vadd.f32 %v2185, %v2346
      %v2427 = vadd.f32 %v2186, %v2351
      %v2428 = vadd.f32 %v2187, %v2354
      %v2429 = vadd.f32 %v2188, %v2359
      %v2430 = vadd.f32 %v2189, %v2362
      %v2431 = vadd.f32 %v2190, %v2367
      %v2432 = vadd.f32 %v2191, %v2370
      %v2433 = vadd.f32 %v2192, %v2375
      %v2434 = vadd.f32 %v2193, %v2378
      %v2435 = vadd.f32 %v2194, %v2383
      %v2436 = vadd.f32 %v2195, %v2386
      %v2437 = vadd.f32 %v2196, %v2391
      %v2438 = vadd.f32 %v2197, %v2394
      %v2439 = vadd.f32 %v2198, %v2399
      %v2440 = vadd.f32 %v2199, %v2402
      %vm2441 = vsmask.f32 5376
      %v2442 = vrot.slane %v363, 2
      %v2443 = vrot.slane %v359, 3
      %v2444 = vor.u32 %v2442, %v2443
      %v2445 = vrot.slane %v371, 2
      %v2446 = vrot.slane %v367, 3
      %v2447 = vor.u32 %v2445, %v2446
      %v2448 = vsel %vm2441, %v2444, %v2447
      %v2449 = vrot.slane %v379, 2
      %v2450 = vrot.slane %v375, 3
      %v2451 = vor.u32 %v2449, %v2450
      %v2452 = vsel %vm2441, %v2447, %v2451
      %v2453 = vrot.slane %v387, 2
      %v2454 = vrot.slane %v383, 3
      %v2455 = vor.u32 %v2453, %v2454
      %v2456 = vsel %vm2441, %v2451, %v2455
      %v2457 = vrot.slane %v395, 2
      %v2458 = vrot.slane %v391, 3
      %v2459 = vor.u32 %v2457, %v2458
      %v2460 = vsel %vm2441, %v2455, %v2459
      %v2461 = vrot.slane %v403, 2
      %v2462 = vrot.slane %v399, 3
      %v2463 = vor.u32 %v2461, %v2462
      %v2464 = vsel %vm2441, %v2459, %v2463
      %v2465 = vrot.slane %v411, 2
      %v2466 = vrot.slane %v407, 3
      %v2467 = vor.u32 %v2465, %v2466
      %v2468 = vsel %vm2441, %v2463, %v2467
      %v2469 = vrot.slane %v419, 2
      %v2470 = vrot.slane %v415, 3
      %v2471 = vor.u32 %v2469, %v2470
      %v2472 = vsel %vm2441, %v2467, %v2471
      %v2473 = vrot.slane %v427, 2
      %v2474 = vrot.slane %v423, 3
      %v2475 = vor.u32 %v2473, %v2474
      %v2476 = vsel %vm2441, %v2471, %v2475
      %v2477 = vrot.slane %v435, 2
      %v2478 = vrot.slane %v431, 3
      %v2479 = vor.u32 %v2477, %v2478
      %v2480 = vsel %vm2441, %v2475, %v2479
      %v2481 = vrot.slane %v443, 2
      %v2482 = vrot.slane %v439, 3
      %v2483 = vor.u32 %v2481, %v2482
      %v2484 = vsel %vm2441, %v2479, %v2483
      %v2485 = vrot.slane %v451, 2
      %v2486 = vrot.slane %v447, 3
      %v2487 = vor.u32 %v2485, %v2486
      %v2488 = vsel %vm2441, %v2483, %v2487
      %v2489 = vrot.slane %v459, 2
      %v2490 = vrot.slane %v455, 3
      %v2491 = vor.u32 %v2489, %v2490
      %v2492 = vsel %vm2441, %v2487, %v2491
      %v2493 = vrot.slane %v467, 2
      %v2494 = vrot.slane %v463, 3
      %v2495 = vor.u32 %v2493, %v2494
      %v2496 = vsel %vm2441, %v2491, %v2495
      %v2497 = vrot.slane %v475, 2
      %v2498 = vrot.slane %v471, 3
      %v2499 = vor.u32 %v2497, %v2498
      %v2500 = vsel %vm2441, %v2495, %v2499
      %v2501 = vrot.slane %v483, 2
      %v2502 = vrot.slane %v479, 3
      %v2503 = vor.u32 %v2501, %v2502
      %v2504 = vsel %vm2441, %v2499, %v2503
      %v2505 = vrot.slane %v1587, 2
      %v2506 = vrot.slane %v1590, 3
      %v2507 = vor.u32 %v2505, %v2506
      %v2508 = vsel %vm2441, %v2503, %v2507
      %v2510 = vshrl.u32 %v2204, 16
      %v2512 = vrot.slane %v2510, 2
      %v2513 = vshll.u32 %v2204, 16
      %v2515 = vrot.slane %v2513, 3
      %v2516 = vor.u32 %v2512, %v2515
      %v2517 = vsel %vm2441, %v2507, %v2516
      %v2519 = vshrl.u32 %v2205, 16
      %v2521 = vrot.slane %v2519, 2
      %v2522 = vshll.u32 %v2205, 16
      %v2524 = vrot.slane %v2522, 3
      %v2525 = vor.u32 %v2521, %v2524
      %v2526 = vsel %vm2441, %v2516, %v2525
      %v2531 = vunpack.c.l.b16 %v241
      %v2532 = vunpack.c.l.b16 %v242
      %v2533 = vunpack.c.l.b16 %v243
      %v2534 = vunpack.c.l.b16 %v244
      %v2535 = vpack.c.b16 %v2532, %v2531
      %v2536 = vpack.c.b16 %v2534, %v2533
      %v2540 = vsel %vm503, %v2448, 0
      %v2543 = vsel %vm503, %v2452, 0
      %v2546 = vsel %vm503, %v2456, 0
      %v2549 = vsel %vm503, %v2460, 0
      %v2552 = vsel %vm503, %v2464, 0
      %v2555 = vsel %vm503, %v2468, 0
      %v2558 = vsel %vm503, %v2472, 0
      %v2561 = vsel %vm503, %v2476, 0
      %v2564 = vsel %vm503, %v2480, 0
      %v2567 = vsel %vm503, %v2484, 0
      %v2570 = vsel %vm503, %v2488, 0
      %v2573 = vsel %vm503, %v2492, 0
      %v2576 = vsel %vm503, %v2496, 0
      %v2579 = vsel %vm503, %v2500, 0
      %v2582 = vsel %vm503, %v2504, 0
      %v2585 = vsel %vm503, %v2508, 0
      %v2588 = vsel %vm503, %v2517, 0
      %v2591 = vsel %vm503, %v2526, 0
      %2593 = vmatprep.subr.bf16.mxu0 0
      %2594 = vmatpush1.bf16.msra.mxu0 %v2535
      %2595 = vmatprep.subr.bf16.mxu0 0
      %2596 = vmatpush1.bf16.msra.mxu0 %v2536
      %2597 = vmatprep.subr.bf16.mxu0 0
      %2598 = vmatpush1.bf16.msra.mxu0 0
      %2599 = vmatprep.subr.bf16.mxu0 0
      %2600 = vmatpush1.bf16.msra.mxu0 0
      %2601 = vmatprep.subr.bf16.mxu0 0
      %2602 = vmatpush1.bf16.msra.mxu0 0
      %2603 = vmatprep.subr.bf16.mxu0 0
      %2604 = vmatpush1.bf16.msra.mxu0 0
      %2605 = vmatprep.subr.bf16.mxu0 0
      %2606 = vmatpush1.bf16.msra.mxu0 0
      %2607 = vmatprep.subr.bf16.mxu0 0
      %2608 = vmatpush1.bf16.msra.mxu0 0
      %2609 = vmatprep.subr.bf16.mxu0 0
      %2610 = vmatpush1.bf16.msra.mxu0 0
      %2611 = vmatprep.subr.bf16.mxu0 0
      %2612 = vmatpush1.bf16.msra.mxu0 0
      %2613 = vmatprep.subr.bf16.mxu0 0
      %2614 = vmatpush1.bf16.msra.mxu0 0
      %2615 = vmatprep.subr.bf16.mxu0 0
      %2616 = vmatpush1.bf16.msra.mxu0 0
      %2617 = vmatprep.subr.bf16.mxu0 0
      %2618 = vmatpush1.bf16.msra.mxu0 0
      %2619 = vmatprep.subr.bf16.mxu0 0
      %2620 = vmatpush1.bf16.msra.mxu0 0
      %2621 = vmatprep.subr.bf16.mxu0 0
      %2622 = vmatpush1.bf16.msra.mxu0 0
      %2623 = vmatprep.subr.bf16.mxu0 0
      %2624 = vmatpush1.bf16.msra.mxu0 0
      %2625 = vmatprep.mubr.bf16.mxu0 0
      %2626 = vmatmul.mubr.bf16.gmra.mrb[0].mxu0 %v2540
      %v2627 = vpop.f32.mrb[0].mxu0
      %v2628 = vadd.f32 0.0, %v2627
      %v2629 = vpop.f32.mrb[0].mxu0
      %v2630 = vpop.f32.mrb[0].mxu0
      %v2631 = vadd.f32 0.0, %v2630
      %v2632 = vpop.f32.mrb[0].mxu0
      %2633 = vmatprep.mubr.bf16.mxu0 0
      %2634 = vmatmul.mubr.bf16.gmra.mrb[0].mxu0 %v2543
      %v2635 = vpop.f32.mrb[0].mxu0
      %v2636 = vadd.f32 0.0, %v2635
      %v2637 = vpop.f32.mrb[0].mxu0
      %v2638 = vpop.f32.mrb[0].mxu0
      %v2639 = vadd.f32 0.0, %v2638
      %v2640 = vpop.f32.mrb[0].mxu0
      %2641 = vmatprep.mubr.bf16.mxu0 0
      %2642 = vmatmul.mubr.bf16.gmra.mrb[0].mxu0 %v2546
      %v2643 = vpop.f32.mrb[0].mxu0
      %v2644 = vadd.f32 0.0, %v2643
      %v2645 = vpop.f32.mrb[0].mxu0
      %v2646 = vpop.f32.mrb[0].mxu0
      %v2647 = vadd.f32 0.0, %v2646
      %v2648 = vpop.f32.mrb[0].mxu0
      %2649 = vmatprep.mubr.bf16.mxu0 0
      %2650 = vmatmul.mubr.bf16.gmra.mrb[0].mxu0 %v2549
      %v2651 = vpop.f32.mrb[0].mxu0
      %v2652 = vadd.f32 0.0, %v2651
      %v2653 = vpop.f32.mrb[0].mxu0
      %v2654 = vpop.f32.mrb[0].mxu0
      %v2655 = vadd.f32 0.0, %v2654
      %v2656 = vpop.f32.mrb[0].mxu0
      %2657 = vmatprep.mubr.bf16.mxu0 0
      %2658 = vmatmul.mubr.bf16.gmra.mrb[0].mxu0 %v2552
      %v2659 = vpop.f32.mrb[0].mxu0
      %v2660 = vadd.f32 0.0, %v2659
      %v2661 = vpop.f32.mrb[0].mxu0
      %v2662 = vpop.f32.mrb[0].mxu0
      %v2663 = vadd.f32 0.0, %v2662
      %v2664 = vpop.f32.mrb[0].mxu0
      %2665 = vmatprep.mubr.bf16.mxu0 0
      %2666 = vmatmul.mubr.bf16.gmra.mrb[0].mxu0 %v2555
      %v2667 = vpop.f32.mrb[0].mxu0
      %v2668 = vadd.f32 0.0, %v2667
      %v2669 = vpop.f32.mrb[0].mxu0
      %v2670 = vpop.f32.mrb[0].mxu0
      %v2671 = vadd.f32 0.0, %v2670
      %v2672 = vpop.f32.mrb[0].mxu0
      %2673 = vmatprep.mubr.bf16.mxu0 0
      %2674 = vmatmul.mubr.bf16.gmra.mrb[0].mxu0 %v2558
      %v2675 = vpop.f32.mrb[0].mxu0
      %v2676 = vadd.f32 0.0, %v2675
      %v2677 = vpop.f32.mrb[0].mxu0
      %v2678 = vpop.f32.mrb[0].mxu0
      %v2679 = vadd.f32 0.0, %v2678
      %v2680 = vpop.f32.mrb[0].mxu0
      %2681 = vmatprep.mubr.bf16.mxu0 0
      %2682 = vmatmul.mubr.bf16.gmra.mrb[0].mxu0 %v2561
      %v2683 = vpop.f32.mrb[0].mxu0
      %v2684 = vadd.f32 0.0, %v2683
      %v2685 = vpop.f32.mrb[0].mxu0
      %v2686 = vpop.f32.mrb[0].mxu0
      %v2687 = vadd.f32 0.0, %v2686
      %v2688 = vpop.f32.mrb[0].mxu0
      %2689 = vmatprep.mubr.bf16.mxu0 0
      %2690 = vmatmul.mubr.bf16.gmra.mrb[0].mxu0 %v2564
      %v2691 = vpop.f32.mrb[0].mxu0
      %v2692 = vadd.f32 0.0, %v2691
      %v2693 = vpop.f32.mrb[0].mxu0
      %v2694 = vpop.f32.mrb[0].mxu0
      %v2695 = vadd.f32 0.0, %v2694
      %v2696 = vpop.f32.mrb[0].mxu0
      %2697 = vmatprep.mubr.bf16.mxu0 0
      %2698 = vmatmul.mubr.bf16.gmra.mrb[0].mxu0 %v2567
      %v2699 = vpop.f32.mrb[0].mxu0
      %v2700 = vadd.f32 0.0, %v2699
      %v2701 = vpop.f32.mrb[0].mxu0
      %v2702 = vpop.f32.mrb[0].mxu0
      %v2703 = vadd.f32 0.0, %v2702
      %v2704 = vpop.f32.mrb[0].mxu0
      %2705 = vmatprep.mubr.bf16.mxu0 0
      %2706 = vmatmul.mubr.bf16.gmra.mrb[0].mxu0 %v2570
      %v2707 = vpop.f32.mrb[0].mxu0
      %v2708 = vadd.f32 0.0, %v2707
      %v2709 = vpop.f32.mrb[0].mxu0
      %v2710 = vpop.f32.mrb[0].mxu0
      %v2711 = vadd.f32 0.0, %v2710
      %v2712 = vpop.f32.mrb[0].mxu0
      %2713 = vmatprep.mubr.bf16.mxu0 0
      %2714 = vmatmul.mubr.bf16.gmra.mrb[0].mxu0 %v2573
      %v2715 = vpop.f32.mrb[0].mxu0
      %v2716 = vadd.f32 0.0, %v2715
      %v2717 = vpop.f32.mrb[0].mxu0
      %v2718 = vpop.f32.mrb[0].mxu0
      %v2719 = vadd.f32 0.0, %v2718
      %v2720 = vpop.f32.mrb[0].mxu0
      %2721 = vmatprep.mubr.bf16.mxu0 0
      %2722 = vmatmul.mubr.bf16.gmra.mrb[0].mxu0 %v2576
      %v2723 = vpop.f32.mrb[0].mxu0
      %v2724 = vadd.f32 0.0, %v2723
      %v2725 = vpop.f32.mrb[0].mxu0
      %v2726 = vpop.f32.mrb[0].mxu0
      %v2727 = vadd.f32 0.0, %v2726
      %v2728 = vpop.f32.mrb[0].mxu0
      %2729 = vmatprep.mubr.bf16.mxu0 0
      %2730 = vmatmul.mubr.bf16.gmra.mrb[0].mxu0 %v2579
      %v2731 = vpop.f32.mrb[0].mxu0
      %v2732 = vadd.f32 0.0, %v2731
      %v2733 = vpop.f32.mrb[0].mxu0
      %v2734 = vpop.f32.mrb[0].mxu0
      %v2735 = vadd.f32 0.0, %v2734
      %v2736 = vpop.f32.mrb[0].mxu0
      %2737 = vmatprep.mubr.bf16.mxu0 0
      %2738 = vmatmul.mubr.bf16.gmra.mrb[0].mxu0 %v2582
      %v2739 = vpop.f32.mrb[0].mxu0
      %v2740 = vadd.f32 0.0, %v2739
      %v2741 = vpop.f32.mrb[0].mxu0
      %v2742 = vpop.f32.mrb[0].mxu0
      %v2743 = vadd.f32 0.0, %v2742
      %v2744 = vpop.f32.mrb[0].mxu0
      %2745 = vmatprep.mubr.bf16.mxu0 0
      %2746 = vmatmul.mubr.bf16.gmra.mrb[0].mxu0 %v2585
      %v2747 = vpop.f32.mrb[0].mxu0
      %v2748 = vadd.f32 0.0, %v2747
      %v2749 = vpop.f32.mrb[0].mxu0
      %v2750 = vpop.f32.mrb[0].mxu0
      %v2751 = vadd.f32 0.0, %v2750
      %v2752 = vpop.f32.mrb[0].mxu0
      %2753 = vmatprep.mubr.bf16.mxu0 0
      %2754 = vmatmul.mubr.bf16.gmra.mrb[0].mxu0 %v2588
      %v2755 = vpop.f32.mrb[0].mxu0
      %v2756 = vadd.f32 0.0, %v2755
      %v2757 = vpop.f32.mrb[0].mxu0
      %v2758 = vpop.f32.mrb[0].mxu0
      %v2759 = vadd.f32 0.0, %v2758
      %v2760 = vpop.f32.mrb[0].mxu0
      %2761 = vmatprep.mubr.bf16.mxu0 0
      %2762 = vmatmul.mubr.bf16.gmra.mrb[0].mxu0 %v2591
      %v2763 = vpop.f32.mrb[0].mxu0
      %v2764 = vadd.f32 0.0, %v2763
      %v2765 = vpop.f32.mrb[0].mxu0
      %v2766 = vpop.f32.mrb[0].mxu0
      %v2767 = vadd.f32 0.0, %v2766
      %v2768 = vpop.f32.mrb[0].mxu0
      %2769 = vdwg.mxu0
      %v2770 = vadd.f32 %v2405, %v2628
      %v2771 = vadd.f32 %v2406, %v2631
      %v2772 = vadd.f32 %v2407, %v2636
      %v2773 = vadd.f32 %v2408, %v2639
      %v2774 = vadd.f32 %v2409, %v2644
      %v2775 = vadd.f32 %v2410, %v2647
      %v2776 = vadd.f32 %v2411, %v2652
      %v2777 = vadd.f32 %v2412, %v2655
      %v2778 = vadd.f32 %v2413, %v2660
      %v2779 = vadd.f32 %v2414, %v2663
      %v2780 = vadd.f32 %v2415, %v2668
      %v2781 = vadd.f32 %v2416, %v2671
      %v2782 = vadd.f32 %v2417, %v2676
      %v2783 = vadd.f32 %v2418, %v2679
      %v2784 = vadd.f32 %v2419, %v2684
      %v2785 = vadd.f32 %v2420, %v2687
      %v2786 = vadd.f32 %v2421, %v2692
      %v2787 = vadd.f32 %v2422, %v2695
      %v2788 = vadd.f32 %v2423, %v2700
      %v2789 = vadd.f32 %v2424, %v2703
      %v2790 = vadd.f32 %v2425, %v2708
      %v2791 = vadd.f32 %v2426, %v2711
      %v2792 = vadd.f32 %v2427, %v2716
      %v2793 = vadd.f32 %v2428, %v2719
      %v2794 = vadd.f32 %v2429, %v2724
      %v2795 = vadd.f32 %v2430, %v2727
      %v2796 = vadd.f32 %v2431, %v2732
      %v2797 = vadd.f32 %v2432, %v2735
      %v2798 = vadd.f32 %v2433, %v2740
      %v2799 = vadd.f32 %v2434, %v2743
      %v2800 = vadd.f32 %v2435, %v2748
      %v2801 = vadd.f32 %v2436, %v2751
      %v2802 = vadd.f32 %v2437, %v2756
      %v2803 = vadd.f32 %v2438, %v2759
      %v2804 = vadd.f32 %v2439, %v2764
      %v2805 = vadd.f32 %v2440, %v2767
      %vm2806 = vcmask 1044480
      %v2807 = vrot.slane %v325, 3
      %v2808 = vrot.slane %v326, 3
      %v2809 = vsel %vm2806, %v2807, %v2808
      %v2810 = vrot.slane %v327, 3
      %v2811 = vsel %vm2806, %v2808, %v2810
      %v2812 = vrot.slane %v328, 3
      %v2813 = vsel %vm2806, %v2810, %v2812
      %v2814 = vrot.slane %v329, 3
      %v2815 = vsel %vm2806, %v2812, %v2814
      %v2816 = vrot.slane %v330, 3
      %v2817 = vsel %vm2806, %v2814, %v2816
      %v2818 = vrot.slane %v331, 3
      %v2819 = vsel %vm2806, %v2816, %v2818
      %v2820 = vrot.slane %v332, 3
      %v2821 = vsel %vm2806, %v2818, %v2820
      %v2822 = vrot.slane %v333, 3
      %v2823 = vsel %vm2806, %v2820, %v2822
      %v2824 = vrot.slane %v334, 3
      %v2825 = vsel %vm2806, %v2822, %v2824
      %v2826 = vrot.slane %v335, 3
      %v2827 = vsel %vm2806, %v2824, %v2826
      %v2828 = vrot.slane %v336, 3
      %v2829 = vsel %vm2806, %v2826, %v2828
      %v2830 = vrot.slane %v337, 3
      %v2831 = vsel %vm2806, %v2828, %v2830
      %v2832 = vrot.slane %v338, 3
      %v2833 = vsel %vm2806, %v2830, %v2832
      %v2834 = vrot.slane %v339, 3
      %v2835 = vsel %vm2806, %v2832, %v2834
      %v2836 = vrot.slane %v340, 3
      %v2837 = vsel %vm2806, %v2834, %v2836
      %v2838 = vrot.slane %v1281, 3
      %v2839 = vsel %vm2806, %v2836, %v2838
      %v2840 = vrot.slane %v2204, 3
      %v2841 = vsel %vm2806, %v2838, %v2840
      %v2842 = vrot.slane %v2205, 3
      %v2843 = vsel %vm2806, %v2840, %v2842
      %v2848 = vunpack.c.l.b16 %v245
      %v2849 = vunpack.c.l.b16 %v246
      %v2850 = vunpack.c.l.b16 %v247
      %v2851 = vunpack.c.l.b16 %v248
      %v2852 = vpack.c.b16 %v2849, %v2848
      %v2853 = vpack.c.b16 %v2851, %v2850
      %v2857 = vsel %vm503, %v2809, 0
      %v2860 = vsel %vm503, %v2811, 0
      %v2863 = vsel %vm503, %v2813, 0
      %v2866 = vsel %vm503, %v2815, 0
      %v2869 = vsel %vm503, %v2817, 0
      %v2872 = vsel %vm503, %v2819, 0
      %v2875 = vsel %vm503, %v2821, 0
      %v2878 = vsel %vm503, %v2823, 0
      %v2881 = vsel %vm503, %v2825, 0
      %v2884 = vsel %vm503, %v2827, 0
      %v2887 = vsel %vm503, %v2829, 0
      %v2890 = vsel %vm503, %v2831, 0
      %v2893 = vsel %vm503, %v2833, 0
      %v2896 = vsel %vm503, %v2835, 0
      %v2899 = vsel %vm503, %v2837, 0
      %v2902 = vsel %vm503, %v2839, 0
      %v2905 = vsel %vm503, %v2841, 0
      %v2908 = vsel %vm503, %v2843, 0
      %2910 = vmatprep.subr.bf16.mxu0 0
      %2911 = vmatpush1.bf16.msra.mxu0 %v2852
      %2912 = vmatprep.subr.bf16.mxu0 0
      %2913 = vmatpush1.bf16.msra.mxu0 %v2853
      %2914 = vmatprep.subr.bf16.mxu0 0
      %2915 = vmatpush1.bf16.msra.mxu0 0
      %2916 = vmatprep.subr.bf16.mxu0 0
      %2917 = vmatpush1.bf16.msra.mxu0 0
      %2918 = vmatprep.subr.bf16.mxu0 0
      %2919 = vmatpush1.bf16.msra.mxu0 0
      %2920 = vmatprep.subr.bf16.mxu0 0
      %2921 = vmatpush1.bf16.msra.mxu0 0
      %2922 = vmatprep.subr.bf16.mxu0 0
      %2923 = vmatpush1.bf16.msra.mxu0 0
      %2924 = vmatprep.subr.bf16.mxu0 0
      %2925 = vmatpush1.bf16.msra.mxu0 0
      %2926 = vmatprep.subr.bf16.mxu0 0
      %2927 = vmatpush1.bf16.msra.mxu0 0
      %2928 = vmatprep.subr.bf16.mxu0 0
      %2929 = vmatpush1.bf16.msra.mxu0 0
      %2930 = vmatprep.subr.bf16.mxu0 0
      %2931 = vmatpush1.bf16.msra.mxu0 0
      %2932 = vmatprep.subr.bf16.mxu0 0
      %2933 = vmatpush1.bf16.msra.mxu0 0
      %2934 = vmatprep.subr.bf16.mxu0 0
      %2935 = vmatpush1.bf16.msra.mxu0 0
      %2936 = vmatprep.subr.bf16.mxu0 0
      %2937 = vmatpush1.bf16.msra.mxu0 0
      %2938 = vmatprep.subr.bf16.mxu0 0
      %2939 = vmatpush1.bf16.msra.mxu0 0
      %2940 = vmatprep.subr.bf16.mxu0 0
      %2941 = vmatpush1.bf16.msra.mxu0 0
      %2942 = vmatprep.mubr.bf16.mxu0 0
      %2943 = vmatmul.mubr.bf16.gmra.mrb[0].mxu0 %v2857
      %v2944 = vpop.f32.mrb[0].mxu0
      %v2945 = vadd.f32 0.0, %v2944
      %v2946 = vpop.f32.mrb[0].mxu0
      %v2947 = vpop.f32.mrb[0].mxu0
      %v2948 = vadd.f32 0.0, %v2947
      %v2949 = vpop.f32.mrb[0].mxu0
      %2950 = vmatprep.mubr.bf16.mxu0 0
      %2951 = vmatmul.mubr.bf16.gmra.mrb[0].mxu0 %v2860
      %v2952 = vpop.f32.mrb[0].mxu0
      %v2953 = vadd.f32 0.0, %v2952
      %v2954 = vpop.f32.mrb[0].mxu0
      %v2955 = vpop.f32.mrb[0].mxu0
      %v2956 = vadd.f32 0.0, %v2955
      %v2957 = vpop.f32.mrb[0].mxu0
      %2958 = vmatprep.mubr.bf16.mxu0 0
      %2959 = vmatmul.mubr.bf16.gmra.mrb[0].mxu0 %v2863
      %v2960 = vpop.f32.mrb[0].mxu0
      %v2961 = vadd.f32 0.0, %v2960
      %v2962 = vpop.f32.mrb[0].mxu0
      %v2963 = vpop.f32.mrb[0].mxu0
      %v2964 = vadd.f32 0.0, %v2963
      %v2965 = vpop.f32.mrb[0].mxu0
      %2966 = vmatprep.mubr.bf16.mxu0 0
      %2967 = vmatmul.mubr.bf16.gmra.mrb[0].mxu0 %v2866
      %v2968 = vpop.f32.mrb[0].mxu0
      %v2969 = vadd.f32 0.0, %v2968
      %v2970 = vpop.f32.mrb[0].mxu0
      %v2971 = vpop.f32.mrb[0].mxu0
      %v2972 = vadd.f32 0.0, %v2971
      %v2973 = vpop.f32.mrb[0].mxu0
      %2974 = vmatprep.mubr.bf16.mxu0 0
      %2975 = vmatmul.mubr.bf16.gmra.mrb[0].mxu0 %v2869
      %v2976 = vpop.f32.mrb[0].mxu0
      %v2977 = vadd.f32 0.0, %v2976
      %v2978 = vpop.f32.mrb[0].mxu0
      %v2979 = vpop.f32.mrb[0].mxu0
      %v2980 = vadd.f32 0.0, %v2979
      %v2981 = vpop.f32.mrb[0].mxu0
      %2982 = vmatprep.mubr.bf16.mxu0 0
      %2983 = vmatmul.mubr.bf16.gmra.mrb[0].mxu0 %v2872
      %v2984 = vpop.f32.mrb[0].mxu0
      %v2985 = vadd.f32 0.0, %v2984
      %v2986 = vpop.f32.mrb[0].mxu0
      %v2987 = vpop.f32.mrb[0].mxu0
      %v2988 = vadd.f32 0.0, %v2987
      %v2989 = vpop.f32.mrb[0].mxu0
      %2990 = vmatprep.mubr.bf16.mxu0 0
      %2991 = vmatmul.mubr.bf16.gmra.mrb[0].mxu0 %v2875
      %v2992 = vpop.f32.mrb[0].mxu0
      %v2993 = vadd.f32 0.0, %v2992
      %v2994 = vpop.f32.mrb[0].mxu0
      %v2995 = vpop.f32.mrb[0].mxu0
      %v2996 = vadd.f32 0.0, %v2995
      %v2997 = vpop.f32.mrb[0].mxu0
      %2998 = vmatprep.mubr.bf16.mxu0 0
      %2999 = vmatmul.mubr.bf16.gmra.mrb[0].mxu0 %v2878
      %v3000 = vpop.f32.mrb[0].mxu0
      %v3001 = vadd.f32 0.0, %v3000
      %v3002 = vpop.f32.mrb[0].mxu0
      %v3003 = vpop.f32.mrb[0].mxu0
      %v3004 = vadd.f32 0.0, %v3003
      %v3005 = vpop.f32.mrb[0].mxu0
      %3006 = vmatprep.mubr.bf16.mxu0 0
      %3007 = vmatmul.mubr.bf16.gmra.mrb[0].mxu0 %v2881
      %v3008 = vpop.f32.mrb[0].mxu0
      %v3009 = vadd.f32 0.0, %v3008
      %v3010 = vpop.f32.mrb[0].mxu0
      %v3011 = vpop.f32.mrb[0].mxu0
      %v3012 = vadd.f32 0.0, %v3011
      %v3013 = vpop.f32.mrb[0].mxu0
      %3014 = vmatprep.mubr.bf16.mxu0 0
      %3015 = vmatmul.mubr.bf16.gmra.mrb[0].mxu0 %v2884
      %v3016 = vpop.f32.mrb[0].mxu0
      %v3017 = vadd.f32 0.0, %v3016
      %v3018 = vpop.f32.mrb[0].mxu0
      %v3019 = vpop.f32.mrb[0].mxu0
      %v3020 = vadd.f32 0.0, %v3019
      %v3021 = vpop.f32.mrb[0].mxu0
      %3022 = vmatprep.mubr.bf16.mxu0 0
      %3023 = vmatmul.mubr.bf16.gmra.mrb[0].mxu0 %v2887
      %v3024 = vpop.f32.mrb[0].mxu0
      %v3025 = vadd.f32 0.0, %v3024
      %v3026 = vpop.f32.mrb[0].mxu0
      %v3027 = vpop.f32.mrb[0].mxu0
      %v3028 = vadd.f32 0.0, %v3027
      %v3029 = vpop.f32.mrb[0].mxu0
      %3030 = vmatprep.mubr.bf16.mxu0 0
      %3031 = vmatmul.mubr.bf16.gmra.mrb[0].mxu0 %v2890
      %v3032 = vpop.f32.mrb[0].mxu0
      %v3033 = vadd.f32 0.0, %v3032
      %v3034 = vpop.f32.mrb[0].mxu0
      %v3035 = vpop.f32.mrb[0].mxu0
      %v3036 = vadd.f32 0.0, %v3035
      %v3037 = vpop.f32.mrb[0].mxu0
      %3038 = vmatprep.mubr.bf16.mxu0 0
      %3039 = vmatmul.mubr.bf16.gmra.mrb[0].mxu0 %v2893
      %v3040 = vpop.f32.mrb[0].mxu0
      %v3041 = vadd.f32 0.0, %v3040
      %v3042 = vpop.f32.mrb[0].mxu0
      %v3043 = vpop.f32.mrb[0].mxu0
      %v3044 = vadd.f32 0.0, %v3043
      %v3045 = vpop.f32.mrb[0].mxu0
      %3046 = vmatprep.mubr.bf16.mxu0 0
      %3047 = vmatmul.mubr.bf16.gmra.mrb[0].mxu0 %v2896
      %v3048 = vpop.f32.mrb[0].mxu0
      %v3049 = vadd.f32 0.0, %v3048
      %v3050 = vpop.f32.mrb[0].mxu0
      %v3051 = vpop.f32.mrb[0].mxu0
      %v3052 = vadd.f32 0.0, %v3051
      %v3053 = vpop.f32.mrb[0].mxu0
      %3054 = vmatprep.mubr.bf16.mxu0 0
      %3055 = vmatmul.mubr.bf16.gmra.mrb[0].mxu0 %v2899
      %v3056 = vpop.f32.mrb[0].mxu0
      %v3057 = vadd.f32 0.0, %v3056
      %v3058 = vpop.f32.mrb[0].mxu0
      %v3059 = vpop.f32.mrb[0].mxu0
      %v3060 = vadd.f32 0.0, %v3059
      %v3061 = vpop.f32.mrb[0].mxu0
      %3062 = vmatprep.mubr.bf16.mxu0 0
      %3063 = vmatmul.mubr.bf16.gmra.mrb[0].mxu0 %v2902
      %v3064 = vpop.f32.mrb[0].mxu0
      %v3065 = vadd.f32 0.0, %v3064
      %v3066 = vpop.f32.mrb[0].mxu0
      %v3067 = vpop.f32.mrb[0].mxu0
      %v3068 = vadd.f32 0.0, %v3067
      %v3069 = vpop.f32.mrb[0].mxu0
      %3070 = vmatprep.mubr.bf16.mxu0 0
      %3071 = vmatmul.mubr.bf16.gmra.mrb[0].mxu0 %v2905
      %v3072 = vpop.f32.mrb[0].mxu0
      %v3073 = vadd.f32 0.0, %v3072
      %v3074 = vpop.f32.mrb[0].mxu0
      %v3075 = vpop.f32.mrb[0].mxu0
      %v3076 = vadd.f32 0.0, %v3075
      %v3077 = vpop.f32.mrb[0].mxu0
      %3078 = vmatprep.mubr.bf16.mxu0 0
      %3079 = vmatmul.mubr.bf16.gmra.mrb[0].mxu0 %v2908
      %v3080 = vpop.f32.mrb[0].mxu0
      %v3081 = vadd.f32 0.0, %v3080
      %v3082 = vpop.f32.mrb[0].mxu0
      %v3083 = vpop.f32.mrb[0].mxu0
      %v3084 = vadd.f32 0.0, %v3083
      %v3085 = vpop.f32.mrb[0].mxu0
      %3086 = vdwg.mxu0
      %v3087 = vadd.f32 %v2770, %v2945
      %v3088 = vadd.f32 %v2771, %v2948
      %v3089 = vadd.f32 %v2772, %v2953
      %v3090 = vadd.f32 %v2773, %v2956
      %v3091 = vadd.f32 %v2774, %v2961
      %v3092 = vadd.f32 %v2775, %v2964
      %v3093 = vadd.f32 %v2776, %v2969
      %v3094 = vadd.f32 %v2777, %v2972
      %v3095 = vadd.f32 %v2778, %v2977
      %v3096 = vadd.f32 %v2779, %v2980
      %v3097 = vadd.f32 %v2780, %v2985
      %v3098 = vadd.f32 %v2781, %v2988
      %v3099 = vadd.f32 %v2782, %v2993
      %v3100 = vadd.f32 %v2783, %v2996
      %v3101 = vadd.f32 %v2784, %v3001
      %v3102 = vadd.f32 %v2785, %v3004
      %v3103 = vadd.f32 %v2786, %v3009
      %v3104 = vadd.f32 %v2787, %v3012
      %v3105 = vadd.f32 %v2788, %v3017
      %v3106 = vadd.f32 %v2789, %v3020
      %v3107 = vadd.f32 %v2790, %v3025
      %v3108 = vadd.f32 %v2791, %v3028
      %v3109 = vadd.f32 %v2792, %v3033
      %v3110 = vadd.f32 %v2793, %v3036
      %v3111 = vadd.f32 %v2794, %v3041
      %v3112 = vadd.f32 %v2795, %v3044
      %v3113 = vadd.f32 %v2796, %v3049
      %v3114 = vadd.f32 %v2797, %v3052
      %v3115 = vadd.f32 %v2798, %v3057
      %v3116 = vadd.f32 %v2799, %v3060
      %v3117 = vadd.f32 %v2800, %v3065
      %v3118 = vadd.f32 %v2801, %v3068
      %v3119 = vadd.f32 %v2802, %v3073
      %v3120 = vadd.f32 %v2803, %v3076
      %v3121 = vadd.f32 %v2804, %v3081
      %v3122 = vadd.f32 %v2805, %v3084
      %v3123 = vld [vmem:[%s2] sm:$0x1]
      %v3125 = vlaneseq
      %v3126 = vshrl.u32 %v3125, 7
      %v3127 = vsub.s32 0, %v3126
      %v3128 = vrot.slane %v3123, %v3127
      %v3130 = vadd.f32 %v3087, %v3128
      %v3131 = vadd.f32 %v3088, %v3128
      %v3132 = vadd.f32 %v3089, %v3128
      %v3133 = vadd.f32 %v3090, %v3128
      %v3134 = vadd.f32 %v3091, %v3128
      %v3135 = vadd.f32 %v3092, %v3128
      %v3136 = vadd.f32 %v3093, %v3128
      %v3137 = vadd.f32 %v3094, %v3128
      %v3138 = vadd.f32 %v3095, %v3128
      %v3139 = vadd.f32 %v3096, %v3128
      %v3140 = vadd.f32 %v3097, %v3128
      %v3141 = vadd.f32 %v3098, %v3128
      %v3142 = vadd.f32 %v3099, %v3128
      %v3143 = vadd.f32 %v3100, %v3128
      %v3144 = vadd.f32 %v3101, %v3128
      %v3145 = vadd.f32 %v3102, %v3128
      %v3146 = vadd.f32 %v3103, %v3128
      %v3147 = vadd.f32 %v3104, %v3128
      %v3148 = vadd.f32 %v3105, %v3128
      %v3149 = vadd.f32 %v3106, %v3128
      %v3150 = vadd.f32 %v3107, %v3128
      %v3151 = vadd.f32 %v3108, %v3128
      %v3152 = vadd.f32 %v3109, %v3128
      %v3153 = vadd.f32 %v3110, %v3128
      %v3154 = vadd.f32 %v3111, %v3128
      %v3155 = vadd.f32 %v3112, %v3128
      %v3156 = vadd.f32 %v3113, %v3128
      %v3157 = vadd.f32 %v3114, %v3128
      %v3158 = vadd.f32 %v3115, %v3128
      %v3159 = vadd.f32 %v3116, %v3128
      %v3160 = vadd.f32 %v3117, %v3128
      %v3161 = vadd.f32 %v3118, %v3128
      %v3162 = vadd.f32 %v3119, %v3128
      %v3163 = vadd.f32 %v3120, %v3128
      %v3164 = vadd.f32 %v3121, %v3128
      %v3165 = vadd.f32 %v3122, %v3128
      %v3166 = vpack.c.bf16 %v3131, %v3130
      %v3167 = vpack.c.bf16 %v3133, %v3132
      %v3168 = vpack.c.bf16 %v3135, %v3134
      %v3169 = vpack.c.bf16 %v3137, %v3136
      %v3170 = vpack.c.bf16 %v3139, %v3138
      %v3171 = vpack.c.bf16 %v3141, %v3140
      %v3172 = vpack.c.bf16 %v3143, %v3142
      %v3173 = vpack.c.bf16 %v3145, %v3144
      %v3174 = vpack.c.bf16 %v3147, %v3146
      %v3175 = vpack.c.bf16 %v3149, %v3148
      %v3176 = vpack.c.bf16 %v3151, %v3150
      %v3177 = vpack.c.bf16 %v3153, %v3152
      %v3178 = vpack.c.bf16 %v3155, %v3154
      %v3179 = vpack.c.bf16 %v3157, %v3156
      %v3180 = vpack.c.bf16 %v3159, %v3158
      %v3181 = vpack.c.bf16 %v3161, %v3160
      %v3182 = vpack.c.bf16 %v3163, %v3162
      %v3183 = vpack.c.bf16 %v3165, %v3164
      %v3202 = vunpack.c.l.b16 %v3166
      %v3203 = vunpack.c.h.b16 %v3166
      %v3204 = vunpack.c.l.b16 %v3167
      %v3205 = vunpack.c.h.b16 %v3167
      %v3206 = vunpack.c.l.b16 %v3168
      %v3207 = vunpack.c.h.b16 %v3168
      %v3208 = vunpack.c.l.b16 %v3169
      %v3209 = vunpack.c.h.b16 %v3169
      %v3210 = vunpack.c.l.b16 %v3170
      %v3211 = vunpack.c.h.b16 %v3170
      %v3212 = vunpack.c.l.b16 %v3171
      %v3213 = vunpack.c.h.b16 %v3171
      %v3214 = vunpack.c.l.b16 %v3172
      %v3215 = vunpack.c.h.b16 %v3172
      %v3216 = vunpack.c.l.b16 %v3173
      %v3217 = vunpack.c.h.b16 %v3173
      %v3218 = vunpack.c.l.b16 %v3174
      %v3219 = vunpack.c.h.b16 %v3174
      %v3220 = vunpack.c.l.b16 %v3175
      %v3221 = vunpack.c.h.b16 %v3175
      %v3222 = vunpack.c.l.b16 %v3176
      %v3223 = vunpack.c.h.b16 %v3176
      %v3224 = vunpack.c.l.b16 %v3177
      %v3225 = vunpack.c.h.b16 %v3177
      %v3226 = vunpack.c.l.b16 %v3178
      %v3227 = vunpack.c.h.b16 %v3178
      %v3228 = vunpack.c.l.b16 %v3179
      %v3229 = vunpack.c.h.b16 %v3179
      %v3230 = vunpack.c.l.b16 %v3180
      %v3231 = vunpack.c.h.b16 %v3180
      %v3232 = vunpack.c.l.b16 %v3181
      %v3233 = vunpack.c.h.b16 %v3181
      %v3234 = vunpack.c.l.b16 %v3182
      %v3235 = vunpack.c.h.b16 %v3182
      %v3236 = vunpack.c.l.b16 %v3183
      %v3237 = vunpack.c.h.b16 %v3183
      %v3238 = vpack.c.b16 %v3202, %v3202
      %v3239 = vpack.c.b16 %v3203, %v3203
      %v3240 = vpack.c.b16 %v3204, %v3204
      %v3241 = vpack.c.b16 %v3205, %v3205
      %v3242 = vpack.c.b16 %v3206, %v3206
      %v3243 = vpack.c.b16 %v3207, %v3207
      %v3244 = vpack.c.b16 %v3208, %v3208
      %v3245 = vpack.c.b16 %v3209, %v3209
      %v3246 = vpack.c.b16 %v3210, %v3210
      %v3247 = vpack.c.b16 %v3211, %v3211
      %v3248 = vpack.c.b16 %v3212, %v3212
      %v3249 = vpack.c.b16 %v3213, %v3213
      %v3250 = vpack.c.b16 %v3214, %v3214
      %v3251 = vpack.c.b16 %v3215, %v3215
      %v3252 = vpack.c.b16 %v3216, %v3216
      %v3253 = vpack.c.b16 %v3217, %v3217
      %v3254 = vpack.c.b16 %v3218, %v3218
      %v3255 = vpack.c.b16 %v3219, %v3219
      %v3256 = vpack.c.b16 %v3220, %v3220
      %v3257 = vpack.c.b16 %v3221, %v3221
      %v3258 = vpack.c.b16 %v3222, %v3222
      %v3259 = vpack.c.b16 %v3223, %v3223
      %v3260 = vpack.c.b16 %v3224, %v3224
      %v3261 = vpack.c.b16 %v3225, %v3225
      %v3262 = vpack.c.b16 %v3226, %v3226
      %v3263 = vpack.c.b16 %v3227, %v3227
      %v3264 = vpack.c.b16 %v3228, %v3228
      %v3265 = vpack.c.b16 %v3229, %v3229
      %v3266 = vpack.c.b16 %v3230, %v3230
      %v3267 = vpack.c.b16 %v3231, %v3231
      %v3268 = vpack.c.b16 %v3232, %v3232
      %v3269 = vpack.c.b16 %v3233, %v3233
      %v3270 = vpack.c.b16 %v3234, %v3234
      %v3271 = vpack.c.b16 %v3235, %v3235
      %v3272 = vpack.c.b16 %v3236, %v3236
      %v3273 = vpack.c.b16 %v3237, %v3237
      %vm3310 = vcmask 60416
      %3311 = vst.msk [vmem:[%s170] sm:$0xf] %vm3310, %v3238
      %3312 = vst.msk [vmem:[%s170 + $0x4] sm:$0xf] %vm3310, %v3239
      %3313 = vst.msk [vmem:[%s170 + $0x8] sm:$0xf] %vm3310, %v3240
      %3314 = vst.msk [vmem:[%s170 + $0xc] sm:$0xf] %vm3310, %v3241
      %3315 = vst.msk [vmem:[%s170 + $0x10] sm:$0xf] %vm3310, %v3242
      %3316 = vst.msk [vmem:[%s170 + $0x14] sm:$0xf] %vm3310, %v3243
      %3317 = vst.msk [vmem:[%s170 + $0x18] sm:$0xf] %vm3310, %v3244
      %3318 = vst.msk [vmem:[%s170 + $0x1c] sm:$0xf] %vm3310, %v3245
      %3319 = vst.msk [vmem:[%s170 + $0x20] sm:$0xf] %vm3310, %v3246
      %3320 = vst.msk [vmem:[%s170 + $0x24] sm:$0xf] %vm3310, %v3247
      %3321 = vst.msk [vmem:[%s170 + $0x28] sm:$0xf] %vm3310, %v3248
      %3322 = vst.msk [vmem:[%s170 + $0x2c] sm:$0xf] %vm3310, %v3249
      %3323 = vst.msk [vmem:[%s170 + $0x30] sm:$0xf] %vm3310, %v3250
      %3324 = vst.msk [vmem:[%s170 + $0x34] sm:$0xf] %vm3310, %v3251
      %3325 = vst.msk [vmem:[%s170 + $0x38] sm:$0xf] %vm3310, %v3252
      %3326 = vst.msk [vmem:[%s170 + $0x3c] sm:$0xf] %vm3310, %v3253
      %3327 = vst.msk [vmem:[%s170 + $0x40] sm:$0xf] %vm3310, %v3254
      %3328 = vst.msk [vmem:[%s170 + $0x44] sm:$0xf] %vm3310, %v3255
      %3329 = vst.msk [vmem:[%s170 + $0x48] sm:$0xf] %vm3310, %v3256
      %3330 = vst.msk [vmem:[%s170 + $0x4c] sm:$0xf] %vm3310, %v3257
      %3331 = vst.msk [vmem:[%s170 + $0x50] sm:$0xf] %vm3310, %v3258
      %3332 = vst.msk [vmem:[%s170 + $0x54] sm:$0xf] %vm3310, %v3259
      %3333 = vst.msk [vmem:[%s170 + $0x58] sm:$0xf] %vm3310, %v3260
      %3334 = vst.msk [vmem:[%s170 + $0x5c] sm:$0xf] %vm3310, %v3261
      %3335 = vst.msk [vmem:[%s170 + $0x60] sm:$0xf] %vm3310, %v3262
      %3336 = vst.msk [vmem:[%s170 + $0x64] sm:$0xf] %vm3310, %v3263
      %3337 = vst.msk [vmem:[%s170 + $0x68] sm:$0xf] %vm3310, %v3264
      %3338 = vst.msk [vmem:[%s170 + $0x6c] sm:$0xf] %vm3310, %v3265
      %3339 = vst.msk [vmem:[%s170 + $0x70] sm:$0xf] %vm3310, %v3266
      %3340 = vst.msk [vmem:[%s170 + $0x74] sm:$0xf] %vm3310, %v3267
      %3341 = vst.msk [vmem:[%s170 + $0x78] sm:$0xf] %vm3310, %v3268
      %3342 = vst.msk [vmem:[%s170 + $0x7c] sm:$0xf] %vm3310, %v3269
      %3343 = vst.msk [vmem:[%s170 + $0x80] sm:$0xf] %vm3310, %v3270
      %3344 = vst.msk [vmem:[%s170 + $0x84] sm:$0xf] %vm3310, %v3271
      %3345 = vst.msk [vmem:[%s170 + $0x88] sm:$0xf] %vm3310, %v3272
      %3346 = vst.msk [vmem:[%s170 + $0x8c] sm:$0xf] %vm3310, %v3273
      %p3347 = scmp.lt.s32.totalorder %s14, 1
      %s3348 = scalar_select %p3347, %s14, 1
      %s3349 = smul.addr %s3348, 36
      %s3350 = smul.addr %s3349, 4
      %s3351 = scalar_lea.vmem %s3, %s3350
      // Predicated region
      $region33: #{densenet_forward.18} parent=31 // pred_check
        %p3352 = pneg %p100
      $region34: #{densenet_forward.18} parent=31 // pred_check_branch
        %3354 = sbr.rel (%p3352) target = $region36
      $region35: #{densenet_forward.18} parent=31 // pred_region
        _
      $region36: #{densenet_forward.18} parent=31 // pred_fallthru
        _
    $region32: #{densenet_forward.18} parent=5 // pred_fallthru
      _
    %p3355 = scmp.le.s32.totalorder 2, %s9
    // Predicated region
    $region37: #{densenet_forward.18} parent=5 // pred_check
      %p3356 = pneg %p3355
    $region38: #{densenet_forward.18} parent=5 // pred_check_branch
      %3358 = sbr.rel (%p3356) target = $region40
    $region39: #{densenet_forward.18} parent=5 // pred_region
      %s3359 = ssub.s32 %s9, 2
      // Predicated region
      $region41: #{densenet_forward.18} parent=39 // pred_check
        %p3360 = pneg %p106
      $region42: #{densenet_forward.18} parent=39 // pred_check_branch
        %3362 = sbr.rel (%p3360) target = $region44
      $region43: #{densenet_forward.18} parent=39 // pred_region
        %p3363 = scmp.lt.s32.totalorder %s15, 1
        %s3364 = scalar_select %p3363, %s15, 1
        %s3365 = smul.addr %s3364, 36
        %s3366 = smul.addr %s3365, 4
        %s3367 = scalar_lea.vmem %s3, %s3366
      $region44: #{densenet_forward.18} parent=39 // pred_fallthru
        _
    $region40: #{densenet_forward.18} parent=5 // pred_fallthru
      _
  $region6: #{densenet_forward.18} parent=0 // loop_footer
    %s13 = sadd.s32 1, %s9
  $region7: #{densenet_forward.18} parent=0 // loop_footer_branch
    %8 = sbr.rel target = $region3
  $region8: #{densenet_forward.18} parent=0 // loop_exit
    _

// kernel: densenet_forward.28
$region0: #{densenet_forward.28}
  #allocation0 [shape = 'u32[]', space=smem, size = 0x4, offset = 0x4, fixed_abs, tag = 'smem constant byte address 0x4 - core index']
  #allocation1 [shape = 'u32[144,128]{1,0:T(1,128)}', space=vmem, size = 0x12000, scoped, tag = 'internal scratch']
  %s0 = inlined_call_operand.vmem [shape: bf16[64,64], index: 0, kind: input, shape index: {}]
  %s1 = inlined_call_operand.vmem [shape: f32[1,64], index: 1, kind: input, shape index: {}]
  %s2 = inlined_call_operand.vmem [shape: f32[1,64], index: 2, kind: input, shape index: {}]
  %s3 = inlined_call_operand.vmem [shape: bf16[64,32], index: 3, kind: output, shape index: {}]
  %s4 = sld [smem:[#allocation0]]
  $region45: #{densenet_forward.28} parent=0
    _
  %s6 = ssub.s32 1, %s4
  %s7 = scalar_select 0, %s6, %s4
  loop: start=0, step=1, limit=6
  $region2: #{densenet_forward.28} parent=0 // loop_pre_header
    _
  $region3: #{densenet_forward.28} parent=0 // loop_header
    %s9 = sphi 0, %s13
    %p10 = scmp.ge.s32.totalorder %s9, 6
    %s19 = sphi 0, %s21
    %s22 = sphi 0, %s19
    %s23 = sphi 0, %s22
    %s39 = sphi 0, %s23
    %s43 = sphi 0, %s43
    %s45 = sphi 0, %s43
    %s46 = sphi 0, %s45
    %s60 = sphi 0, %s46
    %s64 = sphi 0, %s64
    %s66 = sphi 0, %s64
    %s67 = sphi 0, %s66
    %s81 = sphi 0, %s67
    %s87 = sphi 0, %s89
    %s90 = sphi 0, %s87
    %s91 = sphi 0, %s90
    %s107 = sphi 0, %s91
  $region4: #{densenet_forward.28} parent=0 // loop_header_branch
    %12 = sbr.rel (%p10) target = $region8
  $region5: #{densenet_forward.28} parent=0 // loop_body
    %s14 = ssub.s32 %s9, 1
    %s15 = ssub.s32 %s9, 2
    %s16 = sadd.s32 %s9, 1
    %s17 = ssub.s32 %s9, %s16
    %p18 = scmp.eq.s32.totalorder %s17, 0
    %s20 = sadd.s32 %s19, 1
    %s21 = scalar_select %p18, %s19, %s20
    %p24 = pneg %p18
    %p25 = scmp.eq.s32.totalorder %s9, 3
    %p26 = por %p24, %p25
    %p27 = scmp.ne.s32.totalorder %s19, %s22
    %p28 = scmp.eq.s32.totalorder %s9, 0
    %p29 = por %p27, %p28
    %p30 = scmp.ne.s32.totalorder %s19, %s22
    %p31 = scmp.eq.s32.totalorder %s14, 3
    %p32 = por %p30, %p31
    %p33 = scmp.ne.s32.totalorder %s22, %s23
    %p34 = scmp.eq.s32.totalorder %s14, 0
    %p35 = por %p33, %p34
    %p36 = scmp.ne.s32.totalorder %s22, %s23
    %p37 = scmp.eq.s32.totalorder %s15, 3
    %p38 = por %p36, %p37
    %p40 = scmp.ne.s32.totalorder %s23, %s39
    %p41 = scmp.eq.s32.totalorder %s15, 0
    %p42 = por %p40, %p41
    %s44 = sadd.s32 %s43, 1
    %p47 = scmp.eq.s32.totalorder %s9, 3
    %p48 = scmp.ne.s32.totalorder %s43, %s45
    %p49 = scmp.eq.s32.totalorder %s9, 0
    %p50 = por %p48, %p49
    %p51 = scmp.ne.s32.totalorder %s43, %s45
    %p52 = scmp.eq.s32.totalorder %s14, 3
    %p53 = por %p51, %p52
    %p54 = scmp.ne.s32.totalorder %s45, %s46
    %p55 = scmp.eq.s32.totalorder %s14, 0
    %p56 = por %p54, %p55
    %p57 = scmp.ne.s32.totalorder %s45, %s46
    %p58 = scmp.eq.s32.totalorder %s15, 3
    %p59 = por %p57, %p58
    %p61 = scmp.ne.s32.totalorder %s46, %s60
    %p62 = scmp.eq.s32.totalorder %s15, 0
    %p63 = por %p61, %p62
    %s65 = sadd.s32 %s64, 1
    %p68 = scmp.eq.s32.totalorder %s9, 3
    %p69 = scmp.ne.s32.totalorder %s64, %s66
    %p70 = scmp.eq.s32.totalorder %s9, 0
    %p71 = por %p69, %p70
    %p72 = scmp.ne.s32.totalorder %s64, %s66
    %p73 = scmp.eq.s32.totalorder %s14, 3
    %p74 = por %p72, %p73
    %p75 = scmp.ne.s32.totalorder %s66, %s67
    %p76 = scmp.eq.s32.totalorder %s14, 0
    %p77 = por %p75, %p76
    %p78 = scmp.ne.s32.totalorder %s66, %s67
    %p79 = scmp.eq.s32.totalorder %s15, 3
    %p80 = por %p78, %p79
    %p82 = scmp.ne.s32.totalorder %s67, %s81
    %p83 = scmp.eq.s32.totalorder %s15, 0
    %p84 = por %p82, %p83
    %s85 = ssub.s32 %s9, %s16
    %p86 = scmp.eq.s32.totalorder %s85, 0
    %s88 = sadd.s32 %s87, 1
    %s89 = scalar_select %p86, %s87, %s88
    %p92 = pneg %p86
    %p93 = scmp.eq.s32.totalorder %s9, 3
    %p94 = por %p92, %p93
    %p95 = scmp.ne.s32.totalorder %s87, %s90
    %p96 = scmp.eq.s32.totalorder %s9, 0
    %p97 = por %p95, %p96
    %p98 = scmp.ne.s32.totalorder %s87, %s90
    %p99 = scmp.eq.s32.totalorder %s14, 3
    %p100 = por %p98, %p99
    %p101 = scmp.ne.s32.totalorder %s90, %s91
    %p102 = scmp.eq.s32.totalorder %s14, 0
    %p103 = por %p101, %p102
    %p104 = scmp.ne.s32.totalorder %s90, %s91
    %p105 = scmp.eq.s32.totalorder %s15, 3
    %p106 = por %p104, %p105
    %p108 = scmp.ne.s32.totalorder %s91, %s107
    %p109 = scmp.eq.s32.totalorder %s15, 0
    %p110 = por %p108, %p109
    %p111 = scmp.le.s32.totalorder 1, %s9
    %p112 = scmp.lt.s32.totalorder %s9, 5
    %p113 = pnand %p111, %p112
    %p114 = pneg %p113
    // Predicated region
    $region9: #{densenet_forward.28} parent=5 // pred_check
      _
    $region10: #{densenet_forward.28} parent=5 // pred_check_branch
      %116 = sbr.rel (%p113) target = $region12
    $region11: #{densenet_forward.28} parent=5 // pred_region
      %s117 = ssub.s32 %s9, 1
      // Predicated region
      $region13: #{densenet_forward.28} parent=11 // pred_check
        %p118 = pneg %p56
      $region14: #{densenet_forward.28} parent=11 // pred_check_branch
        %120 = sbr.rel (%p118) target = $region16
      $region15: #{densenet_forward.28} parent=11 // pred_region
        _
      $region16: #{densenet_forward.28} parent=11 // pred_fallthru
        _
      // Predicated region
      $region17: #{densenet_forward.28} parent=11 // pred_check
        %p121 = pneg %p77
      $region18: #{densenet_forward.28} parent=11 // pred_check_branch
        %123 = sbr.rel (%p121) target = $region20
      $region19: #{densenet_forward.28} parent=11 // pred_region
        _
      $region20: #{densenet_forward.28} parent=11 // pred_fallthru
        _
    $region12: #{densenet_forward.28} parent=5 // pred_fallthru
      _
    %p124 = scmp.lt.s32.totalorder %s9, 4
    // Predicated region
    $region21: #{densenet_forward.28} parent=5 // pred_check
      %p125 = pneg %p124
    $region22: #{densenet_forward.28} parent=5 // pred_check_branch
      %127 = sbr.rel (%p125) target = $region24
    $region23: #{densenet_forward.28} parent=5 // pred_region
      // Predicated region
      $region25: #{densenet_forward.28} parent=23 // pred_check
        %p128 = pneg %p29
      $region26: #{densenet_forward.28} parent=23 // pred_check_branch
        %130 = sbr.rel (%p128) target = $region28
      $region27: #{densenet_forward.28} parent=23 // pred_region
        %s131 = smul.u32 2, %s9
        %p132 = scmp.lt.s32.totalorder %s131, 7
        %s133 = scalar_select %p132, %s131, 7
        %s134 = smul.addr %s133, 4
        %s135 = scalar_lea.vmem %s0, %s134
        %s136 = smul.u32 2, %s9
      $region28: #{densenet_forward.28} parent=23 // pred_fallthru
        _
    $region24: #{densenet_forward.28} parent=5 // pred_fallthru
      _
    %p137 = scmp.le.s32.totalorder 1, %s9
    %p138 = scmp.lt.s32.totalorder %s9, 5
    %p139 = pnand %p137, %p138
    %p140 = pneg %p139
    // Predicated region
    $region29: #{densenet_forward.28} parent=5 // pred_check
      _
    $region30: #{densenet_forward.28} parent=5 // pred_check_branch
      %142 = sbr.rel (%p139) target = $region32
    $region31: #{densenet_forward.28} parent=5 // pred_region
      %s143 = ssub.s32 %s9, 1
      %s144 = smul.u32 2, %s14
      %p145 = scmp.lt.s32.totalorder %s144, 7
      %s146 = scalar_select %p145, %s144, 7
      %s147 = smul.addr %s146, 4
      %s148 = scalar_lea.vmem %s0, %s147
      %p149 = pneg %p35
      %p150 = pneg %p32
      %p151 = pneg %p56
      %p152 = pneg %p53
      %p153 = pneg %p77
      %p154 = pneg %p74
      %p155 = pneg %p103
      %p156 = pneg %p100
      %s157 = smul.u32 2, %s14
      %p158 = scmp.lt.s32.totalorder %s157, 7
      %s159 = scalar_select %p158, %s157, 7
      %s160 = smul.addr %s159, 4
      %s161 = scalar_lea.vmem %s3, %s160
      %s162 = smul.u32 2, %s14
      %p163 = scmp.lt.s32.totalorder %s162, 7
      %s164 = scalar_select %p163, %s162, 7
      %s165 = smul.addr %s164, 4
      %s166 = scalar_lea.vmem %s0, %s165
      %s167 = smul.u32 2, %s14
      %s168 = smul.u32 2, %s14
      %p169 = scmp.lt.s32.totalorder %s168, 7
      %s170 = scalar_select %p169, %s168, 7
      %s171 = smul.addr %s170, 4
      %s172 = scalar_lea.vmem %s3, %s171
      %s173 = smul.u32 2, %s14
      %v174 = vld [vmem:[%s166] sm:$0xf]
      %v175 = vld [vmem:[%s166 + $0x4] sm:$0xf]
      %v176 = vunpack.c.l.bf16 %v174
      %v177 = vunpack.c.l.bf16 %v175
      %v178 = vld [vmem:[%s1] sm:$0x1]
      %v180 = vlaneseq
      %v181 = vshrl.u32 %v180, 7
      %v182 = vsub.s32 0, %v181
      %v183 = vrot.slane %v178, %v182
      %v185 = vmul.f32 %v176, %v183
      %v186 = vmul.f32 %v177, %v183
      %v187 = vld [vmem:[%s2] sm:$0x1]
      %v189 = vlaneseq
      %v190 = vshrl.u32 %v189, 7
      %v191 = vsub.s32 0, %v190
      %v192 = vrot.slane %v187, %v191
      %v194 = vadd.f32 %v185, %v192
      %v195 = vadd.f32 %v186, %v192
      %v196 = vmax.f32 %v194, 0.0
      %v197 = vmax.f32 %v195, 0.0
      %200 = vrot.lane.b32.xlu0 %v196, 96
      %v201 = vpop.permute.xlu0 %200
      %202 = vrot.lane.b32.xlu0 %v197, 96
      %v203 = vpop.permute.xlu0 %202
      %v206 = vadd.f32 %v196, %v201
      %v207 = vadd.f32 %v197, %v203
      %v208 = vmul.f32 %v206, 0.5
      %v209 = vmul.f32 %v207, 0.5
      %v210 = vpack.c.bf16 %v209, %v208
      %v212 = vunpack.c.l.b16 %v210
      %v213 = vunpack.c.h.b16 %v210
      %v214 = vpack.c.b16 %v212, %v212
      %v215 = vpack.c.b16 %v213, %v213
      %vm218 = vcmask 257024
      %219 = vst.msk [vmem:[%s172] sm:$0xf] %vm218, %v214
      %220 = vst.msk [vmem:[%s172 + $0x4] sm:$0xf] %vm218, %v215
      %s221 = smul.u32 2, %s14
      %p222 = scmp.lt.s32.totalorder %s221, 7
      %s223 = scalar_select %p222, %s221, 7
      %s224 = smul.addr %s223, 4
      %s225 = scalar_lea.vmem %s3, %s224
      // Predicated region
      $region33: #{densenet_forward.28} parent=31 // pred_check
        %p226 = pneg %p100
      $region34: #{densenet_forward.28} parent=31 // pred_check_branch
        %228 = sbr.rel (%p226) target = $region36
      $region35: #{densenet_forward.28} parent=31 // pred_region
        %s229 = smul.u32 2, %s14
      $region36: #{densenet_forward.28} parent=31 // pred_fallthru
        _
    $region32: #{densenet_forward.28} parent=5 // pred_fallthru
      _
    %p230 = scmp.le.s32.totalorder 2, %s9
    // Predicated region
    $region37: #{densenet_forward.28} parent=5 // pred_check
      %p231 = pneg %p230
    $region38: #{densenet_forward.28} parent=5 // pred_check_branch
      %233 = sbr.rel (%p231) target = $region40
    $region39: #{densenet_forward.28} parent=5 // pred_region
      %s234 = ssub.s32 %s9, 2
      // Predicated region
      $region41: #{densenet_forward.28} parent=39 // pred_check
        %p235 = pneg %p106
      $region42: #{densenet_forward.28} parent=39 // pred_check_branch
        %237 = sbr.rel (%p235) target = $region44
      $region43: #{densenet_forward.28} parent=39 // pred_region
        %s238 = smul.u32 2, %s15
        %p239 = scmp.lt.s32.totalorder %s238, 7
        %s240 = scalar_select %p239, %s238, 7
        %s241 = smul.addr %s240, 4
        %s242 = scalar_lea.vmem %s3, %s241
      $region44: #{densenet_forward.28} parent=39 // pred_fallthru
        _
    $region40: #{densenet_forward.28} parent=5 // pred_fallthru
      _
  $region6: #{densenet_forward.28} parent=0 // loop_footer
    %s13 = sadd.s32 1, %s9
  $region7: #{densenet_forward.28} parent=0 // loop_footer_branch
    %8 = sbr.rel target = $region3
  $region8: #{densenet_forward.28} parent=0 // loop_exit
    _

// kernel: densenet_forward.25
$region0: #{densenet_forward.25}
  #allocation0 [shape = 'u32[]', space=smem, size = 0x4, offset = 0x4, fixed_abs, tag = 'smem constant byte address 0x4 - core index']
  #allocation1 [shape = 'u32[144,128]{1,0:T(1,128)}', space=vmem, size = 0x12000, scoped, tag = 'internal scratch']
  %s0 = inlined_call_operand.vmem [shape: bf16[2,122,32], index: 0, kind: input, shape index: {}]
  %s1 = inlined_call_operand.vmem [shape: bf16[288,8], index: 1, kind: input, shape index: {}]
  %s2 = inlined_call_operand.vmem [shape: f32[1,8], index: 2, kind: input, shape index: {}]
  %s3 = inlined_call_operand.vmem [shape: bf16[2,80,8], index: 3, kind: output, shape index: {}]
  %s4 = sld [smem:[#allocation0]]
  $region45: #{densenet_forward.25} parent=0
    _
  %s6 = ssub.s32 1, %s4
  %s7 = scalar_select 0, %s6, %s4
  loop: start=0, step=1, limit=4
  $region2: #{densenet_forward.25} parent=0 // loop_pre_header
    _
  $region3: #{densenet_forward.25} parent=0 // loop_header
    %s9 = sphi 0, %s13
    %p10 = scmp.ge.s32.totalorder %s9, 4
    %s19 = sphi 0, %s21
    %s22 = sphi 0, %s19
    %s23 = sphi 0, %s22
    %s39 = sphi 0, %s23
    %s43 = sphi 0, %s43
    %s45 = sphi 0, %s43
    %s46 = sphi 0, %s45
    %s60 = sphi 0, %s46
    %s64 = sphi 0, %s64
    %s66 = sphi 0, %s64
    %s67 = sphi 0, %s66
    %s81 = sphi 0, %s67
    %s87 = sphi 0, %s89
    %s90 = sphi 0, %s87
    %s91 = sphi 0, %s90
    %s107 = sphi 0, %s91
  $region4: #{densenet_forward.25} parent=0 // loop_header_branch
    %12 = sbr.rel (%p10) target = $region8
  $region5: #{densenet_forward.25} parent=0 // loop_body
    %s14 = ssub.s32 %s9, 1
    %s15 = ssub.s32 %s9, 2
    %s16 = sadd.s32 %s9, 1
    %s17 = ssub.s32 %s9, %s16
    %p18 = scmp.eq.s32.totalorder %s17, 0
    %s20 = sadd.s32 %s19, 1
    %s21 = scalar_select %p18, %s19, %s20
    %p24 = pneg %p18
    %p25 = scmp.eq.s32.totalorder %s9, 1
    %p26 = por %p24, %p25
    %p27 = scmp.ne.s32.totalorder %s19, %s22
    %p28 = scmp.eq.s32.totalorder %s9, 0
    %p29 = por %p27, %p28
    %p30 = scmp.ne.s32.totalorder %s19, %s22
    %p31 = scmp.eq.s32.totalorder %s14, 1
    %p32 = por %p30, %p31
    %p33 = scmp.ne.s32.totalorder %s22, %s23
    %p34 = scmp.eq.s32.totalorder %s14, 0
    %p35 = por %p33, %p34
    %p36 = scmp.ne.s32.totalorder %s22, %s23
    %p37 = scmp.eq.s32.totalorder %s15, 1
    %p38 = por %p36, %p37
    %p40 = scmp.ne.s32.totalorder %s23, %s39
    %p41 = scmp.eq.s32.totalorder %s15, 0
    %p42 = por %p40, %p41
    %s44 = sadd.s32 %s43, 1
    %p47 = scmp.eq.s32.totalorder %s9, 1
    %p48 = scmp.ne.s32.totalorder %s43, %s45
    %p49 = scmp.eq.s32.totalorder %s9, 0
    %p50 = por %p48, %p49
    %p51 = scmp.ne.s32.totalorder %s43, %s45
    %p52 = scmp.eq.s32.totalorder %s14, 1
    %p53 = por %p51, %p52
    %p54 = scmp.ne.s32.totalorder %s45, %s46
    %p55 = scmp.eq.s32.totalorder %s14, 0
    %p56 = por %p54, %p55
    %p57 = scmp.ne.s32.totalorder %s45, %s46
    %p58 = scmp.eq.s32.totalorder %s15, 1
    %p59 = por %p57, %p58
    %p61 = scmp.ne.s32.totalorder %s46, %s60
    %p62 = scmp.eq.s32.totalorder %s15, 0
    %p63 = por %p61, %p62
    %s65 = sadd.s32 %s64, 1
    %p68 = scmp.eq.s32.totalorder %s9, 1
    %p69 = scmp.ne.s32.totalorder %s64, %s66
    %p70 = scmp.eq.s32.totalorder %s9, 0
    %p71 = por %p69, %p70
    %p72 = scmp.ne.s32.totalorder %s64, %s66
    %p73 = scmp.eq.s32.totalorder %s14, 1
    %p74 = por %p72, %p73
    %p75 = scmp.ne.s32.totalorder %s66, %s67
    %p76 = scmp.eq.s32.totalorder %s14, 0
    %p77 = por %p75, %p76
    %p78 = scmp.ne.s32.totalorder %s66, %s67
    %p79 = scmp.eq.s32.totalorder %s15, 1
    %p80 = por %p78, %p79
    %p82 = scmp.ne.s32.totalorder %s67, %s81
    %p83 = scmp.eq.s32.totalorder %s15, 0
    %p84 = por %p82, %p83
    %s85 = ssub.s32 %s9, %s16
    %p86 = scmp.eq.s32.totalorder %s85, 0
    %s88 = sadd.s32 %s87, 1
    %s89 = scalar_select %p86, %s87, %s88
    %p92 = pneg %p86
    %p93 = scmp.eq.s32.totalorder %s9, 1
    %p94 = por %p92, %p93
    %p95 = scmp.ne.s32.totalorder %s87, %s90
    %p96 = scmp.eq.s32.totalorder %s9, 0
    %p97 = por %p95, %p96
    %p98 = scmp.ne.s32.totalorder %s87, %s90
    %p99 = scmp.eq.s32.totalorder %s14, 1
    %p100 = por %p98, %p99
    %p101 = scmp.ne.s32.totalorder %s90, %s91
    %p102 = scmp.eq.s32.totalorder %s14, 0
    %p103 = por %p101, %p102
    %p104 = scmp.ne.s32.totalorder %s90, %s91
    %p105 = scmp.eq.s32.totalorder %s15, 1
    %p106 = por %p104, %p105
    %p108 = scmp.ne.s32.totalorder %s91, %s107
    %p109 = scmp.eq.s32.totalorder %s15, 0
    %p110 = por %p108, %p109
    %p111 = scmp.le.s32.totalorder 1, %s9
    %p112 = scmp.lt.s32.totalorder %s9, 3
    %p113 = pnand %p111, %p112
    %p114 = pneg %p113
    // Predicated region
    $region9: #{densenet_forward.25} parent=5 // pred_check
      _
    $region10: #{densenet_forward.25} parent=5 // pred_check_branch
      %116 = sbr.rel (%p113) target = $region12
    $region11: #{densenet_forward.25} parent=5 // pred_region
      %s117 = ssub.s32 %s9, 1
      // Predicated region
      $region13: #{densenet_forward.25} parent=11 // pred_check
        %p118 = pneg %p56
      $region14: #{densenet_forward.25} parent=11 // pred_check_branch
        %120 = sbr.rel (%p118) target = $region16
      $region15: #{densenet_forward.25} parent=11 // pred_region
        _
      $region16: #{densenet_forward.25} parent=11 // pred_fallthru
        _
      // Predicated region
      $region17: #{densenet_forward.25} parent=11 // pred_check
        %p121 = pneg %p77
      $region18: #{densenet_forward.25} parent=11 // pred_check_branch
        %123 = sbr.rel (%p121) target = $region20
      $region19: #{densenet_forward.25} parent=11 // pred_region
        _
      $region20: #{densenet_forward.25} parent=11 // pred_fallthru
        _
    $region12: #{densenet_forward.25} parent=5 // pred_fallthru
      _
    %p124 = scmp.lt.s32.totalorder %s9, 2
    // Predicated region
    $region21: #{densenet_forward.25} parent=5 // pred_check
      %p125 = pneg %p124
    $region22: #{densenet_forward.25} parent=5 // pred_check_branch
      %127 = sbr.rel (%p125) target = $region24
    $region23: #{densenet_forward.25} parent=5 // pred_region
      // Predicated region
      $region25: #{densenet_forward.25} parent=23 // pred_check
        %p128 = pneg %p29
      $region26: #{densenet_forward.25} parent=23 // pred_check_branch
        %130 = sbr.rel (%p128) target = $region28
      $region27: #{densenet_forward.25} parent=23 // pred_region
        %p131 = scmp.lt.s32.totalorder %s9, 1
        %s132 = scalar_select %p131, %s9, 1
        %s133 = smul.addr %s132, 16
        %s134 = smul.addr %s133, 4
        %s135 = scalar_lea.vmem %s0, %s134
      $region28: #{densenet_forward.25} parent=23 // pred_fallthru
        _
    $region24: #{densenet_forward.25} parent=5 // pred_fallthru
      _
    %p136 = scmp.le.s32.totalorder 1, %s9
    %p137 = scmp.lt.s32.totalorder %s9, 3
    %p138 = pnand %p136, %p137
    %p139 = pneg %p138
    // Predicated region
    $region29: #{densenet_forward.25} parent=5 // pred_check
      _
    $region30: #{densenet_forward.25} parent=5 // pred_check_branch
      %141 = sbr.rel (%p138) target = $region32
    $region31: #{densenet_forward.25} parent=5 // pred_region
      %s142 = ssub.s32 %s9, 1
      %p143 = scmp.lt.s32.totalorder %s14, 1
      %s144 = scalar_select %p143, %s14, 1
      %s145 = smul.addr %s144, 16
      %s146 = smul.addr %s145, 4
      %s147 = scalar_lea.vmem %s0, %s146
      %p148 = pneg %p35
      %p149 = pneg %p32
      %p150 = pneg %p56
      %p151 = pneg %p53
      %p152 = pneg %p77
      %p153 = pneg %p74
      %p154 = pneg %p103
      %p155 = pneg %p100
      %p156 = scmp.lt.s32.totalorder %s14, 1
      %s157 = scalar_select %p156, %s14, 1
      %s158 = smul.addr %s157, 10
      %s159 = smul.addr %s158, 4
      %s160 = scalar_lea.vmem %s3, %s159
      %p161 = scmp.lt.s32.totalorder %s14, 1
      %s162 = scalar_select %p161, %s14, 1
      %s163 = smul.addr %s162, 16
      %s164 = smul.addr %s163, 4
      %s165 = scalar_lea.vmem %s0, %s164
      %p166 = scmp.lt.s32.totalorder %s14, 1
      %s167 = scalar_select %p166, %s14, 1
      %s168 = smul.addr %s167, 10
      %s169 = smul.addr %s168, 4
      %s170 = scalar_lea.vmem %s3, %s169
      %v172 = vld [vmem:[%s165] sm:$0xf]
      %v173 = vld [vmem:[%s165 + $0x4] sm:$0xf]
      %v174 = vld [vmem:[%s165 + $0x8] sm:$0xf]
      %v175 = vld [vmem:[%s165 + $0xc] sm:$0xf]
      %v176 = vld [vmem:[%s165 + $0x10] sm:$0xf]
      %v177 = vld [vmem:[%s165 + $0x14] sm:$0xf]
      %v178 = vld [vmem:[%s165 + $0x18] sm:$0xf]
      %v179 = vld [vmem:[%s165 + $0x1c] sm:$0xf]
      %v180 = vld [vmem:[%s165 + $0x20] sm:$0xf]
      %v181 = vld [vmem:[%s165 + $0x24] sm:$0xf]
      %v182 = vld [vmem:[%s165 + $0x28] sm:$0xf]
      %v183 = vld [vmem:[%s165 + $0x2c] sm:$0xf]
      %v184 = vld [vmem:[%s165 + $0x30] sm:$0xf]
      %v185 = vld [vmem:[%s1] sm:$0xf]
      %v186 = vld [vmem:[%s1 + $0x4] sm:$0xf]
      %v187 = vld [vmem:[%s1 + $0x8] sm:$0xf]
      %v188 = vld [vmem:[%s1 + $0xc] sm:$0xf]
      %v189 = vld [vmem:[%s1 + $0x10] sm:$0xf]
      %v190 = vld [vmem:[%s1 + $0x14] sm:$0xf]
      %v191 = vld [vmem:[%s1 + $0x18] sm:$0xf]
      %v192 = vld [vmem:[%s1 + $0x1c] sm:$0xf]
      %v193 = vld [vmem:[%s1 + $0x20] sm:$0xf]
      %v194 = vld [vmem:[%s1 + $0x24] sm:$0xf]
      %v195 = vld [vmem:[%s1 + $0x28] sm:$0xf]
      %v196 = vld [vmem:[%s1 + $0x2c] sm:$0xf]
      %v197 = vld [vmem:[%s1 + $0x30] sm:$0xf]
      %v198 = vld [vmem:[%s1 + $0x34] sm:$0xf]
      %v199 = vld [vmem:[%s1 + $0x38] sm:$0xf]
      %v200 = vld [vmem:[%s1 + $0x3c] sm:$0xf]
      %v201 = vld [vmem:[%s1 + $0x40] sm:$0xf]
      %v202 = vld [vmem:[%s1 + $0x44] sm:$0xf]
      %v203 = vld [vmem:[%s1 + $0x48] sm:$0xf]
      %v204 = vld [vmem:[%s1 + $0x4c] sm:$0xf]
      %v205 = vld [vmem:[%s1 + $0x50] sm:$0xf]
      %v206 = vld [vmem:[%s1 + $0x54] sm:$0xf]
      %v207 = vld [vmem:[%s1 + $0x58] sm:$0xf]
      %v208 = vld [vmem:[%s1 + $0x5c] sm:$0xf]
      %v209 = vld [vmem:[%s1 + $0x60] sm:$0xf]
      %v210 = vld [vmem:[%s1 + $0x64] sm:$0xf]
      %v211 = vld [vmem:[%s1 + $0x68] sm:$0xf]
      %v212 = vld [vmem:[%s1 + $0x6c] sm:$0xf]
      %v213 = vld [vmem:[%s1 + $0x70] sm:$0xf]
      %v214 = vld [vmem:[%s1 + $0x74] sm:$0xf]
      %v215 = vld [vmem:[%s1 + $0x78] sm:$0xf]
      %v216 = vld [vmem:[%s1 + $0x7c] sm:$0xf]
      %v217 = vld [vmem:[%s1 + $0x80] sm:$0xf]
      %v218 = vld [vmem:[%s1 + $0x84] sm:$0xf]
      %v219 = vld [vmem:[%s1 + $0x88] sm:$0xf]
      %v220 = vld [vmem:[%s1 + $0x8c] sm:$0xf]
      %v232 = vunpack.c.l.b16 %v172
      %v233 = vunpack.c.l.b16 %v173
      %v234 = vunpack.c.l.b16 %v174
      %v235 = vunpack.c.l.b16 %v175
      %v236 = vunpack.c.l.b16 %v176
      %v237 = vunpack.c.l.b16 %v177
      %v238 = vunpack.c.l.b16 %v178
      %v239 = vunpack.c.l.b16 %v179
      %v240 = vunpack.c.l.b16 %v180
      %v241 = vunpack.c.l.b16 %v181
      %v242 = vunpack.c.l.b16 %v182
      %v243 = vpack.c.b16 %v233, %v232
      %v244 = vpack.c.b16 %v235, %v234
      %v245 = vpack.c.b16 %v237, %v236
      %v246 = vpack.c.b16 %v239, %v238
      %v247 = vpack.c.b16 %v241, %v240
      %v248 = vpack.c.b16 %v242, %v242
      %vm249 = vsmask.f32 7424
      %v251 = vshrl.u32 %v243, 16
      %v253 = vshll.u32 %v243, 16
      %v255 = vrot.slane %v253, 1
      %v256 = vor.u32 %v251, %v255
      %v258 = vshll.u32 %v244, 16
      %v260 = vrot.slane %v258, 1
      %v261 = vsel %vm249, %v256, %v260
      %v262 = vshrl.u32 %v244, 16
      %v264 = vor.u32 %v262, %v260
      %v266 = vshll.u32 %v245, 16
      %v268 = vrot.slane %v266, 1
      %v269 = vsel %vm249, %v264, %v268
      %v270 = vshrl.u32 %v245, 16
      %v272 = vor.u32 %v270, %v268
      %v274 = vshll.u32 %v246, 16
      %v276 = vrot.slane %v274, 1
      %v277 = vsel %vm249, %v272, %v276
      %v278 = vshrl.u32 %v246, 16
      %v280 = vor.u32 %v278, %v276
      %v282 = vshll.u32 %v247, 16
      %v284 = vrot.slane %v282, 1
      %v285 = vsel %vm249, %v280, %v284
      %v286 = vshrl.u32 %v247, 16
      %v288 = vor.u32 %v286, %v284
      %v290 = vshll.u32 %v248, 16
      %v292 = vrot.slane %v290, 1
      %v293 = vsel %vm249, %v288, %v292
      %v298 = vunpack.c.l.b16 %v189
      %v299 = vunpack.c.l.b16 %v190
      %v300 = vunpack.c.l.b16 %v191
      %v301 = vunpack.c.l.b16 %v192
      %v302 = vpack.c.b16 %v299, %v298
      %v303 = vpack.c.b16 %v301, %v300
      %vm306 = vcmask 261120
      %v308 = vsel %vm306, %v261, 0
      %v311 = vsel %vm306, %v269, 0
      %v314 = vsel %vm306, %v277, 0
      %v317 = vsel %vm306, %v285, 0
      %v320 = vsel %vm306, %v293, 0
      %322 = vmatprep.subr.bf16.mxu0 0
      %323 = vmatpush1.bf16.msra.mxu0 %v302
      %324 = vmatprep.subr.bf16.mxu0 0
      %325 = vmatpush1.bf16.msra.mxu0 %v303
      %326 = vmatprep.subr.bf16.mxu0 0
      %327 = vmatpush1.bf16.msra.mxu0 0
      %328 = vmatprep.subr.bf16.mxu0 0
      %329 = vmatpush1.bf16.msra.mxu0 0
      %330 = vmatprep.subr.bf16.mxu0 0
      %331 = vmatpush1.bf16.msra.mxu0 0
      %332 = vmatprep.subr.bf16.mxu0 0
      %333 = vmatpush1.bf16.msra.mxu0 0
      %334 = vmatprep.subr.bf16.mxu0 0
      %335 = vmatpush1.bf16.msra.mxu0 0
      %336 = vmatprep.subr.bf16.mxu0 0
      %337 = vmatpush1.bf16.msra.mxu0 0
      %338 = vmatprep.subr.bf16.mxu0 0
      %339 = vmatpush1.bf16.msra.mxu0 0
      %340 = vmatprep.subr.bf16.mxu0 0
      %341 = vmatpush1.bf16.msra.mxu0 0
      %342 = vmatprep.subr.bf16.mxu0 0
      %343 = vmatpush1.bf16.msra.mxu0 0
      %344 = vmatprep.subr.bf16.mxu0 0
      %345 = vmatpush1.bf16.msra.mxu0 0
      %346 = vmatprep.subr.bf16.mxu0 0
      %347 = vmatpush1.bf16.msra.mxu0 0
      %348 = vmatprep.subr.bf16.mxu0 0
      %349 = vmatpush1.bf16.msra.mxu0 0
      %350 = vmatprep.subr.bf16.mxu0 0
      %351 = vmatpush1.bf16.msra.mxu0 0
      %352 = vmatprep.subr.bf16.mxu0 0
      %353 = vmatpush1.bf16.msra.mxu0 0
      %354 = vmatprep.mubr.bf16.mxu0 0
      %355 = vmatmul.mubr.bf16.gmra.mrb[0].mxu0 %v308
      %v356 = vpop.f32.mrb[0].mxu0
      %v357 = vadd.f32 0.0, %v356
      %v358 = vpop.f32.mrb[0].mxu0
      %v359 = vpop.f32.mrb[0].mxu0
      %v360 = vadd.f32 0.0, %v359
      %v361 = vpop.f32.mrb[0].mxu0
      %362 = vmatprep.mubr.bf16.mxu0 0
      %363 = vmatmul.mubr.bf16.gmra.mrb[0].mxu0 %v311
      %v364 = vpop.f32.mrb[0].mxu0
      %v365 = vadd.f32 0.0, %v364
      %v366 = vpop.f32.mrb[0].mxu0
      %v367 = vpop.f32.mrb[0].mxu0
      %v368 = vadd.f32 0.0, %v367
      %v369 = vpop.f32.mrb[0].mxu0
      %370 = vmatprep.mubr.bf16.mxu0 0
      %371 = vmatmul.mubr.bf16.gmra.mrb[0].mxu0 %v314
      %v372 = vpop.f32.mrb[0].mxu0
      %v373 = vadd.f32 0.0, %v372
      %v374 = vpop.f32.mrb[0].mxu0
      %v375 = vpop.f32.mrb[0].mxu0
      %v376 = vadd.f32 0.0, %v375
      %v377 = vpop.f32.mrb[0].mxu0
      %378 = vmatprep.mubr.bf16.mxu0 0
      %379 = vmatmul.mubr.bf16.gmra.mrb[0].mxu0 %v317
      %v380 = vpop.f32.mrb[0].mxu0
      %v381 = vadd.f32 0.0, %v380
      %v382 = vpop.f32.mrb[0].mxu0
      %v383 = vpop.f32.mrb[0].mxu0
      %v384 = vadd.f32 0.0, %v383
      %v385 = vpop.f32.mrb[0].mxu0
      %386 = vmatprep.mubr.bf16.mxu0 0
      %387 = vmatmul.mubr.bf16.gmra.mrb[0].mxu0 %v320
      %v388 = vpop.f32.mrb[0].mxu0
      %v389 = vadd.f32 0.0, %v388
      %v390 = vpop.f32.mrb[0].mxu0
      %v391 = vpop.f32.mrb[0].mxu0
      %v392 = vadd.f32 0.0, %v391
      %v393 = vpop.f32.mrb[0].mxu0
      %394 = vdwg.mxu0
      %v399 = vunpack.c.l.b16 %v185
      %v400 = vunpack.c.l.b16 %v186
      %v401 = vunpack.c.l.b16 %v187
      %v402 = vunpack.c.l.b16 %v188
      %v403 = vpack.c.b16 %v400, %v399
      %v404 = vpack.c.b16 %v402, %v401
      %v407 = vsel %vm306, %v243, 0
      %v409 = vsel %vm306, %v244, 0
      %v411 = vsel %vm306, %v245, 0
      %v413 = vsel %vm306, %v246, 0
      %v415 = vsel %vm306, %v247, 0
      %417 = vmatprep.subr.bf16.mxu0 0
      %418 = vmatpush1.bf16.msra.mxu0 %v403
      %419 = vmatprep.subr.bf16.mxu0 0
      %420 = vmatpush1.bf16.msra.mxu0 %v404
      %421 = vmatprep.subr.bf16.mxu0 0
      %422 = vmatpush1.bf16.msra.mxu0 0
      %423 = vmatprep.subr.bf16.mxu0 0
      %424 = vmatpush1.bf16.msra.mxu0 0
      %425 = vmatprep.subr.bf16.mxu0 0
      %426 = vmatpush1.bf16.msra.mxu0 0
      %427 = vmatprep.subr.bf16.mxu0 0
      %428 = vmatpush1.bf16.msra.mxu0 0
      %429 = vmatprep.subr.bf16.mxu0 0
      %430 = vmatpush1.bf16.msra.mxu0 0
      %431 = vmatprep.subr.bf16.mxu0 0
      %432 = vmatpush1.bf16.msra.mxu0 0
      %433 = vmatprep.subr.bf16.mxu0 0
      %434 = vmatpush1.bf16.msra.mxu0 0
      %435 = vmatprep.subr.bf16.mxu0 0
      %436 = vmatpush1.bf16.msra.mxu0 0
      %437 = vmatprep.subr.bf16.mxu0 0
      %438 = vmatpush1.bf16.msra.mxu0 0
      %439 = vmatprep.subr.bf16.mxu0 0
      %440 = vmatpush1.bf16.msra.mxu0 0
      %441 = vmatprep.subr.bf16.mxu0 0
      %442 = vmatpush1.bf16.msra.mxu0 0
      %443 = vmatprep.subr.bf16.mxu0 0
      %444 = vmatpush1.bf16.msra.mxu0 0
      %445 = vmatprep.subr.bf16.mxu0 0
      %446 = vmatpush1.bf16.msra.mxu0 0
      %447 = vmatprep.subr.bf16.mxu0 0
      %448 = vmatpush1.bf16.msra.mxu0 0
      %449 = vmatprep.mubr.bf16.mxu0 0
      %450 = vmatmul.mubr.bf16.gmra.mrb[0].mxu0 %v407
      %v451 = vpop.f32.mrb[0].mxu0
      %v452 = vadd.f32 %v357, %v451
      %v453 = vpop.f32.mrb[0].mxu0
      %v454 = vpop.f32.mrb[0].mxu0
      %v455 = vadd.f32 %v360, %v454
      %v456 = vpop.f32.mrb[0].mxu0
      %457 = vmatprep.mubr.bf16.mxu0 0
      %458 = vmatmul.mubr.bf16.gmra.mrb[0].mxu0 %v409
      %v459 = vpop.f32.mrb[0].mxu0
      %v460 = vadd.f32 %v365, %v459
      %v461 = vpop.f32.mrb[0].mxu0
      %v462 = vpop.f32.mrb[0].mxu0
      %v463 = vadd.f32 %v368, %v462
      %v464 = vpop.f32.mrb[0].mxu0
      %465 = vmatprep.mubr.bf16.mxu0 0
      %466 = vmatmul.mubr.bf16.gmra.mrb[0].mxu0 %v411
      %v467 = vpop.f32.mrb[0].mxu0
      %v468 = vadd.f32 %v373, %v467
      %v469 = vpop.f32.mrb[0].mxu0
      %v470 = vpop.f32.mrb[0].mxu0
      %v471 = vadd.f32 %v376, %v470
      %v472 = vpop.f32.mrb[0].mxu0
      %473 = vmatprep.mubr.bf16.mxu0 0
      %474 = vmatmul.mubr.bf16.gmra.mrb[0].mxu0 %v413
      %v475 = vpop.f32.mrb[0].mxu0
      %v476 = vadd.f32 %v381, %v475
      %v477 = vpop.f32.mrb[0].mxu0
      %v478 = vpop.f32.mrb[0].mxu0
      %v479 = vadd.f32 %v384, %v478
      %v480 = vpop.f32.mrb[0].mxu0
      %481 = vmatprep.mubr.bf16.mxu0 0
      %482 = vmatmul.mubr.bf16.gmra.mrb[0].mxu0 %v415
      %v483 = vpop.f32.mrb[0].mxu0
      %v484 = vadd.f32 %v389, %v483
      %v485 = vpop.f32.mrb[0].mxu0
      %v486 = vpop.f32.mrb[0].mxu0
      %v487 = vadd.f32 %v392, %v486
      %v488 = vpop.f32.mrb[0].mxu0
      %489 = vdwg.mxu0
      %vm490 = vcmask 1046528
      %v491 = vrot.slane %v243, 1
      %v492 = vrot.slane %v244, 1
      %v493 = vsel %vm490, %v491, %v492
      %v494 = vrot.slane %v245, 1
      %v495 = vsel %vm490, %v492, %v494
      %v496 = vrot.slane %v246, 1
      %v497 = vsel %vm490, %v494, %v496
      %v498 = vrot.slane %v247, 1
      %v499 = vsel %vm490, %v496, %v498
      %v500 = vrot.slane %v248, 1
      %v501 = vsel %vm490, %v498, %v500
      %v506 = vunpack.c.l.b16 %v193
      %v507 = vunpack.c.l.b16 %v194
      %v508 = vunpack.c.l.b16 %v195
      %v509 = vunpack.c.l.b16 %v196
      %v510 = vpack.c.b16 %v507, %v506
      %v511 = vpack.c.b16 %v509, %v508
      %v515 = vsel %vm306, %v493, 0
      %v518 = vsel %vm306, %v495, 0
      %v521 = vsel %vm306, %v497, 0
      %v524 = vsel %vm306, %v499, 0
      %v527 = vsel %vm306, %v501, 0
      %529 = vmatprep.subr.bf16.mxu0 0
      %530 = vmatpush1.bf16.msra.mxu0 %v510
      %531 = vmatprep.subr.bf16.mxu0 0
      %532 = vmatpush1.bf16.msra.mxu0 %v511
      %533 = vmatprep.subr.bf16.mxu0 0
      %534 = vmatpush1.bf16.msra.mxu0 0
      %535 = vmatprep.subr.bf16.mxu0 0
      %536 = vmatpush1.bf16.msra.mxu0 0
      %537 = vmatprep.subr.bf16.mxu0 0
      %538 = vmatpush1.bf16.msra.mxu0 0
      %539 = vmatprep.subr.bf16.mxu0 0
      %540 = vmatpush1.bf16.msra.mxu0 0
      %541 = vmatprep.subr.bf16.mxu0 0
      %542 = vmatpush1.bf16.msra.mxu0 0
      %543 = vmatprep.subr.bf16.mxu0 0
      %544 = vmatpush1.bf16.msra.mxu0 0
      %545 = vmatprep.subr.bf16.mxu0 0
      %546 = vmatpush1.bf16.msra.mxu0 0
      %547 = vmatprep.subr.bf16.mxu0 0
      %548 = vmatpush1.bf16.msra.mxu0 0
      %549 = vmatprep.subr.bf16.mxu0 0
      %550 = vmatpush1.bf16.msra.mxu0 0
      %551 = vmatprep.subr.bf16.mxu0 0
      %552 = vmatpush1.bf16.msra.mxu0 0
      %553 = vmatprep.subr.bf16.mxu0 0
      %554 = vmatpush1.bf16.msra.mxu0 0
      %555 = vmatprep.subr.bf16.mxu0 0
      %556 = vmatpush1.bf16.msra.mxu0 0
      %557 = vmatprep.subr.bf16.mxu0 0
      %558 = vmatpush1.bf16.msra.mxu0 0
      %559 = vmatprep.subr.bf16.mxu0 0
      %560 = vmatpush1.bf16.msra.mxu0 0
      %561 = vmatprep.mubr.bf16.mxu0 0
      %562 = vmatmul.mubr.bf16.gmra.mrb[0].mxu0 %v515
      %v563 = vpop.f32.mrb[0].mxu0
      %v564 = vadd.f32 0.0, %v563
      %v565 = vpop.f32.mrb[0].mxu0
      %v566 = vpop.f32.mrb[0].mxu0
      %v567 = vadd.f32 0.0, %v566
      %v568 = vpop.f32.mrb[0].mxu0
      %569 = vmatprep.mubr.bf16.mxu0 0
      %570 = vmatmul.mubr.bf16.gmra.mrb[0].mxu0 %v518
      %v571 = vpop.f32.mrb[0].mxu0
      %v572 = vadd.f32 0.0, %v571
      %v573 = vpop.f32.mrb[0].mxu0
      %v574 = vpop.f32.mrb[0].mxu0
      %v575 = vadd.f32 0.0, %v574
      %v576 = vpop.f32.mrb[0].mxu0
      %577 = vmatprep.mubr.bf16.mxu0 0
      %578 = vmatmul.mubr.bf16.gmra.mrb[0].mxu0 %v521
      %v579 = vpop.f32.mrb[0].mxu0
      %v580 = vadd.f32 0.0, %v579
      %v581 = vpop.f32.mrb[0].mxu0
      %v582 = vpop.f32.mrb[0].mxu0
      %v583 = vadd.f32 0.0, %v582
      %v584 = vpop.f32.mrb[0].mxu0
      %585 = vmatprep.mubr.bf16.mxu0 0
      %586 = vmatmul.mubr.bf16.gmra.mrb[0].mxu0 %v524
      %v587 = vpop.f32.mrb[0].mxu0
      %v588 = vadd.f32 0.0, %v587
      %v589 = vpop.f32.mrb[0].mxu0
      %v590 = vpop.f32.mrb[0].mxu0
      %v591 = vadd.f32 0.0, %v590
      %v592 = vpop.f32.mrb[0].mxu0
      %593 = vmatprep.mubr.bf16.mxu0 0
      %594 = vmatmul.mubr.bf16.gmra.mrb[0].mxu0 %v527
      %v595 = vpop.f32.mrb[0].mxu0
      %v596 = vadd.f32 0.0, %v595
      %v597 = vpop.f32.mrb[0].mxu0
      %v598 = vpop.f32.mrb[0].mxu0
      %v599 = vadd.f32 0.0, %v598
      %v600 = vpop.f32.mrb[0].mxu0
      %601 = vdwg.mxu0
      %v602 = vadd.f32 %v452, %v564
      %v603 = vadd.f32 %v455, %v567
      %v604 = vadd.f32 %v460, %v572
      %v605 = vadd.f32 %v463, %v575
      %v606 = vadd.f32 %v468, %v580
      %v607 = vadd.f32 %v471, %v583
      %v608 = vadd.f32 %v476, %v588
      %v609 = vadd.f32 %v479, %v591
      %v610 = vadd.f32 %v484, %v596
      %v611 = vadd.f32 %v487, %v599
      %v613 = vunpack.c.l.b16 %v183
      %v614 = vpack.c.b16 %v234, %v233
      %v615 = vpack.c.b16 %v236, %v235
      %v616 = vpack.c.b16 %v238, %v237
      %v617 = vpack.c.b16 %v240, %v239
      %v618 = vpack.c.b16 %v242, %v241
      %v619 = vpack.c.b16 %v613, %v613
      %v620 = vrot.slane %v614, 1
      %v621 = vrot.slane %v615, 1
      %v622 = vsel %vm490, %v620, %v621
      %v623 = vrot.slane %v616, 1
      %v624 = vsel %vm490, %v621, %v623
      %v625 = vrot.slane %v617, 1
      %v626 = vsel %vm490, %v623, %v625
      %v627 = vrot.slane %v618, 1
      %v628 = vsel %vm490, %v625, %v627
      %v629 = vrot.slane %v619, 1
      %v630 = vsel %vm490, %v627, %v629
      %v635 = vunpack.c.l.b16 %v197
      %v636 = vunpack.c.l.b16 %v198
      %v637 = vunpack.c.l.b16 %v199
      %v638 = vunpack.c.l.b16 %v200
      %v639 = vpack.c.b16 %v636, %v635
      %v640 = vpack.c.b16 %v638, %v637
      %v644 = vsel %vm306, %v622, 0
      %v647 = vsel %vm306, %v624, 0
      %v650 = vsel %vm306, %v626, 0
      %v653 = vsel %vm306, %v628, 0
      %v656 = vsel %vm306, %v630, 0
      %658 = vmatprep.subr.bf16.mxu0 0
      %659 = vmatpush1.bf16.msra.mxu0 %v639
      %660 = vmatprep.subr.bf16.mxu0 0
      %661 = vmatpush1.bf16.msra.mxu0 %v640
      %662 = vmatprep.subr.bf16.mxu0 0
      %663 = vmatpush1.bf16.msra.mxu0 0
      %664 = vmatprep.subr.bf16.mxu0 0
      %665 = vmatpush1.bf16.msra.mxu0 0
      %666 = vmatprep.subr.bf16.mxu0 0
      %667 = vmatpush1.bf16.msra.mxu0 0
      %668 = vmatprep.subr.bf16.mxu0 0
      %669 = vmatpush1.bf16.msra.mxu0 0
      %670 = vmatprep.subr.bf16.mxu0 0
      %671 = vmatpush1.bf16.msra.mxu0 0
      %672 = vmatprep.subr.bf16.mxu0 0
      %673 = vmatpush1.bf16.msra.mxu0 0
      %674 = vmatprep.subr.bf16.mxu0 0
      %675 = vmatpush1.bf16.msra.mxu0 0
      %676 = vmatprep.subr.bf16.mxu0 0
      %677 = vmatpush1.bf16.msra.mxu0 0
      %678 = vmatprep.subr.bf16.mxu0 0
      %679 = vmatpush1.bf16.msra.mxu0 0
      %680 = vmatprep.subr.bf16.mxu0 0
      %681 = vmatpush1.bf16.msra.mxu0 0
      %682 = vmatprep.subr.bf16.mxu0 0
      %683 = vmatpush1.bf16.msra.mxu0 0
      %684 = vmatprep.subr.bf16.mxu0 0
      %685 = vmatpush1.bf16.msra.mxu0 0
      %686 = vmatprep.subr.bf16.mxu0 0
      %687 = vmatpush1.bf16.msra.mxu0 0
      %688 = vmatprep.subr.bf16.mxu0 0
      %689 = vmatpush1.bf16.msra.mxu0 0
      %690 = vmatprep.mubr.bf16.mxu0 0
      %691 = vmatmul.mubr.bf16.gmra.mrb[0].mxu0 %v644
      %v692 = vpop.f32.mrb[0].mxu0
      %v693 = vadd.f32 0.0, %v692
      %v694 = vpop.f32.mrb[0].mxu0
      %v695 = vpop.f32.mrb[0].mxu0
      %v696 = vadd.f32 0.0, %v695
      %v697 = vpop.f32.mrb[0].mxu0
      %698 = vmatprep.mubr.bf16.mxu0 0
      %699 = vmatmul.mubr.bf16.gmra.mrb[0].mxu0 %v647
      %v700 = vpop.f32.mrb[0].mxu0
      %v701 = vadd.f32 0.0, %v700
      %v702 = vpop.f32.mrb[0].mxu0
      %v703 = vpop.f32.mrb[0].mxu0
      %v704 = vadd.f32 0.0, %v703
      %v705 = vpop.f32.mrb[0].mxu0
      %706 = vmatprep.mubr.bf16.mxu0 0
      %707 = vmatmul.mubr.bf16.gmra.mrb[0].mxu0 %v650
      %v708 = vpop.f32.mrb[0].mxu0
      %v709 = vadd.f32 0.0, %v708
      %v710 = vpop.f32.mrb[0].mxu0
      %v711 = vpop.f32.mrb[0].mxu0
      %v712 = vadd.f32 0.0, %v711
      %v713 = vpop.f32.mrb[0].mxu0
      %714 = vmatprep.mubr.bf16.mxu0 0
      %715 = vmatmul.mubr.bf16.gmra.mrb[0].mxu0 %v653
      %v716 = vpop.f32.mrb[0].mxu0
      %v717 = vadd.f32 0.0, %v716
      %v718 = vpop.f32.mrb[0].mxu0
      %v719 = vpop.f32.mrb[0].mxu0
      %v720 = vadd.f32 0.0, %v719
      %v721 = vpop.f32.mrb[0].mxu0
      %722 = vmatprep.mubr.bf16.mxu0 0
      %723 = vmatmul.mubr.bf16.gmra.mrb[0].mxu0 %v656
      %v724 = vpop.f32.mrb[0].mxu0
      %v725 = vadd.f32 0.0, %v724
      %v726 = vpop.f32.mrb[0].mxu0
      %v727 = vpop.f32.mrb[0].mxu0
      %v728 = vadd.f32 0.0, %v727
      %v729 = vpop.f32.mrb[0].mxu0
      %730 = vdwg.mxu0
      %v731 = vadd.f32 %v602, %v693
      %v732 = vadd.f32 %v603, %v696
      %v733 = vadd.f32 %v604, %v701
      %v734 = vadd.f32 %v605, %v704
      %v735 = vadd.f32 %v606, %v709
      %v736 = vadd.f32 %v607, %v712
      %v737 = vadd.f32 %v608, %v717
      %v738 = vadd.f32 %v609, %v720
      %v739 = vadd.f32 %v610, %v725
      %v740 = vadd.f32 %v611, %v728
      %vm741 = vsmask.f32 6400
      %v743 = vshrl.u32 %v614, 16
      %v745 = vrot.slane %v743, 1
      %v746 = vshll.u32 %v614, 16
      %v748 = vrot.slane %v746, 2
      %v749 = vor.u32 %v745, %v748
      %v751 = vshrl.u32 %v615, 16
      %v753 = vrot.slane %v751, 1
      %v754 = vshll.u32 %v615, 16
      %v756 = vrot.slane %v754, 2
      %v757 = vor.u32 %v753, %v756
      %v758 = vsel %vm741, %v749, %v757
      %v760 = vshrl.u32 %v616, 16
      %v762 = vrot.slane %v760, 1
      %v763 = vshll.u32 %v616, 16
      %v765 = vrot.slane %v763, 2
      %v766 = vor.u32 %v762, %v765
      %v767 = vsel %vm741, %v757, %v766
      %v769 = vshrl.u32 %v617, 16
      %v771 = vrot.slane %v769, 1
      %v772 = vshll.u32 %v617, 16
      %v774 = vrot.slane %v772, 2
      %v775 = vor.u32 %v771, %v774
      %v776 = vsel %vm741, %v766, %v775
      %v778 = vshrl.u32 %v618, 16
      %v780 = vrot.slane %v778, 1
      %v781 = vshll.u32 %v618, 16
      %v783 = vrot.slane %v781, 2
      %v784 = vor.u32 %v780, %v783
      %v785 = vsel %vm741, %v775, %v784
      %v787 = vshrl.u32 %v619, 16
      %v789 = vrot.slane %v787, 1
      %v790 = vshll.u32 %v619, 16
      %v792 = vrot.slane %v790, 2
      %v793 = vor.u32 %v789, %v792
      %v794 = vsel %vm741, %v784, %v793
      %v799 = vunpack.c.l.b16 %v201
      %v800 = vunpack.c.l.b16 %v202
      %v801 = vunpack.c.l.b16 %v203
      %v802 = vunpack.c.l.b16 %v204
      %v803 = vpack.c.b16 %v800, %v799
      %v804 = vpack.c.b16 %v802, %v801
      %v808 = vsel %vm306, %v758, 0
      %v811 = vsel %vm306, %v767, 0
      %v814 = vsel %vm306, %v776, 0
      %v817 = vsel %vm306, %v785, 0
      %v820 = vsel %vm306, %v794, 0
      %822 = vmatprep.subr.bf16.mxu0 0
      %823 = vmatpush1.bf16.msra.mxu0 %v803
      %824 = vmatprep.subr.bf16.mxu0 0
      %825 = vmatpush1.bf16.msra.mxu0 %v804
      %826 = vmatprep.subr.bf16.mxu0 0
      %827 = vmatpush1.bf16.msra.mxu0 0
      %828 = vmatprep.subr.bf16.mxu0 0
      %829 = vmatpush1.bf16.msra.mxu0 0
      %830 = vmatprep.subr.bf16.mxu0 0
      %831 = vmatpush1.bf16.msra.mxu0 0
      %832 = vmatprep.subr.bf16.mxu0 0
      %833 = vmatpush1.bf16.msra.mxu0 0
      %834 = vmatprep.subr.bf16.mxu0 0
      %835 = vmatpush1.bf16.msra.mxu0 0
      %836 = vmatprep.subr.bf16.mxu0 0
      %837 = vmatpush1.bf16.msra.mxu0 0
      %838 = vmatprep.subr.bf16.mxu0 0
      %839 = vmatpush1.bf16.msra.mxu0 0
      %840 = vmatprep.subr.bf16.mxu0 0
      %841 = vmatpush1.bf16.msra.mxu0 0
      %842 = vmatprep.subr.bf16.mxu0 0
      %843 = vmatpush1.bf16.msra.mxu0 0
      %844 = vmatprep.subr.bf16.mxu0 0
      %845 = vmatpush1.bf16.msra.mxu0 0
      %846 = vmatprep.subr.bf16.mxu0 0
      %847 = vmatpush1.bf16.msra.mxu0 0
      %848 = vmatprep.subr.bf16.mxu0 0
      %849 = vmatpush1.bf16.msra.mxu0 0
      %850 = vmatprep.subr.bf16.mxu0 0
      %851 = vmatpush1.bf16.msra.mxu0 0
      %852 = vmatprep.subr.bf16.mxu0 0
      %853 = vmatpush1.bf16.msra.mxu0 0
      %854 = vmatprep.mubr.bf16.mxu0 0
      %855 = vmatmul.mubr.bf16.gmra.mrb[0].mxu0 %v808
      %v856 = vpop.f32.mrb[0].mxu0
      %v857 = vadd.f32 0.0, %v856
      %v858 = vpop.f32.mrb[0].mxu0
      %v859 = vpop.f32.mrb[0].mxu0
      %v860 = vadd.f32 0.0, %v859
      %v861 = vpop.f32.mrb[0].mxu0
      %862 = vmatprep.mubr.bf16.mxu0 0
      %863 = vmatmul.mubr.bf16.gmra.mrb[0].mxu0 %v811
      %v864 = vpop.f32.mrb[0].mxu0
      %v865 = vadd.f32 0.0, %v864
      %v866 = vpop.f32.mrb[0].mxu0
      %v867 = vpop.f32.mrb[0].mxu0
      %v868 = vadd.f32 0.0, %v867
      %v869 = vpop.f32.mrb[0].mxu0
      %870 = vmatprep.mubr.bf16.mxu0 0
      %871 = vmatmul.mubr.bf16.gmra.mrb[0].mxu0 %v814
      %v872 = vpop.f32.mrb[0].mxu0
      %v873 = vadd.f32 0.0, %v872
      %v874 = vpop.f32.mrb[0].mxu0
      %v875 = vpop.f32.mrb[0].mxu0
      %v876 = vadd.f32 0.0, %v875
      %v877 = vpop.f32.mrb[0].mxu0
      %878 = vmatprep.mubr.bf16.mxu0 0
      %879 = vmatmul.mubr.bf16.gmra.mrb[0].mxu0 %v817
      %v880 = vpop.f32.mrb[0].mxu0
      %v881 = vadd.f32 0.0, %v880
      %v882 = vpop.f32.mrb[0].mxu0
      %v883 = vpop.f32.mrb[0].mxu0
      %v884 = vadd.f32 0.0, %v883
      %v885 = vpop.f32.mrb[0].mxu0
      %886 = vmatprep.mubr.bf16.mxu0 0
      %887 = vmatmul.mubr.bf16.gmra.mrb[0].mxu0 %v820
      %v888 = vpop.f32.mrb[0].mxu0
      %v889 = vadd.f32 0.0, %v888
      %v890 = vpop.f32.mrb[0].mxu0
      %v891 = vpop.f32.mrb[0].mxu0
      %v892 = vadd.f32 0.0, %v891
      %v893 = vpop.f32.mrb[0].mxu0
      %894 = vdwg.mxu0
      %v895 = vadd.f32 %v731, %v857
      %v896 = vadd.f32 %v732, %v860
      %v897 = vadd.f32 %v733, %v865
      %v898 = vadd.f32 %v734, %v868
      %v899 = vadd.f32 %v735, %v873
      %v900 = vadd.f32 %v736, %v876
      %v901 = vadd.f32 %v737, %v881
      %v902 = vadd.f32 %v738, %v884
      %v903 = vadd.f32 %v739, %v889
      %v904 = vadd.f32 %v740, %v892
      %vm905 = vcmask 1045504
      %v906 = vrot.slane %v614, 2
      %v907 = vrot.slane %v615, 2
      %v908 = vsel %vm905, %v906, %v907
      %v909 = vrot.slane %v616, 2
      %v910 = vsel %vm905, %v907, %v909
      %v911 = vrot.slane %v617, 2
      %v912 = vsel %vm905, %v909, %v911
      %v913 = vrot.slane %v618, 2
      %v914 = vsel %vm905, %v911, %v913
      %v915 = vrot.slane %v619, 2
      %v916 = vsel %vm905, %v913, %v915
      %v921 = vunpack.c.l.b16 %v205
      %v922 = vunpack.c.l.b16 %v206
      %v923 = vunpack.c.l.b16 %v207
      %v924 = vunpack.c.l.b16 %v208
      %v925 = vpack.c.b16 %v922, %v921
      %v926 = vpack.c.b16 %v924, %v923
      %v930 = vsel %vm306, %v908, 0
      %v933 = vsel %vm306, %v910, 0
      %v936 = vsel %vm306, %v912, 0
      %v939 = vsel %vm306, %v914, 0
      %v942 = vsel %vm306, %v916, 0
      %944 = vmatprep.subr.bf16.mxu0 0
      %945 = vmatpush1.bf16.msra.mxu0 %v925
      %946 = vmatprep.subr.bf16.mxu0 0
      %947 = vmatpush1.bf16.msra.mxu0 %v926
      %948 = vmatprep.subr.bf16.mxu0 0
      %949 = vmatpush1.bf16.msra.mxu0 0
      %950 = vmatprep.subr.bf16.mxu0 0
      %951 = vmatpush1.bf16.msra.mxu0 0
      %952 = vmatprep.subr.bf16.mxu0 0
      %953 = vmatpush1.bf16.msra.mxu0 0
      %954 = vmatprep.subr.bf16.mxu0 0
      %955 = vmatpush1.bf16.msra.mxu0 0
      %956 = vmatprep.subr.bf16.mxu0 0
      %957 = vmatpush1.bf16.msra.mxu0 0
      %958 = vmatprep.subr.bf16.mxu0 0
      %959 = vmatpush1.bf16.msra.mxu0 0
      %960 = vmatprep.subr.bf16.mxu0 0
      %961 = vmatpush1.bf16.msra.mxu0 0
      %962 = vmatprep.subr.bf16.mxu0 0
      %963 = vmatpush1.bf16.msra.mxu0 0
      %964 = vmatprep.subr.bf16.mxu0 0
      %965 = vmatpush1.bf16.msra.mxu0 0
      %966 = vmatprep.subr.bf16.mxu0 0
      %967 = vmatpush1.bf16.msra.mxu0 0
      %968 = vmatprep.subr.bf16.mxu0 0
      %969 = vmatpush1.bf16.msra.mxu0 0
      %970 = vmatprep.subr.bf16.mxu0 0
      %971 = vmatpush1.bf16.msra.mxu0 0
      %972 = vmatprep.subr.bf16.mxu0 0
      %973 = vmatpush1.bf16.msra.mxu0 0
      %974 = vmatprep.subr.bf16.mxu0 0
      %975 = vmatpush1.bf16.msra.mxu0 0
      %976 = vmatprep.mubr.bf16.mxu0 0
      %977 = vmatmul.mubr.bf16.gmra.mrb[0].mxu0 %v930
      %v978 = vpop.f32.mrb[0].mxu0
      %v979 = vadd.f32 0.0, %v978
      %v980 = vpop.f32.mrb[0].mxu0
      %v981 = vpop.f32.mrb[0].mxu0
      %v982 = vadd.f32 0.0, %v981
      %v983 = vpop.f32.mrb[0].mxu0
      %984 = vmatprep.mubr.bf16.mxu0 0
      %985 = vmatmul.mubr.bf16.gmra.mrb[0].mxu0 %v933
      %v986 = vpop.f32.mrb[0].mxu0
      %v987 = vadd.f32 0.0, %v986
      %v988 = vpop.f32.mrb[0].mxu0
      %v989 = vpop.f32.mrb[0].mxu0
      %v990 = vadd.f32 0.0, %v989
      %v991 = vpop.f32.mrb[0].mxu0
      %992 = vmatprep.mubr.bf16.mxu0 0
      %993 = vmatmul.mubr.bf16.gmra.mrb[0].mxu0 %v936
      %v994 = vpop.f32.mrb[0].mxu0
      %v995 = vadd.f32 0.0, %v994
      %v996 = vpop.f32.mrb[0].mxu0
      %v997 = vpop.f32.mrb[0].mxu0
      %v998 = vadd.f32 0.0, %v997
      %v999 = vpop.f32.mrb[0].mxu0
      %1000 = vmatprep.mubr.bf16.mxu0 0
      %1001 = vmatmul.mubr.bf16.gmra.mrb[0].mxu0 %v939
      %v1002 = vpop.f32.mrb[0].mxu0
      %v1003 = vadd.f32 0.0, %v1002
      %v1004 = vpop.f32.mrb[0].mxu0
      %v1005 = vpop.f32.mrb[0].mxu0
      %v1006 = vadd.f32 0.0, %v1005
      %v1007 = vpop.f32.mrb[0].mxu0
      %1008 = vmatprep.mubr.bf16.mxu0 0
      %1009 = vmatmul.mubr.bf16.gmra.mrb[0].mxu0 %v942
      %v1010 = vpop.f32.mrb[0].mxu0
      %v1011 = vadd.f32 0.0, %v1010
      %v1012 = vpop.f32.mrb[0].mxu0
      %v1013 = vpop.f32.mrb[0].mxu0
      %v1014 = vadd.f32 0.0, %v1013
      %v1015 = vpop.f32.mrb[0].mxu0
      %1016 = vdwg.mxu0
      %v1017 = vadd.f32 %v895, %v979
      %v1018 = vadd.f32 %v896, %v982
      %v1019 = vadd.f32 %v897, %v987
      %v1020 = vadd.f32 %v898, %v990
      %v1021 = vadd.f32 %v899, %v995
      %v1022 = vadd.f32 %v900, %v998
      %v1023 = vadd.f32 %v901, %v1003
      %v1024 = vadd.f32 %v902, %v1006
      %v1025 = vadd.f32 %v903, %v1011
      %v1026 = vadd.f32 %v904, %v1014
      %v1028 = vunpack.c.l.b16 %v184
      %v1029 = vpack.c.b16 %v613, %v242
      %v1030 = vpack.c.b16 %v1028, %v1028
      %v1031 = vrot.slane %v244, 2
      %v1032 = vrot.slane %v245, 2
      %v1033 = vsel %vm905, %v1031, %v1032
      %v1034 = vrot.slane %v246, 2
      %v1035 = vsel %vm905, %v1032, %v1034
      %v1036 = vrot.slane %v247, 2
      %v1037 = vsel %vm905, %v1034, %v1036
      %v1038 = vrot.slane %v1029, 2
      %v1039 = vsel %vm905, %v1036, %v1038
      %v1040 = vrot.slane %v1030, 2
      %v1041 = vsel %vm905, %v1038, %v1040
      %v1046 = vunpack.c.l.b16 %v209
      %v1047 = vunpack.c.l.b16 %v210
      %v1048 = vunpack.c.l.b16 %v211
      %v1049 = vunpack.c.l.b16 %v212
      %v1050 = vpack.c.b16 %v1047, %v1046
      %v1051 = vpack.c.b16 %v1049, %v1048
      %v1055 = vsel %vm306, %v1033, 0
      %v1058 = vsel %vm306, %v1035, 0
      %v1061 = vsel %vm306, %v1037, 0
      %v1064 = vsel %vm306, %v1039, 0
      %v1067 = vsel %vm306, %v1041, 0
      %1069 = vmatprep.subr.bf16.mxu0 0
      %1070 = vmatpush1.bf16.msra.mxu0 %v1050
      %1071 = vmatprep.subr.bf16.mxu0 0
      %1072 = vmatpush1.bf16.msra.mxu0 %v1051
      %1073 = vmatprep.subr.bf16.mxu0 0
      %1074 = vmatpush1.bf16.msra.mxu0 0
      %1075 = vmatprep.subr.bf16.mxu0 0
      %1076 = vmatpush1.bf16.msra.mxu0 0
      %1077 = vmatprep.subr.bf16.mxu0 0
      %1078 = vmatpush1.bf16.msra.mxu0 0
      %1079 = vmatprep.subr.bf16.mxu0 0
      %1080 = vmatpush1.bf16.msra.mxu0 0
      %1081 = vmatprep.subr.bf16.mxu0 0
      %1082 = vmatpush1.bf16.msra.mxu0 0
      %1083 = vmatprep.subr.bf16.mxu0 0
      %1084 = vmatpush1.bf16.msra.mxu0 0
      %1085 = vmatprep.subr.bf16.mxu0 0
      %1086 = vmatpush1.bf16.msra.mxu0 0
      %1087 = vmatprep.subr.bf16.mxu0 0
      %1088 = vmatpush1.bf16.msra.mxu0 0
      %1089 = vmatprep.subr.bf16.mxu0 0
      %1090 = vmatpush1.bf16.msra.mxu0 0
      %1091 = vmatprep.subr.bf16.mxu0 0
      %1092 = vmatpush1.bf16.msra.mxu0 0
      %1093 = vmatprep.subr.bf16.mxu0 0
      %1094 = vmatpush1.bf16.msra.mxu0 0
      %1095 = vmatprep.subr.bf16.mxu0 0
      %1096 = vmatpush1.bf16.msra.mxu0 0
      %1097 = vmatprep.subr.bf16.mxu0 0
      %1098 = vmatpush1.bf16.msra.mxu0 0
      %1099 = vmatprep.subr.bf16.mxu0 0
      %1100 = vmatpush1.bf16.msra.mxu0 0
      %1101 = vmatprep.mubr.bf16.mxu0 0
      %1102 = vmatmul.mubr.bf16.gmra.mrb[0].mxu0 %v1055
      %v1103 = vpop.f32.mrb[0].mxu0
      %v1104 = vadd.f32 0.0, %v1103
      %v1105 = vpop.f32.mrb[0].mxu0
      %v1106 = vpop.f32.mrb[0].mxu0
      %v1107 = vadd.f32 0.0, %v1106
      %v1108 = vpop.f32.mrb[0].mxu0
      %1109 = vmatprep.mubr.bf16.mxu0 0
      %1110 = vmatmul.mubr.bf16.gmra.mrb[0].mxu0 %v1058
      %v1111 = vpop.f32.mrb[0].mxu0
      %v1112 = vadd.f32 0.0, %v1111
      %v1113 = vpop.f32.mrb[0].mxu0
      %v1114 = vpop.f32.mrb[0].mxu0
      %v1115 = vadd.f32 0.0, %v1114
      %v1116 = vpop.f32.mrb[0].mxu0
      %1117 = vmatprep.mubr.bf16.mxu0 0
      %1118 = vmatmul.mubr.bf16.gmra.mrb[0].mxu0 %v1061
      %v1119 = vpop.f32.mrb[0].mxu0
      %v1120 = vadd.f32 0.0, %v1119
      %v1121 = vpop.f32.mrb[0].mxu0
      %v1122 = vpop.f32.mrb[0].mxu0
      %v1123 = vadd.f32 0.0, %v1122
      %v1124 = vpop.f32.mrb[0].mxu0
      %1125 = vmatprep.mubr.bf16.mxu0 0
      %1126 = vmatmul.mubr.bf16.gmra.mrb[0].mxu0 %v1064
      %v1127 = vpop.f32.mrb[0].mxu0
      %v1128 = vadd.f32 0.0, %v1127
      %v1129 = vpop.f32.mrb[0].mxu0
      %v1130 = vpop.f32.mrb[0].mxu0
      %v1131 = vadd.f32 0.0, %v1130
      %v1132 = vpop.f32.mrb[0].mxu0
      %1133 = vmatprep.mubr.bf16.mxu0 0
      %1134 = vmatmul.mubr.bf16.gmra.mrb[0].mxu0 %v1067
      %v1135 = vpop.f32.mrb[0].mxu0
      %v1136 = vadd.f32 0.0, %v1135
      %v1137 = vpop.f32.mrb[0].mxu0
      %v1138 = vpop.f32.mrb[0].mxu0
      %v1139 = vadd.f32 0.0, %v1138
      %v1140 = vpop.f32.mrb[0].mxu0
      %1141 = vdwg.mxu0
      %v1142 = vadd.f32 %v1017, %v1104
      %v1143 = vadd.f32 %v1018, %v1107
      %v1144 = vadd.f32 %v1019, %v1112
      %v1145 = vadd.f32 %v1020, %v1115
      %v1146 = vadd.f32 %v1021, %v1120
      %v1147 = vadd.f32 %v1022, %v1123
      %v1148 = vadd.f32 %v1023, %v1128
      %v1149 = vadd.f32 %v1024, %v1131
      %v1150 = vadd.f32 %v1025, %v1136
      %v1151 = vadd.f32 %v1026, %v1139
      %vm1152 = vsmask.f32 5376
      %v1153 = vrot.slane %v262, 2
      %v1154 = vrot.slane %v258, 3
      %v1155 = vor.u32 %v1153, %v1154
      %v1156 = vrot.slane %v270, 2
      %v1157 = vrot.slane %v266, 3
      %v1158 = vor.u32 %v1156, %v1157
      %v1159 = vsel %vm1152, %v1155, %v1158
      %v1160 = vrot.slane %v278, 2
      %v1161 = vrot.slane %v274, 3
      %v1162 = vor.u32 %v1160, %v1161
      %v1163 = vsel %vm1152, %v1158, %v1162
      %v1164 = vrot.slane %v286, 2
      %v1165 = vrot.slane %v282, 3
      %v1166 = vor.u32 %v1164, %v1165
      %v1167 = vsel %vm1152, %v1162, %v1166
      %v1169 = vshrl.u32 %v1029, 16
      %v1171 = vrot.slane %v1169, 2
      %v1172 = vshll.u32 %v1029, 16
      %v1174 = vrot.slane %v1172, 3
      %v1175 = vor.u32 %v1171, %v1174
      %v1176 = vsel %vm1152, %v1166, %v1175
      %v1178 = vshrl.u32 %v1030, 16
      %v1180 = vrot.slane %v1178, 2
      %v1181 = vshll.u32 %v1030, 16
      %v1183 = vrot.slane %v1181, 3
      %v1184 = vor.u32 %v1180, %v1183
      %v1185 = vsel %vm1152, %v1175, %v1184
      %v1190 = vunpack.c.l.b16 %v213
      %v1191 = vunpack.c.l.b16 %v214
      %v1192 = vunpack.c.l.b16 %v215
      %v1193 = vunpack.c.l.b16 %v216
      %v1194 = vpack.c.b16 %v1191, %v1190
      %v1195 = vpack.c.b16 %v1193, %v1192
      %v1199 = vsel %vm306, %v1159, 0
      %v1202 = vsel %vm306, %v1163, 0
      %v1205 = vsel %vm306, %v1167, 0
      %v1208 = vsel %vm306, %v1176, 0
      %v1211 = vsel %vm306, %v1185, 0
      %1213 = vmatprep.subr.bf16.mxu0 0
      %1214 = vmatpush1.bf16.msra.mxu0 %v1194
      %1215 = vmatprep.subr.bf16.mxu0 0
      %1216 = vmatpush1.bf16.msra.mxu0 %v1195
      %1217 = vmatprep.subr.bf16.mxu0 0
      %1218 = vmatpush1.bf16.msra.mxu0 0
      %1219 = vmatprep.subr.bf16.mxu0 0
      %1220 = vmatpush1.bf16.msra.mxu0 0
      %1221 = vmatprep.subr.bf16.mxu0 0
      %1222 = vmatpush1.bf16.msra.mxu0 0
      %1223 = vmatprep.subr.bf16.mxu0 0
      %1224 = vmatpush1.bf16.msra.mxu0 0
      %1225 = vmatprep.subr.bf16.mxu0 0
      %1226 = vmatpush1.bf16.msra.mxu0 0
      %1227 = vmatprep.subr.bf16.mxu0 0
      %1228 = vmatpush1.bf16.msra.mxu0 0
      %1229 = vmatprep.subr.bf16.mxu0 0
      %1230 = vmatpush1.bf16.msra.mxu0 0
      %1231 = vmatprep.subr.bf16.mxu0 0
      %1232 = vmatpush1.bf16.msra.mxu0 0
      %1233 = vmatprep.subr.bf16.mxu0 0
      %1234 = vmatpush1.bf16.msra.mxu0 0
      %1235 = vmatprep.subr.bf16.mxu0 0
      %1236 = vmatpush1.bf16.msra.mxu0 0
      %1237 = vmatprep.subr.bf16.mxu0 0
      %1238 = vmatpush1.bf16.msra.mxu0 0
      %1239 = vmatprep.subr.bf16.mxu0 0
      %1240 = vmatpush1.bf16.msra.mxu0 0
      %1241 = vmatprep.subr.bf16.mxu0 0
      %1242 = vmatpush1.bf16.msra.mxu0 0
      %1243 = vmatprep.subr.bf16.mxu0 0
      %1244 = vmatpush1.bf16.msra.mxu0 0
      %1245 = vmatprep.mubr.bf16.mxu0 0
      %1246 = vmatmul.mubr.bf16.gmra.mrb[0].mxu0 %v1199
      %v1247 = vpop.f32.mrb[0].mxu0
      %v1248 = vadd.f32 0.0, %v1247
      %v1249 = vpop.f32.mrb[0].mxu0
      %v1250 = vpop.f32.mrb[0].mxu0
      %v1251 = vadd.f32 0.0, %v1250
      %v1252 = vpop.f32.mrb[0].mxu0
      %1253 = vmatprep.mubr.bf16.mxu0 0
      %1254 = vmatmul.mubr.bf16.gmra.mrb[0].mxu0 %v1202
      %v1255 = vpop.f32.mrb[0].mxu0
      %v1256 = vadd.f32 0.0, %v1255
      %v1257 = vpop.f32.mrb[0].mxu0
      %v1258 = vpop.f32.mrb[0].mxu0
      %v1259 = vadd.f32 0.0, %v1258
      %v1260 = vpop.f32.mrb[0].mxu0
      %1261 = vmatprep.mubr.bf16.mxu0 0
      %1262 = vmatmul.mubr.bf16.gmra.mrb[0].mxu0 %v1205
      %v1263 = vpop.f32.mrb[0].mxu0
      %v1264 = vadd.f32 0.0, %v1263
      %v1265 = vpop.f32.mrb[0].mxu0
      %v1266 = vpop.f32.mrb[0].mxu0
      %v1267 = vadd.f32 0.0, %v1266
      %v1268 = vpop.f32.mrb[0].mxu0
      %1269 = vmatprep.mubr.bf16.mxu0 0
      %1270 = vmatmul.mubr.bf16.gmra.mrb[0].mxu0 %v1208
      %v1271 = vpop.f32.mrb[0].mxu0
      %v1272 = vadd.f32 0.0, %v1271
      %v1273 = vpop.f32.mrb[0].mxu0
      %v1274 = vpop.f32.mrb[0].mxu0
      %v1275 = vadd.f32 0.0, %v1274
      %v1276 = vpop.f32.mrb[0].mxu0
      %1277 = vmatprep.mubr.bf16.mxu0 0
      %1278 = vmatmul.mubr.bf16.gmra.mrb[0].mxu0 %v1211
      %v1279 = vpop.f32.mrb[0].mxu0
      %v1280 = vadd.f32 0.0, %v1279
      %v1281 = vpop.f32.mrb[0].mxu0
      %v1282 = vpop.f32.mrb[0].mxu0
      %v1283 = vadd.f32 0.0, %v1282
      %v1284 = vpop.f32.mrb[0].mxu0
      %1285 = vdwg.mxu0
      %v1286 = vadd.f32 %v1142, %v1248
      %v1287 = vadd.f32 %v1143, %v1251
      %v1288 = vadd.f32 %v1144, %v1256
      %v1289 = vadd.f32 %v1145, %v1259
      %v1290 = vadd.f32 %v1146, %v1264
      %v1291 = vadd.f32 %v1147, %v1267
      %v1292 = vadd.f32 %v1148, %v1272
      %v1293 = vadd.f32 %v1149, %v1275
      %v1294 = vadd.f32 %v1150, %v1280
      %v1295 = vadd.f32 %v1151, %v1283
      %vm1296 = vcmask 1044480
      %v1297 = vrot.slane %v244, 3
      %v1298 = vrot.slane %v245, 3
      %v1299 = vsel %vm1296, %v1297, %v1298
      %v1300 = vrot.slane %v246, 3
      %v1301 = vsel %vm1296, %v1298, %v1300
      %v1302 = vrot.slane %v247, 3
      %v1303 = vsel %vm1296, %v1300, %v1302
      %v1304 = vrot.slane %v1029, 3
      %v1305 = vsel %vm1296, %v1302, %v1304
      %v1306 = vrot.slane %v1030, 3
      %v1307 = vsel %vm1296, %v1304, %v1306
      %v1312 = vunpack.c.l.b16 %v217
      %v1313 = vunpack.c.l.b16 %v218
      %v1314 = vunpack.c.l.b16 %v219
      %v1315 = vunpack.c.l.b16 %v220
      %v1316 = vpack.c.b16 %v1313, %v1312
      %v1317 = vpack.c.b16 %v1315, %v1314
      %v1321 = vsel %vm306, %v1299, 0
      %v1324 = vsel %vm306, %v1301, 0
      %v1327 = vsel %vm306, %v1303, 0
      %v1330 = vsel %vm306, %v1305, 0
      %v1333 = vsel %vm306, %v1307, 0
      %1335 = vmatprep.subr.bf16.mxu0 0
      %1336 = vmatpush1.bf16.msra.mxu0 %v1316
      %1337 = vmatprep.subr.bf16.mxu0 0
      %1338 = vmatpush1.bf16.msra.mxu0 %v1317
      %1339 = vmatprep.subr.bf16.mxu0 0
      %1340 = vmatpush1.bf16.msra.mxu0 0
      %1341 = vmatprep.subr.bf16.mxu0 0
      %1342 = vmatpush1.bf16.msra.mxu0 0
      %1343 = vmatprep.subr.bf16.mxu0 0
      %1344 = vmatpush1.bf16.msra.mxu0 0
      %1345 = vmatprep.subr.bf16.mxu0 0
      %1346 = vmatpush1.bf16.msra.mxu0 0
      %1347 = vmatprep.subr.bf16.mxu0 0
      %1348 = vmatpush1.bf16.msra.mxu0 0
      %1349 = vmatprep.subr.bf16.mxu0 0
      %1350 = vmatpush1.bf16.msra.mxu0 0
      %1351 = vmatprep.subr.bf16.mxu0 0
      %1352 = vmatpush1.bf16.msra.mxu0 0
      %1353 = vmatprep.subr.bf16.mxu0 0
      %1354 = vmatpush1.bf16.msra.mxu0 0
      %1355 = vmatprep.subr.bf16.mxu0 0
      %1356 = vmatpush1.bf16.msra.mxu0 0
      %1357 = vmatprep.subr.bf16.mxu0 0
      %1358 = vmatpush1.bf16.msra.mxu0 0
      %1359 = vmatprep.subr.bf16.mxu0 0
      %1360 = vmatpush1.bf16.msra.mxu0 0
      %1361 = vmatprep.subr.bf16.mxu0 0
      %1362 = vmatpush1.bf16.msra.mxu0 0
      %1363 = vmatprep.subr.bf16.mxu0 0
      %1364 = vmatpush1.bf16.msra.mxu0 0
      %1365 = vmatprep.subr.bf16.mxu0 0
      %1366 = vmatpush1.bf16.msra.mxu0 0
      %1367 = vmatprep.mubr.bf16.mxu0 0
      %1368 = vmatmul.mubr.bf16.gmra.mrb[0].mxu0 %v1321
      %v1369 = vpop.f32.mrb[0].mxu0
      %v1370 = vadd.f32 0.0, %v1369
      %v1371 = vpop.f32.mrb[0].mxu0
      %v1372 = vpop.f32.mrb[0].mxu0
      %v1373 = vadd.f32 0.0, %v1372
      %v1374 = vpop.f32.mrb[0].mxu0
      %1375 = vmatprep.mubr.bf16.mxu0 0
      %1376 = vmatmul.mubr.bf16.gmra.mrb[0].mxu0 %v1324
      %v1377 = vpop.f32.mrb[0].mxu0
      %v1378 = vadd.f32 0.0, %v1377
      %v1379 = vpop.f32.mrb[0].mxu0
      %v1380 = vpop.f32.mrb[0].mxu0
      %v1381 = vadd.f32 0.0, %v1380
      %v1382 = vpop.f32.mrb[0].mxu0
      %1383 = vmatprep.mubr.bf16.mxu0 0
      %1384 = vmatmul.mubr.bf16.gmra.mrb[0].mxu0 %v1327
      %v1385 = vpop.f32.mrb[0].mxu0
      %v1386 = vadd.f32 0.0, %v1385
      %v1387 = vpop.f32.mrb[0].mxu0
      %v1388 = vpop.f32.mrb[0].mxu0
      %v1389 = vadd.f32 0.0, %v1388
      %v1390 = vpop.f32.mrb[0].mxu0
      %1391 = vmatprep.mubr.bf16.mxu0 0
      %1392 = vmatmul.mubr.bf16.gmra.mrb[0].mxu0 %v1330
      %v1393 = vpop.f32.mrb[0].mxu0
      %v1394 = vadd.f32 0.0, %v1393
      %v1395 = vpop.f32.mrb[0].mxu0
      %v1396 = vpop.f32.mrb[0].mxu0
      %v1397 = vadd.f32 0.0, %v1396
      %v1398 = vpop.f32.mrb[0].mxu0
      %1399 = vmatprep.mubr.bf16.mxu0 0
      %1400 = vmatmul.mubr.bf16.gmra.mrb[0].mxu0 %v1333
      %v1401 = vpop.f32.mrb[0].mxu0
      %v1402 = vadd.f32 0.0, %v1401
      %v1403 = vpop.f32.mrb[0].mxu0
      %v1404 = vpop.f32.mrb[0].mxu0
      %v1405 = vadd.f32 0.0, %v1404
      %v1406 = vpop.f32.mrb[0].mxu0
      %1407 = vdwg.mxu0
      %v1408 = vadd.f32 %v1286, %v1370
      %v1409 = vadd.f32 %v1287, %v1373
      %v1410 = vadd.f32 %v1288, %v1378
      %v1411 = vadd.f32 %v1289, %v1381
      %v1412 = vadd.f32 %v1290, %v1386
      %v1413 = vadd.f32 %v1291, %v1389
      %v1414 = vadd.f32 %v1292, %v1394
      %v1415 = vadd.f32 %v1293, %v1397
      %v1416 = vadd.f32 %v1294, %v1402
      %v1417 = vadd.f32 %v1295, %v1405
      %v1418 = vld [vmem:[%s2] sm:$0x1]
      %v1420 = vlaneseq
      %v1421 = vshrl.u32 %v1420, 7
      %v1422 = vsub.s32 0, %v1421
      %v1423 = vrot.slane %v1418, %v1422
      %v1425 = vadd.f32 %v1408, %v1423
      %v1426 = vadd.f32 %v1409, %v1423
      %v1427 = vadd.f32 %v1410, %v1423
      %v1428 = vadd.f32 %v1411, %v1423
      %v1429 = vadd.f32 %v1412, %v1423
      %v1430 = vadd.f32 %v1413, %v1423
      %v1431 = vadd.f32 %v1414, %v1423
      %v1432 = vadd.f32 %v1415, %v1423
      %v1433 = vadd.f32 %v1416, %v1423
      %v1434 = vadd.f32 %v1417, %v1423
      %v1435 = vpack.c.bf16 %v1426, %v1425
      %v1436 = vpack.c.bf16 %v1428, %v1427
      %v1437 = vpack.c.bf16 %v1430, %v1429
      %v1438 = vpack.c.bf16 %v1432, %v1431
      %v1439 = vpack.c.bf16 %v1434, %v1433
      %v1445 = vunpack.c.l.b16 %v1435
      %v1446 = vunpack.c.h.b16 %v1435
      %v1447 = vunpack.c.l.b16 %v1436
      %v1448 = vunpack.c.h.b16 %v1436
      %v1449 = vunpack.c.l.b16 %v1437
      %v1450 = vunpack.c.h.b16 %v1437
      %v1451 = vunpack.c.l.b16 %v1438
      %v1452 = vunpack.c.h.b16 %v1438
      %v1453 = vunpack.c.l.b16 %v1439
      %v1454 = vunpack.c.h.b16 %v1439
      %v1455 = vpack.c.b16 %v1445, %v1445
      %v1456 = vpack.c.b16 %v1446, %v1446
      %v1457 = vpack.c.b16 %v1447, %v1447
      %v1458 = vpack.c.b16 %v1448, %v1448
      %v1459 = vpack.c.b16 %v1449, %v1449
      %v1460 = vpack.c.b16 %v1450, %v1450
      %v1461 = vpack.c.b16 %v1451, %v1451
      %v1462 = vpack.c.b16 %v1452, %v1452
      %v1463 = vpack.c.b16 %v1453, %v1453
      %v1464 = vpack.c.b16 %v1454, %v1454
      %vm1475 = vcmask 60416
      %1476 = vst.msk [vmem:[%s170] sm:$0xf] %vm1475, %v1455
      %1477 = vst.msk [vmem:[%s170 + $0x4] sm:$0xf] %vm1475, %v1456
      %1478 = vst.msk [vmem:[%s170 + $0x8] sm:$0xf] %vm1475, %v1457
      %1479 = vst.msk [vmem:[%s170 + $0xc] sm:$0xf] %vm1475, %v1458
      %1480 = vst.msk [vmem:[%s170 + $0x10] sm:$0xf] %vm1475, %v1459
      %1481 = vst.msk [vmem:[%s170 + $0x14] sm:$0xf] %vm1475, %v1460
      %1482 = vst.msk [vmem:[%s170 + $0x18] sm:$0xf] %vm1475, %v1461
      %1483 = vst.msk [vmem:[%s170 + $0x1c] sm:$0xf] %vm1475, %v1462
      %1484 = vst.msk [vmem:[%s170 + $0x20] sm:$0xf] %vm1475, %v1463
      %1485 = vst.msk [vmem:[%s170 + $0x24] sm:$0xf] %vm1475, %v1464
      %p1486 = scmp.lt.s32.totalorder %s14, 1
      %s1487 = scalar_select %p1486, %s14, 1
      %s1488 = smul.addr %s1487, 10
      %s1489 = smul.addr %s1488, 4
      %s1490 = scalar_lea.vmem %s3, %s1489
      // Predicated region
      $region33: #{densenet_forward.25} parent=31 // pred_check
        %p1491 = pneg %p100
      $region34: #{densenet_forward.25} parent=31 // pred_check_branch
        %1493 = sbr.rel (%p1491) target = $region36
      $region35: #{densenet_forward.25} parent=31 // pred_region
        _
      $region36: #{densenet_forward.25} parent=31 // pred_fallthru
        _
    $region32: #{densenet_forward.25} parent=5 // pred_fallthru
      _
    %p1494 = scmp.le.s32.totalorder 2, %s9
    // Predicated region
    $region37: #{densenet_forward.25} parent=5 // pred_check
      %p1495 = pneg %p1494
    $region38: #{densenet_forward.25} parent=5 // pred_check_branch
      %1497 = sbr.rel (%p1495) target = $region40
    $region39: #{densenet_forward.25} parent=5 // pred_region
      %s1498 = ssub.s32 %s9, 2
      // Predicated region
      $region41: #{densenet_forward.25} parent=39 // pred_check
        %p1499 = pneg %p106
      $region42: #{densenet_forward.25} parent=39 // pred_check_branch
        %1501 = sbr.rel (%p1499) target = $region44
      $region43: #{densenet_forward.25} parent=39 // pred_region
        %p1502 = scmp.lt.s32.totalorder %s15, 1
        %s1503 = scalar_select %p1502, %s15, 1
        %s1504 = smul.addr %s1503, 10
        %s1505 = smul.addr %s1504, 4
        %s1506 = scalar_lea.vmem %s3, %s1505
      $region44: #{densenet_forward.25} parent=39 // pred_fallthru
        _
    $region40: #{densenet_forward.25} parent=5 // pred_fallthru
      _
  $region6: #{densenet_forward.25} parent=0 // loop_footer
    %s13 = sadd.s32 1, %s9
  $region7: #{densenet_forward.25} parent=0 // loop_footer_branch
    %8 = sbr.rel target = $region3
  $region8: #{densenet_forward.25} parent=0 // loop_exit
    _

// kernel: densenet_forward.29
$region0: #{densenet_forward.29}
  #allocation0 [shape = 'u32[]', space=smem, size = 0x4, offset = 0x4, fixed_abs, tag = 'smem constant byte address 0x4 - core index']
  #allocation1 [shape = 'u32[144,128]{1,0:T(1,128)}', space=vmem, size = 0x12000, scoped, tag = 'internal scratch']
  %s0 = inlined_call_operand.vmem [shape: bf16[8,256], index: 0, kind: input, shape index: {}]
  %s1 = inlined_call_operand.vmem [shape: bf16[8,128], index: 1, kind: output, shape index: {}]
  %s2 = sld [smem:[#allocation0]]
  $region14: #{densenet_forward.29} parent=0
    _
  %s4 = ssub.s32 1, %s2
  %s5 = scalar_select 0, %s4, %s2
  // Predicated region
  $region2: #{densenet_forward.29} parent=0 // pred_check
    _
  $region3: #{densenet_forward.29} parent=0 // pred_check_branch
    %7 = sbr.rel (0) target = $region5
  $region4: #{densenet_forward.29} parent=0 // pred_region
    _
  $region5: #{densenet_forward.29} parent=0 // pred_fallthru
    _
  %v8 = vld [vmem:[%s0] sm:$0xff]
  %v9 = vunpack.c.l.bf16 %v8
  %v10 = vunpack.c.h.bf16 %v8
  %v11 = vadd.f32 %v9, %v10
  %v12 = vmul.f32 %v11, 0.5
  %v13 = vpack.c.bf16 %v12, %v12
  %14 = vst [vmem:[%s1] sm:$0xf] %v13
  // Predicated region
  $region6: #{densenet_forward.29} parent=0 // pred_check
    _
  $region7: #{densenet_forward.29} parent=0 // pred_check_branch
    %16 = sbr.rel (0) target = $region9
  $region8: #{densenet_forward.29} parent=0 // pred_region
    _
  $region9: #{densenet_forward.29} parent=0 // pred_fallthru
    _
  // Predicated region
  $region10: #{densenet_forward.29} parent=0 // pred_check
    _
  $region11: #{densenet_forward.29} parent=0 // pred_check_branch
    %18 = sbr.rel (0) target = $region13
  $region12: #{densenet_forward.29} parent=0 // pred_region
    _
  $region13: #{densenet_forward.29} parent=0 // pred_fallthru
    _

// kernel: densenet_forward.31
$region0: #{densenet_forward.31}
  #allocation0 [shape = 'u32[]', space=smem, size = 0x4, offset = 0x4, fixed_abs, tag = 'smem constant byte address 0x4 - core index']
  #allocation1 [shape = 'u32[144,128]{1,0:T(1,128)}', space=vmem, size = 0x12000, scoped, tag = 'internal scratch']
  %s0 = inlined_call_operand.vmem [shape: bf16[2,16,16], index: 0, kind: input, shape index: {}]
  %s1 = inlined_call_operand.vmem [shape: bf16[16,10], index: 1, kind: input, shape index: {}]
  %s2 = inlined_call_operand.vmem [shape: f32[1,10], index: 2, kind: input, shape index: {}]
  %s3 = inlined_call_operand.hbm [shape: f32[2,10], index: 3, kind: output, shape index: {}]
  %s4 = sld [smem:[#allocation0]]
  $region22: #{densenet_forward.31} parent=0
    _
  %s6 = ssub.s32 1, %s4
  %s7 = scalar_select 0, %s6, %s4
  $region1: #{densenet_forward.31} parent=0
    #allocation2 [shape = 'u8[1024]{0}', space=vmem, size = 0x400, scoped, tag = 'output window, operand 0, single buffered']
    #allocation3 [shape = 's32[1]{0}', space=sflag, size = 0x4, scoped, tag = 'scoped memory for densenet_forward.31']
    %8 = vsyncpa [#allocation3], 0
    // Predicated region
    $region2: #{densenet_forward.31} parent=1 // pred_check
      _
    $region3: #{densenet_forward.31} parent=1 // pred_check_branch
      %10 = sbr.rel (0) target = $region5
    $region4: #{densenet_forward.31} parent=1 // pred_region
      _
    $region5: #{densenet_forward.31} parent=1 // pred_fallthru
      _
    // Predicated region
    $region6: #{densenet_forward.31} parent=1 // pred_check
      _
    $region7: #{densenet_forward.31} parent=1 // pred_check_branch
      %12 = sbr.rel (0) target = $region9
    $region8: #{densenet_forward.31} parent=1 // pred_region
      _
    $region9: #{densenet_forward.31} parent=1 // pred_fallthru
      _
    // Predicated region
    $region10: #{densenet_forward.31} parent=1 // pred_check
      _
    $region11: #{densenet_forward.31} parent=1 // pred_check_branch
      %14 = sbr.rel (0) target = $region13
    $region12: #{densenet_forward.31} parent=1 // pred_region
      _
    $region13: #{densenet_forward.31} parent=1 // pred_fallthru
      _
    %v16 = vld [vmem:[%s0] sm:$0xf]
    %v17 = vld [vmem:[%s0 + $0x4] sm:$0xf]
    %v18 = vld [vmem:[%s0 + $0x8] sm:$0xf]
    %v19 = vld [vmem:[%s0 + $0xc] sm:$0xf]
    %v20 = vunpack.c.l.bf16 %v16
    %v21 = vunpack.c.l.bf16 %v17
    %v22 = vunpack.c.l.bf16 %v18
    %v23 = vunpack.c.l.bf16 %v19
    %vm24 = vcmask 130048
    %v25 = vsel %vm24, %v20, 0.0
    %v26 = vsel %vm24, %v21, 0.0
    %v27 = vadd.f32 %v25, %v26
    %v28 = vrot.slane %v27, 4
    %v29 = vadd.f32 %v27, %v28
    %v30 = vrot.slane %v29, 2
    %v31 = vadd.f32 %v29, %v30
    %v32 = vrot.slane %v31, 1
    %v33 = vadd.f32 %v31, %v32
    %v34 = vsel %vm24, %v22, 0.0
    %v35 = vsel %vm24, %v23, 0.0
    %v36 = vadd.f32 %v34, %v35
    %v37 = vrot.slane %v36, 4
    %v38 = vadd.f32 %v36, %v37
    %v39 = vrot.slane %v38, 2
    %v40 = vadd.f32 %v38, %v39
    %v41 = vrot.slane %v40, 1
    %v42 = vadd.f32 %v40, %v41
    %v43 = vrcp.pop 16.0
    %v44 = vmul.f32 %v33, %v43
    %v45 = vmul.f32 %v42, %v43
    %v46 = vpack.c.bf16 %v44, %v44
    %v47 = vpack.c.bf16 %v45, %v45
    %v48 = vld [vmem:[%s1] sm:$0xf]
    %v49 = vld [vmem:[%s1 + $0x4] sm:$0xf]
    %v50 = vld [vmem:[%s2] sm:$0x1]
    %v52 = vlaneseq
    %v53 = vshrl.u32 %v52, 7
    %v54 = vsub.s32 0, %v53
    %v55 = vrot.slane %v50, %v54
    %v59 = vunpack.c.l.b16 %v46
    %v60 = vunpack.c.l.b16 %v47
    %vm61 = vcmask 1041409
    %v62 = vsel %vm61, %v60, %v59
    %v63 = vpack.c.b16 %v62, %v62
    %v66 = vunpack.c.l.b16 %v48
    %v67 = vunpack.c.l.b16 %v49
    %v68 = vpack.c.b16 %v67, %v66
    %v71 = vsel %vm24, %v63, 0
    %73 = vmatprep.subr.bf16.mxu0 0
    %74 = vmatpush1.bf16.msra.mxu0 %v68
    %75 = vmatprep.subr.bf16.mxu0 0
    %76 = vmatpush1.bf16.msra.mxu0 0
    %77 = vmatprep.subr.bf16.mxu0 0
    %78 = vmatpush1.bf16.msra.mxu0 0
    %79 = vmatprep.subr.bf16.mxu0 0
    %80 = vmatpush1.bf16.msra.mxu0 0
    %81 = vmatprep.subr.bf16.mxu0 0
    %82 = vmatpush1.bf16.msra.mxu0 0
    %83 = vmatprep.subr.bf16.mxu0 0
    %84 = vmatpush1.bf16.msra.mxu0 0
    %85 = vmatprep.subr.bf16.mxu0 0
    %86 = vmatpush1.bf16.msra.mxu0 0
    %87 = vmatprep.subr.bf16.mxu0 0
    %88 = vmatpush1.bf16.msra.mxu0 0
    %89 = vmatprep.subr.bf16.mxu0 0
    %90 = vmatpush1.bf16.msra.mxu0 0
    %91 = vmatprep.subr.bf16.mxu0 0
    %92 = vmatpush1.bf16.msra.mxu0 0
    %93 = vmatprep.subr.bf16.mxu0 0
    %94 = vmatpush1.bf16.msra.mxu0 0
    %95 = vmatprep.subr.bf16.mxu0 0
    %96 = vmatpush1.bf16.msra.mxu0 0
    %97 = vmatprep.subr.bf16.mxu0 0
    %98 = vmatpush1.bf16.msra.mxu0 0
    %99 = vmatprep.subr.bf16.mxu0 0
    %100 = vmatpush1.bf16.msra.mxu0 0
    %101 = vmatprep.subr.bf16.mxu0 0
    %102 = vmatpush1.bf16.msra.mxu0 0
    %103 = vmatprep.subr.bf16.mxu0 0
    %104 = vmatpush1.bf16.msra.mxu0 0
    %105 = vmatprep.mubr.bf16.mxu0 0
    %106 = vmatmul.mubr.bf16.gmra.mrb[0].mxu0 %v71
    %v107 = vpop.f32.mrb[0].mxu0
    %v108 = vadd.f32 %v55, %v107
    %v109 = vpop.f32.mrb[0].mxu0
    %v110 = vpop.f32.mrb[0].mxu0
    %v111 = vpop.f32.mrb[0].mxu0
    %112 = vdwg.mxu0
    %vm113 = vcmask 74752
    %114 = vst.msk [vmem:[#allocation2] sm:$0x3] %vm113, %v108
    // Predicated region
    $region14: #{densenet_forward.31} parent=1 // pred_check
      _
    $region15: #{densenet_forward.31} parent=1 // pred_check_branch
      %116 = sbr.rel (0) target = $region17
    $region16: #{densenet_forward.31} parent=1 // pred_region
      %s118 = ssub.s32 32, 32
      %119 = vsyncadd [#allocation3], %s118
      %s121 = sshll.u32 [#allocation2], 4
      %s122 = int_to_ptr.vmem [resolvable:$true] %s121
      %124 = dma.vmem_to_hbm [thread:$0]  %s122, 32, %s3, [#allocation3]
    $region17: #{densenet_forward.31} parent=1 // pred_fallthru
      _
    // Predicated region
    $region18: #{densenet_forward.31} parent=1 // pred_check
      _
    $region19: #{densenet_forward.31} parent=1 // pred_check_branch
      %126 = sbr.rel (0) target = $region21
    $region20: #{densenet_forward.31} parent=1 // pred_region
      %127 = dma.done [#allocation3], 32
    $region21: #{densenet_forward.31} parent=1 // pred_fallthru
      _
    %128 = vsyncpa [#allocation3], 1

// kernel: densenet_forward.30
$region0: #{densenet_forward.30}
  #allocation0 [shape = 'u32[]', space=smem, size = 0x4, offset = 0x4, fixed_abs, tag = 'smem constant byte address 0x4 - core index']
  #allocation1 [shape = 'u32[144,128]{1,0:T(1,128)}', space=vmem, size = 0x12000, scoped, tag = 'internal scratch']
  %s0 = inlined_call_operand.vmem [shape: bf16[32,32], index: 0, kind: input, shape index: {}]
  %s1 = inlined_call_operand.vmem [shape: bf16[32,16], index: 1, kind: input, shape index: {}]
  %s2 = inlined_call_operand.vmem [shape: f32[1,16], index: 2, kind: input, shape index: {}]
  %s3 = inlined_call_operand.vmem [shape: bf16[32,16], index: 3, kind: output, shape index: {}]
  %s4 = sld [smem:[#allocation0]]
  $region45: #{densenet_forward.30} parent=0
    _
  %s6 = ssub.s32 1, %s4
  %s7 = scalar_select 0, %s6, %s4
  loop: start=0, step=1, limit=4
  $region2: #{densenet_forward.30} parent=0 // loop_pre_header
    _
  $region3: #{densenet_forward.30} parent=0 // loop_header
    %s9 = sphi 0, %s13
    %p10 = scmp.ge.s32.totalorder %s9, 4
    %s19 = sphi 0, %s21
    %s22 = sphi 0, %s19
    %s23 = sphi 0, %s22
    %s39 = sphi 0, %s23
    %s43 = sphi 0, %s43
    %s45 = sphi 0, %s43
    %s46 = sphi 0, %s45
    %s60 = sphi 0, %s46
    %s64 = sphi 0, %s64
    %s66 = sphi 0, %s64
    %s67 = sphi 0, %s66
    %s81 = sphi 0, %s67
    %s87 = sphi 0, %s89
    %s90 = sphi 0, %s87
    %s91 = sphi 0, %s90
    %s107 = sphi 0, %s91
  $region4: #{densenet_forward.30} parent=0 // loop_header_branch
    %12 = sbr.rel (%p10) target = $region8
  $region5: #{densenet_forward.30} parent=0 // loop_body
    %s14 = ssub.s32 %s9, 1
    %s15 = ssub.s32 %s9, 2
    %s16 = sadd.s32 %s9, 1
    %s17 = ssub.s32 %s9, %s16
    %p18 = scmp.eq.s32.totalorder %s17, 0
    %s20 = sadd.s32 %s19, 1
    %s21 = scalar_select %p18, %s19, %s20
    %p24 = pneg %p18
    %p25 = scmp.eq.s32.totalorder %s9, 1
    %p26 = por %p24, %p25
    %p27 = scmp.ne.s32.totalorder %s19, %s22
    %p28 = scmp.eq.s32.totalorder %s9, 0
    %p29 = por %p27, %p28
    %p30 = scmp.ne.s32.totalorder %s19, %s22
    %p31 = scmp.eq.s32.totalorder %s14, 1
    %p32 = por %p30, %p31
    %p33 = scmp.ne.s32.totalorder %s22, %s23
    %p34 = scmp.eq.s32.totalorder %s14, 0
    %p35 = por %p33, %p34
    %p36 = scmp.ne.s32.totalorder %s22, %s23
    %p37 = scmp.eq.s32.totalorder %s15, 1
    %p38 = por %p36, %p37
    %p40 = scmp.ne.s32.totalorder %s23, %s39
    %p41 = scmp.eq.s32.totalorder %s15, 0
    %p42 = por %p40, %p41
    %s44 = sadd.s32 %s43, 1
    %p47 = scmp.eq.s32.totalorder %s9, 1
    %p48 = scmp.ne.s32.totalorder %s43, %s45
    %p49 = scmp.eq.s32.totalorder %s9, 0
    %p50 = por %p48, %p49
    %p51 = scmp.ne.s32.totalorder %s43, %s45
    %p52 = scmp.eq.s32.totalorder %s14, 1
    %p53 = por %p51, %p52
    %p54 = scmp.ne.s32.totalorder %s45, %s46
    %p55 = scmp.eq.s32.totalorder %s14, 0
    %p56 = por %p54, %p55
    %p57 = scmp.ne.s32.totalorder %s45, %s46
    %p58 = scmp.eq.s32.totalorder %s15, 1
    %p59 = por %p57, %p58
    %p61 = scmp.ne.s32.totalorder %s46, %s60
    %p62 = scmp.eq.s32.totalorder %s15, 0
    %p63 = por %p61, %p62
    %s65 = sadd.s32 %s64, 1
    %p68 = scmp.eq.s32.totalorder %s9, 1
    %p69 = scmp.ne.s32.totalorder %s64, %s66
    %p70 = scmp.eq.s32.totalorder %s9, 0
    %p71 = por %p69, %p70
    %p72 = scmp.ne.s32.totalorder %s64, %s66
    %p73 = scmp.eq.s32.totalorder %s14, 1
    %p74 = por %p72, %p73
    %p75 = scmp.ne.s32.totalorder %s66, %s67
    %p76 = scmp.eq.s32.totalorder %s14, 0
    %p77 = por %p75, %p76
    %p78 = scmp.ne.s32.totalorder %s66, %s67
    %p79 = scmp.eq.s32.totalorder %s15, 1
    %p80 = por %p78, %p79
    %p82 = scmp.ne.s32.totalorder %s67, %s81
    %p83 = scmp.eq.s32.totalorder %s15, 0
    %p84 = por %p82, %p83
    %s85 = ssub.s32 %s9, %s16
    %p86 = scmp.eq.s32.totalorder %s85, 0
    %s88 = sadd.s32 %s87, 1
    %s89 = scalar_select %p86, %s87, %s88
    %p92 = pneg %p86
    %p93 = scmp.eq.s32.totalorder %s9, 1
    %p94 = por %p92, %p93
    %p95 = scmp.ne.s32.totalorder %s87, %s90
    %p96 = scmp.eq.s32.totalorder %s9, 0
    %p97 = por %p95, %p96
    %p98 = scmp.ne.s32.totalorder %s87, %s90
    %p99 = scmp.eq.s32.totalorder %s14, 1
    %p100 = por %p98, %p99
    %p101 = scmp.ne.s32.totalorder %s90, %s91
    %p102 = scmp.eq.s32.totalorder %s14, 0
    %p103 = por %p101, %p102
    %p104 = scmp.ne.s32.totalorder %s90, %s91
    %p105 = scmp.eq.s32.totalorder %s15, 1
    %p106 = por %p104, %p105
    %p108 = scmp.ne.s32.totalorder %s91, %s107
    %p109 = scmp.eq.s32.totalorder %s15, 0
    %p110 = por %p108, %p109
    %p111 = scmp.le.s32.totalorder 1, %s9
    %p112 = scmp.lt.s32.totalorder %s9, 3
    %p113 = pnand %p111, %p112
    %p114 = pneg %p113
    // Predicated region
    $region9: #{densenet_forward.30} parent=5 // pred_check
      _
    $region10: #{densenet_forward.30} parent=5 // pred_check_branch
      %116 = sbr.rel (%p113) target = $region12
    $region11: #{densenet_forward.30} parent=5 // pred_region
      %s117 = ssub.s32 %s9, 1
      // Predicated region
      $region13: #{densenet_forward.30} parent=11 // pred_check
        %p118 = pneg %p56
      $region14: #{densenet_forward.30} parent=11 // pred_check_branch
        %120 = sbr.rel (%p118) target = $region16
      $region15: #{densenet_forward.30} parent=11 // pred_region
        _
      $region16: #{densenet_forward.30} parent=11 // pred_fallthru
        _
      // Predicated region
      $region17: #{densenet_forward.30} parent=11 // pred_check
        %p121 = pneg %p77
      $region18: #{densenet_forward.30} parent=11 // pred_check_branch
        %123 = sbr.rel (%p121) target = $region20
      $region19: #{densenet_forward.30} parent=11 // pred_region
        _
      $region20: #{densenet_forward.30} parent=11 // pred_fallthru
        _
    $region12: #{densenet_forward.30} parent=5 // pred_fallthru
      _
    %p124 = scmp.lt.s32.totalorder %s9, 2
    // Predicated region
    $region21: #{densenet_forward.30} parent=5 // pred_check
      %p125 = pneg %p124
    $region22: #{densenet_forward.30} parent=5 // pred_check_branch
      %127 = sbr.rel (%p125) target = $region24
    $region23: #{densenet_forward.30} parent=5 // pred_region
      // Predicated region
      $region25: #{densenet_forward.30} parent=23 // pred_check
        %p128 = pneg %p29
      $region26: #{densenet_forward.30} parent=23 // pred_check_branch
        %130 = sbr.rel (%p128) target = $region28
      $region27: #{densenet_forward.30} parent=23 // pred_region
        %s131 = smul.u32 2, %s9
        %p132 = scmp.lt.s32.totalorder %s131, 3
        %s133 = scalar_select %p132, %s131, 3
        %s134 = smul.addr %s133, 4
        %s135 = scalar_lea.vmem %s0, %s134
        %s136 = smul.u32 2, %s9
      $region28: #{densenet_forward.30} parent=23 // pred_fallthru
        _
    $region24: #{densenet_forward.30} parent=5 // pred_fallthru
      _
    %p137 = scmp.le.s32.totalorder 1, %s9
    %p138 = scmp.lt.s32.totalorder %s9, 3
    %p139 = pnand %p137, %p138
    %p140 = pneg %p139
    // Predicated region
    $region29: #{densenet_forward.30} parent=5 // pred_check
      _
    $region30: #{densenet_forward.30} parent=5 // pred_check_branch
      %142 = sbr.rel (%p139) target = $region32
    $region31: #{densenet_forward.30} parent=5 // pred_region
      %s143 = ssub.s32 %s9, 1
      %s144 = smul.u32 2, %s14
      %p145 = scmp.lt.s32.totalorder %s144, 3
      %s146 = scalar_select %p145, %s144, 3
      %s147 = smul.addr %s146, 4
      %s148 = scalar_lea.vmem %s0, %s147
      %p149 = pneg %p35
      %p150 = pneg %p32
      %p151 = pneg %p56
      %p152 = pneg %p53
      %p153 = pneg %p77
      %p154 = pneg %p74
      %p155 = pneg %p103
      %p156 = pneg %p100
      %s157 = smul.u32 2, %s14
      %p158 = scmp.lt.s32.totalorder %s157, 3
      %s159 = scalar_select %p158, %s157, 3
      %s160 = smul.addr %s159, 4
      %s161 = scalar_lea.vmem %s3, %s160
      %s162 = smul.u32 2, %s14
      %p163 = scmp.lt.s32.totalorder %s162, 3
      %s164 = scalar_select %p163, %s162, 3
      %s165 = smul.addr %s164, 4
      %s166 = scalar_lea.vmem %s0, %s165
      %s167 = smul.u32 2, %s14
      %s168 = smul.u32 2, %s14
      %p169 = scmp.lt.s32.totalorder %s168, 3
      %s170 = scalar_select %p169, %s168, 3
      %s171 = smul.addr %s170, 4
      %s172 = scalar_lea.vmem %s3, %s171
      %s173 = smul.u32 2, %s14
      %v175 = vld [vmem:[%s166] sm:$0xf]
      %v176 = vld [vmem:[%s166 + $0x4] sm:$0xf]
      %v177 = vld [vmem:[%s1] sm:$0xf]
      %v178 = vld [vmem:[%s1 + $0x4] sm:$0xf]
      %v179 = vld [vmem:[%s1 + $0x8] sm:$0xf]
      %v180 = vld [vmem:[%s1 + $0xc] sm:$0xf]
      %v181 = vld [vmem:[%s2] sm:$0x1]
      %v183 = vlaneseq
      %v184 = vshrl.u32 %v183, 7
      %v185 = vsub.s32 0, %v184
      %v186 = vrot.slane %v181, %v185
      %v190 = vunpack.c.l.b16 %v175
      %v191 = vunpack.c.l.b16 %v176
      %v192 = vpack.c.b16 %v191, %v190
      %v197 = vunpack.c.l.b16 %v177
      %v198 = vunpack.c.l.b16 %v178
      %v199 = vunpack.c.l.b16 %v179
      %v200 = vunpack.c.l.b16 %v180
      %v201 = vpack.c.b16 %v198, %v197
      %v202 = vpack.c.b16 %v200, %v199
      %vm205 = vcmask 261120
      %v207 = vsel %vm205, %v192, 0
      %209 = vmatprep.subr.bf16.mxu0 0
      %210 = vmatpush1.bf16.msra.mxu0 %v201
      %211 = vmatprep.subr.bf16.mxu0 0
      %212 = vmatpush1.bf16.msra.mxu0 %v202
      %213 = vmatprep.subr.bf16.mxu0 0
      %214 = vmatpush1.bf16.msra.mxu0 0
      %215 = vmatprep.subr.bf16.mxu0 0
      %216 = vmatpush1.bf16.msra.mxu0 0
      %217 = vmatprep.subr.bf16.mxu0 0
      %218 = vmatpush1.bf16.msra.mxu0 0
      %219 = vmatprep.subr.bf16.mxu0 0
      %220 = vmatpush1.bf16.msra.mxu0 0
      %221 = vmatprep.subr.bf16.mxu0 0
      %222 = vmatpush1.bf16.msra.mxu0 0
      %223 = vmatprep.subr.bf16.mxu0 0
      %224 = vmatpush1.bf16.msra.mxu0 0
      %225 = vmatprep.subr.bf16.mxu0 0
      %226 = vmatpush1.bf16.msra.mxu0 0
      %227 = vmatprep.subr.bf16.mxu0 0
      %228 = vmatpush1.bf16.msra.mxu0 0
      %229 = vmatprep.subr.bf16.mxu0 0
      %230 = vmatpush1.bf16.msra.mxu0 0
      %231 = vmatprep.subr.bf16.mxu0 0
      %232 = vmatpush1.bf16.msra.mxu0 0
      %233 = vmatprep.subr.bf16.mxu0 0
      %234 = vmatpush1.bf16.msra.mxu0 0
      %235 = vmatprep.subr.bf16.mxu0 0
      %236 = vmatpush1.bf16.msra.mxu0 0
      %237 = vmatprep.subr.bf16.mxu0 0
      %238 = vmatpush1.bf16.msra.mxu0 0
      %239 = vmatprep.subr.bf16.mxu0 0
      %240 = vmatpush1.bf16.msra.mxu0 0
      %241 = vmatprep.mubr.bf16.mxu0 0
      %242 = vmatmul.mubr.bf16.gmra.mrb[0].mxu0 %v207
      %v243 = vpop.f32.mrb[0].mxu0
      %v244 = vadd.f32 %v186, %v243
      %v245 = vpop.f32.mrb[0].mxu0
      %v246 = vpop.f32.mrb[0].mxu0
      %v247 = vadd.f32 %v186, %v246
      %v248 = vpop.f32.mrb[0].mxu0
      %249 = vdwg.mxu0
      %v250 = vpack.c.bf16 %v247, %v244
      %v252 = vunpack.c.l.b16 %v250
      %v253 = vunpack.c.h.b16 %v250
      %v254 = vpack.c.b16 %v252, %v252
      %v255 = vpack.c.b16 %v253, %v253
      %vm258 = vcmask 125952
      %259 = vst.msk [vmem:[%s172] sm:$0xf] %vm258, %v254
      %260 = vst.msk [vmem:[%s172 + $0x4] sm:$0xf] %vm258, %v255
      %s261 = smul.u32 2, %s14
      %p262 = scmp.lt.s32.totalorder %s261, 3
      %s263 = scalar_select %p262, %s261, 3
      %s264 = smul.addr %s263, 4
      %s265 = scalar_lea.vmem %s3, %s264
      // Predicated region
      $region33: #{densenet_forward.30} parent=31 // pred_check
        %p266 = pneg %p100
      $region34: #{densenet_forward.30} parent=31 // pred_check_branch
        %268 = sbr.rel (%p266) target = $region36
      $region35: #{densenet_forward.30} parent=31 // pred_region
        %s269 = smul.u32 2, %s14
      $region36: #{densenet_forward.30} parent=31 // pred_fallthru
        _
    $region32: #{densenet_forward.30} parent=5 // pred_fallthru
      _
    %p270 = scmp.le.s32.totalorder 2, %s9
    // Predicated region
    $region37: #{densenet_forward.30} parent=5 // pred_check
      %p271 = pneg %p270
    $region38: #{densenet_forward.30} parent=5 // pred_check_branch
      %273 = sbr.rel (%p271) target = $region40
    $region39: #{densenet_forward.30} parent=5 // pred_region
      %s274 = ssub.s32 %s9, 2
      // Predicated region
      $region41: #{densenet_forward.30} parent=39 // pred_check
        %p275 = pneg %p106
      $region42: #{densenet_forward.30} parent=39 // pred_check_branch
        %277 = sbr.rel (%p275) target = $region44
      $region43: #{densenet_forward.30} parent=39 // pred_region
        %s278 = smul.u32 2, %s15
        %p279 = scmp.lt.s32.totalorder %s278, 3
        %s280 = scalar_select %p279, %s278, 3
        %s281 = smul.addr %s280, 4
        %s282 = scalar_lea.vmem %s3, %s281
      $region44: #{densenet_forward.30} parent=39 // pred_fallthru
        _
    $region40: #{densenet_forward.30} parent=5 // pred_fallthru
      _
  $region6: #{densenet_forward.30} parent=0 // loop_footer
    %s13 = sadd.s32 1, %s9
  $region7: #{densenet_forward.30} parent=0 // loop_footer_branch
    %8 = sbr.rel target = $region3
  $region8: #{densenet_forward.30} parent=0 // loop_exit
    _

</llo_original>
